<compile_context>
chip_gen: v7x
topology: tpu7x:2x2x1
jax: 0.10.0
libtpu: 0.0.40
codegen_flags: <defaults>
</compile_context>

<pallas_src>
import math
from functools import partial

import numpy as np
import jax
import jax.numpy as jnp
from jax.experimental import pallas as pl
from jax.experimental.pallas import tpu as pltpu

# ---------------- small config (consistent with module semantics) ----------------
B_ORIG = 2                 # batch
C_IN = 3                   # image channels
NUM_FRAMES = 4             # T == num_frames (forward uses frames [:T-1])
IMG = 32                   # H = W
PATCH = 16                 # patch_size
NP_ = (IMG // PATCH) ** 2  # patches per frame = 4
D_ENC = 64                 # encoder_embed_dim (small stand-in for 1024)
ENC_DEPTH = 2
ENC_HEADS = 4
D_DEC = 32                 # decoder_embed_dim (small stand-in for 512)
DEC_DEPTH = 2              # stand-in for decoder_depth=8
DEC_HEADS = 4
DEC_NUM_CLASSES = 64       # stand-in for decoder_num_classes=768
MLP_RATIO = 4
LN_EPS = 1e-5              # nn.LayerNorm default
# At production dims this should be derived from the actual weight+activation
# +double-buffer footprint per layer; 32 MiB is safe on all of v5e/v6e/v7x.
VMEM_LIMIT_BYTES = 32 * 1024 * 1024


# ------------------------------- helpers ------------------------------------------
def _gelu(y):
    # TODO(synk): timm uses exact erf GELU; tanh approximation used (EUP-friendly).
    return 0.5 * y * (1.0 + jnp.tanh(0.7978845608028654 * (y + 0.044715 * y * y * y)))


def _ln(z, g, b, eps=LN_EPS):
    mu = jnp.mean(z, axis=-1, keepdims=True)
    zc = z - mu
    var = jnp.mean(zc * zc, axis=-1, keepdims=True)
    return zc * jax.lax.rsqrt(var + eps) * g + b


# ------------------------------- Pallas kernels -----------------------------------
def _linear_kernel(x_ref, w_ref, *rest, act, has_bias):
    if has_bias:
        b_ref, o_ref = rest
    else:
        (o_ref,) = rest
    y = jnp.dot(x_ref[...].astype(jnp.bfloat16), w_ref[...],
                preferred_element_type=jnp.float32)
    if has_bias:
        y = y + b_ref[...]
    if act == "gelu":
        y = _gelu(y)
    o_ref[...] = y


def _ln_linear_kernel(x_ref, g_ref, bln_ref, w_ref, *rest, has_bias, eps):
    if has_bias:
        b_ref, o_ref = rest
    else:
        (o_ref,) = rest
    h = _ln(x_ref[...], g_ref[...], bln_ref[...], eps)
    y = jnp.dot(h.astype(jnp.bfloat16), w_ref[...],
                preferred_element_type=jnp.float32)
    if has_bias:
        y = y + b_ref[...]
    o_ref[...] = y


def _stacked_block_kernel(*refs, num_heads, scale, use_mask, has_qkv_bias, eps):
    """One grid step = (batch block, one transformer layer).

    grid = (batch_blocks, depth); depth is 'arbitrary' and the output block
    (the residual stream) is invariant over it, so it stays resident in VMEM
    across all layers of the stack.
    """
    it = iter(refs)
    x_ref = next(it)
    mask_ref = next(it) if use_mask else None
    ln1g, ln1b, qkvw = next(it), next(it), next(it)
    qkvb = next(it) if has_qkv_bias else None
    projw, projb, ln2g, ln2b, fc1w, fc1b, fc2w, fc2b, o_ref = (next(it) for _ in range(9))

    layer = pl.program_id(1)

    @pl.when(layer == 0)
    def _():                                   # load the residual once per batch block
        o_ref[...] = x_ref[...]

    Bb, N, D = o_ref.shape
    H = num_heads
    Dh = D // H
    M = Bb * N

    x = o_ref[...].reshape(M, D)               # (M, D) f32 residual stream

    # ---------------- attention ----------------
    h = _ln(x, ln1g[0], ln1b[0], eps)
    qkv = jnp.dot(h.astype(jnp.bfloat16), qkvw[0],
                  preferred_element_type=jnp.float32)        # (M, 3D) f32
    if has_qkv_bias:
        qkv = qkv + qkvb[0]

    # (M, 3D) -> (Bb, 3H, N, Dh): one lane-split reshape + one middle-dim transpose
    qkv = qkv.reshape(M, 3 * H, Dh).reshape(Bb, N, 3 * H, Dh)
    qkv = jnp.transpose(qkv, (0, 2, 1, 3))                   # (Bb, 3H, N, Dh)
    q = (qkv[:, :H] * scale).astype(jnp.bfloat16).reshape(Bb * H, N, Dh)
    k = qkv[:, H:2 * H].astype(jnp.bfloat16).reshape(Bb * H, N, Dh)
    v = qkv[:, 2 * H:].astype(jnp.bfloat16).reshape(Bb * H, N, Dh)

    s = jnp.einsum('bqd,bkd->bqk', q, k,
                   preferred_element_type=jnp.float32)       # (Bb*H, N, N) f32
    if use_mask:
        s = s + mask_ref[...][None, :, :]
    s = s - jnp.max(s, axis=-1, keepdims=True)
    p = jnp.exp(s)
    p = p * pl.reciprocal(jnp.sum(p, axis=-1, keepdims=True), approx=True)
    o = jnp.einsum('bqk,bkd->bqd', p.astype(jnp.bfloat16), v,
                   preferred_element_type=jnp.float32)       # (Bb*H, N, Dh)
    o = jnp.transpose(o.reshape(Bb, H, N, Dh), (0, 2, 1, 3)).reshape(M, D)

    attn = jnp.dot(o.astype(jnp.bfloat16), projw[0],
                   preferred_element_type=jnp.float32) + projb[0]
    x = x + attn

    # ---------------- MLP ----------------
    h2 = _ln(x, ln2g[0], ln2b[0], eps)
    h2 = jnp.dot(h2.astype(jnp.bfloat16), fc1w[0],
                 preferred_element_type=jnp.float32) + fc1b[0]
    h2 = _gelu(h2)
    h2 = jnp.dot(h2.astype(jnp.bfloat16), fc2w[0],
                 preferred_element_type=jnp.float32) + fc2b[0]

    o_ref[...] = (x + h2).reshape(Bb, N, D)
    # TODO(synk): at production dims (D=1024, long N) the (Bb*H, N, N) score tensor
    # and full-layer weight residency exceed v7x VMEM; needs kv-tiled online softmax
    # and attention/MLP split or K-tiling before scaling.


# ------------------------------- Pallas wrappers -----------------------------------
def pallas_linear(x, w, b=None, act=None, tile_m=512):
    lead = x.shape[:-1]
    K = x.shape[-1]
    Nf = w.shape[1]
    M = int(np.prod(lead))
    # At toy M (<8-row multiples) the block must equal the full array; at
    # production M, tile_m should give >=2 grid steps so both v7x cores work.
    tm = M if M <= tile_m else tile_m
    specs = [pl.BlockSpec((tm, K), lambda i: (i, 0)),
             pl.BlockSpec((K, Nf), lambda i: (0, 0))]
    args = [x.reshape(M, K), w]
    if b is not None:
        specs.append(pl.BlockSpec((1, Nf), lambda i: (0, 0)))
        args.append(b.reshape(1, Nf))
    out = pl.pallas_call(
        partial(_linear_kernel, act=act, has_bias=b is not None),
        out_shape=jax.ShapeDtypeStruct((M, Nf), jnp.float32),
        grid=(pl.cdiv(M, tm),),
        in_specs=specs,
        out_specs=pl.BlockSpec((tm, Nf), lambda i: (i, 0)),
        compiler_params=pltpu.CompilerParams(dimension_semantics=("parallel",)),
    )(*args)
    return out.reshape(lead + (Nf,))


def pallas_ln_linear(x, g, bln, w, b=None, tile_m=512):
    """Fused LayerNorm + Linear (encoder-norm->enc2dec, decoder-norm->head)."""
    lead = x.shape[:-1]
    K = x.shape[-1]
    Nf = w.shape[1]
    M = int(np.prod(lead))
    tm = M if M <= tile_m else tile_m
    specs = [pl.BlockSpec((tm, K), lambda i: (i, 0)),
             pl.BlockSpec((1, K), lambda i: (0, 0)),
             pl.BlockSpec((1, K), lambda i: (0, 0)),
             pl.BlockSpec((K, Nf), lambda i: (0, 0))]
    args = [x.reshape(M, K), g.reshape(1, K), bln.reshape(1, K), w]
    if b is not None:
        specs.append(pl.BlockSpec((1, Nf), lambda i: (0, 0)))
        args.append(b.reshape(1, Nf))
    out = pl.pallas_call(
        partial(_ln_linear_kernel, has_bias=b is not None, eps=LN_EPS),
        out_shape=jax.ShapeDtypeStruct((M, Nf), jnp.float32),
        grid=(pl.cdiv(M, tm),),
        in_specs=specs,
        out_specs=pl.BlockSpec((tm, Nf), lambda i: (i, 0)),
        compiler_params=pltpu.CompilerParams(dimension_semantics=("parallel",)),
    )(*args)
    return out.reshape(lead + (Nf,))


def pallas_blocks(x, p, num_heads, mask=None, batch_blocks=2):
    """All transformer layers of a stack in ONE pallas_call.

    grid = (batch_blocks, depth).  The residual (output) block index is
    invariant over depth -> stays resident in VMEM for the whole stack;
    weights are indexed by the depth grid coordinate and streamed once.
    """
    B, N, D = x.shape
    L = p["qkv_w"].shape[0]
    Dh = D // num_heads
    scale = Dh ** -0.5
    has_qkv_bias = "qkv_b" in p
    use_mask = mask is not None

    bb = batch_blocks if (B >= batch_blocks and B % batch_blocks == 0) else 1
    Bb = B // bb

    res_spec = pl.BlockSpec((Bb, N, D), lambda b, l: (b, 0, 0))
    args, specs = [x], [res_spec]
    if use_mask:
        args.append(mask)
        specs.append(pl.BlockSpec(mask.shape, lambda b, l: (0, 0)))

    def push(a):
        args.append(a)
        nd = a.ndim
        specs.append(pl.BlockSpec((1,) + a.shape[1:],
                                  lambda b, l: (l,) + (0,) * (nd - 1)))

    names = ["ln1_g", "ln1_b", "qkv_w"]
    if has_qkv_bias:
        names.append("qkv_b")
    names += ["proj_w", "proj_b", "ln2_g", "ln2_b", "fc1_w", "fc1_b", "fc2_w", "fc2_b"]
    for n in names:
        push(p[n])

    return pl.pallas_call(
        partial(_stacked_block_kernel, num_heads=num_heads, scale=scale,
                use_mask=use_mask, has_qkv_bias=has_qkv_bias, eps=LN_EPS),
        out_shape=jax.ShapeDtypeStruct((B, N, D), jnp.float32),
        grid=(bb, L),
        in_specs=specs,
        out_specs=res_spec,
        compiler_params=pltpu.CompilerParams(
            dimension_semantics=("parallel", "arbitrary"),
            vmem_limit_bytes=VMEM_LIMIT_BYTES),
    )(*args)


# ---------------------------------- model pieces ------------------------------------
def get_sinusoid_encoding_table(n_position, d_hid):
    pos = np.arange(n_position)[:, None].astype(np.float64)
    i = np.arange(d_hid)[None, :]
    angle = pos / np.power(10000.0, 2.0 * (i // 2) / d_hid)
    table = np.zeros((n_position, d_hid))
    table[:, 0::2] = np.sin(angle[:, 0::2])
    table[:, 1::2] = np.cos(angle[:, 1::2])
    return table[None].astype(np.float32)   # (1, n_position, d_hid)


def get_cvm_attn_mask(seq_len, num_blocks):
    # TODO(synk): exact get_cvm_attn_mask semantics unavailable; approximated as
    # block-causal (each frame block attends to itself and earlier frame blocks).
    block = seq_len // num_blocks
    idx = np.arange(seq_len) // block
    allow = idx[:, None] >= idx[None, :]
    return jnp.asarray(np.where(allow, 0.0, -1e9), jnp.float32)


def encoder_forward(x_img, mask, p):
    # x_img: (B', C, H, W) NCHW -> patch rows (B', NP, C*P*P)
    Bp = x_img.shape[0]
    patches = x_img.reshape(Bp, C_IN, IMG // PATCH, PATCH, IMG // PATCH, PATCH)
    patches = jnp.transpose(patches, (0, 2, 4, 1, 3, 5)).reshape(Bp, NP_, C_IN * PATCH * PATCH)
    tok = pallas_linear(patches, p["patch_w"], p["patch_b"])        # patch-embed "conv"
    cls = jnp.broadcast_to(p["cls_token"], (Bp, 1, D_ENC))
    tok = jnp.concatenate([cls, tok], axis=1) + p["pos_embed"]
    # TODO(synk): CVM pretraining uses an all-False mask, so no tokens are dropped
    # and no encoder attention mask is applied; non-trivial masks are ignored.
    tok = pallas_blocks(tok, p["blocks"], ENC_HEADS, mask=None)
    return tok   # final LayerNorm fused with encoder_to_decoder in model_forward


def decoder_forward(x, attn_mask, p):
    x = pallas_blocks(x, p["blocks"], DEC_HEADS, mask=attn_mask)
    # decoder final norm + head (return_token_num == 0 -> head on all tokens)
    return pallas_ln_linear(x, p["norm_g"], p["norm_b"], p["head_w"], p["head_b"])


def model_forward(x, mask, params):
    B_orig, C, T, H, W = x.shape
    xf = x[:, :, :NUM_FRAMES - 1, :, :]
    xf = jnp.moveaxis(xf, 1, 2).reshape(B_orig * (T - 1), C, H, W)

    tok = encoder_forward(xf, mask, params["encoder"])               # (B*(T-1), 1+NP, D_ENC)
    # fused: encoder final LayerNorm + Linear(D_ENC, D_DEC, bias=False)
    x_vis = pallas_ln_linear(tok, params["encoder"]["norm_g"], params["encoder"]["norm_b"],
                             params["enc2dec_w"], None)
    # e_output mean(dim=1) only used when return_features=True (it is False here).

    x_cls = x_vis[:, :1, :]
    xv = x_vis[:, 1:, :]
    Dd = xv.shape[-1]
    xv = xv.reshape(B_orig, -1, Dd)
    xv = xv + params["pos_embed_dec"]                                # sinusoid table (detached)
    xv = xv.reshape(B_orig * (T - 1), -1, Dd)
    x_full = jnp.concatenate([x_cls, xv], axis=1).reshape(B_orig, -1, Dd)

    attn_mask = get_cvm_attn_mask(NP_ * (NUM_FRAMES - 1) + (NUM_FRAMES - 1), NUM_FRAMES - 1)
    xd = decoder_forward(x_full, attn_mask, params["decoder"])       # (B, (T-1)*(NP+1), classes)
    Cc = xd.shape[-1]
    out = xd.reshape(B_orig * (T - 1), -1, Cc)[:, 1:, :].reshape(B_orig, -1, Cc)
    return out


# --------------------------------- deterministic init --------------------------------
def _dense(key, fan_in, fan_out, depth=None):
    lim = math.sqrt(6.0 / (fan_in + fan_out))     # xavier_uniform
    shape = (fan_in, fan_out) if depth is None else (depth, fan_in, fan_out)
    w = jax.random.uniform(key, shape, jnp.float32, -lim, lim)
    return w.astype(jnp.bfloat16)                 # matmul weights stored bf16


def _init_stacked_blocks(key, depth, dim, mlp_hidden, qkv_bias):
    ks = jax.random.split(key, 4)
    p = {
        "ln1_g": jnp.ones((depth, 1, dim), jnp.float32),
        "ln1_b": jnp.zeros((depth, 1, dim), jnp.float32),
        "ln2_g": jnp.ones((depth, 1, dim), jnp.float32),
        "ln2_b": jnp.zeros((depth, 1, dim), jnp.float32),
        "qkv_w": _dense(ks[0], dim, 3 * dim, depth),
        "proj_w": _dense(ks[1], dim, dim, depth),
        "proj_b": jnp.zeros((depth, 1, dim), jnp.float32),
        "fc1_w": _dense(ks[2], dim, mlp_hidden, depth),
        "fc1_b": jnp.zeros((depth, 1, mlp_hidden), jnp.float32),
        "fc2_w": _dense(ks[3], mlp_hidden, dim, depth),
        "fc2_b": jnp.zeros((depth, 1, dim), jnp.float32),
    }
    if qkv_bias:
        p["qkv_b"] = jnp.zeros((depth, 1, 3 * dim), jnp.float32)
    return p


def init_params(key):
    keys = jax.random.split(key, 8)
    return {
        "encoder": {
            "patch_w": _dense(keys[2], C_IN * PATCH * PATCH, D_ENC),
            "patch_b": jnp.zeros((D_ENC,), jnp.float32),
            "cls_token": 0.02 * jax.random.normal(keys[3], (1, 1, D_ENC), jnp.float32),
            "pos_embed": 0.02 * jax.random.normal(keys[4], (1, 1 + NP_, D_ENC), jnp.float32),
            "blocks": _init_stacked_blocks(keys[0], ENC_DEPTH, D_ENC, D_ENC * MLP_RATIO,
                                           qkv_bias=True),
            "norm_g": jnp.ones((D_ENC,), jnp.float32), "norm_b": jnp.zeros((D_ENC,), jnp.float32),
        },
        "enc2dec_w": _dense(keys[5], D_ENC, D_DEC),
        "pos_embed_dec": jnp.asarray(
            get_sinusoid_encoding_table(NP_ * (NUM_FRAMES - 1), D_DEC)),
        "decoder": {
            "blocks": _init_stacked_blocks(keys[1], DEC_DEPTH, D_DEC, D_DEC * MLP_RATIO,
                                           qkv_bias=False),
            "norm_g": jnp.ones((D_DEC,), jnp.float32), "norm_b": jnp.zeros((D_DEC,), jnp.float32),
            "head_w": _dense(keys[6], D_DEC, DEC_NUM_CLASSES),
            "head_b": jnp.zeros((DEC_NUM_CLASSES,), jnp.float32),
        },
    }


# ------------------------------------- main ------------------------------------------
if __name__ == "__main__":
    key = jax.random.PRNGKey(0)
    pkey, xkey = jax.random.split(key)
    params = init_params(pkey)

    x = jax.random.normal(xkey, (B_ORIG, C_IN, NUM_FRAMES, IMG, IMG), jnp.float32)
    mask = jnp.zeros((B_ORIG * (NUM_FRAMES - 1), NP_), dtype=bool)   # CVM: no masking

    fwd = jax.jit(model_forward)
    out = fwd(x, mask, params)
    jax.block_until_ready(out)

    assert out.shape == (B_ORIG, (NUM_FRAMES - 1) * NP_, DEC_NUM_CLASSES), out.shape
    assert bool(jnp.all(jnp.isfinite(out)))
    print("KERNEL_OK")
</pallas_src>

<mosaic_0001>
module attributes {stable_mosaic.version = 11 : i64} {
  func.func @_linear_kernel(%arg0: i32, %arg1: memref<24x768xf32, #tpu.memory_space<vmem>>, %arg2: memref<768x64xbf16, #tpu.memory_space<vmem>>, %arg3: memref<1x64xf32, #tpu.memory_space<vmem>>, %arg4: memref<24x64xf32, #tpu.memory_space<vmem>>) attributes {dimension_semantics = [#tpu.dimension_semantics<parallel>], iteration_bounds = array<i64: 1>, scalar_prefetch = 0 : i64, scratch_operands = 0 : i64, tpu.core_type = #tpu.core_type<tc>, window_params = [{transform_indices = @transform_0, window_bounds = array<i64: 24, 768>}, {pipeline_mode = #tpu.pipeline_mode<synchronous>, transform_indices = @transform_1, window_bounds = array<i64: 768, 64>}, {pipeline_mode = #tpu.pipeline_mode<synchronous>, transform_indices = @transform_2, window_bounds = array<i64: 1, 64>}, {transform_indices = @transform_3, window_bounds = array<i64: 24, 64>}]} {
    %c0 = arith.constant 0 : index
    %c0_0 = arith.constant 0 : index
    %0 = vector.load %arg1[%c0, %c0_0] : memref<24x768xf32, #tpu.memory_space<vmem>>, vector<24x768xf32>
    %1 = arith.truncf %0 : vector<24x768xf32> to vector<24x768xbf16>
    %c0_1 = arith.constant 0 : index
    %c0_2 = arith.constant 0 : index
    %2 = vector.load %arg2[%c0_1, %c0_2] : memref<768x64xbf16, #tpu.memory_space<vmem>>, vector<768x64xbf16>
    %cst = arith.constant dense<0.000000e+00> : vector<24x64xf32>
    %3 = tpu.matmul %1, %2, %cst {dimension_numbers = #tpu.dot_dimension_numbers<[1], [0], [0], [1], [0, 0, 1, 1], [], []>} : vector<24x768xbf16>, vector<768x64xbf16>, vector<24x64xf32> -> vector<24x64xf32>
    %c0_3 = arith.constant 0 : index
    %c0_4 = arith.constant 0 : index
    %4 = vector.load %arg3[%c0_3, %c0_4] : memref<1x64xf32, #tpu.memory_space<vmem>>, vector<1x64xf32>
    %5 = vector.broadcast %4 : vector<1x64xf32> to vector<24x64xf32>
    %6 = arith.addf %3, %5 : vector<24x64xf32>
    %c0_5 = arith.constant 0 : index
    %c0_6 = arith.constant 0 : index
    %7 = vector.load %arg4[%c0_5, %c0_6] : memref<24x64xf32, #tpu.memory_space<vmem>>, vector<24x64xf32>
    tpu.vector_store %arg4[%c0_5, %c0_6], %6 {strides = array<i32>} : memref<24x64xf32, #tpu.memory_space<vmem>>, vector<24x64xf32>,
    return
  }
  func.func @transform_0(%arg0: i32) -> (i32, i32) {
    %c0_i32 = arith.constant 0 : i32
    %c0_i32_0 = arith.constant 0 : i32
    return %arg0, %c0_i32 : i32, i32
  }
  func.func @transform_1(%arg0: i32) -> (i32, i32) {
    %c0_i32 = arith.constant 0 : i32
    %c0_i32_0 = arith.constant 0 : i32
    %c0_i32_1 = arith.constant 0 : i32
    return %c0_i32, %c0_i32_0 : i32, i32
  }
  func.func @transform_2(%arg0: i32) -> (i32, i32) {
    %c0_i32 = arith.constant 0 : i32
    %c0_i32_0 = arith.constant 0 : i32
    %c0_i32_1 = arith.constant 0 : i32
    return %c0_i32, %c0_i32_0 : i32, i32
  }
  func.func @transform_3(%arg0: i32) -> (i32, i32) {
    %c0_i32 = arith.constant 0 : i32
    %c0_i32_0 = arith.constant 0 : i32
    return %arg0, %c0_i32 : i32, i32
  }
}

module attributes {stable_mosaic.version = 11 : i64} {
  func.func @_stacked_block_kernel(%arg0: i32, %arg1: i32, %arg2: memref<3x5x64xf32, #tpu.memory_space<vmem>>, %arg3: memref<1x1x64xf32, #tpu.memory_space<vmem>>, %arg4: memref<1x1x64xf32, #tpu.memory_space<vmem>>, %arg5: memref<1x64x192xbf16, #tpu.memory_space<vmem>>, %arg6: memref<1x1x192xf32, #tpu.memory_space<vmem>>, %arg7: memref<1x64x64xbf16, #tpu.memory_space<vmem>>, %arg8: memref<1x1x64xf32, #tpu.memory_space<vmem>>, %arg9: memref<1x1x64xf32, #tpu.memory_space<vmem>>, %arg10: memref<1x1x64xf32, #tpu.memory_space<vmem>>, %arg11: memref<1x64x256xbf16, #tpu.memory_space<vmem>>, %arg12: memref<1x1x256xf32, #tpu.memory_space<vmem>>, %arg13: memref<1x256x64xbf16, #tpu.memory_space<vmem>>, %arg14: memref<1x1x64xf32, #tpu.memory_space<vmem>>, %arg15: memref<3x5x64xf32, #tpu.memory_space<vmem>>) attributes {dimension_semantics = [#tpu.dimension_semantics<parallel>, #tpu.dimension_semantics<arbitrary>], iteration_bounds = array<i64: 2, 2>, scalar_prefetch = 0 : i64, scratch_operands = 0 : i64, tpu.core_type = #tpu.core_type<tc>, window_params = [{transform_indices = @transform_0, window_bounds = array<i64: 3, 5, 64>}, {transform_indices = @transform_1, window_bounds = array<i64: 1, 1, 64>}, {transform_indices = @transform_2, window_bounds = array<i64: 1, 1, 64>}, {transform_indices = @transform_3, window_bounds = array<i64: 1, 64, 192>}, {transform_indices = @transform_4, window_bounds = array<i64: 1, 1, 192>}, {transform_indices = @transform_5, window_bounds = array<i64: 1, 64, 64>}, {transform_indices = @transform_6, window_bounds = array<i64: 1, 1, 64>}, {transform_indices = @transform_7, window_bounds = array<i64: 1, 1, 64>}, {transform_indices = @transform_8, window_bounds = array<i64: 1, 1, 64>}, {transform_indices = @transform_9, window_bounds = array<i64: 1, 64, 256>}, {transform_indices = @transform_10, window_bounds = array<i64: 1, 1, 256>}, {transform_indices = @transform_11, window_bounds = array<i64: 1, 256, 64>}, {transform_indices = @transform_12, window_bounds = array<i64: 1, 1, 64>}, {transform_indices = @transform_13, window_bounds = array<i64: 3, 5, 64>}]} {
    %c0_i32 = arith.constant 0 : i32
    %0 = arith.cmpi eq, %arg1, %c0_i32 : i32
    %1 = arith.extui %0 : i1 to i32
    %c0_i32_0 = arith.constant 0 : i32
    %2 = arith.cmpi ne, %1, %c0_i32_0 : i32
    scf.if %2 {
      %c0_64 = arith.constant 0 : index
      %c0_65 = arith.constant 0 : index
      %c0_66 = arith.constant 0 : index
      %132 = vector.load %arg2[%c0_64, %c0_65, %c0_66] : memref<3x5x64xf32, #tpu.memory_space<vmem>>, vector<3x5x64xf32>
      %c0_67 = arith.constant 0 : index
      %c0_68 = arith.constant 0 : index
      %c0_69 = arith.constant 0 : index
      %133 = vector.load %arg15[%c0_67, %c0_68, %c0_69] : memref<3x5x64xf32, #tpu.memory_space<vmem>>, vector<3x5x64xf32>
      tpu.vector_store %arg15[%c0_67, %c0_68, %c0_69], %132 {strides = array<i32>} : memref<3x5x64xf32, #tpu.memory_space<vmem>>, vector<3x5x64xf32>,
    } else {
    }
    %c0 = arith.constant 0 : index
    %c0_1 = arith.constant 0 : index
    %c0_2 = arith.constant 0 : index
    %3 = vector.load %arg15[%c0, %c0_1, %c0_2] : memref<3x5x64xf32, #tpu.memory_space<vmem>>, vector<3x5x64xf32>
    %4 = vector.shape_cast %3 : vector<3x5x64xf32> to vector<15x64xf32>
    %c0_3 = arith.constant 0 : index
    %c0_4 = arith.constant 0 : index
    %c0_5 = arith.constant 0 : index
    %5 = vector.load %arg3[%c0_3, %c0_4, %c0_5] : memref<1x1x64xf32, #tpu.memory_space<vmem>>, vector<1x1x64xf32>
    %6 = vector.shape_cast %5 : vector<1x1x64xf32> to vector<1x64xf32>
    %c0_6 = arith.constant 0 : index
    %c0_7 = arith.constant 0 : index
    %c0_8 = arith.constant 0 : index
    %7 = vector.load %arg4[%c0_6, %c0_7, %c0_8] : memref<1x1x64xf32, #tpu.memory_space<vmem>>, vector<1x1x64xf32>
    %8 = vector.shape_cast %7 : vector<1x1x64xf32> to vector<1x64xf32>
    %cst = arith.constant dense<0.000000e+00> : vector<15xf32>
    %9 = vector.multi_reduction <add>, %4, %cst [1] : vector<15x64xf32> to vector<15xf32>
    %10 = vector.shape_cast %9 : vector<15xf32> to vector<15x1xf32>
    %cst_9 = arith.constant 6.400000e+01 : f32
    %11 = vector.broadcast %cst_9 : f32 to vector<15x1xf32>
    %12 = arith.divf %10, %11 : vector<15x1xf32>
    %13 = vector.broadcast %12 : vector<15x1xf32> to vector<15x64xf32>
    %14 = arith.subf %4, %13 : vector<15x64xf32>
    %15 = arith.mulf %14, %14 : vector<15x64xf32>
    %cst_10 = arith.constant dense<0.000000e+00> : vector<15xf32>
    %16 = vector.multi_reduction <add>, %15, %cst_10 [1] : vector<15x64xf32> to vector<15xf32>
    %17 = vector.shape_cast %16 : vector<15xf32> to vector<15x1xf32>
    %cst_11 = arith.constant 6.400000e+01 : f32
    %18 = vector.broadcast %cst_11 : f32 to vector<15x1xf32>
    %19 = arith.divf %17, %18 : vector<15x1xf32>
    %cst_12 = arith.constant 9.99999974E-6 : f32
    %20 = vector.broadcast %cst_12 : f32 to vector<15x1xf32>
    %21 = arith.addf %19, %20 : vector<15x1xf32>
    %22 = math.rsqrt %21 : vector<15x1xf32>
    %23 = vector.broadcast %22 : vector<15x1xf32> to vector<15x64xf32>
    %24 = arith.mulf %14, %23 : vector<15x64xf32>
    %25 = vector.broadcast %6 : vector<1x64xf32> to vector<15x64xf32>
    %26 = arith.mulf %24, %25 : vector<15x64xf32>
    %27 = vector.broadcast %8 : vector<1x64xf32> to vector<15x64xf32>
    %28 = arith.addf %26, %27 : vector<15x64xf32>
    %29 = arith.truncf %28 : vector<15x64xf32> to vector<15x64xbf16>
    %c0_13 = arith.constant 0 : index
    %c0_14 = arith.constant 0 : index
    %c0_15 = arith.constant 0 : index
    %30 = vector.load %arg5[%c0_13, %c0_14, %c0_15] : memref<1x64x192xbf16, #tpu.memory_space<vmem>>, vector<1x64x192xbf16>
    %31 = vector.shape_cast %30 : vector<1x64x192xbf16> to vector<64x192xbf16>
    %cst_16 = arith.constant dense<0.000000e+00> : vector<15x192xf32>
    %32 = tpu.matmul %29, %31, %cst_16 {dimension_numbers = #tpu.dot_dimension_numbers<[1], [0], [0], [1], [0, 0, 1, 1], [], []>} : vector<15x64xbf16>, vector<64x192xbf16>, vector<15x192xf32> -> vector<15x192xf32>
    %c0_17 = arith.constant 0 : index
    %c0_18 = arith.constant 0 : index
    %c0_19 = arith.constant 0 : index
    %33 = vector.load %arg6[%c0_17, %c0_18, %c0_19] : memref<1x1x192xf32, #tpu.memory_space<vmem>>, vector<1x1x192xf32>
    %34 = vector.shape_cast %33 : vector<1x1x192xf32> to vector<1x192xf32>
    %35 = vector.broadcast %34 : vector<1x192xf32> to vector<15x192xf32>
    %36 = arith.addf %32, %35 : vector<15x192xf32>
    %37 = vector.shape_cast %36 : vector<15x192xf32> to vector<15x12x16xf32>
    %38 = vector.shape_cast %37 : vector<15x12x16xf32> to vector<3x5x12x16xf32>
    %39 = tpu.transpose %38, [0, 2, 1, 3] : vector<3x5x12x16xf32> -> vector<3x12x5x16xf32>
    %40 = vector.extract_strided_slice %39 {offsets = [0, 0, 0, 0], sizes = [3, 4, 5, 16], strides = [1, 1, 1, 1]} : vector<3x12x5x16xf32> to vector<3x4x5x16xf32>
    %cst_20 = arith.constant 2.500000e-01 : f32
    %41 = vector.broadcast %cst_20 : f32 to vector<3x4x5x16xf32>
    %42 = arith.mulf %40, %41 : vector<3x4x5x16xf32>
    %43 = arith.truncf %42 : vector<3x4x5x16xf32> to vector<3x4x5x16xbf16>
    %44 = vector.shape_cast %43 : vector<3x4x5x16xbf16> to vector<12x5x16xbf16>
    %45 = vector.extract_strided_slice %39 {offsets = [0, 4, 0, 0], sizes = [3, 4, 5, 16], strides = [1, 1, 1, 1]} : vector<3x12x5x16xf32> to vector<3x4x5x16xf32>
    %46 = arith.truncf %45 : vector<3x4x5x16xf32> to vector<3x4x5x16xbf16>
    %47 = vector.shape_cast %46 : vector<3x4x5x16xbf16> to vector<12x5x16xbf16>
    %48 = vector.extract_strided_slice %39 {offsets = [0, 8, 0, 0], sizes = [3, 4, 5, 16], strides = [1, 1, 1, 1]} : vector<3x12x5x16xf32> to vector<3x4x5x16xf32>
    %49 = arith.truncf %48 : vector<3x4x5x16xf32> to vector<3x4x5x16xbf16>
    %50 = vector.shape_cast %49 : vector<3x4x5x16xbf16> to vector<12x5x16xbf16>
    "tpu.trace_start"() <{level = 10 : i32, message = "bqd,bkd->bqk"}> : () -> ()
    %cst_21 = arith.constant dense<0.000000e+00> : vector<12x5x5xf32>
    %51 = tpu.matmul %44, %47, %cst_21 {dimension_numbers = #tpu.dot_dimension_numbers<[2], [2], [1], [1], [0, 0, 0, 1, 1, 1], [0], [0]>} : vector<12x5x16xbf16>, vector<12x5x16xbf16>, vector<12x5x5xf32> -> vector<12x5x5xf32>
    "tpu.trace_stop"() : () -> ()
    %cst_22 = arith.constant dense<0xFF800000> : vector<12x5xf32>
    %52 = vector.multi_reduction <maximumf>, %51, %cst_22 [2] : vector<12x5x5xf32> to vector<12x5xf32>
    %53 = vector.shape_cast %52 : vector<12x5xf32> to vector<12x5x1xf32>
    %54 = vector.broadcast %53 : vector<12x5x1xf32> to vector<12x5x5xf32>
    %55 = arith.subf %51, %54 : vector<12x5x5xf32>
    %56 = math.exp %55 : vector<12x5x5xf32>
    %cst_23 = arith.constant dense<0.000000e+00> : vector<12x5xf32>
    %57 = vector.multi_reduction <add>, %56, %cst_23 [2] : vector<12x5x5xf32> to vector<12x5xf32>
    %58 = vector.shape_cast %57 : vector<12x5xf32> to vector<12x5x1xf32>
    %59 = tpu.reciprocal %58 {approx = true} : vector<12x5x1xf32> -> vector<12x5x1xf32>
    %60 = vector.broadcast %59 : vector<12x5x1xf32> to vector<12x5x5xf32>
    %61 = arith.mulf %56, %60 : vector<12x5x5xf32>
    %62 = arith.truncf %61 : vector<12x5x5xf32> to vector<12x5x5xbf16>
    "tpu.trace_start"() <{level = 10 : i32, message = "bqk,bkd->bqd"}> : () -> ()
    %cst_24 = arith.constant dense<0.000000e+00> : vector<12x5x16xf32>
    %63 = tpu.matmul %62, %50, %cst_24 {dimension_numbers = #tpu.dot_dimension_numbers<[2], [1], [1], [2], [0, 0, 0, 1, 1, 2], [0], [0]>} : vector<12x5x5xbf16>, vector<12x5x16xbf16>, vector<12x5x16xf32> -> vector<12x5x16xf32>
    "tpu.trace_stop"() : () -> ()
    %64 = vector.shape_cast %63 : vector<12x5x16xf32> to vector<3x4x5x16xf32>
    %65 = tpu.transpose %64, [0, 2, 1, 3] : vector<3x4x5x16xf32> -> vector<3x5x4x16xf32>
    %66 = vector.shape_cast %65 : vector<3x5x4x16xf32> to vector<15x64xf32>
    %67 = arith.truncf %66 : vector<15x64xf32> to vector<15x64xbf16>
    %c0_25 = arith.constant 0 : index
    %c0_26 = arith.constant 0 : index
    %c0_27 = arith.constant 0 : index
    %68 = vector.load %arg7[%c0_25, %c0_26, %c0_27] : memref<1x64x64xbf16, #tpu.memory_space<vmem>>, vector<1x64x64xbf16>
    %69 = vector.shape_cast %68 : vector<1x64x64xbf16> to vector<64x64xbf16>
    %cst_28 = arith.constant dense<0.000000e+00> : vector<15x64xf32>
    %70 = tpu.matmul %67, %69, %cst_28 {dimension_numbers = #tpu.dot_dimension_numbers<[1], [0], [0], [1], [0, 0, 1, 1], [], []>} : vector<15x64xbf16>, vector<64x64xbf16>, vector<15x64xf32> -> vector<15x64xf32>
    %c0_29 = arith.constant 0 : index
    %c0_30 = arith.constant 0 : index
    %c0_31 = arith.constant 0 : index
    %71 = vector.load %arg8[%c0_29, %c0_30, %c0_31] : memref<1x1x64xf32, #tpu.memory_space<vmem>>, vector<1x1x64xf32>
    %72 = vector.shape_cast %71 : vector<1x1x64xf32> to vector<1x64xf32>
    %73 = vector.broadcast %72 : vector<1x64xf32> to vector<15x64xf32>
    %74 = arith.addf %70, %73 : vector<15x64xf32>
    %75 = arith.addf %4, %74 : vector<15x64xf32>
    %c0_32 = arith.constant 0 : index
    %c0_33 = arith.constant 0 : index
    %c0_34 = arith.constant 0 : index
    %76 = vector.load %arg9[%c0_32, %c0_33, %c0_34] : memref<1x1x64xf32, #tpu.memory_space<vmem>>, vector<1x1x64xf32>
    %77 = vector.shape_cast %76 : vector<1x1x64xf32> to vector<1x64xf32>
    %c0_35 = arith.constant 0 : index
    %c0_36 = arith.constant 0 : index
    %c0_37 = arith.constant 0 : index
    %78 = vector.load %arg10[%c0_35, %c0_36, %c0_37] : memref<1x1x64xf32, #tpu.memory_space<vmem>>, vector<1x1x64xf32>
    %79 = vector.shape_cast %78 : vector<1x1x64xf32> to vector<1x64xf32>
    %cst_38 = arith.constant dense<0.000000e+00> : vector<15xf32>
    %80 = vector.multi_reduction <add>, %75, %cst_38 [1] : vector<15x64xf32> to vector<15xf32>
    %81 = vector.shape_cast %80 : vector<15xf32> to vector<15x1xf32>
    %cst_39 = arith.constant 6.400000e+01 : f32
    %82 = vector.broadcast %cst_39 : f32 to vector<15x1xf32>
    %83 = arith.divf %81, %82 : vector<15x1xf32>
    %84 = vector.broadcast %83 : vector<15x1xf32> to vector<15x64xf32>
    %85 = arith.subf %75, %84 : vector<15x64xf32>
    %86 = arith.mulf %85, %85 : vector<15x64xf32>
    %cst_40 = arith.constant dense<0.000000e+00> : vector<15xf32>
    %87 = vector.multi_reduction <add>, %86, %cst_40 [1] : vector<15x64xf32> to vector<15xf32>
    %88 = vector.shape_cast %87 : vector<15xf32> to vector<15x1xf32>
    %cst_41 = arith.constant 6.400000e+01 : f32
    %89 = vector.broadcast %cst_41 : f32 to vector<15x1xf32>
    %90 = arith.divf %88, %89 : vector<15x1xf32>
    %cst_42 = arith.constant 9.99999974E-6 : f32
    %91 = vector.broadcast %cst_42 : f32 to vector<15x1xf32>
    %92 = arith.addf %90, %91 : vector<15x1xf32>
    %93 = math.rsqrt %92 : vector<15x1xf32>
    %94 = vector.broadcast %93 : vector<15x1xf32> to vector<15x64xf32>
    %95 = arith.mulf %85, %94 : vector<15x64xf32>
    %96 = vector.broadcast %77 : vector<1x64xf32> to vector<15x64xf32>
    %97 = arith.mulf %95, %96 : vector<15x64xf32>
    %98 = vector.broadcast %79 : vector<1x64xf32> to vector<15x64xf32>
    %99 = arith.addf %97, %98 : vector<15x64xf32>
    %100 = arith.truncf %99 : vector<15x64xf32> to vector<15x64xbf16>
    %c0_43 = arith.constant 0 : index
    %c0_44 = arith.constant 0 : index
    %c0_45 = arith.constant 0 : index
    %101 = vector.load %arg11[%c0_43, %c0_44, %c0_45] : memref<1x64x256xbf16, #tpu.memory_space<vmem>>, vector<1x64x256xbf16>
    %102 = vector.shape_cast %101 : vector<1x64x256xbf16> to vector<64x256xbf16>
    %cst_46 = arith.constant dense<0.000000e+00> : vector<15x256xf32>
    %103 = tpu.matmul %100, %102, %cst_46 {dimension_numbers = #tpu.dot_dimension_numbers<[1], [0], [0], [1], [0, 0, 1, 1], [], []>} : vector<15x64xbf16>, vector<64x256xbf16>, vector<15x256xf32> -> vector<15x256xf32>
    %c0_47 = arith.constant 0 : index
    %c0_48 = arith.constant 0 : index
    %c0_49 = arith.constant 0 : index
    %104 = vector.load %arg12[%c0_47, %c0_48, %c0_49] : memref<1x1x256xf32, #tpu.memory_space<vmem>>, vector<1x1x256xf32>
    %105 = vector.shape_cast %104 : vector<1x1x256xf32> to vector<1x256xf32>
    %106 = vector.broadcast %105 : vector<1x256xf32> to vector<15x256xf32>
    %107 = arith.addf %103, %106 : vector<15x256xf32>
    %cst_50 = arith.constant 5.000000e-01 : f32
    %108 = vector.broadcast %cst_50 : f32 to vector<15x256xf32>
    %109 = arith.mulf %108, %107 : vector<15x256xf32>
    %cst_51 = arith.constant 4.471500e-02 : f32
    %110 = vector.broadcast %cst_51 : f32 to vector<15x256xf32>
    %111 = arith.mulf %110, %107 : vector<15x256xf32>
    %112 = arith.mulf %111, %107 : vector<15x256xf32>
    %113 = arith.mulf %112, %107 : vector<15x256xf32>
    %114 = arith.addf %107, %113 : vector<15x256xf32>
    %cst_52 = arith.constant 0.797884583 : f32
    %115 = vector.broadcast %cst_52 : f32 to vector<15x256xf32>
    %116 = arith.mulf %115, %114 : vector<15x256xf32>
    %117 = math.tanh %116 : vector<15x256xf32>
    %cst_53 = arith.constant 1.000000e+00 : f32
    %118 = vector.broadcast %cst_53 : f32 to vector<15x256xf32>
    %119 = arith.addf %118, %117 : vector<15x256xf32>
    %120 = arith.mulf %109, %119 : vector<15x256xf32>
    %121 = arith.truncf %120 : vector<15x256xf32> to vector<15x256xbf16>
    %c0_54 = arith.constant 0 : index
    %c0_55 = arith.constant 0 : index
    %c0_56 = arith.constant 0 : index
    %122 = vector.load %arg13[%c0_54, %c0_55, %c0_56] : memref<1x256x64xbf16, #tpu.memory_space<vmem>>, vector<1x256x64xbf16>
    %123 = vector.shape_cast %122 : vector<1x256x64xbf16> to vector<256x64xbf16>
    %cst_57 = arith.constant dense<0.000000e+00> : vector<15x64xf32>
    %124 = tpu.matmul %121, %123, %cst_57 {dimension_numbers = #tpu.dot_dimension_numbers<[1], [0], [0], [1], [0, 0, 1, 1], [], []>} : vector<15x256xbf16>, vector<256x64xbf16>, vector<15x64xf32> -> vector<15x64xf32>
    %c0_58 = arith.constant 0 : index
    %c0_59 = arith.constant 0 : index
    %c0_60 = arith.constant 0 : index
    %125 = vector.load %arg14[%c0_58, %c0_59, %c0_60] : memref<1x1x64xf32, #tpu.memory_space<vmem>>, vector<1x1x64xf32>
    %126 = vector.shape_cast %125 : vector<1x1x64xf32> to vector<1x64xf32>
    %127 = vector.broadcast %126 : vector<1x64xf32> to vector<15x64xf32>
    %128 = arith.addf %124, %127 : vector<15x64xf32>
    %129 = arith.addf %75, %128 : vector<15x64xf32>
    %130 = vector.shape_cast %129 : vector<15x64xf32> to vector<3x5x64xf32>
    %c0_61 = arith.constant 0 : index
    %c0_62 = arith.constant 0 : index
    %c0_63 = arith.constant 0 : index
    %131 = vector.load %arg15[%c0_61, %c0_62, %c0_63] : memref<3x5x64xf32, #tpu.memory_space<vmem>>, vector<3x5x64xf32>
    tpu.vector_store %arg15[%c0_61, %c0_62, %c0_63], %130 {strides = array<i32>} : memref<3x5x64xf32, #tpu.memory_space<vmem>>, vector<3x5x64xf32>,
    return
  }
  func.func @transform_0(%arg0: i32, %arg1: i32) -> (i32, i32, i32) {
    %c0_i32 = arith.constant 0 : i32
    %c0_i32_0 = arith.constant 0 : i32
    %c0_i32_1 = arith.constant 0 : i32
    return %arg0, %c0_i32, %c0_i32_0 : i32, i32, i32
  }
  func.func @transform_1(%arg0: i32, %arg1: i32) -> (i32, i32, i32) {
    %c0_i32 = arith.constant 0 : i32
    %c0_i32_0 = arith.constant 0 : i32
    %c0_i32_1 = arith.constant 0 : i32
    return %arg1, %c0_i32, %c0_i32_0 : i32, i32, i32
  }
  func.func @transform_2(%arg0: i32, %arg1: i32) -> (i32, i32, i32) {
    %c0_i32 = arith.constant 0 : i32
    %c0_i32_0 = arith.constant 0 : i32
    %c0_i32_1 = arith.constant 0 : i32
    return %arg1, %c0_i32, %c0_i32_0 : i32, i32, i32
  }
  func.func @transform_3(%arg0: i32, %arg1: i32) -> (i32, i32, i32) {
    %c0_i32 = arith.constant 0 : i32
    %c0_i32_0 = arith.constant 0 : i32
    %c0_i32_1 = arith.constant 0 : i32
    return %arg1, %c0_i32, %c0_i32_0 : i32, i32, i32
  }
  func.func @transform_4(%arg0: i32, %arg1: i32) -> (i32, i32, i32) {
    %c0_i32 = arith.constant 0 : i32
    %c0_i32_0 = arith.constant 0 : i32
    %c0_i32_1 = arith.constant 0 : i32
    return %arg1, %c0_i32, %c0_i32_0 : i32, i32, i32
  }
  func.func @transform_5(%arg0: i32, %arg1: i32) -> (i32, i32, i32) {
    %c0_i32 = arith.constant 0 : i32
    %c0_i32_0 = arith.constant 0 : i32
    %c0_i32_1 = arith.constant 0 : i32
    return %arg1, %c0_i32, %c0_i32_0 : i32, i32, i32
  }
  func.func @transform_6(%arg0: i32, %arg1: i32) -> (i32, i32, i32) {
    %c0_i32 = arith.constant 0 : i32
    %c0_i32_0 = arith.constant 0 : i32
    %c0_i32_1 = arith.constant 0 : i32
    return %arg1, %c0_i32, %c0_i32_0 : i32, i32, i32
  }
  func.func @transform_7(%arg0: i32, %arg1: i32) -> (i32, i32, i32) {
    %c0_i32 = arith.constant 0 : i32
    %c0_i32_0 = arith.constant 0 : i32
    %c0_i32_1 = arith.constant 0 : i32
    return %arg1, %c0_i32, %c0_i32_0 : i32, i32, i32
  }
  func.func @transform_8(%arg0: i32, %arg1: i32) -> (i32, i32, i32) {
    %c0_i32 = arith.constant 0 : i32
    %c0_i32_0 = arith.constant 0 : i32
    %c0_i32_1 = arith.constant 0 : i32
    return %arg1, %c0_i32, %c0_i32_0 : i32, i32, i32
  }
  func.func @transform_9(%arg0: i32, %arg1: i32) -> (i32, i32, i32) {
    %c0_i32 = arith.constant 0 : i32
    %c0_i32_0 = arith.constant 0 : i32
    %c0_i32_1 = arith.constant 0 : i32
    return %arg1, %c0_i32, %c0_i32_0 : i32, i32, i32
  }
  func.func @transform_10(%arg0: i32, %arg1: i32) -> (i32, i32, i32) {
    %c0_i32 = arith.constant 0 : i32
    %c0_i32_0 = arith.constant 0 : i32
    %c0_i32_1 = arith.constant 0 : i32
    return %arg1, %c0_i32, %c0_i32_0 : i32, i32, i32
  }
  func.func @transform_11(%arg0: i32, %arg1: i32) -> (i32, i32, i32) {
    %c0_i32 = arith.constant 0 : i32
    %c0_i32_0 = arith.constant 0 : i32
    %c0_i32_1 = arith.constant 0 : i32
    return %arg1, %c0_i32, %c0_i32_0 : i32, i32, i32
  }
  func.func @transform_12(%arg0: i32, %arg1: i32) -> (i32, i32, i32) {
    %c0_i32 = arith.constant 0 : i32
    %c0_i32_0 = arith.constant 0 : i32
    %c0_i32_1 = arith.constant 0 : i32
    return %arg1, %c0_i32, %c0_i32_0 : i32, i32, i32
  }
  func.func @transform_13(%arg0: i32, %arg1: i32) -> (i32, i32, i32) {
    %c0_i32 = arith.constant 0 : i32
    %c0_i32_0 = arith.constant 0 : i32
    %c0_i32_1 = arith.constant 0 : i32
    return %arg0, %c0_i32, %c0_i32_0 : i32, i32, i32
  }
}

module attributes {stable_mosaic.version = 11 : i64} {
  func.func @_ln_linear_kernel(%arg0: i32, %arg1: memref<30x64xf32, #tpu.memory_space<vmem>>, %arg2: memref<1x64xf32, #tpu.memory_space<vmem>>, %arg3: memref<1x64xf32, #tpu.memory_space<vmem>>, %arg4: memref<64x32xbf16, #tpu.memory_space<vmem>>, %arg5: memref<30x32xf32, #tpu.memory_space<vmem>>) attributes {dimension_semantics = [#tpu.dimension_semantics<parallel>], iteration_bounds = array<i64: 1>, scalar_prefetch = 0 : i64, scratch_operands = 0 : i64, tpu.core_type = #tpu.core_type<tc>, window_params = [{transform_indices = @transform_0, window_bounds = array<i64: 30, 64>}, {pipeline_mode = #tpu.pipeline_mode<synchronous>, transform_indices = @transform_1, window_bounds = array<i64: 1, 64>}, {pipeline_mode = #tpu.pipeline_mode<synchronous>, transform_indices = @transform_2, window_bounds = array<i64: 1, 64>}, {pipeline_mode = #tpu.pipeline_mode<synchronous>, transform_indices = @transform_3, window_bounds = array<i64: 64, 32>}, {transform_indices = @transform_4, window_bounds = array<i64: 30, 32>}]} {
    %c0 = arith.constant 0 : index
    %c0_0 = arith.constant 0 : index
    %0 = vector.load %arg1[%c0, %c0_0] : memref<30x64xf32, #tpu.memory_space<vmem>>, vector<30x64xf32>
    %c0_1 = arith.constant 0 : index
    %c0_2 = arith.constant 0 : index
    %1 = vector.load %arg2[%c0_1, %c0_2] : memref<1x64xf32, #tpu.memory_space<vmem>>, vector<1x64xf32>
    %c0_3 = arith.constant 0 : index
    %c0_4 = arith.constant 0 : index
    %2 = vector.load %arg3[%c0_3, %c0_4] : memref<1x64xf32, #tpu.memory_space<vmem>>, vector<1x64xf32>
    %cst = arith.constant dense<0.000000e+00> : vector<30xf32>
    %3 = vector.multi_reduction <add>, %0, %cst [1] : vector<30x64xf32> to vector<30xf32>
    %4 = vector.shape_cast %3 : vector<30xf32> to vector<30x1xf32>
    %cst_5 = arith.constant 6.400000e+01 : f32
    %5 = vector.broadcast %cst_5 : f32 to vector<30x1xf32>
    %6 = arith.divf %4, %5 : vector<30x1xf32>
    %7 = vector.broadcast %6 : vector<30x1xf32> to vector<30x64xf32>
    %8 = arith.subf %0, %7 : vector<30x64xf32>
    %9 = arith.mulf %8, %8 : vector<30x64xf32>
    %cst_6 = arith.constant dense<0.000000e+00> : vector<30xf32>
    %10 = vector.multi_reduction <add>, %9, %cst_6 [1] : vector<30x64xf32> to vector<30xf32>
    %11 = vector.shape_cast %10 : vector<30xf32> to vector<30x1xf32>
    %cst_7 = arith.constant 6.400000e+01 : f32
    %12 = vector.broadcast %cst_7 : f32 to vector<30x1xf32>
    %13 = arith.divf %11, %12 : vector<30x1xf32>
    %cst_8 = arith.constant 9.99999974E-6 : f32
    %14 = vector.broadcast %cst_8 : f32 to vector<30x1xf32>
    %15 = arith.addf %13, %14 : vector<30x1xf32>
    %16 = math.rsqrt %15 : vector<30x1xf32>
    %17 = vector.broadcast %16 : vector<30x1xf32> to vector<30x64xf32>
    %18 = arith.mulf %8, %17 : vector<30x64xf32>
    %19 = vector.broadcast %1 : vector<1x64xf32> to vector<30x64xf32>
    %20 = arith.mulf %18, %19 : vector<30x64xf32>
    %21 = vector.broadcast %2 : vector<1x64xf32> to vector<30x64xf32>
    %22 = arith.addf %20, %21 : vector<30x64xf32>
    %23 = arith.truncf %22 : vector<30x64xf32> to vector<30x64xbf16>
    %c0_9 = arith.constant 0 : index
    %c0_10 = arith.constant 0 : index
    %24 = vector.load %arg4[%c0_9, %c0_10] : memref<64x32xbf16, #tpu.memory_space<vmem>>, vector<64x32xbf16>
    %cst_11 = arith.constant dense<0.000000e+00> : vector<30x32xf32>
    %25 = tpu.matmul %23, %24, %cst_11 {dimension_numbers = #tpu.dot_dimension_numbers<[1], [0], [0], [1], [0, 0, 1, 1], [], []>} : vector<30x64xbf16>, vector<64x32xbf16>, vector<30x32xf32> -> vector<30x32xf32>
    %c0_12 = arith.constant 0 : index
    %c0_13 = arith.constant 0 : index
    %26 = vector.load %arg5[%c0_12, %c0_13] : memref<30x32xf32, #tpu.memory_space<vmem>>, vector<30x32xf32>
    tpu.vector_store %arg5[%c0_12, %c0_13], %25 {strides = array<i32>} : memref<30x32xf32, #tpu.memory_space<vmem>>, vector<30x32xf32>,
    return
  }
  func.func @transform_0(%arg0: i32) -> (i32, i32) {
    %c0_i32 = arith.constant 0 : i32
    %c0_i32_0 = arith.constant 0 : i32
    return %arg0, %c0_i32 : i32, i32
  }
  func.func @transform_1(%arg0: i32) -> (i32, i32) {
    %c0_i32 = arith.constant 0 : i32
    %c0_i32_0 = arith.constant 0 : i32
    %c0_i32_1 = arith.constant 0 : i32
    return %c0_i32, %c0_i32_0 : i32, i32
  }
  func.func @transform_2(%arg0: i32) -> (i32, i32) {
    %c0_i32 = arith.constant 0 : i32
    %c0_i32_0 = arith.constant 0 : i32
    %c0_i32_1 = arith.constant 0 : i32
    return %c0_i32, %c0_i32_0 : i32, i32
  }
  func.func @transform_3(%arg0: i32) -> (i32, i32) {
    %c0_i32 = arith.constant 0 : i32
    %c0_i32_0 = arith.constant 0 : i32
    %c0_i32_1 = arith.constant 0 : i32
    return %c0_i32, %c0_i32_0 : i32, i32
  }
  func.func @transform_4(%arg0: i32) -> (i32, i32) {
    %c0_i32 = arith.constant 0 : i32
    %c0_i32_0 = arith.constant 0 : i32
    return %arg0, %c0_i32 : i32, i32
  }
}

module attributes {stable_mosaic.version = 11 : i64} {
  func.func @_stacked_block_kernel(%arg0: i32, %arg1: i32, %arg2: memref<1x15x32xf32, #tpu.memory_space<vmem>>, %arg3: memref<15x15xf32, #tpu.memory_space<vmem>>, %arg4: memref<1x1x32xf32, #tpu.memory_space<vmem>>, %arg5: memref<1x1x32xf32, #tpu.memory_space<vmem>>, %arg6: memref<1x32x96xbf16, #tpu.memory_space<vmem>>, %arg7: memref<1x32x32xbf16, #tpu.memory_space<vmem>>, %arg8: memref<1x1x32xf32, #tpu.memory_space<vmem>>, %arg9: memref<1x1x32xf32, #tpu.memory_space<vmem>>, %arg10: memref<1x1x32xf32, #tpu.memory_space<vmem>>, %arg11: memref<1x32x128xbf16, #tpu.memory_space<vmem>>, %arg12: memref<1x1x128xf32, #tpu.memory_space<vmem>>, %arg13: memref<1x128x32xbf16, #tpu.memory_space<vmem>>, %arg14: memref<1x1x32xf32, #tpu.memory_space<vmem>>, %arg15: memref<1x15x32xf32, #tpu.memory_space<vmem>>) attributes {dimension_semantics = [#tpu.dimension_semantics<parallel>, #tpu.dimension_semantics<arbitrary>], iteration_bounds = array<i64: 2, 2>, scalar_prefetch = 0 : i64, scratch_operands = 0 : i64, tpu.core_type = #tpu.core_type<tc>, window_params = [{transform_indices = @transform_0, window_bounds = array<i64: 1, 15, 32>}, {pipeline_mode = #tpu.pipeline_mode<synchronous>, transform_indices = @transform_1, window_bounds = array<i64: 15, 15>}, {transform_indices = @transform_2, window_bounds = array<i64: 1, 1, 32>}, {transform_indices = @transform_3, window_bounds = array<i64: 1, 1, 32>}, {transform_indices = @transform_4, window_bounds = array<i64: 1, 32, 96>}, {transform_indices = @transform_5, window_bounds = array<i64: 1, 32, 32>}, {transform_indices = @transform_6, window_bounds = array<i64: 1, 1, 32>}, {transform_indices = @transform_7, window_bounds = array<i64: 1, 1, 32>}, {transform_indices = @transform_8, window_bounds = array<i64: 1, 1, 32>}, {transform_indices = @transform_9, window_bounds = array<i64: 1, 32, 128>}, {transform_indices = @transform_10, window_bounds = array<i64: 1, 1, 128>}, {transform_indices = @transform_11, window_bounds = array<i64: 1, 128, 32>}, {transform_indices = @transform_12, window_bounds = array<i64: 1, 1, 32>}, {transform_indices = @transform_13, window_bounds = array<i64: 1, 15, 32>}]} {
    %c0_i32 = arith.constant 0 : i32
    %0 = arith.cmpi eq, %arg1, %c0_i32 : i32
    %1 = arith.extui %0 : i1 to i32
    %c0_i32_0 = arith.constant 0 : i32
    %2 = arith.cmpi ne, %1, %c0_i32_0 : i32
    scf.if %2 {
      %c0_63 = arith.constant 0 : index
      %c0_64 = arith.constant 0 : index
      %c0_65 = arith.constant 0 : index
      %132 = vector.load %arg2[%c0_63, %c0_64, %c0_65] : memref<1x15x32xf32, #tpu.memory_space<vmem>>, vector<1x15x32xf32>
      %c0_66 = arith.constant 0 : index
      %c0_67 = arith.constant 0 : index
      %c0_68 = arith.constant 0 : index
      %133 = vector.load %arg15[%c0_66, %c0_67, %c0_68] : memref<1x15x32xf32, #tpu.memory_space<vmem>>, vector<1x15x32xf32>
      tpu.vector_store %arg15[%c0_66, %c0_67, %c0_68], %132 {strides = array<i32>} : memref<1x15x32xf32, #tpu.memory_space<vmem>>, vector<1x15x32xf32>,
    } else {
    }
    %c0 = arith.constant 0 : index
    %c0_1 = arith.constant 0 : index
    %c0_2 = arith.constant 0 : index
    %3 = vector.load %arg15[%c0, %c0_1, %c0_2] : memref<1x15x32xf32, #tpu.memory_space<vmem>>, vector<1x15x32xf32>
    %4 = vector.shape_cast %3 : vector<1x15x32xf32> to vector<15x32xf32>
    %c0_3 = arith.constant 0 : index
    %c0_4 = arith.constant 0 : index
    %c0_5 = arith.constant 0 : index
    %5 = vector.load %arg4[%c0_3, %c0_4, %c0_5] : memref<1x1x32xf32, #tpu.memory_space<vmem>>, vector<1x1x32xf32>
    %6 = vector.shape_cast %5 : vector<1x1x32xf32> to vector<1x32xf32>
    %c0_6 = arith.constant 0 : index
    %c0_7 = arith.constant 0 : index
    %c0_8 = arith.constant 0 : index
    %7 = vector.load %arg5[%c0_6, %c0_7, %c0_8] : memref<1x1x32xf32, #tpu.memory_space<vmem>>, vector<1x1x32xf32>
    %8 = vector.shape_cast %7 : vector<1x1x32xf32> to vector<1x32xf32>
    %cst = arith.constant dense<0.000000e+00> : vector<15xf32>
    %9 = vector.multi_reduction <add>, %4, %cst [1] : vector<15x32xf32> to vector<15xf32>
    %10 = vector.shape_cast %9 : vector<15xf32> to vector<15x1xf32>
    %cst_9 = arith.constant 3.200000e+01 : f32
    %11 = vector.broadcast %cst_9 : f32 to vector<15x1xf32>
    %12 = arith.divf %10, %11 : vector<15x1xf32>
    %13 = vector.broadcast %12 : vector<15x1xf32> to vector<15x32xf32>
    %14 = arith.subf %4, %13 : vector<15x32xf32>
    %15 = arith.mulf %14, %14 : vector<15x32xf32>
    %cst_10 = arith.constant dense<0.000000e+00> : vector<15xf32>
    %16 = vector.multi_reduction <add>, %15, %cst_10 [1] : vector<15x32xf32> to vector<15xf32>
    %17 = vector.shape_cast %16 : vector<15xf32> to vector<15x1xf32>
    %cst_11 = arith.constant 3.200000e+01 : f32
    %18 = vector.broadcast %cst_11 : f32 to vector<15x1xf32>
    %19 = arith.divf %17, %18 : vector<15x1xf32>
    %cst_12 = arith.constant 9.99999974E-6 : f32
    %20 = vector.broadcast %cst_12 : f32 to vector<15x1xf32>
    %21 = arith.addf %19, %20 : vector<15x1xf32>
    %22 = math.rsqrt %21 : vector<15x1xf32>
    %23 = vector.broadcast %22 : vector<15x1xf32> to vector<15x32xf32>
    %24 = arith.mulf %14, %23 : vector<15x32xf32>
    %25 = vector.broadcast %6 : vector<1x32xf32> to vector<15x32xf32>
    %26 = arith.mulf %24, %25 : vector<15x32xf32>
    %27 = vector.broadcast %8 : vector<1x32xf32> to vector<15x32xf32>
    %28 = arith.addf %26, %27 : vector<15x32xf32>
    %29 = arith.truncf %28 : vector<15x32xf32> to vector<15x32xbf16>
    %c0_13 = arith.constant 0 : index
    %c0_14 = arith.constant 0 : index
    %c0_15 = arith.constant 0 : index
    %30 = vector.load %arg6[%c0_13, %c0_14, %c0_15] : memref<1x32x96xbf16, #tpu.memory_space<vmem>>, vector<1x32x96xbf16>
    %31 = vector.shape_cast %30 : vector<1x32x96xbf16> to vector<32x96xbf16>
    %cst_16 = arith.constant dense<0.000000e+00> : vector<15x96xf32>
    %32 = tpu.matmul %29, %31, %cst_16 {dimension_numbers = #tpu.dot_dimension_numbers<[1], [0], [0], [1], [0, 0, 1, 1], [], []>} : vector<15x32xbf16>, vector<32x96xbf16>, vector<15x96xf32> -> vector<15x96xf32>
    %33 = vector.shape_cast %32 : vector<15x96xf32> to vector<15x12x8xf32>
    %34 = vector.shape_cast %33 : vector<15x12x8xf32> to vector<1x15x12x8xf32>
    %35 = tpu.transpose %34, [0, 2, 1, 3] : vector<1x15x12x8xf32> -> vector<1x12x15x8xf32>
    %36 = vector.extract_strided_slice %35 {offsets = [0, 0, 0, 0], sizes = [1, 4, 15, 8], strides = [1, 1, 1, 1]} : vector<1x12x15x8xf32> to vector<1x4x15x8xf32>
    %cst_17 = arith.constant 0.353553385 : f32
    %37 = vector.broadcast %cst_17 : f32 to vector<1x4x15x8xf32>
    %38 = arith.mulf %36, %37 : vector<1x4x15x8xf32>
    %39 = arith.truncf %38 : vector<1x4x15x8xf32> to vector<1x4x15x8xbf16>
    %40 = vector.shape_cast %39 : vector<1x4x15x8xbf16> to vector<4x15x8xbf16>
    %41 = vector.extract_strided_slice %35 {offsets = [0, 4, 0, 0], sizes = [1, 4, 15, 8], strides = [1, 1, 1, 1]} : vector<1x12x15x8xf32> to vector<1x4x15x8xf32>
    %42 = arith.truncf %41 : vector<1x4x15x8xf32> to vector<1x4x15x8xbf16>
    %43 = vector.shape_cast %42 : vector<1x4x15x8xbf16> to vector<4x15x8xbf16>
    %44 = vector.extract_strided_slice %35 {offsets = [0, 8, 0, 0], sizes = [1, 4, 15, 8], strides = [1, 1, 1, 1]} : vector<1x12x15x8xf32> to vector<1x4x15x8xf32>
    %45 = arith.truncf %44 : vector<1x4x15x8xf32> to vector<1x4x15x8xbf16>
    %46 = vector.shape_cast %45 : vector<1x4x15x8xbf16> to vector<4x15x8xbf16>
    "tpu.trace_start"() <{level = 10 : i32, message = "bqd,bkd->bqk"}> : () -> ()
    %cst_18 = arith.constant dense<0.000000e+00> : vector<4x15x15xf32>
    %47 = tpu.matmul %40, %43, %cst_18 {dimension_numbers = #tpu.dot_dimension_numbers<[2], [2], [1], [1], [0, 0, 0, 1, 1, 1], [0], [0]>} : vector<4x15x8xbf16>, vector<4x15x8xbf16>, vector<4x15x15xf32> -> vector<4x15x15xf32>
    "tpu.trace_stop"() : () -> ()
    %c0_19 = arith.constant 0 : index
    %c0_20 = arith.constant 0 : index
    %48 = vector.load %arg3[%c0_19, %c0_20] : memref<15x15xf32, #tpu.memory_space<vmem>>, vector<15x15xf32>
    %49 = vector.shape_cast %48 : vector<15x15xf32> to vector<1x15x15xf32>
    %50 = vector.broadcast %49 : vector<1x15x15xf32> to vector<4x15x15xf32>
    %51 = arith.addf %47, %50 : vector<4x15x15xf32>
    %cst_21 = arith.constant dense<0xFF800000> : vector<4x15xf32>
    %52 = vector.multi_reduction <maximumf>, %51, %cst_21 [2] : vector<4x15x15xf32> to vector<4x15xf32>
    %53 = vector.shape_cast %52 : vector<4x15xf32> to vector<4x15x1xf32>
    %54 = vector.broadcast %53 : vector<4x15x1xf32> to vector<4x15x15xf32>
    %55 = arith.subf %51, %54 : vector<4x15x15xf32>
    %56 = math.exp %55 : vector<4x15x15xf32>
    %cst_22 = arith.constant dense<0.000000e+00> : vector<4x15xf32>
    %57 = vector.multi_reduction <add>, %56, %cst_22 [2] : vector<4x15x15xf32> to vector<4x15xf32>
    %58 = vector.shape_cast %57 : vector<4x15xf32> to vector<4x15x1xf32>
    %59 = tpu.reciprocal %58 {approx = true} : vector<4x15x1xf32> -> vector<4x15x1xf32>
    %60 = vector.broadcast %59 : vector<4x15x1xf32> to vector<4x15x15xf32>
    %61 = arith.mulf %56, %60 : vector<4x15x15xf32>
    %62 = arith.truncf %61 : vector<4x15x15xf32> to vector<4x15x15xbf16>
    "tpu.trace_start"() <{level = 10 : i32, message = "bqk,bkd->bqd"}> : () -> ()
    %cst_23 = arith.constant dense<0.000000e+00> : vector<4x15x8xf32>
    %63 = tpu.matmul %62, %46, %cst_23 {dimension_numbers = #tpu.dot_dimension_numbers<[2], [1], [1], [2], [0, 0, 0, 1, 1, 2], [0], [0]>} : vector<4x15x15xbf16>, vector<4x15x8xbf16>, vector<4x15x8xf32> -> vector<4x15x8xf32>
    "tpu.trace_stop"() : () -> ()
    %64 = vector.shape_cast %63 : vector<4x15x8xf32> to vector<1x4x15x8xf32>
    %65 = tpu.transpose %64, [0, 2, 1, 3] : vector<1x4x15x8xf32> -> vector<1x15x4x8xf32>
    %66 = vector.shape_cast %65 : vector<1x15x4x8xf32> to vector<15x32xf32>
    %67 = arith.truncf %66 : vector<15x32xf32> to vector<15x32xbf16>
    %c0_24 = arith.constant 0 : index
    %c0_25 = arith.constant 0 : index
    %c0_26 = arith.constant 0 : index
    %68 = vector.load %arg7[%c0_24, %c0_25, %c0_26] : memref<1x32x32xbf16, #tpu.memory_space<vmem>>, vector<1x32x32xbf16>
    %69 = vector.shape_cast %68 : vector<1x32x32xbf16> to vector<32x32xbf16>
    %cst_27 = arith.constant dense<0.000000e+00> : vector<15x32xf32>
    %70 = tpu.matmul %67, %69, %cst_27 {dimension_numbers = #tpu.dot_dimension_numbers<[1], [0], [0], [1], [0, 0, 1, 1], [], []>} : vector<15x32xbf16>, vector<32x32xbf16>, vector<15x32xf32> -> vector<15x32xf32>
    %c0_28 = arith.constant 0 : index
    %c0_29 = arith.constant 0 : index
    %c0_30 = arith.constant 0 : index
    %71 = vector.load %arg8[%c0_28, %c0_29, %c0_30] : memref<1x1x32xf32, #tpu.memory_space<vmem>>, vector<1x1x32xf32>
    %72 = vector.shape_cast %71 : vector<1x1x32xf32> to vector<1x32xf32>
    %73 = vector.broadcast %72 : vector<1x32xf32> to vector<15x32xf32>
    %74 = arith.addf %70, %73 : vector<15x32xf32>
    %75 = arith.addf %4, %74 : vector<15x32xf32>
    %c0_31 = arith.constant 0 : index
    %c0_32 = arith.constant 0 : index
    %c0_33 = arith.constant 0 : index
    %76 = vector.load %arg9[%c0_31, %c0_32, %c0_33] : memref<1x1x32xf32, #tpu.memory_space<vmem>>, vector<1x1x32xf32>
    %77 = vector.shape_cast %76 : vector<1x1x32xf32> to vector<1x32xf32>
    %c0_34 = arith.constant 0 : index
    %c0_35 = arith.constant 0 : index
    %c0_36 = arith.constant 0 : index
    %78 = vector.load %arg10[%c0_34, %c0_35, %c0_36] : memref<1x1x32xf32, #tpu.memory_space<vmem>>, vector<1x1x32xf32>
    %79 = vector.shape_cast %78 : vector<1x1x32xf32> to vector<1x32xf32>
    %cst_37 = arith.constant dense<0.000000e+00> : vector<15xf32>
    %80 = vector.multi_reduction <add>, %75, %cst_37 [1] : vector<15x32xf32> to vector<15xf32>
    %81 = vector.shape_cast %80 : vector<15xf32> to vector<15x1xf32>
    %cst_38 = arith.constant 3.200000e+01 : f32
    %82 = vector.broadcast %cst_38 : f32 to vector<15x1xf32>
    %83 = arith.divf %81, %82 : vector<15x1xf32>
    %84 = vector.broadcast %83 : vector<15x1xf32> to vector<15x32xf32>
    %85 = arith.subf %75, %84 : vector<15x32xf32>
    %86 = arith.mulf %85, %85 : vector<15x32xf32>
    %cst_39 = arith.constant dense<0.000000e+00> : vector<15xf32>
    %87 = vector.multi_reduction <add>, %86, %cst_39 [1] : vector<15x32xf32> to vector<15xf32>
    %88 = vector.shape_cast %87 : vector<15xf32> to vector<15x1xf32>
    %cst_40 = arith.constant 3.200000e+01 : f32
    %89 = vector.broadcast %cst_40 : f32 to vector<15x1xf32>
    %90 = arith.divf %88, %89 : vector<15x1xf32>
    %cst_41 = arith.constant 9.99999974E-6 : f32
    %91 = vector.broadcast %cst_41 : f32 to vector<15x1xf32>
    %92 = arith.addf %90, %91 : vector<15x1xf32>
    %93 = math.rsqrt %92 : vector<15x1xf32>
    %94 = vector.broadcast %93 : vector<15x1xf32> to vector<15x32xf32>
    %95 = arith.mulf %85, %94 : vector<15x32xf32>
    %96 = vector.broadcast %77 : vector<1x32xf32> to vector<15x32xf32>
    %97 = arith.mulf %95, %96 : vector<15x32xf32>
    %98 = vector.broadcast %79 : vector<1x32xf32> to vector<15x32xf32>
    %99 = arith.addf %97, %98 : vector<15x32xf32>
    %100 = arith.truncf %99 : vector<15x32xf32> to vector<15x32xbf16>
    %c0_42 = arith.constant 0 : index
    %c0_43 = arith.constant 0 : index
    %c0_44 = arith.constant 0 : index
    %101 = vector.load %arg11[%c0_42, %c0_43, %c0_44] : memref<1x32x128xbf16, #tpu.memory_space<vmem>>, vector<1x32x128xbf16>
    %102 = vector.shape_cast %101 : vector<1x32x128xbf16> to vector<32x128xbf16>
    %cst_45 = arith.constant dense<0.000000e+00> : vector<15x128xf32>
    %103 = tpu.matmul %100, %102, %cst_45 {dimension_numbers = #tpu.dot_dimension_numbers<[1], [0], [0], [1], [0, 0, 1, 1], [], []>} : vector<15x32xbf16>, vector<32x128xbf16>, vector<15x128xf32> -> vector<15x128xf32>
    %c0_46 = arith.constant 0 : index
    %c0_47 = arith.constant 0 : index
    %c0_48 = arith.constant 0 : index
    %104 = vector.load %arg12[%c0_46, %c0_47, %c0_48] : memref<1x1x128xf32, #tpu.memory_space<vmem>>, vector<1x1x128xf32>
    %105 = vector.shape_cast %104 : vector<1x1x128xf32> to vector<1x128xf32>
    %106 = vector.broadcast %105 : vector<1x128xf32> to vector<15x128xf32>
    %107 = arith.addf %103, %106 : vector<15x128xf32>
    %cst_49 = arith.constant 5.000000e-01 : f32
    %108 = vector.broadcast %cst_49 : f32 to vector<15x128xf32>
    %109 = arith.mulf %108, %107 : vector<15x128xf32>
    %cst_50 = arith.constant 4.471500e-02 : f32
    %110 = vector.broadcast %cst_50 : f32 to vector<15x128xf32>
    %111 = arith.mulf %110, %107 : vector<15x128xf32>
    %112 = arith.mulf %111, %107 : vector<15x128xf32>
    %113 = arith.mulf %112, %107 : vector<15x128xf32>
    %114 = arith.addf %107, %113 : vector<15x128xf32>
    %cst_51 = arith.constant 0.797884583 : f32
    %115 = vector.broadcast %cst_51 : f32 to vector<15x128xf32>
    %116 = arith.mulf %115, %114 : vector<15x128xf32>
    %117 = math.tanh %116 : vector<15x128xf32>
    %cst_52 = arith.constant 1.000000e+00 : f32
    %118 = vector.broadcast %cst_52 : f32 to vector<15x128xf32>
    %119 = arith.addf %118, %117 : vector<15x128xf32>
    %120 = arith.mulf %109, %119 : vector<15x128xf32>
    %121 = arith.truncf %120 : vector<15x128xf32> to vector<15x128xbf16>
    %c0_53 = arith.constant 0 : index
    %c0_54 = arith.constant 0 : index
    %c0_55 = arith.constant 0 : index
    %122 = vector.load %arg13[%c0_53, %c0_54, %c0_55] : memref<1x128x32xbf16, #tpu.memory_space<vmem>>, vector<1x128x32xbf16>
    %123 = vector.shape_cast %122 : vector<1x128x32xbf16> to vector<128x32xbf16>
    %cst_56 = arith.constant dense<0.000000e+00> : vector<15x32xf32>
    %124 = tpu.matmul %121, %123, %cst_56 {dimension_numbers = #tpu.dot_dimension_numbers<[1], [0], [0], [1], [0, 0, 1, 1], [], []>} : vector<15x128xbf16>, vector<128x32xbf16>, vector<15x32xf32> -> vector<15x32xf32>
    %c0_57 = arith.constant 0 : index
    %c0_58 = arith.constant 0 : index
    %c0_59 = arith.constant 0 : index
    %125 = vector.load %arg14[%c0_57, %c0_58, %c0_59] : memref<1x1x32xf32, #tpu.memory_space<vmem>>, vector<1x1x32xf32>
    %126 = vector.shape_cast %125 : vector<1x1x32xf32> to vector<1x32xf32>
    %127 = vector.broadcast %126 : vector<1x32xf32> to vector<15x32xf32>
    %128 = arith.addf %124, %127 : vector<15x32xf32>
    %129 = arith.addf %75, %128 : vector<15x32xf32>
    %130 = vector.shape_cast %129 : vector<15x32xf32> to vector<1x15x32xf32>
    %c0_60 = arith.constant 0 : index
    %c0_61 = arith.constant 0 : index
    %c0_62 = arith.constant 0 : index
    %131 = vector.load %arg15[%c0_60, %c0_61, %c0_62] : memref<1x15x32xf32, #tpu.memory_space<vmem>>, vector<1x15x32xf32>
    tpu.vector_store %arg15[%c0_60, %c0_61, %c0_62], %130 {strides = array<i32>} : memref<1x15x32xf32, #tpu.memory_space<vmem>>, vector<1x15x32xf32>,
    return
  }
  func.func @transform_0(%arg0: i32, %arg1: i32) -> (i32, i32, i32) {
    %c0_i32 = arith.constant 0 : i32
    %c0_i32_0 = arith.constant 0 : i32
    %c0_i32_1 = arith.constant 0 : i32
    return %arg0, %c0_i32, %c0_i32_0 : i32, i32, i32
  }
  func.func @transform_1(%arg0: i32, %arg1: i32) -> (i32, i32) {
    %c0_i32 = arith.constant 0 : i32
    %c0_i32_0 = arith.constant 0 : i32
    %c0_i32_1 = arith.constant 0 : i32
    return %c0_i32, %c0_i32_0 : i32, i32
  }
  func.func @transform_2(%arg0: i32, %arg1: i32) -> (i32, i32, i32) {
    %c0_i32 = arith.constant 0 : i32
    %c0_i32_0 = arith.constant 0 : i32
    %c0_i32_1 = arith.constant 0 : i32
    return %arg1, %c0_i32, %c0_i32_0 : i32, i32, i32
  }
  func.func @transform_3(%arg0: i32, %arg1: i32) -> (i32, i32, i32) {
    %c0_i32 = arith.constant 0 : i32
    %c0_i32_0 = arith.constant 0 : i32
    %c0_i32_1 = arith.constant 0 : i32
    return %arg1, %c0_i32, %c0_i32_0 : i32, i32, i32
  }
  func.func @transform_4(%arg0: i32, %arg1: i32) -> (i32, i32, i32) {
    %c0_i32 = arith.constant 0 : i32
    %c0_i32_0 = arith.constant 0 : i32
    %c0_i32_1 = arith.constant 0 : i32
    return %arg1, %c0_i32, %c0_i32_0 : i32, i32, i32
  }
  func.func @transform_5(%arg0: i32, %arg1: i32) -> (i32, i32, i32) {
    %c0_i32 = arith.constant 0 : i32
    %c0_i32_0 = arith.constant 0 : i32
    %c0_i32_1 = arith.constant 0 : i32
    return %arg1, %c0_i32, %c0_i32_0 : i32, i32, i32
  }
  func.func @transform_6(%arg0: i32, %arg1: i32) -> (i32, i32, i32) {
    %c0_i32 = arith.constant 0 : i32
    %c0_i32_0 = arith.constant 0 : i32
    %c0_i32_1 = arith.constant 0 : i32
    return %arg1, %c0_i32, %c0_i32_0 : i32, i32, i32
  }
  func.func @transform_7(%arg0: i32, %arg1: i32) -> (i32, i32, i32) {
    %c0_i32 = arith.constant 0 : i32
    %c0_i32_0 = arith.constant 0 : i32
    %c0_i32_1 = arith.constant 0 : i32
    return %arg1, %c0_i32, %c0_i32_0 : i32, i32, i32
  }
  func.func @transform_8(%arg0: i32, %arg1: i32) -> (i32, i32, i32) {
    %c0_i32 = arith.constant 0 : i32
    %c0_i32_0 = arith.constant 0 : i32
    %c0_i32_1 = arith.constant 0 : i32
    return %arg1, %c0_i32, %c0_i32_0 : i32, i32, i32
  }
  func.func @transform_9(%arg0: i32, %arg1: i32) -> (i32, i32, i32) {
    %c0_i32 = arith.constant 0 : i32
    %c0_i32_0 = arith.constant 0 : i32
    %c0_i32_1 = arith.constant 0 : i32
    return %arg1, %c0_i32, %c0_i32_0 : i32, i32, i32
  }
  func.func @transform_10(%arg0: i32, %arg1: i32) -> (i32, i32, i32) {
    %c0_i32 = arith.constant 0 : i32
    %c0_i32_0 = arith.constant 0 : i32
    %c0_i32_1 = arith.constant 0 : i32
    return %arg1, %c0_i32, %c0_i32_0 : i32, i32, i32
  }
  func.func @transform_11(%arg0: i32, %arg1: i32) -> (i32, i32, i32) {
    %c0_i32 = arith.constant 0 : i32
    %c0_i32_0 = arith.constant 0 : i32
    %c0_i32_1 = arith.constant 0 : i32
    return %arg1, %c0_i32, %c0_i32_0 : i32, i32, i32
  }
  func.func @transform_12(%arg0: i32, %arg1: i32) -> (i32, i32, i32) {
    %c0_i32 = arith.constant 0 : i32
    %c0_i32_0 = arith.constant 0 : i32
    %c0_i32_1 = arith.constant 0 : i32
    return %arg1, %c0_i32, %c0_i32_0 : i32, i32, i32
  }
  func.func @transform_13(%arg0: i32, %arg1: i32) -> (i32, i32, i32) {
    %c0_i32 = arith.constant 0 : i32
    %c0_i32_0 = arith.constant 0 : i32
    %c0_i32_1 = arith.constant 0 : i32
    return %arg0, %c0_i32, %c0_i32_0 : i32, i32, i32
  }
}

module attributes {stable_mosaic.version = 11 : i64} {
  func.func @_ln_linear_kernel(%arg0: i32, %arg1: memref<30x32xf32, #tpu.memory_space<vmem>>, %arg2: memref<1x32xf32, #tpu.memory_space<vmem>>, %arg3: memref<1x32xf32, #tpu.memory_space<vmem>>, %arg4: memref<32x64xbf16, #tpu.memory_space<vmem>>, %arg5: memref<1x64xf32, #tpu.memory_space<vmem>>, %arg6: memref<30x64xf32, #tpu.memory_space<vmem>>) attributes {dimension_semantics = [#tpu.dimension_semantics<parallel>], iteration_bounds = array<i64: 1>, scalar_prefetch = 0 : i64, scratch_operands = 0 : i64, tpu.core_type = #tpu.core_type<tc>, window_params = [{transform_indices = @transform_0, window_bounds = array<i64: 30, 32>}, {pipeline_mode = #tpu.pipeline_mode<synchronous>, transform_indices = @transform_1, window_bounds = array<i64: 1, 32>}, {pipeline_mode = #tpu.pipeline_mode<synchronous>, transform_indices = @transform_2, window_bounds = array<i64: 1, 32>}, {pipeline_mode = #tpu.pipeline_mode<synchronous>, transform_indices = @transform_3, window_bounds = array<i64: 32, 64>}, {pipeline_mode = #tpu.pipeline_mode<synchronous>, transform_indices = @transform_4, window_bounds = array<i64: 1, 64>}, {transform_indices = @transform_5, window_bounds = array<i64: 30, 64>}]} {
    %c0 = arith.constant 0 : index
    %c0_0 = arith.constant 0 : index
    %0 = vector.load %arg1[%c0, %c0_0] : memref<30x32xf32, #tpu.memory_space<vmem>>, vector<30x32xf32>
    %c0_1 = arith.constant 0 : index
    %c0_2 = arith.constant 0 : index
    %1 = vector.load %arg2[%c0_1, %c0_2] : memref<1x32xf32, #tpu.memory_space<vmem>>, vector<1x32xf32>
    %c0_3 = arith.constant 0 : index
    %c0_4 = arith.constant 0 : index
    %2 = vector.load %arg3[%c0_3, %c0_4] : memref<1x32xf32, #tpu.memory_space<vmem>>, vector<1x32xf32>
    %cst = arith.constant dense<0.000000e+00> : vector<30xf32>
    %3 = vector.multi_reduction <add>, %0, %cst [1] : vector<30x32xf32> to vector<30xf32>
    %4 = vector.shape_cast %3 : vector<30xf32> to vector<30x1xf32>
    %cst_5 = arith.constant 3.200000e+01 : f32
    %5 = vector.broadcast %cst_5 : f32 to vector<30x1xf32>
    %6 = arith.divf %4, %5 : vector<30x1xf32>
    %7 = vector.broadcast %6 : vector<30x1xf32> to vector<30x32xf32>
    %8 = arith.subf %0, %7 : vector<30x32xf32>
    %9 = arith.mulf %8, %8 : vector<30x32xf32>
    %cst_6 = arith.constant dense<0.000000e+00> : vector<30xf32>
    %10 = vector.multi_reduction <add>, %9, %cst_6 [1] : vector<30x32xf32> to vector<30xf32>
    %11 = vector.shape_cast %10 : vector<30xf32> to vector<30x1xf32>
    %cst_7 = arith.constant 3.200000e+01 : f32
    %12 = vector.broadcast %cst_7 : f32 to vector<30x1xf32>
    %13 = arith.divf %11, %12 : vector<30x1xf32>
    %cst_8 = arith.constant 9.99999974E-6 : f32
    %14 = vector.broadcast %cst_8 : f32 to vector<30x1xf32>
    %15 = arith.addf %13, %14 : vector<30x1xf32>
    %16 = math.rsqrt %15 : vector<30x1xf32>
    %17 = vector.broadcast %16 : vector<30x1xf32> to vector<30x32xf32>
    %18 = arith.mulf %8, %17 : vector<30x32xf32>
    %19 = vector.broadcast %1 : vector<1x32xf32> to vector<30x32xf32>
    %20 = arith.mulf %18, %19 : vector<30x32xf32>
    %21 = vector.broadcast %2 : vector<1x32xf32> to vector<30x32xf32>
    %22 = arith.addf %20, %21 : vector<30x32xf32>
    %23 = arith.truncf %22 : vector<30x32xf32> to vector<30x32xbf16>
    %c0_9 = arith.constant 0 : index
    %c0_10 = arith.constant 0 : index
    %24 = vector.load %arg4[%c0_9, %c0_10] : memref<32x64xbf16, #tpu.memory_space<vmem>>, vector<32x64xbf16>
    %cst_11 = arith.constant dense<0.000000e+00> : vector<30x64xf32>
    %25 = tpu.matmul %23, %24, %cst_11 {dimension_numbers = #tpu.dot_dimension_numbers<[1], [0], [0], [1], [0, 0, 1, 1], [], []>} : vector<30x32xbf16>, vector<32x64xbf16>, vector<30x64xf32> -> vector<30x64xf32>
    %c0_12 = arith.constant 0 : index
    %c0_13 = arith.constant 0 : index
    %26 = vector.load %arg5[%c0_12, %c0_13] : memref<1x64xf32, #tpu.memory_space<vmem>>, vector<1x64xf32>
    %27 = vector.broadcast %26 : vector<1x64xf32> to vector<30x64xf32>
    %28 = arith.addf %25, %27 : vector<30x64xf32>
    %c0_14 = arith.constant 0 : index
    %c0_15 = arith.constant 0 : index
    %29 = vector.load %arg6[%c0_14, %c0_15] : memref<30x64xf32, #tpu.memory_space<vmem>>, vector<30x64xf32>
    tpu.vector_store %arg6[%c0_14, %c0_15], %28 {strides = array<i32>} : memref<30x64xf32, #tpu.memory_space<vmem>>, vector<30x64xf32>,
    return
  }
  func.func @transform_0(%arg0: i32) -> (i32, i32) {
    %c0_i32 = arith.constant 0 : i32
    %c0_i32_0 = arith.constant 0 : i32
    return %arg0, %c0_i32 : i32, i32
  }
  func.func @transform_1(%arg0: i32) -> (i32, i32) {
    %c0_i32 = arith.constant 0 : i32
    %c0_i32_0 = arith.constant 0 : i32
    %c0_i32_1 = arith.constant 0 : i32
    return %c0_i32, %c0_i32_0 : i32, i32
  }
  func.func @transform_2(%arg0: i32) -> (i32, i32) {
    %c0_i32 = arith.constant 0 : i32
    %c0_i32_0 = arith.constant 0 : i32
    %c0_i32_1 = arith.constant 0 : i32
    return %c0_i32, %c0_i32_0 : i32, i32
  }
  func.func @transform_3(%arg0: i32) -> (i32, i32) {
    %c0_i32 = arith.constant 0 : i32
    %c0_i32_0 = arith.constant 0 : i32
    %c0_i32_1 = arith.constant 0 : i32
    return %c0_i32, %c0_i32_0 : i32, i32
  }
  func.func @transform_4(%arg0: i32) -> (i32, i32) {
    %c0_i32 = arith.constant 0 : i32
    %c0_i32_0 = arith.constant 0 : i32
    %c0_i32_1 = arith.constant 0 : i32
    return %c0_i32, %c0_i32_0 : i32, i32
  }
  func.func @transform_5(%arg0: i32) -> (i32, i32) {
    %c0_i32 = arith.constant 0 : i32
    %c0_i32_0 = arith.constant 0 : i32
    return %arg0, %c0_i32 : i32, i32
  }
}

</mosaic_0001>

<llo_original>
// kernel: model_forward.5
$region0: #{model_forward.5}
  #allocation0 [shape = 'u32[]', space=smem, size = 0x4, offset = 0x4, fixed_abs, tag = 'smem constant byte address 0x4 - core index']
  #allocation1 [shape = 'u32[144,128]{1,0:T(1,128)}', space=vmem, size = 0x12000, scoped, tag = 'internal scratch']
  %s0 = inlined_call_operand.vmem [shape: f32[24,768], index: 0, kind: input, shape index: {}]
  %s1 = inlined_call_operand.vmem [shape: bf16[768,64], index: 1, kind: input, shape index: {}]
  %s2 = inlined_call_operand.vmem [shape: f32[1,64], index: 2, kind: input, shape index: {}]
  %s3 = inlined_call_operand.vmem [shape: f32[24,64], index: 3, kind: output, shape index: {}]
  %s4 = sld [smem:[#allocation0]]
  $region22: #{model_forward.5} parent=0
    _
  %s6 = ssub.s32 1, %s4
  %s7 = scalar_select 0, %s6, %s4
  // Predicated region
  $region2: #{model_forward.5} parent=0 // pred_check
    _
  $region3: #{model_forward.5} parent=0 // pred_check_branch
    %9 = sbr.rel (0) target = $region5
  $region4: #{model_forward.5} parent=0 // pred_region
    _
  $region5: #{model_forward.5} parent=0 // pred_fallthru
    _
  // Predicated region
  $region6: #{model_forward.5} parent=0 // pred_check
    _
  $region7: #{model_forward.5} parent=0 // pred_check_branch
    %11 = sbr.rel (0) target = $region9
  $region8: #{model_forward.5} parent=0 // pred_region
    _
  $region9: #{model_forward.5} parent=0 // pred_fallthru
    _
  // Predicated region
  $region10: #{model_forward.5} parent=0 // pred_check
    _
  $region11: #{model_forward.5} parent=0 // pred_check_branch
    %13 = sbr.rel (0) target = $region13
  $region12: #{model_forward.5} parent=0 // pred_region
    _
  $region13: #{model_forward.5} parent=0 // pred_fallthru
    _
  %v15 = vld [vmem:[%s0] sm:$0xff]
  %v16 = vld [vmem:[%s0 + $0x8] sm:$0xff]
  %v17 = vld [vmem:[%s0 + $0x10] sm:$0xff]
  %v18 = vld [vmem:[%s0 + $0x18] sm:$0xff]
  %v19 = vld [vmem:[%s0 + $0x20] sm:$0xff]
  %v20 = vld [vmem:[%s0 + $0x28] sm:$0xff]
  %v21 = vld [vmem:[%s0 + $0x30] sm:$0xff]
  %v22 = vld [vmem:[%s0 + $0x38] sm:$0xff]
  %v23 = vld [vmem:[%s0 + $0x40] sm:$0xff]
  %v24 = vld [vmem:[%s0 + $0x48] sm:$0xff]
  %v25 = vld [vmem:[%s0 + $0x50] sm:$0xff]
  %v26 = vld [vmem:[%s0 + $0x58] sm:$0xff]
  %v27 = vld [vmem:[%s0 + $0x60] sm:$0xff]
  %v28 = vld [vmem:[%s0 + $0x68] sm:$0xff]
  %v29 = vld [vmem:[%s0 + $0x70] sm:$0xff]
  %v30 = vld [vmem:[%s0 + $0x78] sm:$0xff]
  %v31 = vld [vmem:[%s0 + $0x80] sm:$0xff]
  %v32 = vld [vmem:[%s0 + $0x88] sm:$0xff]
  %v33 = vpack.c.bf16 %v21, %v15
  %v34 = vpack.c.bf16 %v22, %v16
  %v35 = vpack.c.bf16 %v23, %v17
  %v36 = vpack.c.bf16 %v24, %v18
  %v37 = vpack.c.bf16 %v25, %v19
  %v38 = vpack.c.bf16 %v26, %v20
  %v39 = vpack.c.bf16 %v27, %v27
  %v40 = vpack.c.bf16 %v28, %v28
  %v41 = vpack.c.bf16 %v29, %v29
  %v42 = vpack.c.bf16 %v30, %v30
  %v43 = vpack.c.bf16 %v31, %v31
  %v44 = vpack.c.bf16 %v32, %v32
  %v45 = vld [vmem:[%s1] sm:$0xf]
  %v46 = vld [vmem:[%s1 + $0x4] sm:$0xf]
  %v47 = vld [vmem:[%s1 + $0x8] sm:$0xf]
  %v48 = vld [vmem:[%s1 + $0xc] sm:$0xf]
  %v49 = vld [vmem:[%s1 + $0x10] sm:$0xf]
  %v50 = vld [vmem:[%s1 + $0x14] sm:$0xf]
  %v51 = vld [vmem:[%s1 + $0x18] sm:$0xf]
  %v52 = vld [vmem:[%s1 + $0x1c] sm:$0xf]
  %v53 = vld [vmem:[%s1 + $0x20] sm:$0xf]
  %v54 = vld [vmem:[%s1 + $0x24] sm:$0xf]
  %v55 = vld [vmem:[%s1 + $0x28] sm:$0xf]
  %v56 = vld [vmem:[%s1 + $0x2c] sm:$0xf]
  %v57 = vld [vmem:[%s1 + $0x30] sm:$0xf]
  %v58 = vld [vmem:[%s1 + $0x34] sm:$0xf]
  %v59 = vld [vmem:[%s1 + $0x38] sm:$0xf]
  %v60 = vld [vmem:[%s1 + $0x3c] sm:$0xf]
  %v61 = vld [vmem:[%s1 + $0x40] sm:$0xf]
  %v62 = vld [vmem:[%s1 + $0x44] sm:$0xf]
  %v63 = vld [vmem:[%s1 + $0x48] sm:$0xf]
  %v64 = vld [vmem:[%s1 + $0x4c] sm:$0xf]
  %v65 = vld [vmem:[%s1 + $0x50] sm:$0xf]
  %v66 = vld [vmem:[%s1 + $0x54] sm:$0xf]
  %v67 = vld [vmem:[%s1 + $0x58] sm:$0xf]
  %v68 = vld [vmem:[%s1 + $0x5c] sm:$0xf]
  %v69 = vld [vmem:[%s1 + $0x60] sm:$0xf]
  %v70 = vld [vmem:[%s1 + $0x64] sm:$0xf]
  %v71 = vld [vmem:[%s1 + $0x68] sm:$0xf]
  %v72 = vld [vmem:[%s1 + $0x6c] sm:$0xf]
  %v73 = vld [vmem:[%s1 + $0x70] sm:$0xf]
  %v74 = vld [vmem:[%s1 + $0x74] sm:$0xf]
  %v75 = vld [vmem:[%s1 + $0x78] sm:$0xf]
  %v76 = vld [vmem:[%s1 + $0x7c] sm:$0xf]
  %v77 = vld [vmem:[%s1 + $0x80] sm:$0xf]
  %v78 = vld [vmem:[%s1 + $0x84] sm:$0xf]
  %v79 = vld [vmem:[%s1 + $0x88] sm:$0xf]
  %v80 = vld [vmem:[%s1 + $0x8c] sm:$0xf]
  %v81 = vld [vmem:[%s1 + $0x90] sm:$0xf]
  %v82 = vld [vmem:[%s1 + $0x94] sm:$0xf]
  %v83 = vld [vmem:[%s1 + $0x98] sm:$0xf]
  %v84 = vld [vmem:[%s1 + $0x9c] sm:$0xf]
  %v85 = vld [vmem:[%s1 + $0xa0] sm:$0xf]
  %v86 = vld [vmem:[%s1 + $0xa4] sm:$0xf]
  %v87 = vld [vmem:[%s1 + $0xa8] sm:$0xf]
  %v88 = vld [vmem:[%s1 + $0xac] sm:$0xf]
  %v89 = vld [vmem:[%s1 + $0xb0] sm:$0xf]
  %v90 = vld [vmem:[%s1 + $0xb4] sm:$0xf]
  %v91 = vld [vmem:[%s1 + $0xb8] sm:$0xf]
  %v92 = vld [vmem:[%s1 + $0xbc] sm:$0xf]
  %v93 = vld [vmem:[%s1 + $0xc0] sm:$0xf]
  %v94 = vld [vmem:[%s1 + $0xc4] sm:$0xf]
  %v95 = vld [vmem:[%s1 + $0xc8] sm:$0xf]
  %v96 = vld [vmem:[%s1 + $0xcc] sm:$0xf]
  %v97 = vld [vmem:[%s1 + $0xd0] sm:$0xf]
  %v98 = vld [vmem:[%s1 + $0xd4] sm:$0xf]
  %v99 = vld [vmem:[%s1 + $0xd8] sm:$0xf]
  %v100 = vld [vmem:[%s1 + $0xdc] sm:$0xf]
  %v101 = vld [vmem:[%s1 + $0xe0] sm:$0xf]
  %v102 = vld [vmem:[%s1 + $0xe4] sm:$0xf]
  %v103 = vld [vmem:[%s1 + $0xe8] sm:$0xf]
  %v104 = vld [vmem:[%s1 + $0xec] sm:$0xf]
  %v105 = vld [vmem:[%s1 + $0xf0] sm:$0xf]
  %v106 = vld [vmem:[%s1 + $0xf4] sm:$0xf]
  %v107 = vld [vmem:[%s1 + $0xf8] sm:$0xf]
  %v108 = vld [vmem:[%s1 + $0xfc] sm:$0xf]
  %v109 = vld [vmem:[%s1 + $0x100] sm:$0xf]
  %v110 = vld [vmem:[%s1 + $0x104] sm:$0xf]
  %v111 = vld [vmem:[%s1 + $0x108] sm:$0xf]
  %v112 = vld [vmem:[%s1 + $0x10c] sm:$0xf]
  %v113 = vld [vmem:[%s1 + $0x110] sm:$0xf]
  %v114 = vld [vmem:[%s1 + $0x114] sm:$0xf]
  %v115 = vld [vmem:[%s1 + $0x118] sm:$0xf]
  %v116 = vld [vmem:[%s1 + $0x11c] sm:$0xf]
  %v117 = vld [vmem:[%s1 + $0x120] sm:$0xf]
  %v118 = vld [vmem:[%s1 + $0x124] sm:$0xf]
  %v119 = vld [vmem:[%s1 + $0x128] sm:$0xf]
  %v120 = vld [vmem:[%s1 + $0x12c] sm:$0xf]
  %v121 = vld [vmem:[%s1 + $0x130] sm:$0xf]
  %v122 = vld [vmem:[%s1 + $0x134] sm:$0xf]
  %v123 = vld [vmem:[%s1 + $0x138] sm:$0xf]
  %v124 = vld [vmem:[%s1 + $0x13c] sm:$0xf]
  %v125 = vld [vmem:[%s1 + $0x140] sm:$0xf]
  %v126 = vld [vmem:[%s1 + $0x144] sm:$0xf]
  %v127 = vld [vmem:[%s1 + $0x148] sm:$0xf]
  %v128 = vld [vmem:[%s1 + $0x14c] sm:$0xf]
  %v129 = vld [vmem:[%s1 + $0x150] sm:$0xf]
  %v130 = vld [vmem:[%s1 + $0x154] sm:$0xf]
  %v131 = vld [vmem:[%s1 + $0x158] sm:$0xf]
  %v132 = vld [vmem:[%s1 + $0x15c] sm:$0xf]
  %v133 = vld [vmem:[%s1 + $0x160] sm:$0xf]
  %v134 = vld [vmem:[%s1 + $0x164] sm:$0xf]
  %v135 = vld [vmem:[%s1 + $0x168] sm:$0xf]
  %v136 = vld [vmem:[%s1 + $0x16c] sm:$0xf]
  %v137 = vld [vmem:[%s1 + $0x170] sm:$0xf]
  %v138 = vld [vmem:[%s1 + $0x174] sm:$0xf]
  %v139 = vld [vmem:[%s1 + $0x178] sm:$0xf]
  %v140 = vld [vmem:[%s1 + $0x17c] sm:$0xf]
  %v141 = vld [vmem:[%s2] sm:$0x1]
  %v143 = vlaneseq
  %v144 = vshrl.u32 %v143, 7
  %v145 = vsub.s32 0, %v144
  %v146 = vrot.slane %v141, %v145
  %v244 = vunpack.c.l.b16 %v45
  %v245 = vunpack.c.l.b16 %v46
  %v246 = vunpack.c.l.b16 %v47
  %v247 = vunpack.c.l.b16 %v48
  %v248 = vunpack.c.l.b16 %v49
  %v249 = vunpack.c.l.b16 %v50
  %v250 = vunpack.c.l.b16 %v51
  %v251 = vunpack.c.l.b16 %v52
  %v252 = vunpack.c.l.b16 %v53
  %v253 = vunpack.c.l.b16 %v54
  %v254 = vunpack.c.l.b16 %v55
  %v255 = vunpack.c.l.b16 %v56
  %v256 = vunpack.c.l.b16 %v57
  %v257 = vunpack.c.l.b16 %v58
  %v258 = vunpack.c.l.b16 %v59
  %v259 = vunpack.c.l.b16 %v60
  %v260 = vunpack.c.l.b16 %v61
  %v261 = vunpack.c.l.b16 %v62
  %v262 = vunpack.c.l.b16 %v63
  %v263 = vunpack.c.l.b16 %v64
  %v264 = vunpack.c.l.b16 %v65
  %v265 = vunpack.c.l.b16 %v66
  %v266 = vunpack.c.l.b16 %v67
  %v267 = vunpack.c.l.b16 %v68
  %v268 = vunpack.c.l.b16 %v69
  %v269 = vunpack.c.l.b16 %v70
  %v270 = vunpack.c.l.b16 %v71
  %v271 = vunpack.c.l.b16 %v72
  %v272 = vunpack.c.l.b16 %v73
  %v273 = vunpack.c.l.b16 %v74
  %v274 = vunpack.c.l.b16 %v75
  %v275 = vunpack.c.l.b16 %v76
  %v276 = vunpack.c.l.b16 %v77
  %v277 = vunpack.c.l.b16 %v78
  %v278 = vunpack.c.l.b16 %v79
  %v279 = vunpack.c.l.b16 %v80
  %v280 = vunpack.c.l.b16 %v81
  %v281 = vunpack.c.l.b16 %v82
  %v282 = vunpack.c.l.b16 %v83
  %v283 = vunpack.c.l.b16 %v84
  %v284 = vunpack.c.l.b16 %v85
  %v285 = vunpack.c.l.b16 %v86
  %v286 = vunpack.c.l.b16 %v87
  %v287 = vunpack.c.l.b16 %v88
  %v288 = vunpack.c.l.b16 %v89
  %v289 = vunpack.c.l.b16 %v90
  %v290 = vunpack.c.l.b16 %v91
  %v291 = vunpack.c.l.b16 %v92
  %v292 = vunpack.c.l.b16 %v93
  %v293 = vunpack.c.l.b16 %v94
  %v294 = vunpack.c.l.b16 %v95
  %v295 = vunpack.c.l.b16 %v96
  %v296 = vunpack.c.l.b16 %v97
  %v297 = vunpack.c.l.b16 %v98
  %v298 = vunpack.c.l.b16 %v99
  %v299 = vunpack.c.l.b16 %v100
  %v300 = vunpack.c.l.b16 %v101
  %v301 = vunpack.c.l.b16 %v102
  %v302 = vunpack.c.l.b16 %v103
  %v303 = vunpack.c.l.b16 %v104
  %v304 = vunpack.c.l.b16 %v105
  %v305 = vunpack.c.l.b16 %v106
  %v306 = vunpack.c.l.b16 %v107
  %v307 = vunpack.c.l.b16 %v108
  %v308 = vunpack.c.l.b16 %v109
  %v309 = vunpack.c.l.b16 %v110
  %v310 = vunpack.c.l.b16 %v111
  %v311 = vunpack.c.l.b16 %v112
  %v312 = vunpack.c.l.b16 %v113
  %v313 = vunpack.c.l.b16 %v114
  %v314 = vunpack.c.l.b16 %v115
  %v315 = vunpack.c.l.b16 %v116
  %v316 = vunpack.c.l.b16 %v117
  %v317 = vunpack.c.l.b16 %v118
  %v318 = vunpack.c.l.b16 %v119
  %v319 = vunpack.c.l.b16 %v120
  %v320 = vunpack.c.l.b16 %v121
  %v321 = vunpack.c.l.b16 %v122
  %v322 = vunpack.c.l.b16 %v123
  %v323 = vunpack.c.l.b16 %v124
  %v324 = vunpack.c.l.b16 %v125
  %v325 = vunpack.c.l.b16 %v126
  %v326 = vunpack.c.l.b16 %v127
  %v327 = vunpack.c.l.b16 %v128
  %v328 = vunpack.c.l.b16 %v129
  %v329 = vunpack.c.l.b16 %v130
  %v330 = vunpack.c.l.b16 %v131
  %v331 = vunpack.c.l.b16 %v132
  %v332 = vunpack.c.l.b16 %v133
  %v333 = vunpack.c.l.b16 %v134
  %v334 = vunpack.c.l.b16 %v135
  %v335 = vunpack.c.l.b16 %v136
  %v336 = vunpack.c.l.b16 %v137
  %v337 = vunpack.c.l.b16 %v138
  %v338 = vunpack.c.l.b16 %v139
  %v339 = vunpack.c.l.b16 %v140
  %v340 = vpack.c.b16 %v245, %v244
  %v341 = vpack.c.b16 %v247, %v246
  %v342 = vpack.c.b16 %v249, %v248
  %v343 = vpack.c.b16 %v251, %v250
  %v344 = vpack.c.b16 %v253, %v252
  %v345 = vpack.c.b16 %v255, %v254
  %v346 = vpack.c.b16 %v257, %v256
  %v347 = vpack.c.b16 %v259, %v258
  %v348 = vpack.c.b16 %v261, %v260
  %v349 = vpack.c.b16 %v263, %v262
  %v350 = vpack.c.b16 %v265, %v264
  %v351 = vpack.c.b16 %v267, %v266
  %v352 = vpack.c.b16 %v269, %v268
  %v353 = vpack.c.b16 %v271, %v270
  %v354 = vpack.c.b16 %v273, %v272
  %v355 = vpack.c.b16 %v275, %v274
  %v356 = vpack.c.b16 %v277, %v276
  %v357 = vpack.c.b16 %v279, %v278
  %v358 = vpack.c.b16 %v281, %v280
  %v359 = vpack.c.b16 %v283, %v282
  %v360 = vpack.c.b16 %v285, %v284
  %v361 = vpack.c.b16 %v287, %v286
  %v362 = vpack.c.b16 %v289, %v288
  %v363 = vpack.c.b16 %v291, %v290
  %v364 = vpack.c.b16 %v293, %v292
  %v365 = vpack.c.b16 %v295, %v294
  %v366 = vpack.c.b16 %v297, %v296
  %v367 = vpack.c.b16 %v299, %v298
  %v368 = vpack.c.b16 %v301, %v300
  %v369 = vpack.c.b16 %v303, %v302
  %v370 = vpack.c.b16 %v305, %v304
  %v371 = vpack.c.b16 %v307, %v306
  %v372 = vpack.c.b16 %v309, %v308
  %v373 = vpack.c.b16 %v311, %v310
  %v374 = vpack.c.b16 %v313, %v312
  %v375 = vpack.c.b16 %v315, %v314
  %v376 = vpack.c.b16 %v317, %v316
  %v377 = vpack.c.b16 %v319, %v318
  %v378 = vpack.c.b16 %v321, %v320
  %v379 = vpack.c.b16 %v323, %v322
  %v380 = vpack.c.b16 %v325, %v324
  %v381 = vpack.c.b16 %v327, %v326
  %v382 = vpack.c.b16 %v329, %v328
  %v383 = vpack.c.b16 %v331, %v330
  %v384 = vpack.c.b16 %v333, %v332
  %v385 = vpack.c.b16 %v335, %v334
  %v386 = vpack.c.b16 %v337, %v336
  %v387 = vpack.c.b16 %v339, %v338
  %436 = vmatprep.subr.bf16.mxu0 0
  %437 = vmatpush1.bf16.msra.mxu0 %v340
  %438 = vmatprep.subr.bf16.mxu0 0
  %439 = vmatpush1.bf16.msra.mxu0 %v341
  %440 = vmatprep.subr.bf16.mxu0 0
  %441 = vmatpush1.bf16.msra.mxu0 %v342
  %442 = vmatprep.subr.bf16.mxu0 0
  %443 = vmatpush1.bf16.msra.mxu0 %v343
  %444 = vmatprep.subr.bf16.mxu0 0
  %445 = vmatpush1.bf16.msra.mxu0 %v344
  %446 = vmatprep.subr.bf16.mxu0 0
  %447 = vmatpush1.bf16.msra.mxu0 %v345
  %448 = vmatprep.subr.bf16.mxu0 0
  %449 = vmatpush1.bf16.msra.mxu0 %v346
  %450 = vmatprep.subr.bf16.mxu0 0
  %451 = vmatpush1.bf16.msra.mxu0 %v347
  %452 = vmatprep.subr.bf16.mxu0 0
  %453 = vmatpush1.bf16.msra.mxu0 %v348
  %454 = vmatprep.subr.bf16.mxu0 0
  %455 = vmatpush1.bf16.msra.mxu0 %v349
  %456 = vmatprep.subr.bf16.mxu0 0
  %457 = vmatpush1.bf16.msra.mxu0 %v350
  %458 = vmatprep.subr.bf16.mxu0 0
  %459 = vmatpush1.bf16.msra.mxu0 %v351
  %460 = vmatprep.subr.bf16.mxu0 0
  %461 = vmatpush1.bf16.msra.mxu0 %v352
  %462 = vmatprep.subr.bf16.mxu0 0
  %463 = vmatpush1.bf16.msra.mxu0 %v353
  %464 = vmatprep.subr.bf16.mxu0 0
  %465 = vmatpush1.bf16.msra.mxu0 %v354
  %466 = vmatprep.subr.bf16.mxu0 0
  %467 = vmatpush1.bf16.msra.mxu0 %v355
  %468 = vmatprep.mubr.bf16.mxu0 %v34
  %469 = vmatmul.mubr.bf16.gmra.mrb[0].mxu0 %v33
  %v470 = vpop.f32.mrb[0].mxu0
  %v471 = vadd.f32 %v146, %v470
  %v472 = vpop.f32.mrb[0].mxu0
  %v473 = vpop.f32.mrb[0].mxu0
  %v474 = vadd.f32 %v146, %v473
  %v475 = vpop.f32.mrb[0].mxu0
  %476 = vmatprep.mubr.bf16.mxu0 %v40
  %477 = vmatmul.mubr.bf16.gmra.mrb[0].mxu0 %v39
  %v478 = vpop.f32.mrb[0].mxu0
  %v479 = vadd.f32 %v146, %v478
  %v480 = vpop.f32.mrb[0].mxu0
  %v481 = vpop.f32.mrb[0].mxu0
  %v482 = vpop.f32.mrb[0].mxu0
  %483 = vdwg.mxu0
  %484 = vmatprep.subr.bf16.mxu0 0
  %485 = vmatpush1.bf16.msra.mxu0 %v356
  %486 = vmatprep.subr.bf16.mxu0 0
  %487 = vmatpush1.bf16.msra.mxu0 %v357
  %488 = vmatprep.subr.bf16.mxu0 0
  %489 = vmatpush1.bf16.msra.mxu0 %v358
  %490 = vmatprep.subr.bf16.mxu0 0
  %491 = vmatpush1.bf16.msra.mxu0 %v359
  %492 = vmatprep.subr.bf16.mxu0 0
  %493 = vmatpush1.bf16.msra.mxu0 %v360
  %494 = vmatprep.subr.bf16.mxu0 0
  %495 = vmatpush1.bf16.msra.mxu0 %v361
  %496 = vmatprep.subr.bf16.mxu0 0
  %497 = vmatpush1.bf16.msra.mxu0 %v362
  %498 = vmatprep.subr.bf16.mxu0 0
  %499 = vmatpush1.bf16.msra.mxu0 %v363
  %500 = vmatprep.subr.bf16.mxu0 0
  %501 = vmatpush1.bf16.msra.mxu0 %v364
  %502 = vmatprep.subr.bf16.mxu0 0
  %503 = vmatpush1.bf16.msra.mxu0 %v365
  %504 = vmatprep.subr.bf16.mxu0 0
  %505 = vmatpush1.bf16.msra.mxu0 %v366
  %506 = vmatprep.subr.bf16.mxu0 0
  %507 = vmatpush1.bf16.msra.mxu0 %v367
  %508 = vmatprep.subr.bf16.mxu0 0
  %509 = vmatpush1.bf16.msra.mxu0 %v368
  %510 = vmatprep.subr.bf16.mxu0 0
  %511 = vmatpush1.bf16.msra.mxu0 %v369
  %512 = vmatprep.subr.bf16.mxu0 0
  %513 = vmatpush1.bf16.msra.mxu0 %v370
  %514 = vmatprep.subr.bf16.mxu0 0
  %515 = vmatpush1.bf16.msra.mxu0 %v371
  %516 = vmatprep.mubr.bf16.mxu0 %v36
  %517 = vmatmul.mubr.bf16.gmra.mrb[0].mxu0 %v35
  %v518 = vpop.f32.mrb[0].mxu0
  %v519 = vadd.f32 %v471, %v518
  %v520 = vpop.f32.mrb[0].mxu0
  %v521 = vpop.f32.mrb[0].mxu0
  %v522 = vadd.f32 %v474, %v521
  %v523 = vpop.f32.mrb[0].mxu0
  %524 = vmatprep.mubr.bf16.mxu0 %v42
  %525 = vmatmul.mubr.bf16.gmra.mrb[0].mxu0 %v41
  %v526 = vpop.f32.mrb[0].mxu0
  %v527 = vadd.f32 %v479, %v526
  %v528 = vpop.f32.mrb[0].mxu0
  %v529 = vpop.f32.mrb[0].mxu0
  %v530 = vpop.f32.mrb[0].mxu0
  %531 = vdwg.mxu0
  %532 = vmatprep.subr.bf16.mxu0 0
  %533 = vmatpush1.bf16.msra.mxu0 %v372
  %534 = vmatprep.subr.bf16.mxu0 0
  %535 = vmatpush1.bf16.msra.mxu0 %v373
  %536 = vmatprep.subr.bf16.mxu0 0
  %537 = vmatpush1.bf16.msra.mxu0 %v374
  %538 = vmatprep.subr.bf16.mxu0 0
  %539 = vmatpush1.bf16.msra.mxu0 %v375
  %540 = vmatprep.subr.bf16.mxu0 0
  %541 = vmatpush1.bf16.msra.mxu0 %v376
  %542 = vmatprep.subr.bf16.mxu0 0
  %543 = vmatpush1.bf16.msra.mxu0 %v377
  %544 = vmatprep.subr.bf16.mxu0 0
  %545 = vmatpush1.bf16.msra.mxu0 %v378
  %546 = vmatprep.subr.bf16.mxu0 0
  %547 = vmatpush1.bf16.msra.mxu0 %v379
  %548 = vmatprep.subr.bf16.mxu0 0
  %549 = vmatpush1.bf16.msra.mxu0 %v380
  %550 = vmatprep.subr.bf16.mxu0 0
  %551 = vmatpush1.bf16.msra.mxu0 %v381
  %552 = vmatprep.subr.bf16.mxu0 0
  %553 = vmatpush1.bf16.msra.mxu0 %v382
  %554 = vmatprep.subr.bf16.mxu0 0
  %555 = vmatpush1.bf16.msra.mxu0 %v383
  %556 = vmatprep.subr.bf16.mxu0 0
  %557 = vmatpush1.bf16.msra.mxu0 %v384
  %558 = vmatprep.subr.bf16.mxu0 0
  %559 = vmatpush1.bf16.msra.mxu0 %v385
  %560 = vmatprep.subr.bf16.mxu0 0
  %561 = vmatpush1.bf16.msra.mxu0 %v386
  %562 = vmatprep.subr.bf16.mxu0 0
  %563 = vmatpush1.bf16.msra.mxu0 %v387
  %564 = vmatprep.mubr.bf16.mxu0 %v38
  %565 = vmatmul.mubr.bf16.gmra.mrb[0].mxu0 %v37
  %v566 = vpop.f32.mrb[0].mxu0
  %v567 = vadd.f32 %v519, %v566
  %v568 = vpop.f32.mrb[0].mxu0
  %v569 = vpop.f32.mrb[0].mxu0
  %v570 = vadd.f32 %v522, %v569
  %v571 = vpop.f32.mrb[0].mxu0
  %572 = vmatprep.mubr.bf16.mxu0 %v44
  %573 = vmatmul.mubr.bf16.gmra.mrb[0].mxu0 %v43
  %v574 = vpop.f32.mrb[0].mxu0
  %v575 = vadd.f32 %v527, %v574
  %v576 = vpop.f32.mrb[0].mxu0
  %v577 = vpop.f32.mrb[0].mxu0
  %v578 = vpop.f32.mrb[0].mxu0
  %579 = vdwg.mxu0
  %vm580 = vcmask 523264
  %581 = vst.msk [vmem:[%s3] sm:$0xff] %vm580, %v567
  %582 = vst.msk [vmem:[%s3 + $0x8] sm:$0xff] %vm580, %v570
  %583 = vst.msk [vmem:[%s3 + $0x10] sm:$0xff] %vm580, %v575
  // Predicated region
  $region14: #{model_forward.5} parent=0 // pred_check
    _
  $region15: #{model_forward.5} parent=0 // pred_check_branch
    %585 = sbr.rel (0) target = $region17
  $region16: #{model_forward.5} parent=0 // pred_region
    _
  $region17: #{model_forward.5} parent=0 // pred_fallthru
    _
  // Predicated region
  $region18: #{model_forward.5} parent=0 // pred_check
    _
  $region19: #{model_forward.5} parent=0 // pred_check_branch
    %587 = sbr.rel (0) target = $region21
  $region20: #{model_forward.5} parent=0 // pred_region
    _
  $region21: #{model_forward.5} parent=0 // pred_fallthru
    _

// kernel: model_forward.7
$region0: #{model_forward.7}
  #allocation0 [shape = 'u32[]', space=smem, size = 0x4, offset = 0x4, fixed_abs, tag = 'smem constant byte address 0x4 - core index']
  #allocation1 [shape = 'u32[144,128]{1,0:T(1,128)}', space=vmem, size = 0x12000, scoped, tag = 'internal scratch']
  %s0 = inlined_call_operand.vmem [shape: f32[30,64], index: 0, kind: input, shape index: {}]
  %s1 = inlined_call_operand.vmem [shape: f32[1,64], index: 1, kind: input, shape index: {}]
  %s2 = inlined_call_operand.vmem [shape: f32[1,64], index: 2, kind: input, shape index: {}]
  %s3 = inlined_call_operand.vmem [shape: bf16[64,32], index: 3, kind: input, shape index: {}]
  %s4 = inlined_call_operand.vmem [shape: f32[30,32], index: 4, kind: output, shape index: {}]
  %s5 = sld [smem:[#allocation0]]
  $region26: #{model_forward.7} parent=0
    _
  %s7 = ssub.s32 1, %s5
  %s8 = scalar_select 0, %s7, %s5
  // Predicated region
  $region2: #{model_forward.7} parent=0 // pred_check
    _
  $region3: #{model_forward.7} parent=0 // pred_check_branch
    %10 = sbr.rel (0) target = $region5
  $region4: #{model_forward.7} parent=0 // pred_region
    _
  $region5: #{model_forward.7} parent=0 // pred_fallthru
    _
  // Predicated region
  $region6: #{model_forward.7} parent=0 // pred_check
    _
  $region7: #{model_forward.7} parent=0 // pred_check_branch
    %12 = sbr.rel (0) target = $region9
  $region8: #{model_forward.7} parent=0 // pred_region
    _
  $region9: #{model_forward.7} parent=0 // pred_fallthru
    _
  // Predicated region
  $region10: #{model_forward.7} parent=0 // pred_check
    _
  $region11: #{model_forward.7} parent=0 // pred_check_branch
    %14 = sbr.rel (0) target = $region13
  $region12: #{model_forward.7} parent=0 // pred_region
    _
  $region13: #{model_forward.7} parent=0 // pred_fallthru
    _
  // Predicated region
  $region14: #{model_forward.7} parent=0 // pred_check
    _
  $region15: #{model_forward.7} parent=0 // pred_check_branch
    %16 = sbr.rel (0) target = $region17
  $region16: #{model_forward.7} parent=0 // pred_region
    _
  $region17: #{model_forward.7} parent=0 // pred_fallthru
    _
  %v18 = vld [vmem:[%s0] sm:$0xff]
  %v19 = vld [vmem:[%s0 + $0x8] sm:$0xff]
  %v20 = vld [vmem:[%s0 + $0x10] sm:$0xff]
  %v21 = vld [vmem:[%s0 + $0x18] sm:$0x3f]
  %v22 = vld [vmem:[%s1] sm:$0x1]
  %v23 = vld [vmem:[%s2] sm:$0x1]
  %vm24 = vcmask 523264
  %v25 = vsel %vm24, %v18, 0.0
  %26 = vadd.xlane.f32.xlu0 %v25
  %v27 = vpop.xlane.xlu0 %26
  %v28 = vsel %vm24, %v19, 0.0
  %29 = vadd.xlane.f32.xlu0 %v28
  %v30 = vpop.xlane.xlu0 %29
  %v31 = vsel %vm24, %v20, 0.0
  %32 = vadd.xlane.f32.xlu0 %v31
  %v33 = vpop.xlane.xlu0 %32
  %vm34 = vcmask 521216
  %v35 = vsel %vm34, %v21, 0.0
  %36 = vadd.xlane.f32.xlu0 %v35
  %v37 = vpop.xlane.xlu0 %36
  %v38 = vrcp.pop 64.0
  %v39 = vmul.f32 %v27, %v38
  %v40 = vmul.f32 %v30, %v38
  %v41 = vmul.f32 %v33, %v38
  %v42 = vmul.f32 %v37, %v38
  %v43 = vsub.f32 %v18, %v39
  %v44 = vsub.f32 %v19, %v40
  %v45 = vsub.f32 %v20, %v41
  %v46 = vsub.f32 %v21, %v42
  %v47 = vmul.f32 %v43, %v43
  %v48 = vmul.f32 %v44, %v44
  %v49 = vmul.f32 %v45, %v45
  %v50 = vmul.f32 %v46, %v46
  %v51 = vsel %vm24, %v47, 0.0
  %52 = vadd.xlane.f32.xlu0 %v51
  %v53 = vpop.xlane.xlu0 %52
  %v54 = vsel %vm24, %v48, 0.0
  %55 = vadd.xlane.f32.xlu0 %v54
  %v56 = vpop.xlane.xlu0 %55
  %v57 = vsel %vm24, %v49, 0.0
  %58 = vadd.xlane.f32.xlu0 %v57
  %v59 = vpop.xlane.xlu0 %58
  %v60 = vsel %vm34, %v50, 0.0
  %61 = vadd.xlane.f32.xlu0 %v60
  %v62 = vpop.xlane.xlu0 %61
  %v63 = vmul.f32 %v53, %v38
  %v64 = vmul.f32 %v56, %v38
  %v65 = vmul.f32 %v59, %v38
  %v66 = vmul.f32 %v62, %v38
  %v67 = vadd.f32 %v63, 1e-05
  %v68 = vadd.f32 %v64, 1e-05
  %v69 = vadd.f32 %v65, 1e-05
  %v70 = vadd.f32 %v66, 1e-05
  %v71 = vrsqrt.pop %v67
  %v72 = vrsqrt.pop %v68
  %v73 = vrsqrt.pop %v69
  %v74 = vrsqrt.pop %v70
  %v75 = vmul.f32 %v43, %v71
  %v76 = vmul.f32 %v44, %v72
  %v77 = vmul.f32 %v45, %v73
  %v78 = vmul.f32 %v46, %v74
  %v80 = vlaneseq
  %v81 = vshrl.u32 %v80, 7
  %v82 = vsub.s32 0, %v81
  %v83 = vrot.slane %v22, %v82
  %v85 = vmul.f32 %v75, %v83
  %v86 = vmul.f32 %v76, %v83
  %v87 = vmul.f32 %v77, %v83
  %v88 = vmul.f32 %v78, %v83
  %v90 = vlaneseq
  %v91 = vshrl.u32 %v90, 7
  %v92 = vsub.s32 0, %v91
  %v93 = vrot.slane %v23, %v92
  %v95 = vadd.f32 %v85, %v93
  %v96 = vadd.f32 %v86, %v93
  %v97 = vadd.f32 %v87, %v93
  %v98 = vadd.f32 %v88, %v93
  %v99 = vpack.c.bf16 %v96, %v95
  %v100 = vpack.c.bf16 %v98, %v97
  %v101 = vld [vmem:[%s3] sm:$0xf]
  %v102 = vld [vmem:[%s3 + $0x4] sm:$0xf]
  %v103 = vld [vmem:[%s3 + $0x8] sm:$0xf]
  %v104 = vld [vmem:[%s3 + $0xc] sm:$0xf]
  %v105 = vld [vmem:[%s3 + $0x10] sm:$0xf]
  %v106 = vld [vmem:[%s3 + $0x14] sm:$0xf]
  %v107 = vld [vmem:[%s3 + $0x18] sm:$0xf]
  %v108 = vld [vmem:[%s3 + $0x1c] sm:$0xf]
  %v117 = vunpack.c.l.b16 %v101
  %v118 = vunpack.c.l.b16 %v102
  %v119 = vunpack.c.l.b16 %v103
  %v120 = vunpack.c.l.b16 %v104
  %v121 = vunpack.c.l.b16 %v105
  %v122 = vunpack.c.l.b16 %v106
  %v123 = vunpack.c.l.b16 %v107
  %v124 = vunpack.c.l.b16 %v108
  %v125 = vpack.c.b16 %v118, %v117
  %v126 = vpack.c.b16 %v120, %v119
  %v127 = vpack.c.b16 %v122, %v121
  %v128 = vpack.c.b16 %v124, %v123
  %v134 = vsel %vm24, %v99, 0
  %v137 = vsel %vm24, %v100, 0
  %139 = vmatprep.subr.bf16.mxu0 0
  %140 = vmatpush1.bf16.msra.mxu0 %v125
  %141 = vmatprep.subr.bf16.mxu0 0
  %142 = vmatpush1.bf16.msra.mxu0 %v126
  %143 = vmatprep.subr.bf16.mxu0 0
  %144 = vmatpush1.bf16.msra.mxu0 %v127
  %145 = vmatprep.subr.bf16.mxu0 0
  %146 = vmatpush1.bf16.msra.mxu0 %v128
  %147 = vmatprep.subr.bf16.mxu0 0
  %148 = vmatpush1.bf16.msra.mxu0 0
  %149 = vmatprep.subr.bf16.mxu0 0
  %150 = vmatpush1.bf16.msra.mxu0 0
  %151 = vmatprep.subr.bf16.mxu0 0
  %152 = vmatpush1.bf16.msra.mxu0 0
  %153 = vmatprep.subr.bf16.mxu0 0
  %154 = vmatpush1.bf16.msra.mxu0 0
  %155 = vmatprep.subr.bf16.mxu0 0
  %156 = vmatpush1.bf16.msra.mxu0 0
  %157 = vmatprep.subr.bf16.mxu0 0
  %158 = vmatpush1.bf16.msra.mxu0 0
  %159 = vmatprep.subr.bf16.mxu0 0
  %160 = vmatpush1.bf16.msra.mxu0 0
  %161 = vmatprep.subr.bf16.mxu0 0
  %162 = vmatpush1.bf16.msra.mxu0 0
  %163 = vmatprep.subr.bf16.mxu0 0
  %164 = vmatpush1.bf16.msra.mxu0 0
  %165 = vmatprep.subr.bf16.mxu0 0
  %166 = vmatpush1.bf16.msra.mxu0 0
  %167 = vmatprep.subr.bf16.mxu0 0
  %168 = vmatpush1.bf16.msra.mxu0 0
  %169 = vmatprep.subr.bf16.mxu0 0
  %170 = vmatpush1.bf16.msra.mxu0 0
  %171 = vmatprep.mubr.bf16.mxu0 0
  %172 = vmatmul.mubr.bf16.gmra.mrb[0].mxu0 %v134
  %v173 = vpop.f32.mrb[0].mxu0
  %v174 = vadd.f32 0.0, %v173
  %v175 = vpop.f32.mrb[0].mxu0
  %v176 = vpop.f32.mrb[0].mxu0
  %v177 = vadd.f32 0.0, %v176
  %v178 = vpop.f32.mrb[0].mxu0
  %179 = vmatprep.mubr.bf16.mxu0 0
  %180 = vmatmul.mubr.bf16.gmra.mrb[0].mxu0 %v137
  %v181 = vpop.f32.mrb[0].mxu0
  %v182 = vadd.f32 0.0, %v181
  %v183 = vpop.f32.mrb[0].mxu0
  %v184 = vpop.f32.mrb[0].mxu0
  %v185 = vadd.f32 0.0, %v184
  %v186 = vpop.f32.mrb[0].mxu0
  %187 = vdwg.mxu0
  %vm188 = vcmask 261120
  %189 = vst.msk [vmem:[%s4] sm:$0xff] %vm188, %v174
  %190 = vst.msk [vmem:[%s4 + $0x8] sm:$0xff] %vm188, %v177
  %191 = vst.msk [vmem:[%s4 + $0x10] sm:$0xff] %vm188, %v182
  %vm192 = vcmask 259072
  %193 = vst.msk [vmem:[%s4 + $0x18] sm:$0x3f] %vm192, %v185
  // Predicated region
  $region18: #{model_forward.7} parent=0 // pred_check
    _
  $region19: #{model_forward.7} parent=0 // pred_check_branch
    %195 = sbr.rel (0) target = $region21
  $region20: #{model_forward.7} parent=0 // pred_region
    _
  $region21: #{model_forward.7} parent=0 // pred_fallthru
    _
  // Predicated region
  $region22: #{model_forward.7} parent=0 // pred_check
    _
  $region23: #{model_forward.7} parent=0 // pred_check_branch
    %197 = sbr.rel (0) target = $region25
  $region24: #{model_forward.7} parent=0 // pred_region
    _
  $region25: #{model_forward.7} parent=0 // pred_fallthru
    _

// kernel: model_forward.9
$region0: #{model_forward.9}
  #allocation0 [shape = 'u32[]', space=smem, size = 0x4, offset = 0x4, fixed_abs, tag = 'smem constant byte address 0x4 - core index']
  #allocation1 [shape = 'u32[144,128]{1,0:T(1,128)}', space=vmem, size = 0x12000, scoped, tag = 'internal scratch']
  %s0 = inlined_call_operand.vmem [shape: f32[30,32], index: 0, kind: input, shape index: {}]
  %s1 = inlined_call_operand.vmem [shape: f32[1,32], index: 1, kind: input, shape index: {}]
  %s2 = inlined_call_operand.vmem [shape: f32[1,32], index: 2, kind: input, shape index: {}]
  %s3 = inlined_call_operand.vmem [shape: bf16[32,64], index: 3, kind: input, shape index: {}]
  %s4 = inlined_call_operand.vmem [shape: f32[1,64], index: 4, kind: input, shape index: {}]
  %s5 = inlined_call_operand.vmem [shape: f32[30,64], index: 5, kind: output, shape index: {}]
  %s6 = sld [smem:[#allocation0]]
  $region30: #{model_forward.9} parent=0
    _
  %s8 = ssub.s32 1, %s6
  %s9 = scalar_select 0, %s8, %s6
  // Predicated region
  $region2: #{model_forward.9} parent=0 // pred_check
    _
  $region3: #{model_forward.9} parent=0 // pred_check_branch
    %11 = sbr.rel (0) target = $region5
  $region4: #{model_forward.9} parent=0 // pred_region
    _
  $region5: #{model_forward.9} parent=0 // pred_fallthru
    _
  // Predicated region
  $region6: #{model_forward.9} parent=0 // pred_check
    _
  $region7: #{model_forward.9} parent=0 // pred_check_branch
    %13 = sbr.rel (0) target = $region9
  $region8: #{model_forward.9} parent=0 // pred_region
    _
  $region9: #{model_forward.9} parent=0 // pred_fallthru
    _
  // Predicated region
  $region10: #{model_forward.9} parent=0 // pred_check
    _
  $region11: #{model_forward.9} parent=0 // pred_check_branch
    %15 = sbr.rel (0) target = $region13
  $region12: #{model_forward.9} parent=0 // pred_region
    _
  $region13: #{model_forward.9} parent=0 // pred_fallthru
    _
  // Predicated region
  $region14: #{model_forward.9} parent=0 // pred_check
    _
  $region15: #{model_forward.9} parent=0 // pred_check_branch
    %17 = sbr.rel (0) target = $region17
  $region16: #{model_forward.9} parent=0 // pred_region
    _
  $region17: #{model_forward.9} parent=0 // pred_fallthru
    _
  // Predicated region
  $region18: #{model_forward.9} parent=0 // pred_check
    _
  $region19: #{model_forward.9} parent=0 // pred_check_branch
    %19 = sbr.rel (0) target = $region21
  $region20: #{model_forward.9} parent=0 // pred_region
    _
  $region21: #{model_forward.9} parent=0 // pred_fallthru
    _
  %v21 = vld [vmem:[%s0] sm:$0xff]
  %v22 = vld [vmem:[%s0 + $0x8] sm:$0xff]
  %v23 = vld [vmem:[%s0 + $0x10] sm:$0xff]
  %v24 = vld [vmem:[%s0 + $0x18] sm:$0x3f]
  %v25 = vld [vmem:[%s1] sm:$0x1]
  %v26 = vld [vmem:[%s2] sm:$0x1]
  %vm27 = vcmask 261120
  %v28 = vsel %vm27, %v21, 0.0
  %29 = vadd.xlane.f32.xlu0 %v28
  %v30 = vpop.xlane.xlu0 %29
  %v31 = vsel %vm27, %v22, 0.0
  %32 = vadd.xlane.f32.xlu0 %v31
  %v33 = vpop.xlane.xlu0 %32
  %v34 = vsel %vm27, %v23, 0.0
  %35 = vadd.xlane.f32.xlu0 %v34
  %v36 = vpop.xlane.xlu0 %35
  %vm37 = vcmask 259072
  %v38 = vsel %vm37, %v24, 0.0
  %39 = vadd.xlane.f32.xlu0 %v38
  %v40 = vpop.xlane.xlu0 %39
  %v41 = vrcp.pop 32.0
  %v42 = vmul.f32 %v30, %v41
  %v43 = vmul.f32 %v33, %v41
  %v44 = vmul.f32 %v36, %v41
  %v45 = vmul.f32 %v40, %v41
  %v46 = vsub.f32 %v21, %v42
  %v47 = vsub.f32 %v22, %v43
  %v48 = vsub.f32 %v23, %v44
  %v49 = vsub.f32 %v24, %v45
  %v50 = vmul.f32 %v46, %v46
  %v51 = vmul.f32 %v47, %v47
  %v52 = vmul.f32 %v48, %v48
  %v53 = vmul.f32 %v49, %v49
  %v54 = vsel %vm27, %v50, 0.0
  %55 = vadd.xlane.f32.xlu0 %v54
  %v56 = vpop.xlane.xlu0 %55
  %v57 = vsel %vm27, %v51, 0.0
  %58 = vadd.xlane.f32.xlu0 %v57
  %v59 = vpop.xlane.xlu0 %58
  %v60 = vsel %vm27, %v52, 0.0
  %61 = vadd.xlane.f32.xlu0 %v60
  %v62 = vpop.xlane.xlu0 %61
  %v63 = vsel %vm37, %v53, 0.0
  %64 = vadd.xlane.f32.xlu0 %v63
  %v65 = vpop.xlane.xlu0 %64
  %v66 = vmul.f32 %v56, %v41
  %v67 = vmul.f32 %v59, %v41
  %v68 = vmul.f32 %v62, %v41
  %v69 = vmul.f32 %v65, %v41
  %v70 = vadd.f32 %v66, 1e-05
  %v71 = vadd.f32 %v67, 1e-05
  %v72 = vadd.f32 %v68, 1e-05
  %v73 = vadd.f32 %v69, 1e-05
  %v74 = vrsqrt.pop %v70
  %v75 = vrsqrt.pop %v71
  %v76 = vrsqrt.pop %v72
  %v77 = vrsqrt.pop %v73
  %v78 = vmul.f32 %v46, %v74
  %v79 = vmul.f32 %v47, %v75
  %v80 = vmul.f32 %v48, %v76
  %v81 = vmul.f32 %v49, %v77
  %v83 = vlaneseq
  %v84 = vshrl.u32 %v83, 7
  %v85 = vsub.s32 0, %v84
  %v86 = vrot.slane %v25, %v85
  %v88 = vmul.f32 %v78, %v86
  %v89 = vmul.f32 %v79, %v86
  %v90 = vmul.f32 %v80, %v86
  %v91 = vmul.f32 %v81, %v86
  %v93 = vlaneseq
  %v94 = vshrl.u32 %v93, 7
  %v95 = vsub.s32 0, %v94
  %v96 = vrot.slane %v26, %v95
  %v98 = vadd.f32 %v88, %v96
  %v99 = vadd.f32 %v89, %v96
  %v100 = vadd.f32 %v90, %v96
  %v101 = vadd.f32 %v91, %v96
  %v102 = vpack.c.bf16 %v99, %v98
  %v103 = vpack.c.bf16 %v101, %v100
  %v104 = vld [vmem:[%s3] sm:$0xf]
  %v105 = vld [vmem:[%s3 + $0x4] sm:$0xf]
  %v106 = vld [vmem:[%s3 + $0x8] sm:$0xf]
  %v107 = vld [vmem:[%s3 + $0xc] sm:$0xf]
  %v108 = vld [vmem:[%s4] sm:$0x1]
  %v110 = vlaneseq
  %v111 = vshrl.u32 %v110, 7
  %v112 = vsub.s32 0, %v111
  %v113 = vrot.slane %v108, %v112
  %v119 = vunpack.c.l.b16 %v104
  %v120 = vunpack.c.l.b16 %v105
  %v121 = vunpack.c.l.b16 %v106
  %v122 = vunpack.c.l.b16 %v107
  %v123 = vpack.c.b16 %v120, %v119
  %v124 = vpack.c.b16 %v122, %v121
  %v128 = vsel %vm27, %v102, 0
  %v131 = vsel %vm27, %v103, 0
  %133 = vmatprep.subr.bf16.mxu0 0
  %134 = vmatpush1.bf16.msra.mxu0 %v123
  %135 = vmatprep.subr.bf16.mxu0 0
  %136 = vmatpush1.bf16.msra.mxu0 %v124
  %137 = vmatprep.subr.bf16.mxu0 0
  %138 = vmatpush1.bf16.msra.mxu0 0
  %139 = vmatprep.subr.bf16.mxu0 0
  %140 = vmatpush1.bf16.msra.mxu0 0
  %141 = vmatprep.subr.bf16.mxu0 0
  %142 = vmatpush1.bf16.msra.mxu0 0
  %143 = vmatprep.subr.bf16.mxu0 0
  %144 = vmatpush1.bf16.msra.mxu0 0
  %145 = vmatprep.subr.bf16.mxu0 0
  %146 = vmatpush1.bf16.msra.mxu0 0
  %147 = vmatprep.subr.bf16.mxu0 0
  %148 = vmatpush1.bf16.msra.mxu0 0
  %149 = vmatprep.subr.bf16.mxu0 0
  %150 = vmatpush1.bf16.msra.mxu0 0
  %151 = vmatprep.subr.bf16.mxu0 0
  %152 = vmatpush1.bf16.msra.mxu0 0
  %153 = vmatprep.subr.bf16.mxu0 0
  %154 = vmatpush1.bf16.msra.mxu0 0
  %155 = vmatprep.subr.bf16.mxu0 0
  %156 = vmatpush1.bf16.msra.mxu0 0
  %157 = vmatprep.subr.bf16.mxu0 0
  %158 = vmatpush1.bf16.msra.mxu0 0
  %159 = vmatprep.subr.bf16.mxu0 0
  %160 = vmatpush1.bf16.msra.mxu0 0
  %161 = vmatprep.subr.bf16.mxu0 0
  %162 = vmatpush1.bf16.msra.mxu0 0
  %163 = vmatprep.subr.bf16.mxu0 0
  %164 = vmatpush1.bf16.msra.mxu0 0
  %165 = vmatprep.mubr.bf16.mxu0 0
  %166 = vmatmul.mubr.bf16.gmra.mrb[0].mxu0 %v128
  %v167 = vpop.f32.mrb[0].mxu0
  %v168 = vadd.f32 %v113, %v167
  %v169 = vpop.f32.mrb[0].mxu0
  %v170 = vpop.f32.mrb[0].mxu0
  %v171 = vadd.f32 %v113, %v170
  %v172 = vpop.f32.mrb[0].mxu0
  %173 = vmatprep.mubr.bf16.mxu0 0
  %174 = vmatmul.mubr.bf16.gmra.mrb[0].mxu0 %v131
  %v175 = vpop.f32.mrb[0].mxu0
  %v176 = vadd.f32 %v113, %v175
  %v177 = vpop.f32.mrb[0].mxu0
  %v178 = vpop.f32.mrb[0].mxu0
  %v179 = vadd.f32 %v113, %v178
  %v180 = vpop.f32.mrb[0].mxu0
  %181 = vdwg.mxu0
  %vm182 = vcmask 523264
  %183 = vst.msk [vmem:[%s5] sm:$0xff] %vm182, %v168
  %184 = vst.msk [vmem:[%s5 + $0x8] sm:$0xff] %vm182, %v171
  %185 = vst.msk [vmem:[%s5 + $0x10] sm:$0xff] %vm182, %v176
  %vm186 = vcmask 521216
  %187 = vst.msk [vmem:[%s5 + $0x18] sm:$0x3f] %vm186, %v179
  // Predicated region
  $region22: #{model_forward.9} parent=0 // pred_check
    _
  $region23: #{model_forward.9} parent=0 // pred_check_branch
    %189 = sbr.rel (0) target = $region25
  $region24: #{model_forward.9} parent=0 // pred_region
    _
  $region25: #{model_forward.9} parent=0 // pred_fallthru
    _
  // Predicated region
  $region26: #{model_forward.9} parent=0 // pred_check
    _
  $region27: #{model_forward.9} parent=0 // pred_check_branch
    %191 = sbr.rel (0) target = $region29
  $region28: #{model_forward.9} parent=0 // pred_region
    _
  $region29: #{model_forward.9} parent=0 // pred_fallthru
    _

// kernel: model_forward.6
$region0: #{model_forward.6}
  #allocation0 [shape = 'u32[]', space=smem, size = 0x4, offset = 0x4, fixed_abs, tag = 'smem constant byte address 0x4 - core index']
  #allocation1 [shape = 'u32[144,128]{1,0:T(1,128)}', space=vmem, size = 0x12000, scoped, tag = 'internal scratch']
  %s0 = inlined_call_operand.vmem [shape: f32[6,5,64], index: 0, kind: input, shape index: {}]
  %s1 = inlined_call_operand.vmem [shape: f32[2,1,64], index: 1, kind: input, shape index: {}]
  %s2 = inlined_call_operand.vmem [shape: f32[2,1,64], index: 2, kind: input, shape index: {}]
  %s3 = inlined_call_operand.vmem [shape: bf16[2,64,192], index: 3, kind: input, shape index: {}]
  %s4 = inlined_call_operand.vmem [shape: f32[2,1,192], index: 4, kind: input, shape index: {}]
  %s5 = inlined_call_operand.vmem [shape: bf16[2,64,64], index: 5, kind: input, shape index: {}]
  %s6 = inlined_call_operand.vmem [shape: f32[2,1,64], index: 6, kind: input, shape index: {}]
  %s7 = inlined_call_operand.vmem [shape: f32[2,1,64], index: 7, kind: input, shape index: {}]
  %s8 = inlined_call_operand.vmem [shape: f32[2,1,64], index: 8, kind: input, shape index: {}]
  %s9 = inlined_call_operand.vmem [shape: bf16[2,64,256], index: 9, kind: input, shape index: {}]
  %s10 = inlined_call_operand.vmem [shape: f32[2,1,256], index: 10, kind: input, shape index: {}]
  %s11 = inlined_call_operand.vmem [shape: bf16[2,256,64], index: 11, kind: input, shape index: {}]
  %s12 = inlined_call_operand.vmem [shape: f32[2,1,64], index: 12, kind: input, shape index: {}]
  %s13 = inlined_call_operand.vmem [shape: f32[6,5,64], index: 13, kind: output, shape index: {}]
  %s14 = sld [smem:[#allocation0]]
  $region89: #{model_forward.6} parent=0
    _
  %s16 = ssub.s32 1, %s14
  %s17 = scalar_select 0, %s16, %s14
  loop: start=0, step=1, limit=6
  $region2: #{model_forward.6} parent=0 // loop_pre_header
    _
  $region3: #{model_forward.6} parent=0 // loop_header
    %s19 = sphi 0, %s23
    %p20 = scmp.ge.s32.totalorder %s19, 6
    %s26 = sphi 0, %s38
    %s27 = sphi 0, %s34
    %s28 = sphi 0, %s26
    %s29 = sphi 0, %s27
    %s30 = sphi 0, %s28
    %s31 = sphi 0, %s29
    %s41 = sphi 0, %s43
    %s44 = sphi 0, %s41
    %s45 = sphi 0, %s44
    %s61 = sphi 0, %s45
    %s67 = sphi 0, %s69
    %s70 = sphi 0, %s67
    %s71 = sphi 0, %s70
    %s87 = sphi 0, %s71
    %s93 = sphi 0, %s95
    %s96 = sphi 0, %s93
    %s97 = sphi 0, %s96
    %s113 = sphi 0, %s97
    %s119 = sphi 0, %s121
    %s122 = sphi 0, %s119
    %s123 = sphi 0, %s122
    %s139 = sphi 0, %s123
    %s145 = sphi 0, %s147
    %s148 = sphi 0, %s145
    %s149 = sphi 0, %s148
    %s165 = sphi 0, %s149
    %s171 = sphi 0, %s173
    %s174 = sphi 0, %s171
    %s175 = sphi 0, %s174
    %s191 = sphi 0, %s175
    %s197 = sphi 0, %s199
    %s200 = sphi 0, %s197
    %s201 = sphi 0, %s200
    %s217 = sphi 0, %s201
    %s223 = sphi 0, %s225
    %s226 = sphi 0, %s223
    %s227 = sphi 0, %s226
    %s243 = sphi 0, %s227
    %s249 = sphi 0, %s251
    %s252 = sphi 0, %s249
    %s253 = sphi 0, %s252
    %s269 = sphi 0, %s253
    %s275 = sphi 0, %s277
    %s278 = sphi 0, %s275
    %s279 = sphi 0, %s278
    %s295 = sphi 0, %s279
    %s301 = sphi 0, %s303
    %s304 = sphi 0, %s301
    %s305 = sphi 0, %s304
    %s321 = sphi 0, %s305
    %s327 = sphi 0, %s329
    %s330 = sphi 0, %s327
    %s331 = sphi 0, %s330
    %s347 = sphi 0, %s331
    %s353 = sphi 0, %s355
    %s356 = sphi 0, %s353
    %s357 = sphi 0, %s356
    %s373 = sphi 0, %s357
    %s379 = sphi 0, %s381
    %s382 = sphi 0, %s379
    %s383 = sphi 0, %s382
    %s399 = sphi 0, %s383
  $region4: #{model_forward.6} parent=0 // loop_header_branch
    %22 = sbr.rel (%p20) target = $region8
  $region5: #{model_forward.6} parent=0 // loop_body
    %s24 = ssub.s32 %s19, 1
    %s25 = ssub.s32 %s19, 2
    %s32 = sadd.s32 1, %s27
    %p33 = scmp.ge.s32.totalorder %s32, 2
    %s34 = scalar_select %p33, 0, %s32
    %s35 = sadd.s32 1, %s26
    %s36 = scalar_select %p33, %s35, %s26
    %p37 = scmp.ge.s32.totalorder %s36, 2
    %s38 = scalar_select %p37, 0, %s36
    %s39 = ssub.s32 %s26, %s38
    %p40 = scmp.eq.s32.totalorder %s39, 0
    %s42 = sadd.s32 %s41, 1
    %s43 = scalar_select %p40, %s41, %s42
    %p46 = pneg %p40
    %p47 = scmp.eq.s32.totalorder %s19, 3
    %p48 = por %p46, %p47
    %p49 = scmp.ne.s32.totalorder %s41, %s44
    %p50 = scmp.eq.s32.totalorder %s19, 0
    %p51 = por %p49, %p50
    %p52 = scmp.ne.s32.totalorder %s41, %s44
    %p53 = scmp.eq.s32.totalorder %s24, 3
    %p54 = por %p52, %p53
    %p55 = scmp.ne.s32.totalorder %s44, %s45
    %p56 = scmp.eq.s32.totalorder %s24, 0
    %p57 = por %p55, %p56
    %p58 = scmp.ne.s32.totalorder %s44, %s45
    %p59 = scmp.eq.s32.totalorder %s25, 3
    %p60 = por %p58, %p59
    %p62 = scmp.ne.s32.totalorder %s45, %s61
    %p63 = scmp.eq.s32.totalorder %s25, 0
    %p64 = por %p62, %p63
    %s65 = ssub.s32 %s27, %s34
    %p66 = scmp.eq.s32.totalorder %s65, 0
    %s68 = sadd.s32 %s67, 1
    %s69 = scalar_select %p66, %s67, %s68
    %p72 = pneg %p66
    %p73 = scmp.eq.s32.totalorder %s19, 3
    %p74 = por %p72, %p73
    %p75 = scmp.ne.s32.totalorder %s67, %s70
    %p76 = scmp.eq.s32.totalorder %s19, 0
    %p77 = por %p75, %p76
    %p78 = scmp.ne.s32.totalorder %s67, %s70
    %p79 = scmp.eq.s32.totalorder %s24, 3
    %p80 = por %p78, %p79
    %p81 = scmp.ne.s32.totalorder %s70, %s71
    %p82 = scmp.eq.s32.totalorder %s24, 0
    %p83 = por %p81, %p82
    %p84 = scmp.ne.s32.totalorder %s70, %s71
    %p85 = scmp.eq.s32.totalorder %s25, 3
    %p86 = por %p84, %p85
    %p88 = scmp.ne.s32.totalorder %s71, %s87
    %p89 = scmp.eq.s32.totalorder %s25, 0
    %p90 = por %p88, %p89
    %s91 = ssub.s32 %s27, %s34
    %p92 = scmp.eq.s32.totalorder %s91, 0
    %s94 = sadd.s32 %s93, 1
    %s95 = scalar_select %p92, %s93, %s94
    %p98 = pneg %p92
    %p99 = scmp.eq.s32.totalorder %s19, 3
    %p100 = por %p98, %p99
    %p101 = scmp.ne.s32.totalorder %s93, %s96
    %p102 = scmp.eq.s32.totalorder %s19, 0
    %p103 = por %p101, %p102
    %p104 = scmp.ne.s32.totalorder %s93, %s96
    %p105 = scmp.eq.s32.totalorder %s24, 3
    %p106 = por %p104, %p105
    %p107 = scmp.ne.s32.totalorder %s96, %s97
    %p108 = scmp.eq.s32.totalorder %s24, 0
    %p109 = por %p107, %p108
    %p110 = scmp.ne.s32.totalorder %s96, %s97
    %p111 = scmp.eq.s32.totalorder %s25, 3
    %p112 = por %p110, %p111
    %p114 = scmp.ne.s32.totalorder %s97, %s113
    %p115 = scmp.eq.s32.totalorder %s25, 0
    %p116 = por %p114, %p115
    %s117 = ssub.s32 %s27, %s34
    %p118 = scmp.eq.s32.totalorder %s117, 0
    %s120 = sadd.s32 %s119, 1
    %s121 = scalar_select %p118, %s119, %s120
    %p124 = pneg %p118
    %p125 = scmp.eq.s32.totalorder %s19, 3
    %p126 = por %p124, %p125
    %p127 = scmp.ne.s32.totalorder %s119, %s122
    %p128 = scmp.eq.s32.totalorder %s19, 0
    %p129 = por %p127, %p128
    %p130 = scmp.ne.s32.totalorder %s119, %s122
    %p131 = scmp.eq.s32.totalorder %s24, 3
    %p132 = por %p130, %p131
    %p133 = scmp.ne.s32.totalorder %s122, %s123
    %p134 = scmp.eq.s32.totalorder %s24, 0
    %p135 = por %p133, %p134
    %p136 = scmp.ne.s32.totalorder %s122, %s123
    %p137 = scmp.eq.s32.totalorder %s25, 3
    %p138 = por %p136, %p137
    %p140 = scmp.ne.s32.totalorder %s123, %s139
    %p141 = scmp.eq.s32.totalorder %s25, 0
    %p142 = por %p140, %p141
    %s143 = ssub.s32 %s27, %s34
    %p144 = scmp.eq.s32.totalorder %s143, 0
    %s146 = sadd.s32 %s145, 1
    %s147 = scalar_select %p144, %s145, %s146
    %p150 = pneg %p144
    %p151 = scmp.eq.s32.totalorder %s19, 3
    %p152 = por %p150, %p151
    %p153 = scmp.ne.s32.totalorder %s145, %s148
    %p154 = scmp.eq.s32.totalorder %s19, 0
    %p155 = por %p153, %p154
    %p156 = scmp.ne.s32.totalorder %s145, %s148
    %p157 = scmp.eq.s32.totalorder %s24, 3
    %p158 = por %p156, %p157
    %p159 = scmp.ne.s32.totalorder %s148, %s149
    %p160 = scmp.eq.s32.totalorder %s24, 0
    %p161 = por %p159, %p160
    %p162 = scmp.ne.s32.totalorder %s148, %s149
    %p163 = scmp.eq.s32.totalorder %s25, 3
    %p164 = por %p162, %p163
    %p166 = scmp.ne.s32.totalorder %s149, %s165
    %p167 = scmp.eq.s32.totalorder %s25, 0
    %p168 = por %p166, %p167
    %s169 = ssub.s32 %s27, %s34
    %p170 = scmp.eq.s32.totalorder %s169, 0
    %s172 = sadd.s32 %s171, 1
    %s173 = scalar_select %p170, %s171, %s172
    %p176 = pneg %p170
    %p177 = scmp.eq.s32.totalorder %s19, 3
    %p178 = por %p176, %p177
    %p179 = scmp.ne.s32.totalorder %s171, %s174
    %p180 = scmp.eq.s32.totalorder %s19, 0
    %p181 = por %p179, %p180
    %p182 = scmp.ne.s32.totalorder %s171, %s174
    %p183 = scmp.eq.s32.totalorder %s24, 3
    %p184 = por %p182, %p183
    %p185 = scmp.ne.s32.totalorder %s174, %s175
    %p186 = scmp.eq.s32.totalorder %s24, 0
    %p187 = por %p185, %p186
    %p188 = scmp.ne.s32.totalorder %s174, %s175
    %p189 = scmp.eq.s32.totalorder %s25, 3
    %p190 = por %p188, %p189
    %p192 = scmp.ne.s32.totalorder %s175, %s191
    %p193 = scmp.eq.s32.totalorder %s25, 0
    %p194 = por %p192, %p193
    %s195 = ssub.s32 %s27, %s34
    %p196 = scmp.eq.s32.totalorder %s195, 0
    %s198 = sadd.s32 %s197, 1
    %s199 = scalar_select %p196, %s197, %s198
    %p202 = pneg %p196
    %p203 = scmp.eq.s32.totalorder %s19, 3
    %p204 = por %p202, %p203
    %p205 = scmp.ne.s32.totalorder %s197, %s200
    %p206 = scmp.eq.s32.totalorder %s19, 0
    %p207 = por %p205, %p206
    %p208 = scmp.ne.s32.totalorder %s197, %s200
    %p209 = scmp.eq.s32.totalorder %s24, 3
    %p210 = por %p208, %p209
    %p211 = scmp.ne.s32.totalorder %s200, %s201
    %p212 = scmp.eq.s32.totalorder %s24, 0
    %p213 = por %p211, %p212
    %p214 = scmp.ne.s32.totalorder %s200, %s201
    %p215 = scmp.eq.s32.totalorder %s25, 3
    %p216 = por %p214, %p215
    %p218 = scmp.ne.s32.totalorder %s201, %s217
    %p219 = scmp.eq.s32.totalorder %s25, 0
    %p220 = por %p218, %p219
    %s221 = ssub.s32 %s27, %s34
    %p222 = scmp.eq.s32.totalorder %s221, 0
    %s224 = sadd.s32 %s223, 1
    %s225 = scalar_select %p222, %s223, %s224
    %p228 = pneg %p222
    %p229 = scmp.eq.s32.totalorder %s19, 3
    %p230 = por %p228, %p229
    %p231 = scmp.ne.s32.totalorder %s223, %s226
    %p232 = scmp.eq.s32.totalorder %s19, 0
    %p233 = por %p231, %p232
    %p234 = scmp.ne.s32.totalorder %s223, %s226
    %p235 = scmp.eq.s32.totalorder %s24, 3
    %p236 = por %p234, %p235
    %p237 = scmp.ne.s32.totalorder %s226, %s227
    %p238 = scmp.eq.s32.totalorder %s24, 0
    %p239 = por %p237, %p238
    %p240 = scmp.ne.s32.totalorder %s226, %s227
    %p241 = scmp.eq.s32.totalorder %s25, 3
    %p242 = por %p240, %p241
    %p244 = scmp.ne.s32.totalorder %s227, %s243
    %p245 = scmp.eq.s32.totalorder %s25, 0
    %p246 = por %p244, %p245
    %s247 = ssub.s32 %s27, %s34
    %p248 = scmp.eq.s32.totalorder %s247, 0
    %s250 = sadd.s32 %s249, 1
    %s251 = scalar_select %p248, %s249, %s250
    %p254 = pneg %p248
    %p255 = scmp.eq.s32.totalorder %s19, 3
    %p256 = por %p254, %p255
    %p257 = scmp.ne.s32.totalorder %s249, %s252
    %p258 = scmp.eq.s32.totalorder %s19, 0
    %p259 = por %p257, %p258
    %p260 = scmp.ne.s32.totalorder %s249, %s252
    %p261 = scmp.eq.s32.totalorder %s24, 3
    %p262 = por %p260, %p261
    %p263 = scmp.ne.s32.totalorder %s252, %s253
    %p264 = scmp.eq.s32.totalorder %s24, 0
    %p265 = por %p263, %p264
    %p266 = scmp.ne.s32.totalorder %s252, %s253
    %p267 = scmp.eq.s32.totalorder %s25, 3
    %p268 = por %p266, %p267
    %p270 = scmp.ne.s32.totalorder %s253, %s269
    %p271 = scmp.eq.s32.totalorder %s25, 0
    %p272 = por %p270, %p271
    %s273 = ssub.s32 %s27, %s34
    %p274 = scmp.eq.s32.totalorder %s273, 0
    %s276 = sadd.s32 %s275, 1
    %s277 = scalar_select %p274, %s275, %s276
    %p280 = pneg %p274
    %p281 = scmp.eq.s32.totalorder %s19, 3
    %p282 = por %p280, %p281
    %p283 = scmp.ne.s32.totalorder %s275, %s278
    %p284 = scmp.eq.s32.totalorder %s19, 0
    %p285 = por %p283, %p284
    %p286 = scmp.ne.s32.totalorder %s275, %s278
    %p287 = scmp.eq.s32.totalorder %s24, 3
    %p288 = por %p286, %p287
    %p289 = scmp.ne.s32.totalorder %s278, %s279
    %p290 = scmp.eq.s32.totalorder %s24, 0
    %p291 = por %p289, %p290
    %p292 = scmp.ne.s32.totalorder %s278, %s279
    %p293 = scmp.eq.s32.totalorder %s25, 3
    %p294 = por %p292, %p293
    %p296 = scmp.ne.s32.totalorder %s279, %s295
    %p297 = scmp.eq.s32.totalorder %s25, 0
    %p298 = por %p296, %p297
    %s299 = ssub.s32 %s27, %s34
    %p300 = scmp.eq.s32.totalorder %s299, 0
    %s302 = sadd.s32 %s301, 1
    %s303 = scalar_select %p300, %s301, %s302
    %p306 = pneg %p300
    %p307 = scmp.eq.s32.totalorder %s19, 3
    %p308 = por %p306, %p307
    %p309 = scmp.ne.s32.totalorder %s301, %s304
    %p310 = scmp.eq.s32.totalorder %s19, 0
    %p311 = por %p309, %p310
    %p312 = scmp.ne.s32.totalorder %s301, %s304
    %p313 = scmp.eq.s32.totalorder %s24, 3
    %p314 = por %p312, %p313
    %p315 = scmp.ne.s32.totalorder %s304, %s305
    %p316 = scmp.eq.s32.totalorder %s24, 0
    %p317 = por %p315, %p316
    %p318 = scmp.ne.s32.totalorder %s304, %s305
    %p319 = scmp.eq.s32.totalorder %s25, 3
    %p320 = por %p318, %p319
    %p322 = scmp.ne.s32.totalorder %s305, %s321
    %p323 = scmp.eq.s32.totalorder %s25, 0
    %p324 = por %p322, %p323
    %s325 = ssub.s32 %s27, %s34
    %p326 = scmp.eq.s32.totalorder %s325, 0
    %s328 = sadd.s32 %s327, 1
    %s329 = scalar_select %p326, %s327, %s328
    %p332 = pneg %p326
    %p333 = scmp.eq.s32.totalorder %s19, 3
    %p334 = por %p332, %p333
    %p335 = scmp.ne.s32.totalorder %s327, %s330
    %p336 = scmp.eq.s32.totalorder %s19, 0
    %p337 = por %p335, %p336
    %p338 = scmp.ne.s32.totalorder %s327, %s330
    %p339 = scmp.eq.s32.totalorder %s24, 3
    %p340 = por %p338, %p339
    %p341 = scmp.ne.s32.totalorder %s330, %s331
    %p342 = scmp.eq.s32.totalorder %s24, 0
    %p343 = por %p341, %p342
    %p344 = scmp.ne.s32.totalorder %s330, %s331
    %p345 = scmp.eq.s32.totalorder %s25, 3
    %p346 = por %p344, %p345
    %p348 = scmp.ne.s32.totalorder %s331, %s347
    %p349 = scmp.eq.s32.totalorder %s25, 0
    %p350 = por %p348, %p349
    %s351 = ssub.s32 %s27, %s34
    %p352 = scmp.eq.s32.totalorder %s351, 0
    %s354 = sadd.s32 %s353, 1
    %s355 = scalar_select %p352, %s353, %s354
    %p358 = pneg %p352
    %p359 = scmp.eq.s32.totalorder %s19, 3
    %p360 = por %p358, %p359
    %p361 = scmp.ne.s32.totalorder %s353, %s356
    %p362 = scmp.eq.s32.totalorder %s19, 0
    %p363 = por %p361, %p362
    %p364 = scmp.ne.s32.totalorder %s353, %s356
    %p365 = scmp.eq.s32.totalorder %s24, 3
    %p366 = por %p364, %p365
    %p367 = scmp.ne.s32.totalorder %s356, %s357
    %p368 = scmp.eq.s32.totalorder %s24, 0
    %p369 = por %p367, %p368
    %p370 = scmp.ne.s32.totalorder %s356, %s357
    %p371 = scmp.eq.s32.totalorder %s25, 3
    %p372 = por %p370, %p371
    %p374 = scmp.ne.s32.totalorder %s357, %s373
    %p375 = scmp.eq.s32.totalorder %s25, 0
    %p376 = por %p374, %p375
    %s377 = ssub.s32 %s26, %s38
    %p378 = scmp.eq.s32.totalorder %s377, 0
    %s380 = sadd.s32 %s379, 1
    %s381 = scalar_select %p378, %s379, %s380
    %p384 = pneg %p378
    %p385 = scmp.eq.s32.totalorder %s19, 3
    %p386 = por %p384, %p385
    %p387 = scmp.ne.s32.totalorder %s379, %s382
    %p388 = scmp.eq.s32.totalorder %s19, 0
    %p389 = por %p387, %p388
    %p390 = scmp.ne.s32.totalorder %s379, %s382
    %p391 = scmp.eq.s32.totalorder %s24, 3
    %p392 = por %p390, %p391
    %p393 = scmp.ne.s32.totalorder %s382, %s383
    %p394 = scmp.eq.s32.totalorder %s24, 0
    %p395 = por %p393, %p394
    %p396 = scmp.ne.s32.totalorder %s382, %s383
    %p397 = scmp.eq.s32.totalorder %s25, 3
    %p398 = por %p396, %p397
    %p400 = scmp.ne.s32.totalorder %s383, %s399
    %p401 = scmp.eq.s32.totalorder %s25, 0
    %p402 = por %p400, %p401
    %p403 = scmp.le.s32.totalorder 1, %s19
    %p404 = scmp.lt.s32.totalorder %s19, 5
    %p405 = pnand %p403, %p404
    %p406 = pneg %p405
    // Predicated region
    $region9: #{model_forward.6} parent=5 // pred_check
      _
    $region10: #{model_forward.6} parent=5 // pred_check_branch
      %408 = sbr.rel (%p405) target = $region12
    $region11: #{model_forward.6} parent=5 // pred_region
      %s409 = ssub.s32 %s19, 1
    $region12: #{model_forward.6} parent=5 // pred_fallthru
      _
    %p410 = scmp.lt.s32.totalorder %s19, 4
    // Predicated region
    $region13: #{model_forward.6} parent=5 // pred_check
      %p411 = pneg %p410
    $region14: #{model_forward.6} parent=5 // pred_check_branch
      %413 = sbr.rel (%p411) target = $region16
    $region15: #{model_forward.6} parent=5 // pred_region
      // Predicated region
      $region17: #{model_forward.6} parent=15 // pred_check
        %p414 = pneg %p51
      $region18: #{model_forward.6} parent=15 // pred_check_branch
        %416 = sbr.rel (%p414) target = $region20
      $region19: #{model_forward.6} parent=15 // pred_region
        %s417 = smul.u32 3, %s26
        %p418 = scmp.lt.s32.totalorder %s417, 5
        %s419 = scalar_select %p418, %s417, 5
        %s420 = smul.addr %s419, 8
        %s421 = scalar_lea.vmem %s0, %s420
        %s422 = smul.u32 3, %s26
      $region20: #{model_forward.6} parent=15 // pred_fallthru
        _
      // Predicated region
      $region21: #{model_forward.6} parent=15 // pred_check
        %p423 = pneg %p77
      $region22: #{model_forward.6} parent=15 // pred_check_branch
        %425 = sbr.rel (%p423) target = $region24
      $region23: #{model_forward.6} parent=15 // pred_region
        %p426 = scmp.lt.s32.totalorder %s27, 1
        %s427 = scalar_select %p426, %s27, 1
        %s428 = scalar_lea.vmem %s1, %s427
      $region24: #{model_forward.6} parent=15 // pred_fallthru
        _
      // Predicated region
      $region25: #{model_forward.6} parent=15 // pred_check
        %p429 = pneg %p103
      $region26: #{model_forward.6} parent=15 // pred_check_branch
        %431 = sbr.rel (%p429) target = $region28
      $region27: #{model_forward.6} parent=15 // pred_region
        %p432 = scmp.lt.s32.totalorder %s27, 1
        %s433 = scalar_select %p432, %s27, 1
        %s434 = scalar_lea.vmem %s2, %s433
      $region28: #{model_forward.6} parent=15 // pred_fallthru
        _
      // Predicated region
      $region29: #{model_forward.6} parent=15 // pred_check
        %p435 = pneg %p129
      $region30: #{model_forward.6} parent=15 // pred_check_branch
        %437 = sbr.rel (%p435) target = $region32
      $region31: #{model_forward.6} parent=15 // pred_region
        %p438 = scmp.lt.s32.totalorder %s27, 1
        %s439 = scalar_select %p438, %s27, 1
        %s440 = smul.addr %s439, 16
        %s441 = smul.addr %s440, 4
        %s442 = scalar_lea.vmem %s3, %s441
      $region32: #{model_forward.6} parent=15 // pred_fallthru
        _
      // Predicated region
      $region33: #{model_forward.6} parent=15 // pred_check
        %p443 = pneg %p155
      $region34: #{model_forward.6} parent=15 // pred_check_branch
        %445 = sbr.rel (%p443) target = $region36
      $region35: #{model_forward.6} parent=15 // pred_region
        %p446 = scmp.lt.s32.totalorder %s27, 1
        %s447 = scalar_select %p446, %s27, 1
        %s448 = smul.addr %s447, 2
        %s449 = scalar_lea.vmem %s4, %s448
      $region36: #{model_forward.6} parent=15 // pred_fallthru
        _
      // Predicated region
      $region37: #{model_forward.6} parent=15 // pred_check
        %p450 = pneg %p181
      $region38: #{model_forward.6} parent=15 // pred_check_branch
        %452 = sbr.rel (%p450) target = $region40
      $region39: #{model_forward.6} parent=15 // pred_region
        %p453 = scmp.lt.s32.totalorder %s27, 1
        %s454 = scalar_select %p453, %s27, 1
        %s455 = smul.addr %s454, 8
        %s456 = smul.addr %s455, 4
        %s457 = scalar_lea.vmem %s5, %s456
      $region40: #{model_forward.6} parent=15 // pred_fallthru
        _
      // Predicated region
      $region41: #{model_forward.6} parent=15 // pred_check
        %p458 = pneg %p207
      $region42: #{model_forward.6} parent=15 // pred_check_branch
        %460 = sbr.rel (%p458) target = $region44
      $region43: #{model_forward.6} parent=15 // pred_region
        %p461 = scmp.lt.s32.totalorder %s27, 1
        %s462 = scalar_select %p461, %s27, 1
        %s463 = scalar_lea.vmem %s6, %s462
      $region44: #{model_forward.6} parent=15 // pred_fallthru
        _
      // Predicated region
      $region45: #{model_forward.6} parent=15 // pred_check
        %p464 = pneg %p233
      $region46: #{model_forward.6} parent=15 // pred_check_branch
        %466 = sbr.rel (%p464) target = $region48
      $region47: #{model_forward.6} parent=15 // pred_region
        %p467 = scmp.lt.s32.totalorder %s27, 1
        %s468 = scalar_select %p467, %s27, 1
        %s469 = scalar_lea.vmem %s7, %s468
      $region48: #{model_forward.6} parent=15 // pred_fallthru
        _
      // Predicated region
      $region49: #{model_forward.6} parent=15 // pred_check
        %p470 = pneg %p259
      $region50: #{model_forward.6} parent=15 // pred_check_branch
        %472 = sbr.rel (%p470) target = $region52
      $region51: #{model_forward.6} parent=15 // pred_region
        %p473 = scmp.lt.s32.totalorder %s27, 1
        %s474 = scalar_select %p473, %s27, 1
        %s475 = scalar_lea.vmem %s8, %s474
      $region52: #{model_forward.6} parent=15 // pred_fallthru
        _
      // Predicated region
      $region53: #{model_forward.6} parent=15 // pred_check
        %p476 = pneg %p285
      $region54: #{model_forward.6} parent=15 // pred_check_branch
        %478 = sbr.rel (%p476) target = $region56
      $region55: #{model_forward.6} parent=15 // pred_region
        %p479 = scmp.lt.s32.totalorder %s27, 1
        %s480 = scalar_select %p479, %s27, 1
        %s481 = smul.addr %s480, 16
        %s482 = smul.addr %s481, 4
        %s483 = scalar_lea.vmem %s9, %s482
      $region56: #{model_forward.6} parent=15 // pred_fallthru
        _
      // Predicated region
      $region57: #{model_forward.6} parent=15 // pred_check
        %p484 = pneg %p311
      $region58: #{model_forward.6} parent=15 // pred_check_branch
        %486 = sbr.rel (%p484) target = $region60
      $region59: #{model_forward.6} parent=15 // pred_region
        %p487 = scmp.lt.s32.totalorder %s27, 1
        %s488 = scalar_select %p487, %s27, 1
        %s489 = smul.addr %s488, 2
        %s490 = scalar_lea.vmem %s10, %s489
      $region60: #{model_forward.6} parent=15 // pred_fallthru
        _
      // Predicated region
      $region61: #{model_forward.6} parent=15 // pred_check
        %p491 = pneg %p337
      $region62: #{model_forward.6} parent=15 // pred_check_branch
        %493 = sbr.rel (%p491) target = $region64
      $region63: #{model_forward.6} parent=15 // pred_region
        %p494 = scmp.lt.s32.totalorder %s27, 1
        %s495 = scalar_select %p494, %s27, 1
        %s496 = smul.addr %s495, 32
        %s497 = smul.addr %s496, 4
        %s498 = scalar_lea.vmem %s11, %s497
      $region64: #{model_forward.6} parent=15 // pred_fallthru
        _
      // Predicated region
      $region65: #{model_forward.6} parent=15 // pred_check
        %p499 = pneg %p363
      $region66: #{model_forward.6} parent=15 // pred_check_branch
        %501 = sbr.rel (%p499) target = $region68
      $region67: #{model_forward.6} parent=15 // pred_region
        %p502 = scmp.lt.s32.totalorder %s27, 1
        %s503 = scalar_select %p502, %s27, 1
        %s504 = scalar_lea.vmem %s12, %s503
      $region68: #{model_forward.6} parent=15 // pred_fallthru
        _
    $region16: #{model_forward.6} parent=5 // pred_fallthru
      _
    %p505 = scmp.le.s32.totalorder 1, %s19
    %p506 = scmp.lt.s32.totalorder %s19, 5
    %p507 = pnand %p505, %p506
    %p508 = pneg %p507
    // Predicated region
    $region69: #{model_forward.6} parent=5 // pred_check
      _
    $region70: #{model_forward.6} parent=5 // pred_check_branch
      %510 = sbr.rel (%p507) target = $region72
    $region71: #{model_forward.6} parent=5 // pred_region
      %s511 = ssub.s32 %s19, 1
      %s512 = smul.u32 3, %s28
      %p513 = scmp.lt.s32.totalorder %s512, 5
      %s514 = scalar_select %p513, %s512, 5
      %s515 = smul.addr %s514, 8
      %s516 = scalar_lea.vmem %s0, %s515
      %p517 = pneg %p57
      %p518 = pneg %p54
      %p519 = scmp.lt.s32.totalorder %s29, 1
      %s520 = scalar_select %p519, %s29, 1
      %s521 = scalar_lea.vmem %s1, %s520
      %p522 = pneg %p83
      %p523 = pneg %p80
      %p524 = scmp.lt.s32.totalorder %s29, 1
      %s525 = scalar_select %p524, %s29, 1
      %s526 = scalar_lea.vmem %s2, %s525
      %p527 = pneg %p109
      %p528 = pneg %p106
      %p529 = scmp.lt.s32.totalorder %s29, 1
      %s530 = scalar_select %p529, %s29, 1
      %s531 = smul.addr %s530, 16
      %s532 = smul.addr %s531, 4
      %s533 = scalar_lea.vmem %s3, %s532
      %p534 = pneg %p135
      %p535 = pneg %p132
      %p536 = scmp.lt.s32.totalorder %s29, 1
      %s537 = scalar_select %p536, %s29, 1
      %s538 = smul.addr %s537, 2
      %s539 = scalar_lea.vmem %s4, %s538
      %p540 = pneg %p161
      %p541 = pneg %p158
      %p542 = scmp.lt.s32.totalorder %s29, 1
      %s543 = scalar_select %p542, %s29, 1
      %s544 = smul.addr %s543, 8
      %s545 = smul.addr %s544, 4
      %s546 = scalar_lea.vmem %s5, %s545
      %p547 = pneg %p187
      %p548 = pneg %p184
      %p549 = scmp.lt.s32.totalorder %s29, 1
      %s550 = scalar_select %p549, %s29, 1
      %s551 = scalar_lea.vmem %s6, %s550
      %p552 = pneg %p213
      %p553 = pneg %p210
      %p554 = scmp.lt.s32.totalorder %s29, 1
      %s555 = scalar_select %p554, %s29, 1
      %s556 = scalar_lea.vmem %s7, %s555
      %p557 = pneg %p239
      %p558 = pneg %p236
      %p559 = scmp.lt.s32.totalorder %s29, 1
      %s560 = scalar_select %p559, %s29, 1
      %s561 = scalar_lea.vmem %s8, %s560
      %p562 = pneg %p265
      %p563 = pneg %p262
      %p564 = scmp.lt.s32.totalorder %s29, 1
      %s565 = scalar_select %p564, %s29, 1
      %s566 = smul.addr %s565, 16
      %s567 = smul.addr %s566, 4
      %s568 = scalar_lea.vmem %s9, %s567
      %p569 = pneg %p291
      %p570 = pneg %p288
      %p571 = scmp.lt.s32.totalorder %s29, 1
      %s572 = scalar_select %p571, %s29, 1
      %s573 = smul.addr %s572, 2
      %s574 = scalar_lea.vmem %s10, %s573
      %p575 = pneg %p317
      %p576 = pneg %p314
      %p577 = scmp.lt.s32.totalorder %s29, 1
      %s578 = scalar_select %p577, %s29, 1
      %s579 = smul.addr %s578, 32
      %s580 = smul.addr %s579, 4
      %s581 = scalar_lea.vmem %s11, %s580
      %p582 = pneg %p343
      %p583 = pneg %p340
      %p584 = scmp.lt.s32.totalorder %s29, 1
      %s585 = scalar_select %p584, %s29, 1
      %s586 = scalar_lea.vmem %s12, %s585
      %p587 = pneg %p369
      %p588 = pneg %p366
      %p589 = pneg %p395
      %p590 = pneg %p392
      %s591 = smul.u32 3, %s28
      %p592 = scmp.lt.s32.totalorder %s591, 5
      %s593 = scalar_select %p592, %s591, 5
      %s594 = smul.addr %s593, 8
      %s595 = scalar_lea.vmem %s13, %s594
      %s596 = smul.u32 3, %s28
      %p597 = scmp.lt.s32.totalorder %s596, 5
      %s598 = scalar_select %p597, %s596, 5
      %s599 = smul.addr %s598, 8
      %s600 = scalar_lea.vmem %s0, %s599
      %s601 = smul.u32 3, %s28
      %p602 = scmp.lt.s32.totalorder %s29, 1
      %s603 = scalar_select %p602, %s29, 1
      %s604 = scalar_lea.vmem %s1, %s603
      %p605 = scmp.lt.s32.totalorder %s29, 1
      %s606 = scalar_select %p605, %s29, 1
      %s607 = scalar_lea.vmem %s2, %s606
      %p608 = scmp.lt.s32.totalorder %s29, 1
      %s609 = scalar_select %p608, %s29, 1
      %s610 = smul.addr %s609, 16
      %s611 = smul.addr %s610, 4
      %s612 = scalar_lea.vmem %s3, %s611
      %p613 = scmp.lt.s32.totalorder %s29, 1
      %s614 = scalar_select %p613, %s29, 1
      %s615 = smul.addr %s614, 2
      %s616 = scalar_lea.vmem %s4, %s615
      %p617 = scmp.lt.s32.totalorder %s29, 1
      %s618 = scalar_select %p617, %s29, 1
      %s619 = smul.addr %s618, 8
      %s620 = smul.addr %s619, 4
      %s621 = scalar_lea.vmem %s5, %s620
      %p622 = scmp.lt.s32.totalorder %s29, 1
      %s623 = scalar_select %p622, %s29, 1
      %s624 = scalar_lea.vmem %s6, %s623
      %p625 = scmp.lt.s32.totalorder %s29, 1
      %s626 = scalar_select %p625, %s29, 1
      %s627 = scalar_lea.vmem %s7, %s626
      %p628 = scmp.lt.s32.totalorder %s29, 1
      %s629 = scalar_select %p628, %s29, 1
      %s630 = scalar_lea.vmem %s8, %s629
      %p631 = scmp.lt.s32.totalorder %s29, 1
      %s632 = scalar_select %p631, %s29, 1
      %s633 = smul.addr %s632, 16
      %s634 = smul.addr %s633, 4
      %s635 = scalar_lea.vmem %s9, %s634
      %p636 = scmp.lt.s32.totalorder %s29, 1
      %s637 = scalar_select %p636, %s29, 1
      %s638 = smul.addr %s637, 2
      %s639 = scalar_lea.vmem %s10, %s638
      %p640 = scmp.lt.s32.totalorder %s29, 1
      %s641 = scalar_select %p640, %s29, 1
      %s642 = smul.addr %s641, 32
      %s643 = smul.addr %s642, 4
      %s644 = scalar_lea.vmem %s11, %s643
      %p645 = scmp.lt.s32.totalorder %s29, 1
      %s646 = scalar_select %p645, %s29, 1
      %s647 = scalar_lea.vmem %s12, %s646
      %s648 = smul.u32 3, %s28
      %p649 = scmp.lt.s32.totalorder %s648, 5
      %s650 = scalar_select %p649, %s648, 5
      %s651 = smul.addr %s650, 8
      %s652 = scalar_lea.vmem %s13, %s651
      %s653 = smul.u32 3, %s28
      %p655 = scmp.eq.s32.totalorder %s29, 0
      // Predicated region
      $region73: #{model_forward.6} parent=71 // pred_check
        %p656 = pneg %p655
      $region74: #{model_forward.6} parent=71 // pred_check_branch
        %658 = sbr.rel (%p656) target = $region76
      $region75: #{model_forward.6} parent=71 // pred_region
        %v659 = vld [vmem:[%s600] sm:$0x1f]
        %v660 = vld [vmem:[%s600 + $0x8] sm:$0x1f]
        %v661 = vld [vmem:[%s600 + $0x10] sm:$0x1f]
        %vm662 = vcmask 520192
        %663 = vst.msk [vmem:[%s652] sm:$0x1f] %vm662, %v659
        %664 = vst.msk [vmem:[%s652 + $0x8] sm:$0x1f] %vm662, %v660
        %665 = vst.msk [vmem:[%s652 + $0x10] sm:$0x1f] %vm662, %v661
      $region76: #{model_forward.6} parent=71 // pred_fallthru
        _
      %v666 = vld [vmem:[%s652] sm:$0x1f]
      %v667 = vld [vmem:[%s652 + $0x8] sm:$0x1f]
      %v668 = vld [vmem:[%s652 + $0x10] sm:$0x1f]
      %v672 = vcombine.high %v666, %v666
      %v674 = vunpack.c.l.s4 1966171168
      %v675 = vunpack.c.0.s8 %v674
      %v676 = vlaneseq
      %v677 = vshrl.u32 %v676, 7
      %v678 = vsub.s32 %v675, %v677
      %v679 = vrot.slane %v666, %v678
      %v681 = vunpack.c.l.s4 1966171168
      %v682 = vunpack.c.0.s8 %v681
      %v683 = vlaneseq
      %v684 = vshrl.u32 %v683, 7
      %v685 = vsub.s32 %v682, %v684
      %v686 = vrot.slane %v672, %v685
      %v687 = vcombine.high %v679, %v679
      %v689 = vunpack.c.l.s4 1966171168
      %v690 = vunpack.c.0.s8 %v689
      %v691 = vlaneseq
      %v692 = vshrl.u32 %v691, 7
      %v693 = vsub.s32 %v690, %v692
      %v694 = vrot.slane %v679, %v693
      %v696 = vunpack.c.l.s4 1966171168
      %v697 = vunpack.c.0.s8 %v696
      %v698 = vlaneseq
      %v699 = vshrl.u32 %v698, 7
      %v700 = vsub.s32 %v697, %v699
      %v701 = vrot.slane %v686, %v700
      %v703 = vunpack.c.l.s4 1966171168
      %v704 = vunpack.c.0.s8 %v703
      %v705 = vlaneseq
      %v706 = vshrl.u32 %v705, 7
      %v707 = vsub.s32 %v704, %v706
      %v708 = vrot.slane %v687, %v707
      %v709 = vcombine.high %v694, %v694
      %v710 = vcombine.high %v708, %v708
      %v711 = vcombine.high %v667, %v667
      %v713 = vunpack.c.l.s4 1966171168
      %v714 = vunpack.c.0.s8 %v713
      %v715 = vlaneseq
      %v716 = vshrl.u32 %v715, 7
      %v717 = vsub.s32 %v714, %v716
      %v718 = vrot.slane %v667, %v717
      %v720 = vunpack.c.l.s4 1966171168
      %v721 = vunpack.c.0.s8 %v720
      %v722 = vlaneseq
      %v723 = vshrl.u32 %v722, 7
      %v724 = vsub.s32 %v721, %v723
      %v725 = vrot.slane %v711, %v724
      %v726 = vcombine.high %v718, %v718
      %v728 = vunpack.c.l.s4 1966171168
      %v729 = vunpack.c.0.s8 %v728
      %v730 = vlaneseq
      %v731 = vshrl.u32 %v730, 7
      %v732 = vsub.s32 %v729, %v731
      %v733 = vrot.slane %v718, %v732
      %v735 = vunpack.c.l.s4 1966171168
      %v736 = vunpack.c.0.s8 %v735
      %v737 = vlaneseq
      %v738 = vshrl.u32 %v737, 7
      %v739 = vsub.s32 %v736, %v738
      %v740 = vrot.slane %v725, %v739
      %v742 = vunpack.c.l.s4 1966171168
      %v743 = vunpack.c.0.s8 %v742
      %v744 = vlaneseq
      %v745 = vshrl.u32 %v744, 7
      %v746 = vsub.s32 %v743, %v745
      %v747 = vrot.slane %v726, %v746
      %v748 = vcombine.high %v733, %v733
      %v749 = vcombine.high %v747, %v747
      %v750 = vcombine.high %v668, %v668
      %v752 = vunpack.c.l.s4 1966171168
      %v753 = vunpack.c.0.s8 %v752
      %v754 = vlaneseq
      %v755 = vshrl.u32 %v754, 7
      %v756 = vsub.s32 %v753, %v755
      %v757 = vrot.slane %v668, %v756
      %v759 = vunpack.c.l.s4 1966171168
      %v760 = vunpack.c.0.s8 %v759
      %v761 = vlaneseq
      %v762 = vshrl.u32 %v761, 7
      %v763 = vsub.s32 %v760, %v762
      %v764 = vrot.slane %v750, %v763
      %v765 = vcombine.high %v757, %v757
      %v767 = vunpack.c.l.s4 1966171168
      %v768 = vunpack.c.0.s8 %v767
      %v769 = vlaneseq
      %v770 = vshrl.u32 %v769, 7
      %v771 = vsub.s32 %v768, %v770
      %v772 = vrot.slane %v757, %v771
      %v774 = vunpack.c.l.s4 1966171168
      %v775 = vunpack.c.0.s8 %v774
      %v776 = vlaneseq
      %v777 = vshrl.u32 %v776, 7
      %v778 = vsub.s32 %v775, %v777
      %v779 = vrot.slane %v764, %v778
      %v781 = vunpack.c.l.s4 1966171168
      %v782 = vunpack.c.0.s8 %v781
      %v783 = vlaneseq
      %v784 = vshrl.u32 %v783, 7
      %v785 = vsub.s32 %v782, %v784
      %v786 = vrot.slane %v765, %v785
      %v787 = vcombine.high %v772, %v772
      %v788 = vcombine.high %v786, %v786
      %v804 = vld [vmem:[%s604] sm:$0x1]
      %v805 = vld [vmem:[%s607] sm:$0x1]
      %v806 = vcombine.low %v694, %v708
      %v807 = vcombine.low %v709, %v710
      %v808 = vcombine.low %v701, %v733
      %v809 = vcombine.low %v747, %v748
      %v811 = vunpack.c.l.s4 1966171168
      %v812 = vunpack.c.0.s8 %v811
      %v813 = vlaneseq
      %v814 = vshrl.u32 %v813, 7
      %v815 = vsub.s32 %v812, %v814
      %v816 = vrot.slane %v806, %v815
      %v818 = vunpack.c.l.s4 1966171168
      %v819 = vunpack.c.0.s8 %v818
      %v820 = vlaneseq
      %v821 = vshrl.u32 %v820, 7
      %v822 = vsub.s32 %v819, %v821
      %v823 = vrot.slane %v807, %v822
      %v825 = vunpack.c.l.s4 1966171168
      %v826 = vunpack.c.0.s8 %v825
      %v827 = vlaneseq
      %v828 = vshrl.u32 %v827, 7
      %v829 = vsub.s32 %v826, %v828
      %v830 = vrot.slane %v808, %v829
      %v832 = vunpack.c.l.s4 1966171168
      %v833 = vunpack.c.0.s8 %v832
      %v834 = vlaneseq
      %v835 = vshrl.u32 %v834, 7
      %v836 = vsub.s32 %v833, %v835
      %v837 = vrot.slane %v809, %v836
      %v838 = vcombine.low %v816, %v823
      %v839 = vcombine.low %v830, %v837
      %v841 = vunpack.c.l.s4 1966171168
      %v842 = vunpack.c.0.s8 %v841
      %v843 = vlaneseq
      %v844 = vshrl.u32 %v843, 7
      %v845 = vsub.s32 %v842, %v844
      %v846 = vrot.slane %v838, %v845
      %v848 = vunpack.c.l.s4 1966171168
      %v849 = vunpack.c.0.s8 %v848
      %v850 = vlaneseq
      %v851 = vshrl.u32 %v850, 7
      %v852 = vsub.s32 %v849, %v851
      %v853 = vrot.slane %v839, %v852
      %v854 = vcombine.low %v846, %v853
      %v855 = vcombine.low %v749, %v740
      %v856 = vcombine.low %v772, %v786
      %v857 = vcombine.low %v787, %v788
      %v859 = vunpack.c.l.s4 1966171168
      %v860 = vunpack.c.0.s8 %v859
      %v861 = vlaneseq
      %v862 = vshrl.u32 %v861, 7
      %v863 = vsub.s32 %v860, %v862
      %v864 = vrot.slane %v855, %v863
      %v866 = vunpack.c.l.s4 1966171168
      %v867 = vunpack.c.0.s8 %v866
      %v868 = vlaneseq
      %v869 = vshrl.u32 %v868, 7
      %v870 = vsub.s32 %v867, %v869
      %v871 = vrot.slane %v856, %v870
      %v873 = vunpack.c.l.s4 1966171168
      %v874 = vunpack.c.0.s8 %v873
      %v875 = vlaneseq
      %v876 = vshrl.u32 %v875, 7
      %v877 = vsub.s32 %v874, %v876
      %v878 = vrot.slane %v857, %v877
      %v880 = vunpack.c.l.s4 1966171168
      %v881 = vunpack.c.0.s8 %v880
      %v882 = vlaneseq
      %v883 = vshrl.u32 %v882, 7
      %v884 = vsub.s32 %v881, %v883
      %v885 = vrot.slane %v779, %v884
      %v886 = vcombine.low %v864, %v871
      %v887 = vcombine.low %v878, %v885
      %v889 = vunpack.c.l.s4 1966171168
      %v890 = vunpack.c.0.s8 %v889
      %v891 = vlaneseq
      %v892 = vshrl.u32 %v891, 7
      %v893 = vsub.s32 %v890, %v892
      %v894 = vrot.slane %v886, %v893
      %v896 = vunpack.c.l.s4 1966171168
      %v897 = vunpack.c.0.s8 %v896
      %v898 = vlaneseq
      %v899 = vshrl.u32 %v898, 7
      %v900 = vsub.s32 %v897, %v899
      %v901 = vrot.slane %v887, %v900
      %v902 = vcombine.low %v894, %v901
      %vm905 = vcmask 523264
      %v906 = vsel %vm905, %v854, 0.0
      %907 = vadd.xlane.f32.xlu0 %v906
      %v908 = vpop.xlane.xlu0 %907
      %vm909 = vcmask 522240
      %v910 = vsel %vm909, %v902, 0.0
      %911 = vadd.xlane.f32.xlu0 %v910
      %v912 = vpop.xlane.xlu0 %911
      %v913 = vrcp.pop 64.0
      %v914 = vmul.f32 %v908, %v913
      %v915 = vmul.f32 %v912, %v913
      %v918 = vlaneseq
      %v919 = vshrl.u32 %v918, 7
      %v920 = vsub.s32 0, %v919
      %v921 = vrot.slane %v914, %v920
      %v922 = vlaneseq
      %v923 = vshrl.u32 %v922, 7
      %v924 = vsub.s32 1, %v923
      %v925 = vrot.slane %v914, %v924
      %v926 = vlaneseq
      %v927 = vshrl.u32 %v926, 7
      %v928 = vsub.s32 2, %v927
      %v929 = vrot.slane %v914, %v928
      %v930 = vlaneseq
      %v931 = vshrl.u32 %v930, 7
      %v932 = vsub.s32 3, %v931
      %v933 = vrot.slane %v914, %v932
      %v934 = vlaneseq
      %v935 = vshrl.u32 %v934, 7
      %v936 = vsub.s32 4, %v935
      %v937 = vrot.slane %v914, %v936
      %v938 = vlaneseq
      %v939 = vshrl.u32 %v938, 7
      %v940 = vsub.s32 5, %v939
      %v941 = vrot.slane %v914, %v940
      %v942 = vlaneseq
      %v943 = vshrl.u32 %v942, 7
      %v944 = vsub.s32 6, %v943
      %v945 = vrot.slane %v914, %v944
      %v946 = vlaneseq
      %v947 = vshrl.u32 %v946, 7
      %v948 = vsub.s32 7, %v947
      %v949 = vrot.slane %v914, %v948
      %v950 = vlaneseq
      %v951 = vshrl.u32 %v950, 7
      %v952 = vsub.s32 0, %v951
      %v953 = vrot.slane %v915, %v952
      %v954 = vlaneseq
      %v955 = vshrl.u32 %v954, 7
      %v956 = vsub.s32 1, %v955
      %v957 = vrot.slane %v915, %v956
      %v958 = vlaneseq
      %v959 = vshrl.u32 %v958, 7
      %v960 = vsub.s32 2, %v959
      %v961 = vrot.slane %v915, %v960
      %v962 = vlaneseq
      %v963 = vshrl.u32 %v962, 7
      %v964 = vsub.s32 3, %v963
      %v965 = vrot.slane %v915, %v964
      %v966 = vlaneseq
      %v967 = vshrl.u32 %v966, 7
      %v968 = vsub.s32 4, %v967
      %v969 = vrot.slane %v915, %v968
      %v970 = vlaneseq
      %v971 = vshrl.u32 %v970, 7
      %v972 = vsub.s32 5, %v971
      %v973 = vrot.slane %v915, %v972
      %v974 = vlaneseq
      %v975 = vshrl.u32 %v974, 7
      %v976 = vsub.s32 6, %v975
      %v977 = vrot.slane %v915, %v976
      %v993 = vsub.f32 %v694, %v921
      %v994 = vsub.f32 %v708, %v925
      %v995 = vsub.f32 %v709, %v929
      %v996 = vsub.f32 %v710, %v933
      %v997 = vsub.f32 %v701, %v937
      %v998 = vsub.f32 %v733, %v941
      %v999 = vsub.f32 %v747, %v945
      %v1000 = vsub.f32 %v748, %v949
      %v1001 = vsub.f32 %v749, %v953
      %v1002 = vsub.f32 %v740, %v957
      %v1003 = vsub.f32 %v772, %v961
      %v1004 = vsub.f32 %v786, %v965
      %v1005 = vsub.f32 %v787, %v969
      %v1006 = vsub.f32 %v788, %v973
      %v1007 = vsub.f32 %v779, %v977
      %v1008 = vmul.f32 %v993, %v993
      %v1009 = vmul.f32 %v994, %v994
      %v1010 = vmul.f32 %v995, %v995
      %v1011 = vmul.f32 %v996, %v996
      %v1012 = vmul.f32 %v997, %v997
      %v1013 = vmul.f32 %v998, %v998
      %v1014 = vmul.f32 %v999, %v999
      %v1015 = vmul.f32 %v1000, %v1000
      %v1016 = vmul.f32 %v1001, %v1001
      %v1017 = vmul.f32 %v1002, %v1002
      %v1018 = vmul.f32 %v1003, %v1003
      %v1019 = vmul.f32 %v1004, %v1004
      %v1020 = vmul.f32 %v1005, %v1005
      %v1021 = vmul.f32 %v1006, %v1006
      %v1022 = vmul.f32 %v1007, %v1007
      %v1038 = vcombine.low %v1008, %v1009
      %v1039 = vcombine.low %v1010, %v1011
      %v1040 = vcombine.low %v1012, %v1013
      %v1041 = vcombine.low %v1014, %v1015
      %v1043 = vunpack.c.l.s4 1966171168
      %v1044 = vunpack.c.0.s8 %v1043
      %v1045 = vlaneseq
      %v1046 = vshrl.u32 %v1045, 7
      %v1047 = vsub.s32 %v1044, %v1046
      %v1048 = vrot.slane %v1038, %v1047
      %v1050 = vunpack.c.l.s4 1966171168
      %v1051 = vunpack.c.0.s8 %v1050
      %v1052 = vlaneseq
      %v1053 = vshrl.u32 %v1052, 7
      %v1054 = vsub.s32 %v1051, %v1053
      %v1055 = vrot.slane %v1039, %v1054
      %v1057 = vunpack.c.l.s4 1966171168
      %v1058 = vunpack.c.0.s8 %v1057
      %v1059 = vlaneseq
      %v1060 = vshrl.u32 %v1059, 7
      %v1061 = vsub.s32 %v1058, %v1060
      %v1062 = vrot.slane %v1040, %v1061
      %v1064 = vunpack.c.l.s4 1966171168
      %v1065 = vunpack.c.0.s8 %v1064
      %v1066 = vlaneseq
      %v1067 = vshrl.u32 %v1066, 7
      %v1068 = vsub.s32 %v1065, %v1067
      %v1069 = vrot.slane %v1041, %v1068
      %v1070 = vcombine.low %v1048, %v1055
      %v1071 = vcombine.low %v1062, %v1069
      %v1073 = vunpack.c.l.s4 1966171168
      %v1074 = vunpack.c.0.s8 %v1073
      %v1075 = vlaneseq
      %v1076 = vshrl.u32 %v1075, 7
      %v1077 = vsub.s32 %v1074, %v1076
      %v1078 = vrot.slane %v1070, %v1077
      %v1080 = vunpack.c.l.s4 1966171168
      %v1081 = vunpack.c.0.s8 %v1080
      %v1082 = vlaneseq
      %v1083 = vshrl.u32 %v1082, 7
      %v1084 = vsub.s32 %v1081, %v1083
      %v1085 = vrot.slane %v1071, %v1084
      %v1086 = vcombine.low %v1078, %v1085
      %v1087 = vcombine.low %v1016, %v1017
      %v1088 = vcombine.low %v1018, %v1019
      %v1089 = vcombine.low %v1020, %v1021
      %v1091 = vunpack.c.l.s4 1966171168
      %v1092 = vunpack.c.0.s8 %v1091
      %v1093 = vlaneseq
      %v1094 = vshrl.u32 %v1093, 7
      %v1095 = vsub.s32 %v1092, %v1094
      %v1096 = vrot.slane %v1087, %v1095
      %v1098 = vunpack.c.l.s4 1966171168
      %v1099 = vunpack.c.0.s8 %v1098
      %v1100 = vlaneseq
      %v1101 = vshrl.u32 %v1100, 7
      %v1102 = vsub.s32 %v1099, %v1101
      %v1103 = vrot.slane %v1088, %v1102
      %v1105 = vunpack.c.l.s4 1966171168
      %v1106 = vunpack.c.0.s8 %v1105
      %v1107 = vlaneseq
      %v1108 = vshrl.u32 %v1107, 7
      %v1109 = vsub.s32 %v1106, %v1108
      %v1110 = vrot.slane %v1089, %v1109
      %v1112 = vunpack.c.l.s4 1966171168
      %v1113 = vunpack.c.0.s8 %v1112
      %v1114 = vlaneseq
      %v1115 = vshrl.u32 %v1114, 7
      %v1116 = vsub.s32 %v1113, %v1115
      %v1117 = vrot.slane %v1022, %v1116
      %v1118 = vcombine.low %v1096, %v1103
      %v1119 = vcombine.low %v1110, %v1117
      %v1121 = vunpack.c.l.s4 1966171168
      %v1122 = vunpack.c.0.s8 %v1121
      %v1123 = vlaneseq
      %v1124 = vshrl.u32 %v1123, 7
      %v1125 = vsub.s32 %v1122, %v1124
      %v1126 = vrot.slane %v1118, %v1125
      %v1128 = vunpack.c.l.s4 1966171168
      %v1129 = vunpack.c.0.s8 %v1128
      %v1130 = vlaneseq
      %v1131 = vshrl.u32 %v1130, 7
      %v1132 = vsub.s32 %v1129, %v1131
      %v1133 = vrot.slane %v1119, %v1132
      %v1134 = vcombine.low %v1126, %v1133
      %v1137 = vsel %vm905, %v1086, 0.0
      %1138 = vadd.xlane.f32.xlu0 %v1137
      %v1139 = vpop.xlane.xlu0 %1138
      %v1140 = vsel %vm909, %v1134, 0.0
      %1141 = vadd.xlane.f32.xlu0 %v1140
      %v1142 = vpop.xlane.xlu0 %1141
      %v1143 = vmul.f32 %v1139, %v913
      %v1144 = vmul.f32 %v1142, %v913
      %v1145 = vadd.f32 %v1143, 1e-05
      %v1146 = vadd.f32 %v1144, 1e-05
      %v1147 = vrsqrt.pop %v1145
      %v1148 = vrsqrt.pop %v1146
      %v1151 = vlaneseq
      %v1152 = vshrl.u32 %v1151, 7
      %v1153 = vsub.s32 0, %v1152
      %v1154 = vrot.slane %v1147, %v1153
      %v1155 = vlaneseq
      %v1156 = vshrl.u32 %v1155, 7
      %v1157 = vsub.s32 1, %v1156
      %v1158 = vrot.slane %v1147, %v1157
      %v1159 = vlaneseq
      %v1160 = vshrl.u32 %v1159, 7
      %v1161 = vsub.s32 2, %v1160
      %v1162 = vrot.slane %v1147, %v1161
      %v1163 = vlaneseq
      %v1164 = vshrl.u32 %v1163, 7
      %v1165 = vsub.s32 3, %v1164
      %v1166 = vrot.slane %v1147, %v1165
      %v1167 = vlaneseq
      %v1168 = vshrl.u32 %v1167, 7
      %v1169 = vsub.s32 4, %v1168
      %v1170 = vrot.slane %v1147, %v1169
      %v1171 = vlaneseq
      %v1172 = vshrl.u32 %v1171, 7
      %v1173 = vsub.s32 5, %v1172
      %v1174 = vrot.slane %v1147, %v1173
      %v1175 = vlaneseq
      %v1176 = vshrl.u32 %v1175, 7
      %v1177 = vsub.s32 6, %v1176
      %v1178 = vrot.slane %v1147, %v1177
      %v1179 = vlaneseq
      %v1180 = vshrl.u32 %v1179, 7
      %v1181 = vsub.s32 7, %v1180
      %v1182 = vrot.slane %v1147, %v1181
      %v1183 = vlaneseq
      %v1184 = vshrl.u32 %v1183, 7
      %v1185 = vsub.s32 0, %v1184
      %v1186 = vrot.slane %v1148, %v1185
      %v1187 = vlaneseq
      %v1188 = vshrl.u32 %v1187, 7
      %v1189 = vsub.s32 1, %v1188
      %v1190 = vrot.slane %v1148, %v1189
      %v1191 = vlaneseq
      %v1192 = vshrl.u32 %v1191, 7
      %v1193 = vsub.s32 2, %v1192
      %v1194 = vrot.slane %v1148, %v1193
      %v1195 = vlaneseq
      %v1196 = vshrl.u32 %v1195, 7
      %v1197 = vsub.s32 3, %v1196
      %v1198 = vrot.slane %v1148, %v1197
      %v1199 = vlaneseq
      %v1200 = vshrl.u32 %v1199, 7
      %v1201 = vsub.s32 4, %v1200
      %v1202 = vrot.slane %v1148, %v1201
      %v1203 = vlaneseq
      %v1204 = vshrl.u32 %v1203, 7
      %v1205 = vsub.s32 5, %v1204
      %v1206 = vrot.slane %v1148, %v1205
      %v1207 = vlaneseq
      %v1208 = vshrl.u32 %v1207, 7
      %v1209 = vsub.s32 6, %v1208
      %v1210 = vrot.slane %v1148, %v1209
      %v1226 = vmul.f32 %v993, %v1154
      %v1227 = vmul.f32 %v994, %v1158
      %v1228 = vmul.f32 %v995, %v1162
      %v1229 = vmul.f32 %v996, %v1166
      %v1230 = vmul.f32 %v997, %v1170
      %v1231 = vmul.f32 %v998, %v1174
      %v1232 = vmul.f32 %v999, %v1178
      %v1233 = vmul.f32 %v1000, %v1182
      %v1234 = vmul.f32 %v1001, %v1186
      %v1235 = vmul.f32 %v1002, %v1190
      %v1236 = vmul.f32 %v1003, %v1194
      %v1237 = vmul.f32 %v1004, %v1198
      %v1238 = vmul.f32 %v1005, %v1202
      %v1239 = vmul.f32 %v1006, %v1206
      %v1240 = vmul.f32 %v1007, %v1210
      %v1242 = vlaneseq
      %v1243 = vshrl.u32 %v1242, 7
      %v1244 = vsub.s32 0, %v1243
      %v1245 = vrot.slane %v804, %v1244
      %v1246 = vcombine.high %v1245, %v1245
      %v1248 = vunpack.c.l.s4 1966171168
      %v1249 = vunpack.c.0.s8 %v1248
      %v1250 = vlaneseq
      %v1251 = vshrl.u32 %v1250, 7
      %v1252 = vsub.s32 %v1249, %v1251
      %v1253 = vrot.slane %v1245, %v1252
      %v1255 = vunpack.c.l.s4 1966171168
      %v1256 = vunpack.c.0.s8 %v1255
      %v1257 = vlaneseq
      %v1258 = vshrl.u32 %v1257, 7
      %v1259 = vsub.s32 %v1256, %v1258
      %v1260 = vrot.slane %v1246, %v1259
      %v1261 = vcombine.high %v1253, %v1253
      %v1262 = vcombine.high %v1260, %v1260
      %v1264 = vunpack.c.l.s4 1966171168
      %v1265 = vunpack.c.0.s8 %v1264
      %v1266 = vlaneseq
      %v1267 = vshrl.u32 %v1266, 7
      %v1268 = vsub.s32 %v1265, %v1267
      %v1269 = vrot.slane %v1253, %v1268
      %v1271 = vunpack.c.l.s4 1966171168
      %v1272 = vunpack.c.0.s8 %v1271
      %v1273 = vlaneseq
      %v1274 = vshrl.u32 %v1273, 7
      %v1275 = vsub.s32 %v1272, %v1274
      %v1276 = vrot.slane %v1260, %v1275
      %v1278 = vunpack.c.l.s4 1966171168
      %v1279 = vunpack.c.0.s8 %v1278
      %v1280 = vlaneseq
      %v1281 = vshrl.u32 %v1280, 7
      %v1282 = vsub.s32 %v1279, %v1281
      %v1283 = vrot.slane %v1261, %v1282
      %v1285 = vunpack.c.l.s4 1966171168
      %v1286 = vunpack.c.0.s8 %v1285
      %v1287 = vlaneseq
      %v1288 = vshrl.u32 %v1287, 7
      %v1289 = vsub.s32 %v1286, %v1288
      %v1290 = vrot.slane %v1262, %v1289
      %v1291 = vcombine.high %v1269, %v1269
      %v1292 = vcombine.high %v1276, %v1276
      %v1293 = vcombine.high %v1283, %v1283
      %v1294 = vcombine.high %v1290, %v1290
      %v1303 = vmul.f32 %v1226, %v1269
      %v1304 = vmul.f32 %v1227, %v1283
      %v1305 = vmul.f32 %v1228, %v1291
      %v1306 = vmul.f32 %v1229, %v1293
      %v1307 = vmul.f32 %v1230, %v1276
      %v1308 = vmul.f32 %v1231, %v1290
      %v1309 = vmul.f32 %v1232, %v1292
      %v1310 = vmul.f32 %v1233, %v1294
      %v1311 = vmul.f32 %v1234, %v1269
      %v1312 = vmul.f32 %v1235, %v1283
      %v1313 = vmul.f32 %v1236, %v1291
      %v1314 = vmul.f32 %v1237, %v1293
      %v1315 = vmul.f32 %v1238, %v1276
      %v1316 = vmul.f32 %v1239, %v1290
      %v1317 = vmul.f32 %v1240, %v1292
      %v1319 = vlaneseq
      %v1320 = vshrl.u32 %v1319, 7
      %v1321 = vsub.s32 0, %v1320
      %v1322 = vrot.slane %v805, %v1321
      %v1323 = vcombine.high %v1322, %v1322
      %v1325 = vunpack.c.l.s4 1966171168
      %v1326 = vunpack.c.0.s8 %v1325
      %v1327 = vlaneseq
      %v1328 = vshrl.u32 %v1327, 7
      %v1329 = vsub.s32 %v1326, %v1328
      %v1330 = vrot.slane %v1322, %v1329
      %v1332 = vunpack.c.l.s4 1966171168
      %v1333 = vunpack.c.0.s8 %v1332
      %v1334 = vlaneseq
      %v1335 = vshrl.u32 %v1334, 7
      %v1336 = vsub.s32 %v1333, %v1335
      %v1337 = vrot.slane %v1323, %v1336
      %v1338 = vcombine.high %v1330, %v1330
      %v1339 = vcombine.high %v1337, %v1337
      %v1341 = vunpack.c.l.s4 1966171168
      %v1342 = vunpack.c.0.s8 %v1341
      %v1343 = vlaneseq
      %v1344 = vshrl.u32 %v1343, 7
      %v1345 = vsub.s32 %v1342, %v1344
      %v1346 = vrot.slane %v1330, %v1345
      %v1348 = vunpack.c.l.s4 1966171168
      %v1349 = vunpack.c.0.s8 %v1348
      %v1350 = vlaneseq
      %v1351 = vshrl.u32 %v1350, 7
      %v1352 = vsub.s32 %v1349, %v1351
      %v1353 = vrot.slane %v1337, %v1352
      %v1355 = vunpack.c.l.s4 1966171168
      %v1356 = vunpack.c.0.s8 %v1355
      %v1357 = vlaneseq
      %v1358 = vshrl.u32 %v1357, 7
      %v1359 = vsub.s32 %v1356, %v1358
      %v1360 = vrot.slane %v1338, %v1359
      %v1362 = vunpack.c.l.s4 1966171168
      %v1363 = vunpack.c.0.s8 %v1362
      %v1364 = vlaneseq
      %v1365 = vshrl.u32 %v1364, 7
      %v1366 = vsub.s32 %v1363, %v1365
      %v1367 = vrot.slane %v1339, %v1366
      %v1368 = vcombine.high %v1346, %v1346
      %v1369 = vcombine.high %v1353, %v1353
      %v1370 = vcombine.high %v1360, %v1360
      %v1371 = vcombine.high %v1367, %v1367
      %v1380 = vadd.f32 %v1303, %v1346
      %v1381 = vadd.f32 %v1304, %v1360
      %v1382 = vadd.f32 %v1305, %v1368
      %v1383 = vadd.f32 %v1306, %v1370
      %v1384 = vadd.f32 %v1307, %v1353
      %v1385 = vadd.f32 %v1308, %v1367
      %v1386 = vadd.f32 %v1309, %v1369
      %v1387 = vadd.f32 %v1310, %v1371
      %v1388 = vadd.f32 %v1311, %v1346
      %v1389 = vadd.f32 %v1312, %v1360
      %v1390 = vadd.f32 %v1313, %v1368
      %v1391 = vadd.f32 %v1314, %v1370
      %v1392 = vadd.f32 %v1315, %v1353
      %v1393 = vadd.f32 %v1316, %v1367
      %v1394 = vadd.f32 %v1317, %v1369
      %v1410 = vcombine.low %v1380, %v1381
      %v1411 = vcombine.low %v1382, %v1383
      %v1412 = vcombine.low %v1384, %v1385
      %v1413 = vcombine.low %v1386, %v1387
      %v1415 = vunpack.c.l.s4 1966171168
      %v1416 = vunpack.c.0.s8 %v1415
      %v1417 = vlaneseq
      %v1418 = vshrl.u32 %v1417, 7
      %v1419 = vsub.s32 %v1416, %v1418
      %v1420 = vrot.slane %v1410, %v1419
      %v1422 = vunpack.c.l.s4 1966171168
      %v1423 = vunpack.c.0.s8 %v1422
      %v1424 = vlaneseq
      %v1425 = vshrl.u32 %v1424, 7
      %v1426 = vsub.s32 %v1423, %v1425
      %v1427 = vrot.slane %v1411, %v1426
      %v1429 = vunpack.c.l.s4 1966171168
      %v1430 = vunpack.c.0.s8 %v1429
      %v1431 = vlaneseq
      %v1432 = vshrl.u32 %v1431, 7
      %v1433 = vsub.s32 %v1430, %v1432
      %v1434 = vrot.slane %v1412, %v1433
      %v1436 = vunpack.c.l.s4 1966171168
      %v1437 = vunpack.c.0.s8 %v1436
      %v1438 = vlaneseq
      %v1439 = vshrl.u32 %v1438, 7
      %v1440 = vsub.s32 %v1437, %v1439
      %v1441 = vrot.slane %v1413, %v1440
      %v1442 = vcombine.low %v1420, %v1427
      %v1443 = vcombine.low %v1434, %v1441
      %v1445 = vunpack.c.l.s4 1966171168
      %v1446 = vunpack.c.0.s8 %v1445
      %v1447 = vlaneseq
      %v1448 = vshrl.u32 %v1447, 7
      %v1449 = vsub.s32 %v1446, %v1448
      %v1450 = vrot.slane %v1442, %v1449
      %v1452 = vunpack.c.l.s4 1966171168
      %v1453 = vunpack.c.0.s8 %v1452
      %v1454 = vlaneseq
      %v1455 = vshrl.u32 %v1454, 7
      %v1456 = vsub.s32 %v1453, %v1455
      %v1457 = vrot.slane %v1443, %v1456
      %v1458 = vcombine.low %v1450, %v1457
      %v1459 = vcombine.low %v1388, %v1389
      %v1460 = vcombine.low %v1390, %v1391
      %v1461 = vcombine.low %v1392, %v1393
      %v1463 = vunpack.c.l.s4 1966171168
      %v1464 = vunpack.c.0.s8 %v1463
      %v1465 = vlaneseq
      %v1466 = vshrl.u32 %v1465, 7
      %v1467 = vsub.s32 %v1464, %v1466
      %v1468 = vrot.slane %v1459, %v1467
      %v1470 = vunpack.c.l.s4 1966171168
      %v1471 = vunpack.c.0.s8 %v1470
      %v1472 = vlaneseq
      %v1473 = vshrl.u32 %v1472, 7
      %v1474 = vsub.s32 %v1471, %v1473
      %v1475 = vrot.slane %v1460, %v1474
      %v1477 = vunpack.c.l.s4 1966171168
      %v1478 = vunpack.c.0.s8 %v1477
      %v1479 = vlaneseq
      %v1480 = vshrl.u32 %v1479, 7
      %v1481 = vsub.s32 %v1478, %v1480
      %v1482 = vrot.slane %v1461, %v1481
      %v1484 = vunpack.c.l.s4 1966171168
      %v1485 = vunpack.c.0.s8 %v1484
      %v1486 = vlaneseq
      %v1487 = vshrl.u32 %v1486, 7
      %v1488 = vsub.s32 %v1485, %v1487
      %v1489 = vrot.slane %v1394, %v1488
      %v1490 = vcombine.low %v1468, %v1475
      %v1491 = vcombine.low %v1482, %v1489
      %v1493 = vunpack.c.l.s4 1966171168
      %v1494 = vunpack.c.0.s8 %v1493
      %v1495 = vlaneseq
      %v1496 = vshrl.u32 %v1495, 7
      %v1497 = vsub.s32 %v1494, %v1496
      %v1498 = vrot.slane %v1490, %v1497
      %v1500 = vunpack.c.l.s4 1966171168
      %v1501 = vunpack.c.0.s8 %v1500
      %v1502 = vlaneseq
      %v1503 = vshrl.u32 %v1502, 7
      %v1504 = vsub.s32 %v1501, %v1503
      %v1505 = vrot.slane %v1491, %v1504
      %v1506 = vcombine.low %v1498, %v1505
      %v1509 = vpack.c.bf16 %v1506, %v1458
      %v1510 = vld [vmem:[%s612] sm:$0xff]
      %v1511 = vld [vmem:[%s612 + $0x8] sm:$0xff]
      %v1512 = vld [vmem:[%s612 + $0x10] sm:$0xff]
      %v1513 = vld [vmem:[%s612 + $0x18] sm:$0xff]
      %v1514 = vld [vmem:[%s612 + $0x20] sm:$0xff]
      %v1515 = vld [vmem:[%s612 + $0x28] sm:$0xff]
      %v1516 = vld [vmem:[%s612 + $0x30] sm:$0xff]
      %v1517 = vld [vmem:[%s612 + $0x38] sm:$0xff]
      %v1518 = vld [vmem:[%s616] sm:$0x3]
      %v1520 = vlaneseq
      %v1521 = vshrl.u32 %v1520, 7
      %v1522 = vsub.s32 0, %v1521
      %v1523 = vrot.slane %v1518, %v1522
      %v1524 = vlaneseq
      %v1525 = vshrl.u32 %v1524, 7
      %v1526 = vsub.s32 1, %v1525
      %v1527 = vrot.slane %v1518, %v1526
      %v1538 = vunpack.c.l.b16 %v1510
      %v1539 = vunpack.c.h.b16 %v1510
      %v1540 = vunpack.c.l.b16 %v1511
      %v1541 = vunpack.c.h.b16 %v1511
      %v1542 = vunpack.c.l.b16 %v1512
      %v1543 = vunpack.c.h.b16 %v1512
      %v1544 = vunpack.c.l.b16 %v1513
      %v1545 = vunpack.c.h.b16 %v1513
      %v1546 = vunpack.c.l.b16 %v1514
      %v1547 = vunpack.c.h.b16 %v1514
      %v1548 = vunpack.c.l.b16 %v1515
      %v1549 = vunpack.c.h.b16 %v1515
      %v1550 = vunpack.c.l.b16 %v1516
      %v1551 = vunpack.c.h.b16 %v1516
      %v1552 = vunpack.c.l.b16 %v1517
      %v1553 = vunpack.c.h.b16 %v1517
      %v1554 = vpack.c.b16 %v1540, %v1538
      %v1555 = vpack.c.b16 %v1541, %v1539
      %v1556 = vpack.c.b16 %v1544, %v1542
      %v1557 = vpack.c.b16 %v1545, %v1543
      %v1558 = vpack.c.b16 %v1548, %v1546
      %v1559 = vpack.c.b16 %v1549, %v1547
      %v1560 = vpack.c.b16 %v1552, %v1550
      %v1561 = vpack.c.b16 %v1553, %v1551
      %v1571 = vsel %vm905, %v1509, 0
      %1573 = vmatprep.subr.bf16.mxu0 %v1555
      %1574 = vmatpush1.bf16.msra.mxu0 %v1554
      %1575 = vmatprep.subr.bf16.mxu0 %v1557
      %1576 = vmatpush1.bf16.msra.mxu0 %v1556
      %1577 = vmatprep.subr.bf16.mxu0 %v1559
      %1578 = vmatpush1.bf16.msra.mxu0 %v1558
      %1579 = vmatprep.subr.bf16.mxu0 %v1561
      %1580 = vmatpush1.bf16.msra.mxu0 %v1560
      %1581 = vmatprep.subr.bf16.mxu0 0
      %1582 = vmatpush1.bf16.msra.mxu0 0
      %1583 = vmatprep.subr.bf16.mxu0 0
      %1584 = vmatpush1.bf16.msra.mxu0 0
      %1585 = vmatprep.subr.bf16.mxu0 0
      %1586 = vmatpush1.bf16.msra.mxu0 0
      %1587 = vmatprep.subr.bf16.mxu0 0
      %1588 = vmatpush1.bf16.msra.mxu0 0
      %1589 = vmatprep.subr.bf16.mxu0 0
      %1590 = vmatpush1.bf16.msra.mxu0 0
      %1591 = vmatprep.subr.bf16.mxu0 0
      %1592 = vmatpush1.bf16.msra.mxu0 0
      %1593 = vmatprep.subr.bf16.mxu0 0
      %1594 = vmatpush1.bf16.msra.mxu0 0
      %1595 = vmatprep.subr.bf16.mxu0 0
      %1596 = vmatpush1.bf16.msra.mxu0 0
      %1597 = vmatprep.subr.bf16.mxu0 0
      %1598 = vmatpush1.bf16.msra.mxu0 0
      %1599 = vmatprep.subr.bf16.mxu0 0
      %1600 = vmatpush1.bf16.msra.mxu0 0
      %1601 = vmatprep.subr.bf16.mxu0 0
      %1602 = vmatpush1.bf16.msra.mxu0 0
      %1603 = vmatprep.subr.bf16.mxu0 0
      %1604 = vmatpush1.bf16.msra.mxu0 0
      %1605 = vmatprep.mubr.bf16.mxu0 0
      %1606 = vmatmul.mubr.bf16.gmra.mrb[0].mxu0 %v1571
      %v1607 = vpop.f32.mrb[0].mxu0
      %v1608 = vadd.f32 %v1523, %v1607
      %v1609 = vpop.f32.mrb[0].mxu0
      %v1610 = vadd.f32 %v1527, %v1609
      %v1611 = vpop.f32.mrb[0].mxu0
      %v1612 = vadd.f32 %v1523, %v1611
      %v1613 = vpop.f32.mrb[0].mxu0
      %v1614 = vadd.f32 %v1527, %v1613
      %1615 = vdwg.mxu0
      %1618 = vrot.lane.b32.xlu0 %v1608, 112
      %v1619 = vpop.permute.xlu0 %1618
      %1620 = vrot.lane.b32.xlu0 %v1612, 112
      %v1621 = vpop.permute.xlu0 %1620
      %1624 = vrot.lane.b32.xlu0 %v1608, 96
      %v1625 = vpop.permute.xlu0 %1624
      %1626 = vrot.lane.b32.xlu0 %v1612, 96
      %v1627 = vpop.permute.xlu0 %1626
      %1630 = vrot.lane.b32.xlu0 %v1608, 80
      %v1631 = vpop.permute.xlu0 %1630
      %1632 = vrot.lane.b32.xlu0 %v1612, 80
      %v1633 = vpop.permute.xlu0 %1632
      %1636 = vrot.lane.b32.xlu0 %v1608, 64
      %v1637 = vpop.permute.xlu0 %1636
      %1638 = vrot.lane.b32.xlu0 %v1612, 64
      %v1639 = vpop.permute.xlu0 %1638
      %1642 = vrot.lane.b32.xlu0 %v1608, 48
      %v1643 = vpop.permute.xlu0 %1642
      %1644 = vrot.lane.b32.xlu0 %v1612, 48
      %v1645 = vpop.permute.xlu0 %1644
      %1648 = vrot.lane.b32.xlu0 %v1608, 32
      %v1649 = vpop.permute.xlu0 %1648
      %1650 = vrot.lane.b32.xlu0 %v1612, 32
      %v1651 = vpop.permute.xlu0 %1650
      %1654 = vrot.lane.b32.xlu0 %v1608, 16
      %v1655 = vpop.permute.xlu0 %1654
      %1656 = vrot.lane.b32.xlu0 %v1612, 16
      %v1657 = vpop.permute.xlu0 %1656
      %1662 = vrot.lane.b32.xlu0 %v1610, 112
      %v1663 = vpop.permute.xlu0 %1662
      %1664 = vrot.lane.b32.xlu0 %v1614, 112
      %v1665 = vpop.permute.xlu0 %1664
      %1668 = vrot.lane.b32.xlu0 %v1610, 96
      %v1669 = vpop.permute.xlu0 %1668
      %1670 = vrot.lane.b32.xlu0 %v1614, 96
      %v1671 = vpop.permute.xlu0 %1670
      %1674 = vrot.lane.b32.xlu0 %v1610, 80
      %v1675 = vpop.permute.xlu0 %1674
      %1676 = vrot.lane.b32.xlu0 %v1614, 80
      %v1677 = vpop.permute.xlu0 %1676
      %v1680 = vcombine.low %v1608, %v1625
      %v1681 = vcombine.high %v1608, %v1625
      %v1683 = vunpack.c.l.s4 1983009808
      %v1684 = vunpack.c.0.s8 %v1683
      %v1685 = vlaneseq
      %v1686 = vshrl.u32 %v1685, 7
      %v1687 = vsub.s32 %v1684, %v1686
      %v1688 = vrot.slane %v1680, %v1687
      %v1690 = vunpack.c.l.s4 1983009808
      %v1691 = vunpack.c.0.s8 %v1690
      %v1692 = vlaneseq
      %v1693 = vshrl.u32 %v1692, 7
      %v1694 = vsub.s32 %v1691, %v1693
      %v1695 = vrot.slane %v1681, %v1694
      %v1696 = vcombine.low %v1619, %v1631
      %v1697 = vcombine.high %v1619, %v1631
      %v1699 = vunpack.c.l.s4 1983009808
      %v1700 = vunpack.c.0.s8 %v1699
      %v1701 = vlaneseq
      %v1702 = vshrl.u32 %v1701, 7
      %v1703 = vsub.s32 %v1700, %v1702
      %v1704 = vrot.slane %v1696, %v1703
      %v1706 = vunpack.c.l.s4 1983009808
      %v1707 = vunpack.c.0.s8 %v1706
      %v1708 = vlaneseq
      %v1709 = vshrl.u32 %v1708, 7
      %v1710 = vsub.s32 %v1707, %v1709
      %v1711 = vrot.slane %v1697, %v1710
      %v1712 = vcombine.low %v1637, %v1649
      %v1713 = vcombine.high %v1637, %v1649
      %v1715 = vunpack.c.l.s4 1983009808
      %v1716 = vunpack.c.0.s8 %v1715
      %v1717 = vlaneseq
      %v1718 = vshrl.u32 %v1717, 7
      %v1719 = vsub.s32 %v1716, %v1718
      %v1720 = vrot.slane %v1712, %v1719
      %v1722 = vunpack.c.l.s4 1983009808
      %v1723 = vunpack.c.0.s8 %v1722
      %v1724 = vlaneseq
      %v1725 = vshrl.u32 %v1724, 7
      %v1726 = vsub.s32 %v1723, %v1725
      %v1727 = vrot.slane %v1713, %v1726
      %v1728 = vcombine.low %v1643, %v1655
      %v1729 = vcombine.high %v1643, %v1655
      %v1731 = vunpack.c.l.s4 1983009808
      %v1732 = vunpack.c.0.s8 %v1731
      %v1733 = vlaneseq
      %v1734 = vshrl.u32 %v1733, 7
      %v1735 = vsub.s32 %v1732, %v1734
      %v1736 = vrot.slane %v1728, %v1735
      %v1738 = vunpack.c.l.s4 1983009808
      %v1739 = vunpack.c.0.s8 %v1738
      %v1740 = vlaneseq
      %v1741 = vshrl.u32 %v1740, 7
      %v1742 = vsub.s32 %v1739, %v1741
      %v1743 = vrot.slane %v1729, %v1742
      %v1744 = vcombine.low %v1688, %v1704
      %v1745 = vcombine.high %v1688, %v1704
      %v1747 = vunpack.c.l.s4 1934713408
      %v1748 = vunpack.c.0.s8 %v1747
      %v1749 = vlaneseq
      %v1750 = vshrl.u32 %v1749, 7
      %v1751 = vsub.s32 %v1748, %v1750
      %v1752 = vrot.slane %v1744, %v1751
      %v1754 = vunpack.c.l.s4 1934713408
      %v1755 = vunpack.c.0.s8 %v1754
      %v1756 = vlaneseq
      %v1757 = vshrl.u32 %v1756, 7
      %v1758 = vsub.s32 %v1755, %v1757
      %v1759 = vrot.slane %v1745, %v1758
      %v1760 = vcombine.low %v1695, %v1711
      %v1761 = vcombine.high %v1695, %v1711
      %v1763 = vunpack.c.l.s4 1934713408
      %v1764 = vunpack.c.0.s8 %v1763
      %v1765 = vlaneseq
      %v1766 = vshrl.u32 %v1765, 7
      %v1767 = vsub.s32 %v1764, %v1766
      %v1768 = vrot.slane %v1760, %v1767
      %v1770 = vunpack.c.l.s4 1934713408
      %v1771 = vunpack.c.0.s8 %v1770
      %v1772 = vlaneseq
      %v1773 = vshrl.u32 %v1772, 7
      %v1774 = vsub.s32 %v1771, %v1773
      %v1775 = vrot.slane %v1761, %v1774
      %v1776 = vcombine.low %v1720, %v1736
      %v1777 = vcombine.high %v1720, %v1736
      %v1779 = vunpack.c.l.s4 1934713408
      %v1780 = vunpack.c.0.s8 %v1779
      %v1781 = vlaneseq
      %v1782 = vshrl.u32 %v1781, 7
      %v1783 = vsub.s32 %v1780, %v1782
      %v1784 = vrot.slane %v1776, %v1783
      %v1786 = vunpack.c.l.s4 1934713408
      %v1787 = vunpack.c.0.s8 %v1786
      %v1788 = vlaneseq
      %v1789 = vshrl.u32 %v1788, 7
      %v1790 = vsub.s32 %v1787, %v1789
      %v1791 = vrot.slane %v1777, %v1790
      %v1792 = vcombine.low %v1727, %v1743
      %v1793 = vcombine.high %v1727, %v1743
      %v1795 = vunpack.c.l.s4 1934713408
      %v1796 = vunpack.c.0.s8 %v1795
      %v1797 = vlaneseq
      %v1798 = vshrl.u32 %v1797, 7
      %v1799 = vsub.s32 %v1796, %v1798
      %v1800 = vrot.slane %v1792, %v1799
      %v1802 = vunpack.c.l.s4 1934713408
      %v1803 = vunpack.c.0.s8 %v1802
      %v1804 = vlaneseq
      %v1805 = vshrl.u32 %v1804, 7
      %v1806 = vsub.s32 %v1803, %v1805
      %v1807 = vrot.slane %v1793, %v1806
      %v1808 = vcombine.low %v1752, %v1784
      %v1809 = vcombine.high %v1752, %v1784
      %v1810 = vcombine.low %v1759, %v1791
      %v1811 = vcombine.high %v1759, %v1791
      %v1812 = vcombine.low %v1768, %v1800
      %v1813 = vcombine.high %v1768, %v1800
      %v1814 = vcombine.low %v1775, %v1807
      %v1815 = vcombine.high %v1775, %v1807
      %v1816 = vcombine.low %v1610, %v1669
      %v1817 = vcombine.high %v1610, %v1669
      %v1819 = vunpack.c.l.s4 1983009808
      %v1820 = vunpack.c.0.s8 %v1819
      %v1821 = vlaneseq
      %v1822 = vshrl.u32 %v1821, 7
      %v1823 = vsub.s32 %v1820, %v1822
      %v1824 = vrot.slane %v1816, %v1823
      %v1826 = vunpack.c.l.s4 1983009808
      %v1827 = vunpack.c.0.s8 %v1826
      %v1828 = vlaneseq
      %v1829 = vshrl.u32 %v1828, 7
      %v1830 = vsub.s32 %v1827, %v1829
      %v1831 = vrot.slane %v1817, %v1830
      %v1832 = vcombine.low %v1663, %v1675
      %v1833 = vcombine.high %v1663, %v1675
      %v1835 = vunpack.c.l.s4 1983009808
      %v1836 = vunpack.c.0.s8 %v1835
      %v1837 = vlaneseq
      %v1838 = vshrl.u32 %v1837, 7
      %v1839 = vsub.s32 %v1836, %v1838
      %v1840 = vrot.slane %v1832, %v1839
      %v1842 = vunpack.c.l.s4 1983009808
      %v1843 = vunpack.c.0.s8 %v1842
      %v1844 = vlaneseq
      %v1845 = vshrl.u32 %v1844, 7
      %v1846 = vsub.s32 %v1843, %v1845
      %v1847 = vrot.slane %v1833, %v1846
      %v1848 = vcombine.low %v1824, %v1840
      %v1849 = vcombine.high %v1824, %v1840
      %v1851 = vunpack.c.l.s4 1934713408
      %v1852 = vunpack.c.0.s8 %v1851
      %v1853 = vlaneseq
      %v1854 = vshrl.u32 %v1853, 7
      %v1855 = vsub.s32 %v1852, %v1854
      %v1856 = vrot.slane %v1848, %v1855
      %v1858 = vunpack.c.l.s4 1934713408
      %v1859 = vunpack.c.0.s8 %v1858
      %v1860 = vlaneseq
      %v1861 = vshrl.u32 %v1860, 7
      %v1862 = vsub.s32 %v1859, %v1861
      %v1863 = vrot.slane %v1849, %v1862
      %v1864 = vcombine.low %v1831, %v1847
      %v1865 = vcombine.high %v1831, %v1847
      %v1867 = vunpack.c.l.s4 1934713408
      %v1868 = vunpack.c.0.s8 %v1867
      %v1869 = vlaneseq
      %v1870 = vshrl.u32 %v1869, 7
      %v1871 = vsub.s32 %v1868, %v1870
      %v1872 = vrot.slane %v1864, %v1871
      %v1874 = vunpack.c.l.s4 1934713408
      %v1875 = vunpack.c.0.s8 %v1874
      %v1876 = vlaneseq
      %v1877 = vshrl.u32 %v1876, 7
      %v1878 = vsub.s32 %v1875, %v1877
      %v1879 = vrot.slane %v1865, %v1878
      %v1880 = vcombine.high %v1856, 0.0
      %v1881 = vcombine.high %v1863, 0.0
      %v1882 = vcombine.high %v1872, 0.0
      %v1883 = vcombine.high %v1879, 0.0
      %v1884 = vcombine.low %v1612, %v1627
      %v1885 = vcombine.high %v1612, %v1627
      %v1887 = vunpack.c.l.s4 1983009808
      %v1888 = vunpack.c.0.s8 %v1887
      %v1889 = vlaneseq
      %v1890 = vshrl.u32 %v1889, 7
      %v1891 = vsub.s32 %v1888, %v1890
      %v1892 = vrot.slane %v1884, %v1891
      %v1894 = vunpack.c.l.s4 1983009808
      %v1895 = vunpack.c.0.s8 %v1894
      %v1896 = vlaneseq
      %v1897 = vshrl.u32 %v1896, 7
      %v1898 = vsub.s32 %v1895, %v1897
      %v1899 = vrot.slane %v1885, %v1898
      %v1900 = vcombine.low %v1621, %v1633
      %v1901 = vcombine.high %v1621, %v1633
      %v1903 = vunpack.c.l.s4 1983009808
      %v1904 = vunpack.c.0.s8 %v1903
      %v1905 = vlaneseq
      %v1906 = vshrl.u32 %v1905, 7
      %v1907 = vsub.s32 %v1904, %v1906
      %v1908 = vrot.slane %v1900, %v1907
      %v1910 = vunpack.c.l.s4 1983009808
      %v1911 = vunpack.c.0.s8 %v1910
      %v1912 = vlaneseq
      %v1913 = vshrl.u32 %v1912, 7
      %v1914 = vsub.s32 %v1911, %v1913
      %v1915 = vrot.slane %v1901, %v1914
      %v1916 = vcombine.low %v1639, %v1651
      %v1917 = vcombine.high %v1639, %v1651
      %v1919 = vunpack.c.l.s4 1983009808
      %v1920 = vunpack.c.0.s8 %v1919
      %v1921 = vlaneseq
      %v1922 = vshrl.u32 %v1921, 7
      %v1923 = vsub.s32 %v1920, %v1922
      %v1924 = vrot.slane %v1916, %v1923
      %v1926 = vunpack.c.l.s4 1983009808
      %v1927 = vunpack.c.0.s8 %v1926
      %v1928 = vlaneseq
      %v1929 = vshrl.u32 %v1928, 7
      %v1930 = vsub.s32 %v1927, %v1929
      %v1931 = vrot.slane %v1917, %v1930
      %v1932 = vcombine.low %v1645, %v1657
      %v1933 = vcombine.high %v1645, %v1657
      %v1935 = vunpack.c.l.s4 1983009808
      %v1936 = vunpack.c.0.s8 %v1935
      %v1937 = vlaneseq
      %v1938 = vshrl.u32 %v1937, 7
      %v1939 = vsub.s32 %v1936, %v1938
      %v1940 = vrot.slane %v1932, %v1939
      %v1942 = vunpack.c.l.s4 1983009808
      %v1943 = vunpack.c.0.s8 %v1942
      %v1944 = vlaneseq
      %v1945 = vshrl.u32 %v1944, 7
      %v1946 = vsub.s32 %v1943, %v1945
      %v1947 = vrot.slane %v1933, %v1946
      %v1948 = vcombine.low %v1892, %v1908
      %v1949 = vcombine.high %v1892, %v1908
      %v1951 = vunpack.c.l.s4 1934713408
      %v1952 = vunpack.c.0.s8 %v1951
      %v1953 = vlaneseq
      %v1954 = vshrl.u32 %v1953, 7
      %v1955 = vsub.s32 %v1952, %v1954
      %v1956 = vrot.slane %v1948, %v1955
      %v1958 = vunpack.c.l.s4 1934713408
      %v1959 = vunpack.c.0.s8 %v1958
      %v1960 = vlaneseq
      %v1961 = vshrl.u32 %v1960, 7
      %v1962 = vsub.s32 %v1959, %v1961
      %v1963 = vrot.slane %v1949, %v1962
      %v1964 = vcombine.low %v1899, %v1915
      %v1965 = vcombine.high %v1899, %v1915
      %v1967 = vunpack.c.l.s4 1934713408
      %v1968 = vunpack.c.0.s8 %v1967
      %v1969 = vlaneseq
      %v1970 = vshrl.u32 %v1969, 7
      %v1971 = vsub.s32 %v1968, %v1970
      %v1972 = vrot.slane %v1964, %v1971
      %v1974 = vunpack.c.l.s4 1934713408
      %v1975 = vunpack.c.0.s8 %v1974
      %v1976 = vlaneseq
      %v1977 = vshrl.u32 %v1976, 7
      %v1978 = vsub.s32 %v1975, %v1977
      %v1979 = vrot.slane %v1965, %v1978
      %v1980 = vcombine.low %v1924, %v1940
      %v1981 = vcombine.high %v1924, %v1940
      %v1983 = vunpack.c.l.s4 1934713408
      %v1984 = vunpack.c.0.s8 %v1983
      %v1985 = vlaneseq
      %v1986 = vshrl.u32 %v1985, 7
      %v1987 = vsub.s32 %v1984, %v1986
      %v1988 = vrot.slane %v1980, %v1987
      %v1990 = vunpack.c.l.s4 1934713408
      %v1991 = vunpack.c.0.s8 %v1990
      %v1992 = vlaneseq
      %v1993 = vshrl.u32 %v1992, 7
      %v1994 = vsub.s32 %v1991, %v1993
      %v1995 = vrot.slane %v1981, %v1994
      %v1996 = vcombine.low %v1931, %v1947
      %v1997 = vcombine.high %v1931, %v1947
      %v1999 = vunpack.c.l.s4 1934713408
      %v2000 = vunpack.c.0.s8 %v1999
      %v2001 = vlaneseq
      %v2002 = vshrl.u32 %v2001, 7
      %v2003 = vsub.s32 %v2000, %v2002
      %v2004 = vrot.slane %v1996, %v2003
      %v2006 = vunpack.c.l.s4 1934713408
      %v2007 = vunpack.c.0.s8 %v2006
      %v2008 = vlaneseq
      %v2009 = vshrl.u32 %v2008, 7
      %v2010 = vsub.s32 %v2007, %v2009
      %v2011 = vrot.slane %v1997, %v2010
      %v2012 = vcombine.low %v1956, %v1988
      %v2013 = vcombine.high %v1956, %v1988
      %v2014 = vcombine.low %v1963, %v1995
      %v2015 = vcombine.high %v1963, %v1995
      %v2016 = vcombine.low %v1972, %v2004
      %v2017 = vcombine.high %v1972, %v2004
      %v2018 = vcombine.low %v1979, %v2011
      %v2019 = vcombine.low %v1614, %v1671
      %v2020 = vcombine.high %v1614, %v1671
      %v2022 = vunpack.c.l.s4 1983009808
      %v2023 = vunpack.c.0.s8 %v2022
      %v2024 = vlaneseq
      %v2025 = vshrl.u32 %v2024, 7
      %v2026 = vsub.s32 %v2023, %v2025
      %v2027 = vrot.slane %v2019, %v2026
      %v2029 = vunpack.c.l.s4 1983009808
      %v2030 = vunpack.c.0.s8 %v2029
      %v2031 = vlaneseq
      %v2032 = vshrl.u32 %v2031, 7
      %v2033 = vsub.s32 %v2030, %v2032
      %v2034 = vrot.slane %v2020, %v2033
      %v2035 = vcombine.low %v1665, %v1677
      %v2036 = vcombine.high %v1665, %v1677
      %v2038 = vunpack.c.l.s4 1983009808
      %v2039 = vunpack.c.0.s8 %v2038
      %v2040 = vlaneseq
      %v2041 = vshrl.u32 %v2040, 7
      %v2042 = vsub.s32 %v2039, %v2041
      %v2043 = vrot.slane %v2035, %v2042
      %v2045 = vunpack.c.l.s4 1983009808
      %v2046 = vunpack.c.0.s8 %v2045
      %v2047 = vlaneseq
      %v2048 = vshrl.u32 %v2047, 7
      %v2049 = vsub.s32 %v2046, %v2048
      %v2050 = vrot.slane %v2036, %v2049
      %v2051 = vcombine.low %v2027, %v2043
      %v2052 = vcombine.high %v2027, %v2043
      %v2054 = vunpack.c.l.s4 1934713408
      %v2055 = vunpack.c.0.s8 %v2054
      %v2056 = vlaneseq
      %v2057 = vshrl.u32 %v2056, 7
      %v2058 = vsub.s32 %v2055, %v2057
      %v2059 = vrot.slane %v2051, %v2058
      %v2061 = vunpack.c.l.s4 1934713408
      %v2062 = vunpack.c.0.s8 %v2061
      %v2063 = vlaneseq
      %v2064 = vshrl.u32 %v2063, 7
      %v2065 = vsub.s32 %v2062, %v2064
      %v2066 = vrot.slane %v2052, %v2065
      %v2067 = vcombine.low %v2034, %v2050
      %v2068 = vcombine.high %v2034, %v2050
      %v2070 = vunpack.c.l.s4 1934713408
      %v2071 = vunpack.c.0.s8 %v2070
      %v2072 = vlaneseq
      %v2073 = vshrl.u32 %v2072, 7
      %v2074 = vsub.s32 %v2071, %v2073
      %v2075 = vrot.slane %v2067, %v2074
      %v2076 = vcombine.high %v2066, 0.0
      %v2077 = vcombine.high %v2075, 0.0
      %v2078 = vcombine.low %v1808, %v1810
      %v2079 = vcombine.high %v1808, %v1810
      %v2081 = vunpack.c.l.s4 1983009808
      %v2082 = vunpack.c.0.s8 %v2081
      %v2083 = vlaneseq
      %v2084 = vshrl.u32 %v2083, 7
      %v2085 = vsub.s32 %v2082, %v2084
      %v2086 = vrot.slane %v2078, %v2085
      %v2088 = vunpack.c.l.s4 1983009808
      %v2089 = vunpack.c.0.s8 %v2088
      %v2090 = vlaneseq
      %v2091 = vshrl.u32 %v2090, 7
      %v2092 = vsub.s32 %v2089, %v2091
      %v2093 = vrot.slane %v2079, %v2092
      %v2094 = vcombine.low %v1809, %v1811
      %v2095 = vcombine.high %v1809, %v1811
      %v2097 = vunpack.c.l.s4 1983009808
      %v2098 = vunpack.c.0.s8 %v2097
      %v2099 = vlaneseq
      %v2100 = vshrl.u32 %v2099, 7
      %v2101 = vsub.s32 %v2098, %v2100
      %v2102 = vrot.slane %v2094, %v2101
      %v2104 = vunpack.c.l.s4 1983009808
      %v2105 = vunpack.c.0.s8 %v2104
      %v2106 = vlaneseq
      %v2107 = vshrl.u32 %v2106, 7
      %v2108 = vsub.s32 %v2105, %v2107
      %v2109 = vrot.slane %v2095, %v2108
      %v2110 = vcombine.high %v1812, 0.0
      %v2112 = vunpack.c.l.s4 1983009808
      %v2113 = vunpack.c.0.s8 %v2112
      %v2114 = vlaneseq
      %v2115 = vshrl.u32 %v2114, 7
      %v2116 = vsub.s32 %v2113, %v2115
      %v2117 = vrot.slane %v1812, %v2116
      %v2119 = vunpack.c.l.s4 1983009808
      %v2120 = vunpack.c.0.s8 %v2119
      %v2121 = vlaneseq
      %v2122 = vshrl.u32 %v2121, 7
      %v2123 = vsub.s32 %v2120, %v2122
      %v2124 = vrot.slane %v2110, %v2123
      %v2125 = vcombine.low %v2086, %v2102
      %v2126 = vcombine.high %v2086, %v2102
      %v2128 = vunpack.c.l.s4 1934713408
      %v2129 = vunpack.c.0.s8 %v2128
      %v2130 = vlaneseq
      %v2131 = vshrl.u32 %v2130, 7
      %v2132 = vsub.s32 %v2129, %v2131
      %v2133 = vrot.slane %v2125, %v2132
      %v2135 = vunpack.c.l.s4 1934713408
      %v2136 = vunpack.c.0.s8 %v2135
      %v2137 = vlaneseq
      %v2138 = vshrl.u32 %v2137, 7
      %v2139 = vsub.s32 %v2136, %v2138
      %v2140 = vrot.slane %v2126, %v2139
      %v2141 = vcombine.low %v2093, %v2109
      %v2142 = vcombine.high %v2093, %v2109
      %v2144 = vunpack.c.l.s4 1934713408
      %v2145 = vunpack.c.0.s8 %v2144
      %v2146 = vlaneseq
      %v2147 = vshrl.u32 %v2146, 7
      %v2148 = vsub.s32 %v2145, %v2147
      %v2149 = vrot.slane %v2141, %v2148
      %v2151 = vunpack.c.l.s4 1934713408
      %v2152 = vunpack.c.0.s8 %v2151
      %v2153 = vlaneseq
      %v2154 = vshrl.u32 %v2153, 7
      %v2155 = vsub.s32 %v2152, %v2154
      %v2156 = vrot.slane %v2142, %v2155
      %v2157 = vcombine.high %v2117, 0.0
      %v2159 = vunpack.c.l.s4 1934713408
      %v2160 = vunpack.c.0.s8 %v2159
      %v2161 = vlaneseq
      %v2162 = vshrl.u32 %v2161, 7
      %v2163 = vsub.s32 %v2160, %v2162
      %v2164 = vrot.slane %v2117, %v2163
      %v2166 = vunpack.c.l.s4 1934713408
      %v2167 = vunpack.c.0.s8 %v2166
      %v2168 = vlaneseq
      %v2169 = vshrl.u32 %v2168, 7
      %v2170 = vsub.s32 %v2167, %v2169
      %v2171 = vrot.slane %v2157, %v2170
      %v2172 = vcombine.high %v2124, 0.0
      %v2174 = vunpack.c.l.s4 1934713408
      %v2175 = vunpack.c.0.s8 %v2174
      %v2176 = vlaneseq
      %v2177 = vshrl.u32 %v2176, 7
      %v2178 = vsub.s32 %v2175, %v2177
      %v2179 = vrot.slane %v2124, %v2178
      %v2181 = vunpack.c.l.s4 1934713408
      %v2182 = vunpack.c.0.s8 %v2181
      %v2183 = vlaneseq
      %v2184 = vshrl.u32 %v2183, 7
      %v2185 = vsub.s32 %v2182, %v2184
      %v2186 = vrot.slane %v2172, %v2185
      %v2187 = vcombine.low %v2133, %v2164
      %v2188 = vcombine.high %v2133, %v2164
      %v2189 = vcombine.low %v2140, %v2171
      %v2190 = vcombine.high %v2140, %v2171
      %v2191 = vcombine.low %v2149, %v2179
      %v2192 = vcombine.high %v2149, %v2179
      %v2193 = vcombine.low %v2156, %v2186
      %v2194 = vcombine.high %v2156, %v2186
      %v2195 = vcombine.low %v1856, %v1863
      %v2197 = vunpack.c.l.s4 1983009808
      %v2198 = vunpack.c.0.s8 %v2197
      %v2199 = vlaneseq
      %v2200 = vshrl.u32 %v2199, 7
      %v2201 = vsub.s32 %v2198, %v2200
      %v2202 = vrot.slane %v2195, %v2201
      %v2203 = vcombine.low %v1880, %v1881
      %v2205 = vunpack.c.l.s4 1983009808
      %v2206 = vunpack.c.0.s8 %v2205
      %v2207 = vlaneseq
      %v2208 = vshrl.u32 %v2207, 7
      %v2209 = vsub.s32 %v2206, %v2208
      %v2210 = vrot.slane %v2203, %v2209
      %v2212 = vunpack.c.l.s4 1983009808
      %v2213 = vunpack.c.0.s8 %v2212
      %v2214 = vlaneseq
      %v2215 = vshrl.u32 %v2214, 7
      %v2216 = vsub.s32 %v2213, %v2215
      %v2217 = vrot.slane %v1872, %v2216
      %v2218 = vcombine.low %v2202, %v2210
      %v2219 = vcombine.high %v2202, %v2210
      %v2221 = vunpack.c.l.s4 1934713408
      %v2222 = vunpack.c.0.s8 %v2221
      %v2223 = vlaneseq
      %v2224 = vshrl.u32 %v2223, 7
      %v2225 = vsub.s32 %v2222, %v2224
      %v2226 = vrot.slane %v2218, %v2225
      %v2228 = vunpack.c.l.s4 1934713408
      %v2229 = vunpack.c.0.s8 %v2228
      %v2230 = vlaneseq
      %v2231 = vshrl.u32 %v2230, 7
      %v2232 = vsub.s32 %v2229, %v2231
      %v2233 = vrot.slane %v2219, %v2232
      %v2234 = vcombine.high %v2217, 0.0
      %v2236 = vunpack.c.l.s4 1934713408
      %v2237 = vunpack.c.0.s8 %v2236
      %v2238 = vlaneseq
      %v2239 = vshrl.u32 %v2238, 7
      %v2240 = vsub.s32 %v2237, %v2239
      %v2241 = vrot.slane %v2217, %v2240
      %v2243 = vunpack.c.l.s4 1934713408
      %v2244 = vunpack.c.0.s8 %v2243
      %v2245 = vlaneseq
      %v2246 = vshrl.u32 %v2245, 7
      %v2247 = vsub.s32 %v2244, %v2246
      %v2248 = vrot.slane %v2234, %v2247
      %v2249 = vcombine.low %v2226, %v2241
      %v2250 = vcombine.high %v2226, %v2241
      %v2251 = vcombine.low %v2233, %v2248
      %v2252 = vcombine.high %v2233, %v2248
      %v2253 = vcombine.low %v1813, %v1815
      %v2254 = vcombine.high %v1813, %v1815
      %v2256 = vunpack.c.l.s4 1983009808
      %v2257 = vunpack.c.0.s8 %v2256
      %v2258 = vlaneseq
      %v2259 = vshrl.u32 %v2258, 7
      %v2260 = vsub.s32 %v2257, %v2259
      %v2261 = vrot.slane %v2253, %v2260
      %v2263 = vunpack.c.l.s4 1983009808
      %v2264 = vunpack.c.0.s8 %v2263
      %v2265 = vlaneseq
      %v2266 = vshrl.u32 %v2265, 7
      %v2267 = vsub.s32 %v2264, %v2266
      %v2268 = vrot.slane %v2254, %v2267
      %v2269 = vcombine.low %v1814, %v2012
      %v2270 = vcombine.high %v1814, %v2012
      %v2272 = vunpack.c.l.s4 1983009808
      %v2273 = vunpack.c.0.s8 %v2272
      %v2274 = vlaneseq
      %v2275 = vshrl.u32 %v2274, 7
      %v2276 = vsub.s32 %v2273, %v2275
      %v2277 = vrot.slane %v2269, %v2276
      %v2279 = vunpack.c.l.s4 1983009808
      %v2280 = vunpack.c.0.s8 %v2279
      %v2281 = vlaneseq
      %v2282 = vshrl.u32 %v2281, 7
      %v2283 = vsub.s32 %v2280, %v2282
      %v2284 = vrot.slane %v2270, %v2283
      %v2285 = vcombine.high %v2013, 0.0
      %v2287 = vunpack.c.l.s4 1983009808
      %v2288 = vunpack.c.0.s8 %v2287
      %v2289 = vlaneseq
      %v2290 = vshrl.u32 %v2289, 7
      %v2291 = vsub.s32 %v2288, %v2290
      %v2292 = vrot.slane %v2013, %v2291
      %v2294 = vunpack.c.l.s4 1983009808
      %v2295 = vunpack.c.0.s8 %v2294
      %v2296 = vlaneseq
      %v2297 = vshrl.u32 %v2296, 7
      %v2298 = vsub.s32 %v2295, %v2297
      %v2299 = vrot.slane %v2285, %v2298
      %v2300 = vcombine.low %v2261, %v2277
      %v2301 = vcombine.high %v2261, %v2277
      %v2303 = vunpack.c.l.s4 1934713408
      %v2304 = vunpack.c.0.s8 %v2303
      %v2305 = vlaneseq
      %v2306 = vshrl.u32 %v2305, 7
      %v2307 = vsub.s32 %v2304, %v2306
      %v2308 = vrot.slane %v2300, %v2307
      %v2310 = vunpack.c.l.s4 1934713408
      %v2311 = vunpack.c.0.s8 %v2310
      %v2312 = vlaneseq
      %v2313 = vshrl.u32 %v2312, 7
      %v2314 = vsub.s32 %v2311, %v2313
      %v2315 = vrot.slane %v2301, %v2314
      %v2316 = vcombine.low %v2268, %v2284
      %v2317 = vcombine.high %v2268, %v2284
      %v2319 = vunpack.c.l.s4 1934713408
      %v2320 = vunpack.c.0.s8 %v2319
      %v2321 = vlaneseq
      %v2322 = vshrl.u32 %v2321, 7
      %v2323 = vsub.s32 %v2320, %v2322
      %v2324 = vrot.slane %v2316, %v2323
      %v2326 = vunpack.c.l.s4 1934713408
      %v2327 = vunpack.c.0.s8 %v2326
      %v2328 = vlaneseq
      %v2329 = vshrl.u32 %v2328, 7
      %v2330 = vsub.s32 %v2327, %v2329
      %v2331 = vrot.slane %v2317, %v2330
      %v2332 = vcombine.high %v2292, 0.0
      %v2334 = vunpack.c.l.s4 1934713408
      %v2335 = vunpack.c.0.s8 %v2334
      %v2336 = vlaneseq
      %v2337 = vshrl.u32 %v2336, 7
      %v2338 = vsub.s32 %v2335, %v2337
      %v2339 = vrot.slane %v2292, %v2338
      %v2341 = vunpack.c.l.s4 1934713408
      %v2342 = vunpack.c.0.s8 %v2341
      %v2343 = vlaneseq
      %v2344 = vshrl.u32 %v2343, 7
      %v2345 = vsub.s32 %v2342, %v2344
      %v2346 = vrot.slane %v2332, %v2345
      %v2347 = vcombine.high %v2299, 0.0
      %v2349 = vunpack.c.l.s4 1934713408
      %v2350 = vunpack.c.0.s8 %v2349
      %v2351 = vlaneseq
      %v2352 = vshrl.u32 %v2351, 7
      %v2353 = vsub.s32 %v2350, %v2352
      %v2354 = vrot.slane %v2299, %v2353
      %v2356 = vunpack.c.l.s4 1934713408
      %v2357 = vunpack.c.0.s8 %v2356
      %v2358 = vlaneseq
      %v2359 = vshrl.u32 %v2358, 7
      %v2360 = vsub.s32 %v2357, %v2359
      %v2361 = vrot.slane %v2347, %v2360
      %v2362 = vcombine.low %v2308, %v2339
      %v2363 = vcombine.high %v2308, %v2339
      %v2364 = vcombine.low %v2315, %v2346
      %v2365 = vcombine.high %v2315, %v2346
      %v2366 = vcombine.low %v2324, %v2354
      %v2367 = vcombine.high %v2324, %v2354
      %v2368 = vcombine.low %v2331, %v2361
      %v2369 = vcombine.high %v2331, %v2361
      %v2370 = vcombine.low %v1882, %v1883
      %v2372 = vunpack.c.l.s4 1983009808
      %v2373 = vunpack.c.0.s8 %v2372
      %v2374 = vlaneseq
      %v2375 = vshrl.u32 %v2374, 7
      %v2376 = vsub.s32 %v2373, %v2375
      %v2377 = vrot.slane %v2370, %v2376
      %v2378 = vcombine.low %v1879, %v2059
      %v2380 = vunpack.c.l.s4 1983009808
      %v2381 = vunpack.c.0.s8 %v2380
      %v2382 = vlaneseq
      %v2383 = vshrl.u32 %v2382, 7
      %v2384 = vsub.s32 %v2381, %v2383
      %v2385 = vrot.slane %v2378, %v2384
      %v2386 = vcombine.high %v2059, 0.0
      %v2388 = vunpack.c.l.s4 1983009808
      %v2389 = vunpack.c.0.s8 %v2388
      %v2390 = vlaneseq
      %v2391 = vshrl.u32 %v2390, 7
      %v2392 = vsub.s32 %v2389, %v2391
      %v2393 = vrot.slane %v2386, %v2392
      %v2394 = vcombine.low %v2377, %v2385
      %v2395 = vcombine.high %v2377, %v2385
      %v2397 = vunpack.c.l.s4 1934713408
      %v2398 = vunpack.c.0.s8 %v2397
      %v2399 = vlaneseq
      %v2400 = vshrl.u32 %v2399, 7
      %v2401 = vsub.s32 %v2398, %v2400
      %v2402 = vrot.slane %v2394, %v2401
      %v2404 = vunpack.c.l.s4 1934713408
      %v2405 = vunpack.c.0.s8 %v2404
      %v2406 = vlaneseq
      %v2407 = vshrl.u32 %v2406, 7
      %v2408 = vsub.s32 %v2405, %v2407
      %v2409 = vrot.slane %v2395, %v2408
      %v2410 = vcombine.high %v2393, 0.0
      %v2412 = vunpack.c.l.s4 1934713408
      %v2413 = vunpack.c.0.s8 %v2412
      %v2414 = vlaneseq
      %v2415 = vshrl.u32 %v2414, 7
      %v2416 = vsub.s32 %v2413, %v2415
      %v2417 = vrot.slane %v2393, %v2416
      %v2419 = vunpack.c.l.s4 1934713408
      %v2420 = vunpack.c.0.s8 %v2419
      %v2421 = vlaneseq
      %v2422 = vshrl.u32 %v2421, 7
      %v2423 = vsub.s32 %v2420, %v2422
      %v2424 = vrot.slane %v2410, %v2423
      %v2425 = vcombine.low %v2402, %v2417
      %v2426 = vcombine.high %v2402, %v2417
      %v2427 = vcombine.low %v2409, %v2424
      %v2428 = vcombine.high %v2409, %v2424
      %v2429 = vcombine.low %v2014, %v2016
      %v2430 = vcombine.high %v2014, %v2016
      %v2432 = vunpack.c.l.s4 1983009808
      %v2433 = vunpack.c.0.s8 %v2432
      %v2434 = vlaneseq
      %v2435 = vshrl.u32 %v2434, 7
      %v2436 = vsub.s32 %v2433, %v2435
      %v2437 = vrot.slane %v2429, %v2436
      %v2439 = vunpack.c.l.s4 1983009808
      %v2440 = vunpack.c.0.s8 %v2439
      %v2441 = vlaneseq
      %v2442 = vshrl.u32 %v2441, 7
      %v2443 = vsub.s32 %v2440, %v2442
      %v2444 = vrot.slane %v2430, %v2443
      %v2445 = vcombine.low %v2015, %v2017
      %v2446 = vcombine.high %v2015, %v2017
      %v2448 = vunpack.c.l.s4 1983009808
      %v2449 = vunpack.c.0.s8 %v2448
      %v2450 = vlaneseq
      %v2451 = vshrl.u32 %v2450, 7
      %v2452 = vsub.s32 %v2449, %v2451
      %v2453 = vrot.slane %v2445, %v2452
      %v2455 = vunpack.c.l.s4 1983009808
      %v2456 = vunpack.c.0.s8 %v2455
      %v2457 = vlaneseq
      %v2458 = vshrl.u32 %v2457, 7
      %v2459 = vsub.s32 %v2456, %v2458
      %v2460 = vrot.slane %v2446, %v2459
      %v2461 = vcombine.high %v2018, 0.0
      %v2463 = vunpack.c.l.s4 1983009808
      %v2464 = vunpack.c.0.s8 %v2463
      %v2465 = vlaneseq
      %v2466 = vshrl.u32 %v2465, 7
      %v2467 = vsub.s32 %v2464, %v2466
      %v2468 = vrot.slane %v2018, %v2467
      %v2470 = vunpack.c.l.s4 1983009808
      %v2471 = vunpack.c.0.s8 %v2470
      %v2472 = vlaneseq
      %v2473 = vshrl.u32 %v2472, 7
      %v2474 = vsub.s32 %v2471, %v2473
      %v2475 = vrot.slane %v2461, %v2474
      %v2476 = vcombine.low %v2437, %v2453
      %v2477 = vcombine.high %v2437, %v2453
      %v2479 = vunpack.c.l.s4 1934713408
      %v2480 = vunpack.c.0.s8 %v2479
      %v2481 = vlaneseq
      %v2482 = vshrl.u32 %v2481, 7
      %v2483 = vsub.s32 %v2480, %v2482
      %v2484 = vrot.slane %v2476, %v2483
      %v2486 = vunpack.c.l.s4 1934713408
      %v2487 = vunpack.c.0.s8 %v2486
      %v2488 = vlaneseq
      %v2489 = vshrl.u32 %v2488, 7
      %v2490 = vsub.s32 %v2487, %v2489
      %v2491 = vrot.slane %v2477, %v2490
      %v2492 = vcombine.low %v2444, %v2460
      %v2493 = vcombine.high %v2444, %v2460
      %v2495 = vunpack.c.l.s4 1934713408
      %v2496 = vunpack.c.0.s8 %v2495
      %v2497 = vlaneseq
      %v2498 = vshrl.u32 %v2497, 7
      %v2499 = vsub.s32 %v2496, %v2498
      %v2500 = vrot.slane %v2492, %v2499
      %v2502 = vunpack.c.l.s4 1934713408
      %v2503 = vunpack.c.0.s8 %v2502
      %v2504 = vlaneseq
      %v2505 = vshrl.u32 %v2504, 7
      %v2506 = vsub.s32 %v2503, %v2505
      %v2507 = vrot.slane %v2493, %v2506
      %v2508 = vcombine.high %v2468, 0.0
      %v2510 = vunpack.c.l.s4 1934713408
      %v2511 = vunpack.c.0.s8 %v2510
      %v2512 = vlaneseq
      %v2513 = vshrl.u32 %v2512, 7
      %v2514 = vsub.s32 %v2511, %v2513
      %v2515 = vrot.slane %v2468, %v2514
      %v2517 = vunpack.c.l.s4 1934713408
      %v2518 = vunpack.c.0.s8 %v2517
      %v2519 = vlaneseq
      %v2520 = vshrl.u32 %v2519, 7
      %v2521 = vsub.s32 %v2518, %v2520
      %v2522 = vrot.slane %v2508, %v2521
      %v2523 = vcombine.high %v2475, 0.0
      %v2525 = vunpack.c.l.s4 1934713408
      %v2526 = vunpack.c.0.s8 %v2525
      %v2527 = vlaneseq
      %v2528 = vshrl.u32 %v2527, 7
      %v2529 = vsub.s32 %v2526, %v2528
      %v2530 = vrot.slane %v2475, %v2529
      %v2532 = vunpack.c.l.s4 1934713408
      %v2533 = vunpack.c.0.s8 %v2532
      %v2534 = vlaneseq
      %v2535 = vshrl.u32 %v2534, 7
      %v2536 = vsub.s32 %v2533, %v2535
      %v2537 = vrot.slane %v2523, %v2536
      %v2538 = vcombine.low %v2484, %v2515
      %v2539 = vcombine.high %v2484, %v2515
      %v2540 = vcombine.low %v2491, %v2522
      %v2541 = vcombine.high %v2491, %v2522
      %v2542 = vcombine.low %v2500, %v2530
      %v2543 = vcombine.high %v2500, %v2530
      %v2544 = vcombine.low %v2507, %v2537
      %v2545 = vcombine.high %v2507, %v2537
      %v2546 = vcombine.low %v2066, %v2075
      %v2548 = vunpack.c.l.s4 1983009808
      %v2549 = vunpack.c.0.s8 %v2548
      %v2550 = vlaneseq
      %v2551 = vshrl.u32 %v2550, 7
      %v2552 = vsub.s32 %v2549, %v2551
      %v2553 = vrot.slane %v2546, %v2552
      %v2554 = vcombine.low %v2076, %v2077
      %v2556 = vunpack.c.l.s4 1983009808
      %v2557 = vunpack.c.0.s8 %v2556
      %v2558 = vlaneseq
      %v2559 = vshrl.u32 %v2558, 7
      %v2560 = vsub.s32 %v2557, %v2559
      %v2561 = vrot.slane %v2554, %v2560
      %v2563 = vunpack.c.l.s4 1934713408
      %v2564 = vunpack.c.0.s8 %v2563
      %v2565 = vlaneseq
      %v2566 = vshrl.u32 %v2565, 7
      %v2567 = vsub.s32 %v2564, %v2566
      %v2568 = vrot.slane %v2068, %v2567
      %v2570 = vunpack.c.l.s4 1983009808
      %v2571 = vunpack.c.0.s8 %v2570
      %v2572 = vlaneseq
      %v2573 = vshrl.u32 %v2572, 7
      %v2574 = vsub.s32 %v2571, %v2573
      %v2575 = vrot.slane %v2568, %v2574
      %v2576 = vcombine.low %v2553, %v2561
      %v2577 = vcombine.high %v2553, %v2561
      %v2579 = vunpack.c.l.s4 1934713408
      %v2580 = vunpack.c.0.s8 %v2579
      %v2581 = vlaneseq
      %v2582 = vshrl.u32 %v2581, 7
      %v2583 = vsub.s32 %v2580, %v2582
      %v2584 = vrot.slane %v2576, %v2583
      %v2586 = vunpack.c.l.s4 1934713408
      %v2587 = vunpack.c.0.s8 %v2586
      %v2588 = vlaneseq
      %v2589 = vshrl.u32 %v2588, 7
      %v2590 = vsub.s32 %v2587, %v2589
      %v2591 = vrot.slane %v2577, %v2590
      %v2592 = vcombine.high %v2575, 0.0
      %v2594 = vunpack.c.l.s4 1934713408
      %v2595 = vunpack.c.0.s8 %v2594
      %v2596 = vlaneseq
      %v2597 = vshrl.u32 %v2596, 7
      %v2598 = vsub.s32 %v2595, %v2597
      %v2599 = vrot.slane %v2575, %v2598
      %v2601 = vunpack.c.l.s4 1934713408
      %v2602 = vunpack.c.0.s8 %v2601
      %v2603 = vlaneseq
      %v2604 = vshrl.u32 %v2603, 7
      %v2605 = vsub.s32 %v2602, %v2604
      %v2606 = vrot.slane %v2592, %v2605
      %v2607 = vcombine.low %v2584, %v2599
      %v2608 = vcombine.high %v2584, %v2599
      %v2609 = vcombine.low %v2591, %v2606
      %v2610 = vcombine.high %v2591, %v2606
      %v2611 = vmul.f32 %v2187, 0.25
      %v2612 = vmul.f32 %v2188, 0.25
      %v2613 = vmul.f32 %v2189, 0.25
      %v2614 = vmul.f32 %v2190, 0.25
      %v2615 = vmul.f32 %v2362, 0.25
      %v2616 = vmul.f32 %v2363, 0.25
      %v2617 = vmul.f32 %v2364, 0.25
      %v2618 = vmul.f32 %v2365, 0.25
      %v2619 = vmul.f32 %v2538, 0.25
      %v2620 = vmul.f32 %v2539, 0.25
      %v2621 = vmul.f32 %v2540, 0.25
      %v2622 = vmul.f32 %v2541, 0.25
      %v2623 = vpack.c.bf16 %v2611, %v2611
      %v2624 = vpack.c.bf16 %v2612, %v2612
      %v2625 = vpack.c.bf16 %v2613, %v2613
      %v2626 = vpack.c.bf16 %v2614, %v2614
      %v2627 = vpack.c.bf16 %v2615, %v2615
      %v2628 = vpack.c.bf16 %v2616, %v2616
      %v2629 = vpack.c.bf16 %v2617, %v2617
      %v2630 = vpack.c.bf16 %v2618, %v2618
      %v2631 = vpack.c.bf16 %v2619, %v2619
      %v2632 = vpack.c.bf16 %v2620, %v2620
      %v2633 = vpack.c.bf16 %v2621, %v2621
      %v2634 = vpack.c.bf16 %v2622, %v2622
      %v2635 = vpack.c.bf16 %v2191, %v2191
      %v2636 = vpack.c.bf16 %v2192, %v2192
      %v2637 = vpack.c.bf16 %v2193, %v2193
      %v2638 = vpack.c.bf16 %v2194, %v2194
      %v2639 = vpack.c.bf16 %v2366, %v2366
      %v2640 = vpack.c.bf16 %v2367, %v2367
      %v2641 = vpack.c.bf16 %v2368, %v2368
      %v2642 = vpack.c.bf16 %v2369, %v2369
      %v2643 = vpack.c.bf16 %v2542, %v2542
      %v2644 = vpack.c.bf16 %v2543, %v2543
      %v2645 = vpack.c.bf16 %v2544, %v2544
      %v2646 = vpack.c.bf16 %v2545, %v2545
      %v2647 = vpack.c.bf16 %v2249, %v2249
      %v2648 = vpack.c.bf16 %v2250, %v2250
      %v2649 = vpack.c.bf16 %v2251, %v2251
      %v2650 = vpack.c.bf16 %v2252, %v2252
      %v2651 = vpack.c.bf16 %v2425, %v2425
      %v2652 = vpack.c.bf16 %v2426, %v2426
      %v2653 = vpack.c.bf16 %v2427, %v2427
      %v2654 = vpack.c.bf16 %v2428, %v2428
      %v2655 = vpack.c.bf16 %v2607, %v2607
      %v2656 = vpack.c.bf16 %v2608, %v2608
      %v2657 = vpack.c.bf16 %v2609, %v2609
      %v2658 = vpack.c.bf16 %v2610, %v2610
      %vm2659 = vcmask 130048
      %v2661 = vsel %vm2659, %v2623, 0
      %v2664 = vsel %vm2659, %v2635, 0
      %2666 = vmatprep.subr.bf16.mxu0 0
      %2667 = vmatpush1.bf16.xpose.msra.mxu0 %v2664
      %2668 = vmatprep.subr.bf16.mxu0 0
      %2669 = vmatpush1.bf16.xpose.msra.mxu0 0
      %2670 = vmatprep.subr.bf16.mxu0 0
      %2671 = vmatpush1.bf16.xpose.msra.mxu0 0
      %2672 = vmatprep.subr.bf16.mxu0 0
      %2673 = vmatpush1.bf16.xpose.msra.mxu0 0
      %2674 = vmatprep.subr.bf16.mxu0 0
      %2675 = vmatpush1.bf16.xpose.msra.mxu0 0
      %2676 = vmatprep.subr.bf16.mxu0 0
      %2677 = vmatpush1.bf16.xpose.msra.mxu0 0
      %2678 = vmatprep.subr.bf16.mxu0 0
      %2679 = vmatpush1.bf16.xpose.msra.mxu0 0
      %2680 = vmatprep.subr.bf16.mxu0 0
      %2681 = vmatpush1.bf16.xpose.msra.mxu0 0
      %2682 = vmatprep.subr.bf16.mxu0 0
      %2683 = vmatpush1.bf16.xpose.msra.mxu0 0
      %2684 = vmatprep.subr.bf16.mxu0 0
      %2685 = vmatpush1.bf16.xpose.msra.mxu0 0
      %2686 = vmatprep.subr.bf16.mxu0 0
      %2687 = vmatpush1.bf16.xpose.msra.mxu0 0
      %2688 = vmatprep.subr.bf16.mxu0 0
      %2689 = vmatpush1.bf16.xpose.msra.mxu0 0
      %2690 = vmatprep.subr.bf16.mxu0 0
      %2691 = vmatpush1.bf16.xpose.msra.mxu0 0
      %2692 = vmatprep.subr.bf16.mxu0 0
      %2693 = vmatpush1.bf16.xpose.msra.mxu0 0
      %2694 = vmatprep.subr.bf16.mxu0 0
      %2695 = vmatpush1.bf16.xpose.msra.mxu0 0
      %2696 = vmatprep.subr.bf16.mxu0 0
      %2697 = vmatpush1.bf16.xpose.msra.mxu0 0
      %2698 = vmatprep.mubr.bf16.mxu0 0
      %2699 = vmatmul.mubr.bf16.gmra.mrb[0].mxu0 %v2661
      %v2700 = vpop.f32.mrb[0].mxu0
      %v2701 = vadd.f32 0.0, %v2700
      %v2702 = vpop.f32.mrb[0].mxu0
      %v2703 = vpop.f32.mrb[0].mxu0
      %v2704 = vpop.f32.mrb[0].mxu0
      %2705 = vdwg.mxu0
      %v2707 = vsel %vm2659, %v2624, 0
      %v2710 = vsel %vm2659, %v2636, 0
      %2712 = vmatprep.subr.bf16.mxu0 0
      %2713 = vmatpush1.bf16.xpose.msra.mxu0 %v2710
      %2714 = vmatprep.subr.bf16.mxu0 0
      %2715 = vmatpush1.bf16.xpose.msra.mxu0 0
      %2716 = vmatprep.subr.bf16.mxu0 0
      %2717 = vmatpush1.bf16.xpose.msra.mxu0 0
      %2718 = vmatprep.subr.bf16.mxu0 0
      %2719 = vmatpush1.bf16.xpose.msra.mxu0 0
      %2720 = vmatprep.subr.bf16.mxu0 0
      %2721 = vmatpush1.bf16.xpose.msra.mxu0 0
      %2722 = vmatprep.subr.bf16.mxu0 0
      %2723 = vmatpush1.bf16.xpose.msra.mxu0 0
      %2724 = vmatprep.subr.bf16.mxu0 0
      %2725 = vmatpush1.bf16.xpose.msra.mxu0 0
      %2726 = vmatprep.subr.bf16.mxu0 0
      %2727 = vmatpush1.bf16.xpose.msra.mxu0 0
      %2728 = vmatprep.subr.bf16.mxu0 0
      %2729 = vmatpush1.bf16.xpose.msra.mxu0 0
      %2730 = vmatprep.subr.bf16.mxu0 0
      %2731 = vmatpush1.bf16.xpose.msra.mxu0 0
      %2732 = vmatprep.subr.bf16.mxu0 0
      %2733 = vmatpush1.bf16.xpose.msra.mxu0 0
      %2734 = vmatprep.subr.bf16.mxu0 0
      %2735 = vmatpush1.bf16.xpose.msra.mxu0 0
      %2736 = vmatprep.subr.bf16.mxu0 0
      %2737 = vmatpush1.bf16.xpose.msra.mxu0 0
      %2738 = vmatprep.subr.bf16.mxu0 0
      %2739 = vmatpush1.bf16.xpose.msra.mxu0 0
      %2740 = vmatprep.subr.bf16.mxu0 0
      %2741 = vmatpush1.bf16.xpose.msra.mxu0 0
      %2742 = vmatprep.subr.bf16.mxu0 0
      %2743 = vmatpush1.bf16.xpose.msra.mxu0 0
      %2744 = vmatprep.mubr.bf16.mxu0 0
      %2745 = vmatmul.mubr.bf16.gmra.mrb[0].mxu0 %v2707
      %v2746 = vpop.f32.mrb[0].mxu0
      %v2747 = vadd.f32 0.0, %v2746
      %v2748 = vpop.f32.mrb[0].mxu0
      %v2749 = vpop.f32.mrb[0].mxu0
      %v2750 = vpop.f32.mrb[0].mxu0
      %2751 = vdwg.mxu0
      %v2753 = vsel %vm2659, %v2625, 0
      %v2756 = vsel %vm2659, %v2637, 0
      %2758 = vmatprep.subr.bf16.mxu0 0
      %2759 = vmatpush1.bf16.xpose.msra.mxu0 %v2756
      %2760 = vmatprep.subr.bf16.mxu0 0
      %2761 = vmatpush1.bf16.xpose.msra.mxu0 0
      %2762 = vmatprep.subr.bf16.mxu0 0
      %2763 = vmatpush1.bf16.xpose.msra.mxu0 0
      %2764 = vmatprep.subr.bf16.mxu0 0
      %2765 = vmatpush1.bf16.xpose.msra.mxu0 0
      %2766 = vmatprep.subr.bf16.mxu0 0
      %2767 = vmatpush1.bf16.xpose.msra.mxu0 0
      %2768 = vmatprep.subr.bf16.mxu0 0
      %2769 = vmatpush1.bf16.xpose.msra.mxu0 0
      %2770 = vmatprep.subr.bf16.mxu0 0
      %2771 = vmatpush1.bf16.xpose.msra.mxu0 0
      %2772 = vmatprep.subr.bf16.mxu0 0
      %2773 = vmatpush1.bf16.xpose.msra.mxu0 0
      %2774 = vmatprep.subr.bf16.mxu0 0
      %2775 = vmatpush1.bf16.xpose.msra.mxu0 0
      %2776 = vmatprep.subr.bf16.mxu0 0
      %2777 = vmatpush1.bf16.xpose.msra.mxu0 0
      %2778 = vmatprep.subr.bf16.mxu0 0
      %2779 = vmatpush1.bf16.xpose.msra.mxu0 0
      %2780 = vmatprep.subr.bf16.mxu0 0
      %2781 = vmatpush1.bf16.xpose.msra.mxu0 0
      %2782 = vmatprep.subr.bf16.mxu0 0
      %2783 = vmatpush1.bf16.xpose.msra.mxu0 0
      %2784 = vmatprep.subr.bf16.mxu0 0
      %2785 = vmatpush1.bf16.xpose.msra.mxu0 0
      %2786 = vmatprep.subr.bf16.mxu0 0
      %2787 = vmatpush1.bf16.xpose.msra.mxu0 0
      %2788 = vmatprep.subr.bf16.mxu0 0
      %2789 = vmatpush1.bf16.xpose.msra.mxu0 0
      %2790 = vmatprep.mubr.bf16.mxu0 0
      %2791 = vmatmul.mubr.bf16.gmra.mrb[0].mxu0 %v2753
      %v2792 = vpop.f32.mrb[0].mxu0
      %v2793 = vadd.f32 0.0, %v2792
      %v2794 = vpop.f32.mrb[0].mxu0
      %v2795 = vpop.f32.mrb[0].mxu0
      %v2796 = vpop.f32.mrb[0].mxu0
      %2797 = vdwg.mxu0
      %v2799 = vsel %vm2659, %v2626, 0
      %v2802 = vsel %vm2659, %v2638, 0
      %2804 = vmatprep.subr.bf16.mxu0 0
      %2805 = vmatpush1.bf16.xpose.msra.mxu0 %v2802
      %2806 = vmatprep.subr.bf16.mxu0 0
      %2807 = vmatpush1.bf16.xpose.msra.mxu0 0
      %2808 = vmatprep.subr.bf16.mxu0 0
      %2809 = vmatpush1.bf16.xpose.msra.mxu0 0
      %2810 = vmatprep.subr.bf16.mxu0 0
      %2811 = vmatpush1.bf16.xpose.msra.mxu0 0
      %2812 = vmatprep.subr.bf16.mxu0 0
      %2813 = vmatpush1.bf16.xpose.msra.mxu0 0
      %2814 = vmatprep.subr.bf16.mxu0 0
      %2815 = vmatpush1.bf16.xpose.msra.mxu0 0
      %2816 = vmatprep.subr.bf16.mxu0 0
      %2817 = vmatpush1.bf16.xpose.msra.mxu0 0
      %2818 = vmatprep.subr.bf16.mxu0 0
      %2819 = vmatpush1.bf16.xpose.msra.mxu0 0
      %2820 = vmatprep.subr.bf16.mxu0 0
      %2821 = vmatpush1.bf16.xpose.msra.mxu0 0
      %2822 = vmatprep.subr.bf16.mxu0 0
      %2823 = vmatpush1.bf16.xpose.msra.mxu0 0
      %2824 = vmatprep.subr.bf16.mxu0 0
      %2825 = vmatpush1.bf16.xpose.msra.mxu0 0
      %2826 = vmatprep.subr.bf16.mxu0 0
      %2827 = vmatpush1.bf16.xpose.msra.mxu0 0
      %2828 = vmatprep.subr.bf16.mxu0 0
      %2829 = vmatpush1.bf16.xpose.msra.mxu0 0
      %2830 = vmatprep.subr.bf16.mxu0 0
      %2831 = vmatpush1.bf16.xpose.msra.mxu0 0
      %2832 = vmatprep.subr.bf16.mxu0 0
      %2833 = vmatpush1.bf16.xpose.msra.mxu0 0
      %2834 = vmatprep.subr.bf16.mxu0 0
      %2835 = vmatpush1.bf16.xpose.msra.mxu0 0
      %2836 = vmatprep.mubr.bf16.mxu0 0
      %2837 = vmatmul.mubr.bf16.gmra.mrb[0].mxu0 %v2799
      %v2838 = vpop.f32.mrb[0].mxu0
      %v2839 = vadd.f32 0.0, %v2838
      %v2840 = vpop.f32.mrb[0].mxu0
      %v2841 = vpop.f32.mrb[0].mxu0
      %v2842 = vpop.f32.mrb[0].mxu0
      %2843 = vdwg.mxu0
      %v2845 = vsel %vm2659, %v2627, 0
      %v2848 = vsel %vm2659, %v2639, 0
      %2850 = vmatprep.subr.bf16.mxu0 0
      %2851 = vmatpush1.bf16.xpose.msra.mxu0 %v2848
      %2852 = vmatprep.subr.bf16.mxu0 0
      %2853 = vmatpush1.bf16.xpose.msra.mxu0 0
      %2854 = vmatprep.subr.bf16.mxu0 0
      %2855 = vmatpush1.bf16.xpose.msra.mxu0 0
      %2856 = vmatprep.subr.bf16.mxu0 0
      %2857 = vmatpush1.bf16.xpose.msra.mxu0 0
      %2858 = vmatprep.subr.bf16.mxu0 0
      %2859 = vmatpush1.bf16.xpose.msra.mxu0 0
      %2860 = vmatprep.subr.bf16.mxu0 0
      %2861 = vmatpush1.bf16.xpose.msra.mxu0 0
      %2862 = vmatprep.subr.bf16.mxu0 0
      %2863 = vmatpush1.bf16.xpose.msra.mxu0 0
      %2864 = vmatprep.subr.bf16.mxu0 0
      %2865 = vmatpush1.bf16.xpose.msra.mxu0 0
      %2866 = vmatprep.subr.bf16.mxu0 0
      %2867 = vmatpush1.bf16.xpose.msra.mxu0 0
      %2868 = vmatprep.subr.bf16.mxu0 0
      %2869 = vmatpush1.bf16.xpose.msra.mxu0 0
      %2870 = vmatprep.subr.bf16.mxu0 0
      %2871 = vmatpush1.bf16.xpose.msra.mxu0 0
      %2872 = vmatprep.subr.bf16.mxu0 0
      %2873 = vmatpush1.bf16.xpose.msra.mxu0 0
      %2874 = vmatprep.subr.bf16.mxu0 0
      %2875 = vmatpush1.bf16.xpose.msra.mxu0 0
      %2876 = vmatprep.subr.bf16.mxu0 0
      %2877 = vmatpush1.bf16.xpose.msra.mxu0 0
      %2878 = vmatprep.subr.bf16.mxu0 0
      %2879 = vmatpush1.bf16.xpose.msra.mxu0 0
      %2880 = vmatprep.subr.bf16.mxu0 0
      %2881 = vmatpush1.bf16.xpose.msra.mxu0 0
      %2882 = vmatprep.mubr.bf16.mxu0 0
      %2883 = vmatmul.mubr.bf16.gmra.mrb[0].mxu0 %v2845
      %v2884 = vpop.f32.mrb[0].mxu0
      %v2885 = vadd.f32 0.0, %v2884
      %v2886 = vpop.f32.mrb[0].mxu0
      %v2887 = vpop.f32.mrb[0].mxu0
      %v2888 = vpop.f32.mrb[0].mxu0
      %2889 = vdwg.mxu0
      %v2891 = vsel %vm2659, %v2628, 0
      %v2894 = vsel %vm2659, %v2640, 0
      %2896 = vmatprep.subr.bf16.mxu0 0
      %2897 = vmatpush1.bf16.xpose.msra.mxu0 %v2894
      %2898 = vmatprep.subr.bf16.mxu0 0
      %2899 = vmatpush1.bf16.xpose.msra.mxu0 0
      %2900 = vmatprep.subr.bf16.mxu0 0
      %2901 = vmatpush1.bf16.xpose.msra.mxu0 0
      %2902 = vmatprep.subr.bf16.mxu0 0
      %2903 = vmatpush1.bf16.xpose.msra.mxu0 0
      %2904 = vmatprep.subr.bf16.mxu0 0
      %2905 = vmatpush1.bf16.xpose.msra.mxu0 0
      %2906 = vmatprep.subr.bf16.mxu0 0
      %2907 = vmatpush1.bf16.xpose.msra.mxu0 0
      %2908 = vmatprep.subr.bf16.mxu0 0
      %2909 = vmatpush1.bf16.xpose.msra.mxu0 0
      %2910 = vmatprep.subr.bf16.mxu0 0
      %2911 = vmatpush1.bf16.xpose.msra.mxu0 0
      %2912 = vmatprep.subr.bf16.mxu0 0
      %2913 = vmatpush1.bf16.xpose.msra.mxu0 0
      %2914 = vmatprep.subr.bf16.mxu0 0
      %2915 = vmatpush1.bf16.xpose.msra.mxu0 0
      %2916 = vmatprep.subr.bf16.mxu0 0
      %2917 = vmatpush1.bf16.xpose.msra.mxu0 0
      %2918 = vmatprep.subr.bf16.mxu0 0
      %2919 = vmatpush1.bf16.xpose.msra.mxu0 0
      %2920 = vmatprep.subr.bf16.mxu0 0
      %2921 = vmatpush1.bf16.xpose.msra.mxu0 0
      %2922 = vmatprep.subr.bf16.mxu0 0
      %2923 = vmatpush1.bf16.xpose.msra.mxu0 0
      %2924 = vmatprep.subr.bf16.mxu0 0
      %2925 = vmatpush1.bf16.xpose.msra.mxu0 0
      %2926 = vmatprep.subr.bf16.mxu0 0
      %2927 = vmatpush1.bf16.xpose.msra.mxu0 0
      %2928 = vmatprep.mubr.bf16.mxu0 0
      %2929 = vmatmul.mubr.bf16.gmra.mrb[0].mxu0 %v2891
      %v2930 = vpop.f32.mrb[0].mxu0
      %v2931 = vadd.f32 0.0, %v2930
      %v2932 = vpop.f32.mrb[0].mxu0
      %v2933 = vpop.f32.mrb[0].mxu0
      %v2934 = vpop.f32.mrb[0].mxu0
      %2935 = vdwg.mxu0
      %v2937 = vsel %vm2659, %v2629, 0
      %v2940 = vsel %vm2659, %v2641, 0
      %2942 = vmatprep.subr.bf16.mxu0 0
      %2943 = vmatpush1.bf16.xpose.msra.mxu0 %v2940
      %2944 = vmatprep.subr.bf16.mxu0 0
      %2945 = vmatpush1.bf16.xpose.msra.mxu0 0
      %2946 = vmatprep.subr.bf16.mxu0 0
      %2947 = vmatpush1.bf16.xpose.msra.mxu0 0
      %2948 = vmatprep.subr.bf16.mxu0 0
      %2949 = vmatpush1.bf16.xpose.msra.mxu0 0
      %2950 = vmatprep.subr.bf16.mxu0 0
      %2951 = vmatpush1.bf16.xpose.msra.mxu0 0
      %2952 = vmatprep.subr.bf16.mxu0 0
      %2953 = vmatpush1.bf16.xpose.msra.mxu0 0
      %2954 = vmatprep.subr.bf16.mxu0 0
      %2955 = vmatpush1.bf16.xpose.msra.mxu0 0
      %2956 = vmatprep.subr.bf16.mxu0 0
      %2957 = vmatpush1.bf16.xpose.msra.mxu0 0
      %2958 = vmatprep.subr.bf16.mxu0 0
      %2959 = vmatpush1.bf16.xpose.msra.mxu0 0
      %2960 = vmatprep.subr.bf16.mxu0 0
      %2961 = vmatpush1.bf16.xpose.msra.mxu0 0
      %2962 = vmatprep.subr.bf16.mxu0 0
      %2963 = vmatpush1.bf16.xpose.msra.mxu0 0
      %2964 = vmatprep.subr.bf16.mxu0 0
      %2965 = vmatpush1.bf16.xpose.msra.mxu0 0
      %2966 = vmatprep.subr.bf16.mxu0 0
      %2967 = vmatpush1.bf16.xpose.msra.mxu0 0
      %2968 = vmatprep.subr.bf16.mxu0 0
      %2969 = vmatpush1.bf16.xpose.msra.mxu0 0
      %2970 = vmatprep.subr.bf16.mxu0 0
      %2971 = vmatpush1.bf16.xpose.msra.mxu0 0
      %2972 = vmatprep.subr.bf16.mxu0 0
      %2973 = vmatpush1.bf16.xpose.msra.mxu0 0
      %2974 = vmatprep.mubr.bf16.mxu0 0
      %2975 = vmatmul.mubr.bf16.gmra.mrb[0].mxu0 %v2937
      %v2976 = vpop.f32.mrb[0].mxu0
      %v2977 = vadd.f32 0.0, %v2976
      %v2978 = vpop.f32.mrb[0].mxu0
      %v2979 = vpop.f32.mrb[0].mxu0
      %v2980 = vpop.f32.mrb[0].mxu0
      %2981 = vdwg.mxu0
      %v2983 = vsel %vm2659, %v2630, 0
      %v2986 = vsel %vm2659, %v2642, 0
      %2988 = vmatprep.subr.bf16.mxu0 0
      %2989 = vmatpush1.bf16.xpose.msra.mxu0 %v2986
      %2990 = vmatprep.subr.bf16.mxu0 0
      %2991 = vmatpush1.bf16.xpose.msra.mxu0 0
      %2992 = vmatprep.subr.bf16.mxu0 0
      %2993 = vmatpush1.bf16.xpose.msra.mxu0 0
      %2994 = vmatprep.subr.bf16.mxu0 0
      %2995 = vmatpush1.bf16.xpose.msra.mxu0 0
      %2996 = vmatprep.subr.bf16.mxu0 0
      %2997 = vmatpush1.bf16.xpose.msra.mxu0 0
      %2998 = vmatprep.subr.bf16.mxu0 0
      %2999 = vmatpush1.bf16.xpose.msra.mxu0 0
      %3000 = vmatprep.subr.bf16.mxu0 0
      %3001 = vmatpush1.bf16.xpose.msra.mxu0 0
      %3002 = vmatprep.subr.bf16.mxu0 0
      %3003 = vmatpush1.bf16.xpose.msra.mxu0 0
      %3004 = vmatprep.subr.bf16.mxu0 0
      %3005 = vmatpush1.bf16.xpose.msra.mxu0 0
      %3006 = vmatprep.subr.bf16.mxu0 0
      %3007 = vmatpush1.bf16.xpose.msra.mxu0 0
      %3008 = vmatprep.subr.bf16.mxu0 0
      %3009 = vmatpush1.bf16.xpose.msra.mxu0 0
      %3010 = vmatprep.subr.bf16.mxu0 0
      %3011 = vmatpush1.bf16.xpose.msra.mxu0 0
      %3012 = vmatprep.subr.bf16.mxu0 0
      %3013 = vmatpush1.bf16.xpose.msra.mxu0 0
      %3014 = vmatprep.subr.bf16.mxu0 0
      %3015 = vmatpush1.bf16.xpose.msra.mxu0 0
      %3016 = vmatprep.subr.bf16.mxu0 0
      %3017 = vmatpush1.bf16.xpose.msra.mxu0 0
      %3018 = vmatprep.subr.bf16.mxu0 0
      %3019 = vmatpush1.bf16.xpose.msra.mxu0 0
      %3020 = vmatprep.mubr.bf16.mxu0 0
      %3021 = vmatmul.mubr.bf16.gmra.mrb[0].mxu0 %v2983
      %v3022 = vpop.f32.mrb[0].mxu0
      %v3023 = vadd.f32 0.0, %v3022
      %v3024 = vpop.f32.mrb[0].mxu0
      %v3025 = vpop.f32.mrb[0].mxu0
      %v3026 = vpop.f32.mrb[0].mxu0
      %3027 = vdwg.mxu0
      %v3029 = vsel %vm2659, %v2631, 0
      %v3032 = vsel %vm2659, %v2643, 0
      %3034 = vmatprep.subr.bf16.mxu0 0
      %3035 = vmatpush1.bf16.xpose.msra.mxu0 %v3032
      %3036 = vmatprep.subr.bf16.mxu0 0
      %3037 = vmatpush1.bf16.xpose.msra.mxu0 0
      %3038 = vmatprep.subr.bf16.mxu0 0
      %3039 = vmatpush1.bf16.xpose.msra.mxu0 0
      %3040 = vmatprep.subr.bf16.mxu0 0
      %3041 = vmatpush1.bf16.xpose.msra.mxu0 0
      %3042 = vmatprep.subr.bf16.mxu0 0
      %3043 = vmatpush1.bf16.xpose.msra.mxu0 0
      %3044 = vmatprep.subr.bf16.mxu0 0
      %3045 = vmatpush1.bf16.xpose.msra.mxu0 0
      %3046 = vmatprep.subr.bf16.mxu0 0
      %3047 = vmatpush1.bf16.xpose.msra.mxu0 0
      %3048 = vmatprep.subr.bf16.mxu0 0
      %3049 = vmatpush1.bf16.xpose.msra.mxu0 0
      %3050 = vmatprep.subr.bf16.mxu0 0
      %3051 = vmatpush1.bf16.xpose.msra.mxu0 0
      %3052 = vmatprep.subr.bf16.mxu0 0
      %3053 = vmatpush1.bf16.xpose.msra.mxu0 0
      %3054 = vmatprep.subr.bf16.mxu0 0
      %3055 = vmatpush1.bf16.xpose.msra.mxu0 0
      %3056 = vmatprep.subr.bf16.mxu0 0
      %3057 = vmatpush1.bf16.xpose.msra.mxu0 0
      %3058 = vmatprep.subr.bf16.mxu0 0
      %3059 = vmatpush1.bf16.xpose.msra.mxu0 0
      %3060 = vmatprep.subr.bf16.mxu0 0
      %3061 = vmatpush1.bf16.xpose.msra.mxu0 0
      %3062 = vmatprep.subr.bf16.mxu0 0
      %3063 = vmatpush1.bf16.xpose.msra.mxu0 0
      %3064 = vmatprep.subr.bf16.mxu0 0
      %3065 = vmatpush1.bf16.xpose.msra.mxu0 0
      %3066 = vmatprep.mubr.bf16.mxu0 0
      %3067 = vmatmul.mubr.bf16.gmra.mrb[0].mxu0 %v3029
      %v3068 = vpop.f32.mrb[0].mxu0
      %v3069 = vadd.f32 0.0, %v3068
      %v3070 = vpop.f32.mrb[0].mxu0
      %v3071 = vpop.f32.mrb[0].mxu0
      %v3072 = vpop.f32.mrb[0].mxu0
      %3073 = vdwg.mxu0
      %v3075 = vsel %vm2659, %v2632, 0
      %v3078 = vsel %vm2659, %v2644, 0
      %3080 = vmatprep.subr.bf16.mxu0 0
      %3081 = vmatpush1.bf16.xpose.msra.mxu0 %v3078
      %3082 = vmatprep.subr.bf16.mxu0 0
      %3083 = vmatpush1.bf16.xpose.msra.mxu0 0
      %3084 = vmatprep.subr.bf16.mxu0 0
      %3085 = vmatpush1.bf16.xpose.msra.mxu0 0
      %3086 = vmatprep.subr.bf16.mxu0 0
      %3087 = vmatpush1.bf16.xpose.msra.mxu0 0
      %3088 = vmatprep.subr.bf16.mxu0 0
      %3089 = vmatpush1.bf16.xpose.msra.mxu0 0
      %3090 = vmatprep.subr.bf16.mxu0 0
      %3091 = vmatpush1.bf16.xpose.msra.mxu0 0
      %3092 = vmatprep.subr.bf16.mxu0 0
      %3093 = vmatpush1.bf16.xpose.msra.mxu0 0
      %3094 = vmatprep.subr.bf16.mxu0 0
      %3095 = vmatpush1.bf16.xpose.msra.mxu0 0
      %3096 = vmatprep.subr.bf16.mxu0 0
      %3097 = vmatpush1.bf16.xpose.msra.mxu0 0
      %3098 = vmatprep.subr.bf16.mxu0 0
      %3099 = vmatpush1.bf16.xpose.msra.mxu0 0
      %3100 = vmatprep.subr.bf16.mxu0 0
      %3101 = vmatpush1.bf16.xpose.msra.mxu0 0
      %3102 = vmatprep.subr.bf16.mxu0 0
      %3103 = vmatpush1.bf16.xpose.msra.mxu0 0
      %3104 = vmatprep.subr.bf16.mxu0 0
      %3105 = vmatpush1.bf16.xpose.msra.mxu0 0
      %3106 = vmatprep.subr.bf16.mxu0 0
      %3107 = vmatpush1.bf16.xpose.msra.mxu0 0
      %3108 = vmatprep.subr.bf16.mxu0 0
      %3109 = vmatpush1.bf16.xpose.msra.mxu0 0
      %3110 = vmatprep.subr.bf16.mxu0 0
      %3111 = vmatpush1.bf16.xpose.msra.mxu0 0
      %3112 = vmatprep.mubr.bf16.mxu0 0
      %3113 = vmatmul.mubr.bf16.gmra.mrb[0].mxu0 %v3075
      %v3114 = vpop.f32.mrb[0].mxu0
      %v3115 = vadd.f32 0.0, %v3114
      %v3116 = vpop.f32.mrb[0].mxu0
      %v3117 = vpop.f32.mrb[0].mxu0
      %v3118 = vpop.f32.mrb[0].mxu0
      %3119 = vdwg.mxu0
      %v3121 = vsel %vm2659, %v2633, 0
      %v3124 = vsel %vm2659, %v2645, 0
      %3126 = vmatprep.subr.bf16.mxu0 0
      %3127 = vmatpush1.bf16.xpose.msra.mxu0 %v3124
      %3128 = vmatprep.subr.bf16.mxu0 0
      %3129 = vmatpush1.bf16.xpose.msra.mxu0 0
      %3130 = vmatprep.subr.bf16.mxu0 0
      %3131 = vmatpush1.bf16.xpose.msra.mxu0 0
      %3132 = vmatprep.subr.bf16.mxu0 0
      %3133 = vmatpush1.bf16.xpose.msra.mxu0 0
      %3134 = vmatprep.subr.bf16.mxu0 0
      %3135 = vmatpush1.bf16.xpose.msra.mxu0 0
      %3136 = vmatprep.subr.bf16.mxu0 0
      %3137 = vmatpush1.bf16.xpose.msra.mxu0 0
      %3138 = vmatprep.subr.bf16.mxu0 0
      %3139 = vmatpush1.bf16.xpose.msra.mxu0 0
      %3140 = vmatprep.subr.bf16.mxu0 0
      %3141 = vmatpush1.bf16.xpose.msra.mxu0 0
      %3142 = vmatprep.subr.bf16.mxu0 0
      %3143 = vmatpush1.bf16.xpose.msra.mxu0 0
      %3144 = vmatprep.subr.bf16.mxu0 0
      %3145 = vmatpush1.bf16.xpose.msra.mxu0 0
      %3146 = vmatprep.subr.bf16.mxu0 0
      %3147 = vmatpush1.bf16.xpose.msra.mxu0 0
      %3148 = vmatprep.subr.bf16.mxu0 0
      %3149 = vmatpush1.bf16.xpose.msra.mxu0 0
      %3150 = vmatprep.subr.bf16.mxu0 0
      %3151 = vmatpush1.bf16.xpose.msra.mxu0 0
      %3152 = vmatprep.subr.bf16.mxu0 0
      %3153 = vmatpush1.bf16.xpose.msra.mxu0 0
      %3154 = vmatprep.subr.bf16.mxu0 0
      %3155 = vmatpush1.bf16.xpose.msra.mxu0 0
      %3156 = vmatprep.subr.bf16.mxu0 0
      %3157 = vmatpush1.bf16.xpose.msra.mxu0 0
      %3158 = vmatprep.mubr.bf16.mxu0 0
      %3159 = vmatmul.mubr.bf16.gmra.mrb[0].mxu0 %v3121
      %v3160 = vpop.f32.mrb[0].mxu0
      %v3161 = vadd.f32 0.0, %v3160
      %v3162 = vpop.f32.mrb[0].mxu0
      %v3163 = vpop.f32.mrb[0].mxu0
      %v3164 = vpop.f32.mrb[0].mxu0
      %3165 = vdwg.mxu0
      %v3167 = vsel %vm2659, %v2634, 0
      %v3170 = vsel %vm2659, %v2646, 0
      %3172 = vmatprep.subr.bf16.mxu0 0
      %3173 = vmatpush1.bf16.xpose.msra.mxu0 %v3170
      %3174 = vmatprep.subr.bf16.mxu0 0
      %3175 = vmatpush1.bf16.xpose.msra.mxu0 0
      %3176 = vmatprep.subr.bf16.mxu0 0
      %3177 = vmatpush1.bf16.xpose.msra.mxu0 0
      %3178 = vmatprep.subr.bf16.mxu0 0
      %3179 = vmatpush1.bf16.xpose.msra.mxu0 0
      %3180 = vmatprep.subr.bf16.mxu0 0
      %3181 = vmatpush1.bf16.xpose.msra.mxu0 0
      %3182 = vmatprep.subr.bf16.mxu0 0
      %3183 = vmatpush1.bf16.xpose.msra.mxu0 0
      %3184 = vmatprep.subr.bf16.mxu0 0
      %3185 = vmatpush1.bf16.xpose.msra.mxu0 0
      %3186 = vmatprep.subr.bf16.mxu0 0
      %3187 = vmatpush1.bf16.xpose.msra.mxu0 0
      %3188 = vmatprep.subr.bf16.mxu0 0
      %3189 = vmatpush1.bf16.xpose.msra.mxu0 0
      %3190 = vmatprep.subr.bf16.mxu0 0
      %3191 = vmatpush1.bf16.xpose.msra.mxu0 0
      %3192 = vmatprep.subr.bf16.mxu0 0
      %3193 = vmatpush1.bf16.xpose.msra.mxu0 0
      %3194 = vmatprep.subr.bf16.mxu0 0
      %3195 = vmatpush1.bf16.xpose.msra.mxu0 0
      %3196 = vmatprep.subr.bf16.mxu0 0
      %3197 = vmatpush1.bf16.xpose.msra.mxu0 0
      %3198 = vmatprep.subr.bf16.mxu0 0
      %3199 = vmatpush1.bf16.xpose.msra.mxu0 0
      %3200 = vmatprep.subr.bf16.mxu0 0
      %3201 = vmatpush1.bf16.xpose.msra.mxu0 0
      %3202 = vmatprep.subr.bf16.mxu0 0
      %3203 = vmatpush1.bf16.xpose.msra.mxu0 0
      %3204 = vmatprep.mubr.bf16.mxu0 0
      %3205 = vmatmul.mubr.bf16.gmra.mrb[0].mxu0 %v3167
      %v3206 = vpop.f32.mrb[0].mxu0
      %v3207 = vadd.f32 0.0, %v3206
      %v3208 = vpop.f32.mrb[0].mxu0
      %v3209 = vpop.f32.mrb[0].mxu0
      %v3210 = vpop.f32.mrb[0].mxu0
      %3211 = vdwg.mxu0
      %vm3212 = vcmask 36864
      %v3213 = vsel %vm3212, %v2701, -inf
      %3214 = vmax.xlane.f32.xlu0 %v3213
      %v3215 = vpop.xlane.xlu0 %3214
      %v3216 = vsel %vm3212, %v2747, -inf
      %3217 = vmax.xlane.f32.xlu0 %v3216
      %v3218 = vpop.xlane.xlu0 %3217
      %v3219 = vsel %vm3212, %v2793, -inf
      %3220 = vmax.xlane.f32.xlu0 %v3219
      %v3221 = vpop.xlane.xlu0 %3220
      %v3222 = vsel %vm3212, %v2839, -inf
      %3223 = vmax.xlane.f32.xlu0 %v3222
      %v3224 = vpop.xlane.xlu0 %3223
      %v3225 = vsel %vm3212, %v2885, -inf
      %3226 = vmax.xlane.f32.xlu0 %v3225
      %v3227 = vpop.xlane.xlu0 %3226
      %v3228 = vsel %vm3212, %v2931, -inf
      %3229 = vmax.xlane.f32.xlu0 %v3228
      %v3230 = vpop.xlane.xlu0 %3229
      %v3231 = vsel %vm3212, %v2977, -inf
      %3232 = vmax.xlane.f32.xlu0 %v3231
      %v3233 = vpop.xlane.xlu0 %3232
      %v3234 = vsel %vm3212, %v3023, -inf
      %3235 = vmax.xlane.f32.xlu0 %v3234
      %v3236 = vpop.xlane.xlu0 %3235
      %v3237 = vsel %vm3212, %v3069, -inf
      %3238 = vmax.xlane.f32.xlu0 %v3237
      %v3239 = vpop.xlane.xlu0 %3238
      %v3240 = vsel %vm3212, %v3115, -inf
      %3241 = vmax.xlane.f32.xlu0 %v3240
      %v3242 = vpop.xlane.xlu0 %3241
      %v3243 = vsel %vm3212, %v3161, -inf
      %3244 = vmax.xlane.f32.xlu0 %v3243
      %v3245 = vpop.xlane.xlu0 %3244
      %v3246 = vsel %vm3212, %v3207, -inf
      %3247 = vmax.xlane.f32.xlu0 %v3246
      %v3248 = vpop.xlane.xlu0 %3247
      %v3249 = vsub.f32 %v2701, %v3215
      %v3250 = vsub.f32 %v2747, %v3218
      %v3251 = vsub.f32 %v2793, %v3221
      %v3252 = vsub.f32 %v2839, %v3224
      %v3253 = vsub.f32 %v2885, %v3227
      %v3254 = vsub.f32 %v2931, %v3230
      %v3255 = vsub.f32 %v2977, %v3233
      %v3256 = vsub.f32 %v3023, %v3236
      %v3257 = vsub.f32 %v3069, %v3239
      %v3258 = vsub.f32 %v3115, %v3242
      %v3259 = vsub.f32 %v3161, %v3245
      %v3260 = vsub.f32 %v3207, %v3248
      %v3261 = vmul.f32 %v3249, 1.442695
      %v3262 = vpow.pop %v3261
      %v3263 = vmul.f32 %v3250, 1.442695
      %v3264 = vpow.pop %v3263
      %v3265 = vmul.f32 %v3251, 1.442695
      %v3266 = vpow.pop %v3265
      %v3267 = vmul.f32 %v3252, 1.442695
      %v3268 = vpow.pop %v3267
      %v3269 = vmul.f32 %v3253, 1.442695
      %v3270 = vpow.pop %v3269
      %v3271 = vmul.f32 %v3254, 1.442695
      %v3272 = vpow.pop %v3271
      %v3273 = vmul.f32 %v3255, 1.442695
      %v3274 = vpow.pop %v3273
      %v3275 = vmul.f32 %v3256, 1.442695
      %v3276 = vpow.pop %v3275
      %v3277 = vmul.f32 %v3257, 1.442695
      %v3278 = vpow.pop %v3277
      %v3279 = vmul.f32 %v3258, 1.442695
      %v3280 = vpow.pop %v3279
      %v3281 = vmul.f32 %v3259, 1.442695
      %v3282 = vpow.pop %v3281
      %v3283 = vmul.f32 %v3260, 1.442695
      %v3284 = vpow.pop %v3283
      %v3285 = vsel %vm3212, %v3262, 0.0
      %3286 = vadd.xlane.f32.xlu0 %v3285
      %v3287 = vpop.xlane.xlu0 %3286
      %v3288 = vsel %vm3212, %v3264, 0.0
      %3289 = vadd.xlane.f32.xlu0 %v3288
      %v3290 = vpop.xlane.xlu0 %3289
      %v3291 = vsel %vm3212, %v3266, 0.0
      %3292 = vadd.xlane.f32.xlu0 %v3291
      %v3293 = vpop.xlane.xlu0 %3292
      %v3294 = vsel %vm3212, %v3268, 0.0
      %3295 = vadd.xlane.f32.xlu0 %v3294
      %v3296 = vpop.xlane.xlu0 %3295
      %v3297 = vsel %vm3212, %v3270, 0.0
      %3298 = vadd.xlane.f32.xlu0 %v3297
      %v3299 = vpop.xlane.xlu0 %3298
      %v3300 = vsel %vm3212, %v3272, 0.0
      %3301 = vadd.xlane.f32.xlu0 %v3300
      %v3302 = vpop.xlane.xlu0 %3301
      %v3303 = vsel %vm3212, %v3274, 0.0
      %3304 = vadd.xlane.f32.xlu0 %v3303
      %v3305 = vpop.xlane.xlu0 %3304
      %v3306 = vsel %vm3212, %v3276, 0.0
      %3307 = vadd.xlane.f32.xlu0 %v3306
      %v3308 = vpop.xlane.xlu0 %3307
      %v3309 = vsel %vm3212, %v3278, 0.0
      %3310 = vadd.xlane.f32.xlu0 %v3309
      %v3311 = vpop.xlane.xlu0 %3310
      %v3312 = vsel %vm3212, %v3280, 0.0
      %3313 = vadd.xlane.f32.xlu0 %v3312
      %v3314 = vpop.xlane.xlu0 %3313
      %v3315 = vsel %vm3212, %v3282, 0.0
      %3316 = vadd.xlane.f32.xlu0 %v3315
      %v3317 = vpop.xlane.xlu0 %3316
      %v3318 = vsel %vm3212, %v3284, 0.0
      %3319 = vadd.xlane.f32.xlu0 %v3318
      %v3320 = vpop.xlane.xlu0 %3319
      %v3321 = vrcp.pop %v3287
      %v3322 = vrcp.pop %v3290
      %v3323 = vrcp.pop %v3293
      %v3324 = vrcp.pop %v3296
      %v3325 = vrcp.pop %v3299
      %v3326 = vrcp.pop %v3302
      %v3327 = vrcp.pop %v3305
      %v3328 = vrcp.pop %v3308
      %v3329 = vrcp.pop %v3311
      %v3330 = vrcp.pop %v3314
      %v3331 = vrcp.pop %v3317
      %v3332 = vrcp.pop %v3320
      %v3333 = vmul.f32 %v3262, %v3321
      %v3334 = vmul.f32 %v3264, %v3322
      %v3335 = vmul.f32 %v3266, %v3323
      %v3336 = vmul.f32 %v3268, %v3324
      %v3337 = vmul.f32 %v3270, %v3325
      %v3338 = vmul.f32 %v3272, %v3326
      %v3339 = vmul.f32 %v3274, %v3327
      %v3340 = vmul.f32 %v3276, %v3328
      %v3341 = vmul.f32 %v3278, %v3329
      %v3342 = vmul.f32 %v3280, %v3330
      %v3343 = vmul.f32 %v3282, %v3331
      %v3344 = vmul.f32 %v3284, %v3332
      %v3345 = vpack.c.bf16 %v3333, %v3333
      %v3346 = vpack.c.bf16 %v3334, %v3334
      %v3347 = vpack.c.bf16 %v3335, %v3335
      %v3348 = vpack.c.bf16 %v3336, %v3336
      %v3349 = vpack.c.bf16 %v3337, %v3337
      %v3350 = vpack.c.bf16 %v3338, %v3338
      %v3351 = vpack.c.bf16 %v3339, %v3339
      %v3352 = vpack.c.bf16 %v3340, %v3340
      %v3353 = vpack.c.bf16 %v3341, %v3341
      %v3354 = vpack.c.bf16 %v3342, %v3342
      %v3355 = vpack.c.bf16 %v3343, %v3343
      %v3356 = vpack.c.bf16 %v3344, %v3344
      %vm3357 = vcmask 39936
      %v3359 = vsel %vm3357, %v3345, 0
      %vm3361 = vcmask 1041408
      %vm3362 = vcmask 1042432
      %v3363 = vsel %vm3361, 4294967295, 65535
      %v3364 = vsel %vm3362, %v3363, 0
      %v3366 = vand.u32 %v2647, %v3364
      %3368 = vmatprep.subr.bf16.mxu0 0
      %3369 = vmatpush1.bf16.msra.mxu0 %v3366
      %3370 = vmatprep.subr.bf16.mxu0 0
      %3371 = vmatpush1.bf16.msra.mxu0 0
      %3372 = vmatprep.subr.bf16.mxu0 0
      %3373 = vmatpush1.bf16.msra.mxu0 0
      %3374 = vmatprep.subr.bf16.mxu0 0
      %3375 = vmatpush1.bf16.msra.mxu0 0
      %3376 = vmatprep.subr.bf16.mxu0 0
      %3377 = vmatpush1.bf16.msra.mxu0 0
      %3378 = vmatprep.subr.bf16.mxu0 0
      %3379 = vmatpush1.bf16.msra.mxu0 0
      %3380 = vmatprep.subr.bf16.mxu0 0
      %3381 = vmatpush1.bf16.msra.mxu0 0
      %3382 = vmatprep.subr.bf16.mxu0 0
      %3383 = vmatpush1.bf16.msra.mxu0 0
      %3384 = vmatprep.subr.bf16.mxu0 0
      %3385 = vmatpush1.bf16.msra.mxu0 0
      %3386 = vmatprep.subr.bf16.mxu0 0
      %3387 = vmatpush1.bf16.msra.mxu0 0
      %3388 = vmatprep.subr.bf16.mxu0 0
      %3389 = vmatpush1.bf16.msra.mxu0 0
      %3390 = vmatprep.subr.bf16.mxu0 0
      %3391 = vmatpush1.bf16.msra.mxu0 0
      %3392 = vmatprep.subr.bf16.mxu0 0
      %3393 = vmatpush1.bf16.msra.mxu0 0
      %3394 = vmatprep.subr.bf16.mxu0 0
      %3395 = vmatpush1.bf16.msra.mxu0 0
      %3396 = vmatprep.subr.bf16.mxu0 0
      %3397 = vmatpush1.bf16.msra.mxu0 0
      %3398 = vmatprep.subr.bf16.mxu0 0
      %3399 = vmatpush1.bf16.msra.mxu0 0
      %3400 = vmatprep.mubr.bf16.mxu0 0
      %3401 = vmatmul.mubr.bf16.gmra.mrb[0].mxu0 %v3359
      %v3402 = vpop.f32.mrb[0].mxu0
      %v3403 = vadd.f32 0.0, %v3402
      %v3404 = vpop.f32.mrb[0].mxu0
      %v3405 = vpop.f32.mrb[0].mxu0
      %v3406 = vpop.f32.mrb[0].mxu0
      %3407 = vdwg.mxu0
      %v3409 = vsel %vm3357, %v3346, 0
      %v3412 = vand.u32 %v2648, %v3364
      %3414 = vmatprep.subr.bf16.mxu0 0
      %3415 = vmatpush1.bf16.msra.mxu0 %v3412
      %3416 = vmatprep.subr.bf16.mxu0 0
      %3417 = vmatpush1.bf16.msra.mxu0 0
      %3418 = vmatprep.subr.bf16.mxu0 0
      %3419 = vmatpush1.bf16.msra.mxu0 0
      %3420 = vmatprep.subr.bf16.mxu0 0
      %3421 = vmatpush1.bf16.msra.mxu0 0
      %3422 = vmatprep.subr.bf16.mxu0 0
      %3423 = vmatpush1.bf16.msra.mxu0 0
      %3424 = vmatprep.subr.bf16.mxu0 0
      %3425 = vmatpush1.bf16.msra.mxu0 0
      %3426 = vmatprep.subr.bf16.mxu0 0
      %3427 = vmatpush1.bf16.msra.mxu0 0
      %3428 = vmatprep.subr.bf16.mxu0 0
      %3429 = vmatpush1.bf16.msra.mxu0 0
      %3430 = vmatprep.subr.bf16.mxu0 0
      %3431 = vmatpush1.bf16.msra.mxu0 0
      %3432 = vmatprep.subr.bf16.mxu0 0
      %3433 = vmatpush1.bf16.msra.mxu0 0
      %3434 = vmatprep.subr.bf16.mxu0 0
      %3435 = vmatpush1.bf16.msra.mxu0 0
      %3436 = vmatprep.subr.bf16.mxu0 0
      %3437 = vmatpush1.bf16.msra.mxu0 0
      %3438 = vmatprep.subr.bf16.mxu0 0
      %3439 = vmatpush1.bf16.msra.mxu0 0
      %3440 = vmatprep.subr.bf16.mxu0 0
      %3441 = vmatpush1.bf16.msra.mxu0 0
      %3442 = vmatprep.subr.bf16.mxu0 0
      %3443 = vmatpush1.bf16.msra.mxu0 0
      %3444 = vmatprep.subr.bf16.mxu0 0
      %3445 = vmatpush1.bf16.msra.mxu0 0
      %3446 = vmatprep.mubr.bf16.mxu0 0
      %3447 = vmatmul.mubr.bf16.gmra.mrb[0].mxu0 %v3409
      %v3448 = vpop.f32.mrb[0].mxu0
      %v3449 = vadd.f32 0.0, %v3448
      %v3450 = vpop.f32.mrb[0].mxu0
      %v3451 = vpop.f32.mrb[0].mxu0
      %v3452 = vpop.f32.mrb[0].mxu0
      %3453 = vdwg.mxu0
      %v3455 = vsel %vm3357, %v3347, 0
      %v3458 = vand.u32 %v2649, %v3364
      %3460 = vmatprep.subr.bf16.mxu0 0
      %3461 = vmatpush1.bf16.msra.mxu0 %v3458
      %3462 = vmatprep.subr.bf16.mxu0 0
      %3463 = vmatpush1.bf16.msra.mxu0 0
      %3464 = vmatprep.subr.bf16.mxu0 0
      %3465 = vmatpush1.bf16.msra.mxu0 0
      %3466 = vmatprep.subr.bf16.mxu0 0
      %3467 = vmatpush1.bf16.msra.mxu0 0
      %3468 = vmatprep.subr.bf16.mxu0 0
      %3469 = vmatpush1.bf16.msra.mxu0 0
      %3470 = vmatprep.subr.bf16.mxu0 0
      %3471 = vmatpush1.bf16.msra.mxu0 0
      %3472 = vmatprep.subr.bf16.mxu0 0
      %3473 = vmatpush1.bf16.msra.mxu0 0
      %3474 = vmatprep.subr.bf16.mxu0 0
      %3475 = vmatpush1.bf16.msra.mxu0 0
      %3476 = vmatprep.subr.bf16.mxu0 0
      %3477 = vmatpush1.bf16.msra.mxu0 0
      %3478 = vmatprep.subr.bf16.mxu0 0
      %3479 = vmatpush1.bf16.msra.mxu0 0
      %3480 = vmatprep.subr.bf16.mxu0 0
      %3481 = vmatpush1.bf16.msra.mxu0 0
      %3482 = vmatprep.subr.bf16.mxu0 0
      %3483 = vmatpush1.bf16.msra.mxu0 0
      %3484 = vmatprep.subr.bf16.mxu0 0
      %3485 = vmatpush1.bf16.msra.mxu0 0
      %3486 = vmatprep.subr.bf16.mxu0 0
      %3487 = vmatpush1.bf16.msra.mxu0 0
      %3488 = vmatprep.subr.bf16.mxu0 0
      %3489 = vmatpush1.bf16.msra.mxu0 0
      %3490 = vmatprep.subr.bf16.mxu0 0
      %3491 = vmatpush1.bf16.msra.mxu0 0
      %3492 = vmatprep.mubr.bf16.mxu0 0
      %3493 = vmatmul.mubr.bf16.gmra.mrb[0].mxu0 %v3455
      %v3494 = vpop.f32.mrb[0].mxu0
      %v3495 = vadd.f32 0.0, %v3494
      %v3496 = vpop.f32.mrb[0].mxu0
      %v3497 = vpop.f32.mrb[0].mxu0
      %v3498 = vpop.f32.mrb[0].mxu0
      %3499 = vdwg.mxu0
      %v3501 = vsel %vm3357, %v3348, 0
      %v3504 = vand.u32 %v2650, %v3364
      %3506 = vmatprep.subr.bf16.mxu0 0
      %3507 = vmatpush1.bf16.msra.mxu0 %v3504
      %3508 = vmatprep.subr.bf16.mxu0 0
      %3509 = vmatpush1.bf16.msra.mxu0 0
      %3510 = vmatprep.subr.bf16.mxu0 0
      %3511 = vmatpush1.bf16.msra.mxu0 0
      %3512 = vmatprep.subr.bf16.mxu0 0
      %3513 = vmatpush1.bf16.msra.mxu0 0
      %3514 = vmatprep.subr.bf16.mxu0 0
      %3515 = vmatpush1.bf16.msra.mxu0 0
      %3516 = vmatprep.subr.bf16.mxu0 0
      %3517 = vmatpush1.bf16.msra.mxu0 0
      %3518 = vmatprep.subr.bf16.mxu0 0
      %3519 = vmatpush1.bf16.msra.mxu0 0
      %3520 = vmatprep.subr.bf16.mxu0 0
      %3521 = vmatpush1.bf16.msra.mxu0 0
      %3522 = vmatprep.subr.bf16.mxu0 0
      %3523 = vmatpush1.bf16.msra.mxu0 0
      %3524 = vmatprep.subr.bf16.mxu0 0
      %3525 = vmatpush1.bf16.msra.mxu0 0
      %3526 = vmatprep.subr.bf16.mxu0 0
      %3527 = vmatpush1.bf16.msra.mxu0 0
      %3528 = vmatprep.subr.bf16.mxu0 0
      %3529 = vmatpush1.bf16.msra.mxu0 0
      %3530 = vmatprep.subr.bf16.mxu0 0
      %3531 = vmatpush1.bf16.msra.mxu0 0
      %3532 = vmatprep.subr.bf16.mxu0 0
      %3533 = vmatpush1.bf16.msra.mxu0 0
      %3534 = vmatprep.subr.bf16.mxu0 0
      %3535 = vmatpush1.bf16.msra.mxu0 0
      %3536 = vmatprep.subr.bf16.mxu0 0
      %3537 = vmatpush1.bf16.msra.mxu0 0
      %3538 = vmatprep.mubr.bf16.mxu0 0
      %3539 = vmatmul.mubr.bf16.gmra.mrb[0].mxu0 %v3501
      %v3540 = vpop.f32.mrb[0].mxu0
      %v3541 = vadd.f32 0.0, %v3540
      %v3542 = vpop.f32.mrb[0].mxu0
      %v3543 = vpop.f32.mrb[0].mxu0
      %v3544 = vpop.f32.mrb[0].mxu0
      %3545 = vdwg.mxu0
      %v3547 = vsel %vm3357, %v3349, 0
      %v3550 = vand.u32 %v2651, %v3364
      %3552 = vmatprep.subr.bf16.mxu0 0
      %3553 = vmatpush1.bf16.msra.mxu0 %v3550
      %3554 = vmatprep.subr.bf16.mxu0 0
      %3555 = vmatpush1.bf16.msra.mxu0 0
      %3556 = vmatprep.subr.bf16.mxu0 0
      %3557 = vmatpush1.bf16.msra.mxu0 0
      %3558 = vmatprep.subr.bf16.mxu0 0
      %3559 = vmatpush1.bf16.msra.mxu0 0
      %3560 = vmatprep.subr.bf16.mxu0 0
      %3561 = vmatpush1.bf16.msra.mxu0 0
      %3562 = vmatprep.subr.bf16.mxu0 0
      %3563 = vmatpush1.bf16.msra.mxu0 0
      %3564 = vmatprep.subr.bf16.mxu0 0
      %3565 = vmatpush1.bf16.msra.mxu0 0
      %3566 = vmatprep.subr.bf16.mxu0 0
      %3567 = vmatpush1.bf16.msra.mxu0 0
      %3568 = vmatprep.subr.bf16.mxu0 0
      %3569 = vmatpush1.bf16.msra.mxu0 0
      %3570 = vmatprep.subr.bf16.mxu0 0
      %3571 = vmatpush1.bf16.msra.mxu0 0
      %3572 = vmatprep.subr.bf16.mxu0 0
      %3573 = vmatpush1.bf16.msra.mxu0 0
      %3574 = vmatprep.subr.bf16.mxu0 0
      %3575 = vmatpush1.bf16.msra.mxu0 0
      %3576 = vmatprep.subr.bf16.mxu0 0
      %3577 = vmatpush1.bf16.msra.mxu0 0
      %3578 = vmatprep.subr.bf16.mxu0 0
      %3579 = vmatpush1.bf16.msra.mxu0 0
      %3580 = vmatprep.subr.bf16.mxu0 0
      %3581 = vmatpush1.bf16.msra.mxu0 0
      %3582 = vmatprep.subr.bf16.mxu0 0
      %3583 = vmatpush1.bf16.msra.mxu0 0
      %3584 = vmatprep.mubr.bf16.mxu0 0
      %3585 = vmatmul.mubr.bf16.gmra.mrb[0].mxu0 %v3547
      %v3586 = vpop.f32.mrb[0].mxu0
      %v3587 = vadd.f32 0.0, %v3586
      %v3588 = vpop.f32.mrb[0].mxu0
      %v3589 = vpop.f32.mrb[0].mxu0
      %v3590 = vpop.f32.mrb[0].mxu0
      %3591 = vdwg.mxu0
      %v3593 = vsel %vm3357, %v3350, 0
      %v3596 = vand.u32 %v2652, %v3364
      %3598 = vmatprep.subr.bf16.mxu0 0
      %3599 = vmatpush1.bf16.msra.mxu0 %v3596
      %3600 = vmatprep.subr.bf16.mxu0 0
      %3601 = vmatpush1.bf16.msra.mxu0 0
      %3602 = vmatprep.subr.bf16.mxu0 0
      %3603 = vmatpush1.bf16.msra.mxu0 0
      %3604 = vmatprep.subr.bf16.mxu0 0
      %3605 = vmatpush1.bf16.msra.mxu0 0
      %3606 = vmatprep.subr.bf16.mxu0 0
      %3607 = vmatpush1.bf16.msra.mxu0 0
      %3608 = vmatprep.subr.bf16.mxu0 0
      %3609 = vmatpush1.bf16.msra.mxu0 0
      %3610 = vmatprep.subr.bf16.mxu0 0
      %3611 = vmatpush1.bf16.msra.mxu0 0
      %3612 = vmatprep.subr.bf16.mxu0 0
      %3613 = vmatpush1.bf16.msra.mxu0 0
      %3614 = vmatprep.subr.bf16.mxu0 0
      %3615 = vmatpush1.bf16.msra.mxu0 0
      %3616 = vmatprep.subr.bf16.mxu0 0
      %3617 = vmatpush1.bf16.msra.mxu0 0
      %3618 = vmatprep.subr.bf16.mxu0 0
      %3619 = vmatpush1.bf16.msra.mxu0 0
      %3620 = vmatprep.subr.bf16.mxu0 0
      %3621 = vmatpush1.bf16.msra.mxu0 0
      %3622 = vmatprep.subr.bf16.mxu0 0
      %3623 = vmatpush1.bf16.msra.mxu0 0
      %3624 = vmatprep.subr.bf16.mxu0 0
      %3625 = vmatpush1.bf16.msra.mxu0 0
      %3626 = vmatprep.subr.bf16.mxu0 0
      %3627 = vmatpush1.bf16.msra.mxu0 0
      %3628 = vmatprep.subr.bf16.mxu0 0
      %3629 = vmatpush1.bf16.msra.mxu0 0
      %3630 = vmatprep.mubr.bf16.mxu0 0
      %3631 = vmatmul.mubr.bf16.gmra.mrb[0].mxu0 %v3593
      %v3632 = vpop.f32.mrb[0].mxu0
      %v3633 = vadd.f32 0.0, %v3632
      %v3634 = vpop.f32.mrb[0].mxu0
      %v3635 = vpop.f32.mrb[0].mxu0
      %v3636 = vpop.f32.mrb[0].mxu0
      %3637 = vdwg.mxu0
      %v3639 = vsel %vm3357, %v3351, 0
      %v3642 = vand.u32 %v2653, %v3364
      %3644 = vmatprep.subr.bf16.mxu0 0
      %3645 = vmatpush1.bf16.msra.mxu0 %v3642
      %3646 = vmatprep.subr.bf16.mxu0 0
      %3647 = vmatpush1.bf16.msra.mxu0 0
      %3648 = vmatprep.subr.bf16.mxu0 0
      %3649 = vmatpush1.bf16.msra.mxu0 0
      %3650 = vmatprep.subr.bf16.mxu0 0
      %3651 = vmatpush1.bf16.msra.mxu0 0
      %3652 = vmatprep.subr.bf16.mxu0 0
      %3653 = vmatpush1.bf16.msra.mxu0 0
      %3654 = vmatprep.subr.bf16.mxu0 0
      %3655 = vmatpush1.bf16.msra.mxu0 0
      %3656 = vmatprep.subr.bf16.mxu0 0
      %3657 = vmatpush1.bf16.msra.mxu0 0
      %3658 = vmatprep.subr.bf16.mxu0 0
      %3659 = vmatpush1.bf16.msra.mxu0 0
      %3660 = vmatprep.subr.bf16.mxu0 0
      %3661 = vmatpush1.bf16.msra.mxu0 0
      %3662 = vmatprep.subr.bf16.mxu0 0
      %3663 = vmatpush1.bf16.msra.mxu0 0
      %3664 = vmatprep.subr.bf16.mxu0 0
      %3665 = vmatpush1.bf16.msra.mxu0 0
      %3666 = vmatprep.subr.bf16.mxu0 0
      %3667 = vmatpush1.bf16.msra.mxu0 0
      %3668 = vmatprep.subr.bf16.mxu0 0
      %3669 = vmatpush1.bf16.msra.mxu0 0
      %3670 = vmatprep.subr.bf16.mxu0 0
      %3671 = vmatpush1.bf16.msra.mxu0 0
      %3672 = vmatprep.subr.bf16.mxu0 0
      %3673 = vmatpush1.bf16.msra.mxu0 0
      %3674 = vmatprep.subr.bf16.mxu0 0
      %3675 = vmatpush1.bf16.msra.mxu0 0
      %3676 = vmatprep.mubr.bf16.mxu0 0
      %3677 = vmatmul.mubr.bf16.gmra.mrb[0].mxu0 %v3639
      %v3678 = vpop.f32.mrb[0].mxu0
      %v3679 = vadd.f32 0.0, %v3678
      %v3680 = vpop.f32.mrb[0].mxu0
      %v3681 = vpop.f32.mrb[0].mxu0
      %v3682 = vpop.f32.mrb[0].mxu0
      %3683 = vdwg.mxu0
      %v3685 = vsel %vm3357, %v3352, 0
      %v3688 = vand.u32 %v2654, %v3364
      %3690 = vmatprep.subr.bf16.mxu0 0
      %3691 = vmatpush1.bf16.msra.mxu0 %v3688
      %3692 = vmatprep.subr.bf16.mxu0 0
      %3693 = vmatpush1.bf16.msra.mxu0 0
      %3694 = vmatprep.subr.bf16.mxu0 0
      %3695 = vmatpush1.bf16.msra.mxu0 0
      %3696 = vmatprep.subr.bf16.mxu0 0
      %3697 = vmatpush1.bf16.msra.mxu0 0
      %3698 = vmatprep.subr.bf16.mxu0 0
      %3699 = vmatpush1.bf16.msra.mxu0 0
      %3700 = vmatprep.subr.bf16.mxu0 0
      %3701 = vmatpush1.bf16.msra.mxu0 0
      %3702 = vmatprep.subr.bf16.mxu0 0
      %3703 = vmatpush1.bf16.msra.mxu0 0
      %3704 = vmatprep.subr.bf16.mxu0 0
      %3705 = vmatpush1.bf16.msra.mxu0 0
      %3706 = vmatprep.subr.bf16.mxu0 0
      %3707 = vmatpush1.bf16.msra.mxu0 0
      %3708 = vmatprep.subr.bf16.mxu0 0
      %3709 = vmatpush1.bf16.msra.mxu0 0
      %3710 = vmatprep.subr.bf16.mxu0 0
      %3711 = vmatpush1.bf16.msra.mxu0 0
      %3712 = vmatprep.subr.bf16.mxu0 0
      %3713 = vmatpush1.bf16.msra.mxu0 0
      %3714 = vmatprep.subr.bf16.mxu0 0
      %3715 = vmatpush1.bf16.msra.mxu0 0
      %3716 = vmatprep.subr.bf16.mxu0 0
      %3717 = vmatpush1.bf16.msra.mxu0 0
      %3718 = vmatprep.subr.bf16.mxu0 0
      %3719 = vmatpush1.bf16.msra.mxu0 0
      %3720 = vmatprep.subr.bf16.mxu0 0
      %3721 = vmatpush1.bf16.msra.mxu0 0
      %3722 = vmatprep.mubr.bf16.mxu0 0
      %3723 = vmatmul.mubr.bf16.gmra.mrb[0].mxu0 %v3685
      %v3724 = vpop.f32.mrb[0].mxu0
      %v3725 = vadd.f32 0.0, %v3724
      %v3726 = vpop.f32.mrb[0].mxu0
      %v3727 = vpop.f32.mrb[0].mxu0
      %v3728 = vpop.f32.mrb[0].mxu0
      %3729 = vdwg.mxu0
      %v3731 = vsel %vm3357, %v3353, 0
      %v3734 = vand.u32 %v2655, %v3364
      %3736 = vmatprep.subr.bf16.mxu0 0
      %3737 = vmatpush1.bf16.msra.mxu0 %v3734
      %3738 = vmatprep.subr.bf16.mxu0 0
      %3739 = vmatpush1.bf16.msra.mxu0 0
      %3740 = vmatprep.subr.bf16.mxu0 0
      %3741 = vmatpush1.bf16.msra.mxu0 0
      %3742 = vmatprep.subr.bf16.mxu0 0
      %3743 = vmatpush1.bf16.msra.mxu0 0
      %3744 = vmatprep.subr.bf16.mxu0 0
      %3745 = vmatpush1.bf16.msra.mxu0 0
      %3746 = vmatprep.subr.bf16.mxu0 0
      %3747 = vmatpush1.bf16.msra.mxu0 0
      %3748 = vmatprep.subr.bf16.mxu0 0
      %3749 = vmatpush1.bf16.msra.mxu0 0
      %3750 = vmatprep.subr.bf16.mxu0 0
      %3751 = vmatpush1.bf16.msra.mxu0 0
      %3752 = vmatprep.subr.bf16.mxu0 0
      %3753 = vmatpush1.bf16.msra.mxu0 0
      %3754 = vmatprep.subr.bf16.mxu0 0
      %3755 = vmatpush1.bf16.msra.mxu0 0
      %3756 = vmatprep.subr.bf16.mxu0 0
      %3757 = vmatpush1.bf16.msra.mxu0 0
      %3758 = vmatprep.subr.bf16.mxu0 0
      %3759 = vmatpush1.bf16.msra.mxu0 0
      %3760 = vmatprep.subr.bf16.mxu0 0
      %3761 = vmatpush1.bf16.msra.mxu0 0
      %3762 = vmatprep.subr.bf16.mxu0 0
      %3763 = vmatpush1.bf16.msra.mxu0 0
      %3764 = vmatprep.subr.bf16.mxu0 0
      %3765 = vmatpush1.bf16.msra.mxu0 0
      %3766 = vmatprep.subr.bf16.mxu0 0
      %3767 = vmatpush1.bf16.msra.mxu0 0
      %3768 = vmatprep.mubr.bf16.mxu0 0
      %3769 = vmatmul.mubr.bf16.gmra.mrb[0].mxu0 %v3731
      %v3770 = vpop.f32.mrb[0].mxu0
      %v3771 = vadd.f32 0.0, %v3770
      %v3772 = vpop.f32.mrb[0].mxu0
      %v3773 = vpop.f32.mrb[0].mxu0
      %v3774 = vpop.f32.mrb[0].mxu0
      %3775 = vdwg.mxu0
      %v3777 = vsel %vm3357, %v3354, 0
      %v3780 = vand.u32 %v2656, %v3364
      %3782 = vmatprep.subr.bf16.mxu0 0
      %3783 = vmatpush1.bf16.msra.mxu0 %v3780
      %3784 = vmatprep.subr.bf16.mxu0 0
      %3785 = vmatpush1.bf16.msra.mxu0 0
      %3786 = vmatprep.subr.bf16.mxu0 0
      %3787 = vmatpush1.bf16.msra.mxu0 0
      %3788 = vmatprep.subr.bf16.mxu0 0
      %3789 = vmatpush1.bf16.msra.mxu0 0
      %3790 = vmatprep.subr.bf16.mxu0 0
      %3791 = vmatpush1.bf16.msra.mxu0 0
      %3792 = vmatprep.subr.bf16.mxu0 0
      %3793 = vmatpush1.bf16.msra.mxu0 0
      %3794 = vmatprep.subr.bf16.mxu0 0
      %3795 = vmatpush1.bf16.msra.mxu0 0
      %3796 = vmatprep.subr.bf16.mxu0 0
      %3797 = vmatpush1.bf16.msra.mxu0 0
      %3798 = vmatprep.subr.bf16.mxu0 0
      %3799 = vmatpush1.bf16.msra.mxu0 0
      %3800 = vmatprep.subr.bf16.mxu0 0
      %3801 = vmatpush1.bf16.msra.mxu0 0
      %3802 = vmatprep.subr.bf16.mxu0 0
      %3803 = vmatpush1.bf16.msra.mxu0 0
      %3804 = vmatprep.subr.bf16.mxu0 0
      %3805 = vmatpush1.bf16.msra.mxu0 0
      %3806 = vmatprep.subr.bf16.mxu0 0
      %3807 = vmatpush1.bf16.msra.mxu0 0
      %3808 = vmatprep.subr.bf16.mxu0 0
      %3809 = vmatpush1.bf16.msra.mxu0 0
      %3810 = vmatprep.subr.bf16.mxu0 0
      %3811 = vmatpush1.bf16.msra.mxu0 0
      %3812 = vmatprep.subr.bf16.mxu0 0
      %3813 = vmatpush1.bf16.msra.mxu0 0
      %3814 = vmatprep.mubr.bf16.mxu0 0
      %3815 = vmatmul.mubr.bf16.gmra.mrb[0].mxu0 %v3777
      %v3816 = vpop.f32.mrb[0].mxu0
      %v3817 = vadd.f32 0.0, %v3816
      %v3818 = vpop.f32.mrb[0].mxu0
      %v3819 = vpop.f32.mrb[0].mxu0
      %v3820 = vpop.f32.mrb[0].mxu0
      %3821 = vdwg.mxu0
      %v3823 = vsel %vm3357, %v3355, 0
      %v3826 = vand.u32 %v2657, %v3364
      %3828 = vmatprep.subr.bf16.mxu0 0
      %3829 = vmatpush1.bf16.msra.mxu0 %v3826
      %3830 = vmatprep.subr.bf16.mxu0 0
      %3831 = vmatpush1.bf16.msra.mxu0 0
      %3832 = vmatprep.subr.bf16.mxu0 0
      %3833 = vmatpush1.bf16.msra.mxu0 0
      %3834 = vmatprep.subr.bf16.mxu0 0
      %3835 = vmatpush1.bf16.msra.mxu0 0
      %3836 = vmatprep.subr.bf16.mxu0 0
      %3837 = vmatpush1.bf16.msra.mxu0 0
      %3838 = vmatprep.subr.bf16.mxu0 0
      %3839 = vmatpush1.bf16.msra.mxu0 0
      %3840 = vmatprep.subr.bf16.mxu0 0
      %3841 = vmatpush1.bf16.msra.mxu0 0
      %3842 = vmatprep.subr.bf16.mxu0 0
      %3843 = vmatpush1.bf16.msra.mxu0 0
      %3844 = vmatprep.subr.bf16.mxu0 0
      %3845 = vmatpush1.bf16.msra.mxu0 0
      %3846 = vmatprep.subr.bf16.mxu0 0
      %3847 = vmatpush1.bf16.msra.mxu0 0
      %3848 = vmatprep.subr.bf16.mxu0 0
      %3849 = vmatpush1.bf16.msra.mxu0 0
      %3850 = vmatprep.subr.bf16.mxu0 0
      %3851 = vmatpush1.bf16.msra.mxu0 0
      %3852 = vmatprep.subr.bf16.mxu0 0
      %3853 = vmatpush1.bf16.msra.mxu0 0
      %3854 = vmatprep.subr.bf16.mxu0 0
      %3855 = vmatpush1.bf16.msra.mxu0 0
      %3856 = vmatprep.subr.bf16.mxu0 0
      %3857 = vmatpush1.bf16.msra.mxu0 0
      %3858 = vmatprep.subr.bf16.mxu0 0
      %3859 = vmatpush1.bf16.msra.mxu0 0
      %3860 = vmatprep.mubr.bf16.mxu0 0
      %3861 = vmatmul.mubr.bf16.gmra.mrb[0].mxu0 %v3823
      %v3862 = vpop.f32.mrb[0].mxu0
      %v3863 = vadd.f32 0.0, %v3862
      %v3864 = vpop.f32.mrb[0].mxu0
      %v3865 = vpop.f32.mrb[0].mxu0
      %v3866 = vpop.f32.mrb[0].mxu0
      %3867 = vdwg.mxu0
      %v3869 = vsel %vm3357, %v3356, 0
      %v3872 = vand.u32 %v2658, %v3364
      %3874 = vmatprep.subr.bf16.mxu0 0
      %3875 = vmatpush1.bf16.msra.mxu0 %v3872
      %3876 = vmatprep.subr.bf16.mxu0 0
      %3877 = vmatpush1.bf16.msra.mxu0 0
      %3878 = vmatprep.subr.bf16.mxu0 0
      %3879 = vmatpush1.bf16.msra.mxu0 0
      %3880 = vmatprep.subr.bf16.mxu0 0
      %3881 = vmatpush1.bf16.msra.mxu0 0
      %3882 = vmatprep.subr.bf16.mxu0 0
      %3883 = vmatpush1.bf16.msra.mxu0 0
      %3884 = vmatprep.subr.bf16.mxu0 0
      %3885 = vmatpush1.bf16.msra.mxu0 0
      %3886 = vmatprep.subr.bf16.mxu0 0
      %3887 = vmatpush1.bf16.msra.mxu0 0
      %3888 = vmatprep.subr.bf16.mxu0 0
      %3889 = vmatpush1.bf16.msra.mxu0 0
      %3890 = vmatprep.subr.bf16.mxu0 0
      %3891 = vmatpush1.bf16.msra.mxu0 0
      %3892 = vmatprep.subr.bf16.mxu0 0
      %3893 = vmatpush1.bf16.msra.mxu0 0
      %3894 = vmatprep.subr.bf16.mxu0 0
      %3895 = vmatpush1.bf16.msra.mxu0 0
      %3896 = vmatprep.subr.bf16.mxu0 0
      %3897 = vmatpush1.bf16.msra.mxu0 0
      %3898 = vmatprep.subr.bf16.mxu0 0
      %3899 = vmatpush1.bf16.msra.mxu0 0
      %3900 = vmatprep.subr.bf16.mxu0 0
      %3901 = vmatpush1.bf16.msra.mxu0 0
      %3902 = vmatprep.subr.bf16.mxu0 0
      %3903 = vmatpush1.bf16.msra.mxu0 0
      %3904 = vmatprep.subr.bf16.mxu0 0
      %3905 = vmatpush1.bf16.msra.mxu0 0
      %3906 = vmatprep.mubr.bf16.mxu0 0
      %3907 = vmatmul.mubr.bf16.gmra.mrb[0].mxu0 %v3869
      %v3908 = vpop.f32.mrb[0].mxu0
      %v3909 = vadd.f32 0.0, %v3908
      %v3910 = vpop.f32.mrb[0].mxu0
      %v3911 = vpop.f32.mrb[0].mxu0
      %v3912 = vpop.f32.mrb[0].mxu0
      %3913 = vdwg.mxu0
      %v3914 = vcombine.low %v3403, %v3495
      %v3915 = vcombine.high %v3403, %v3495
      %v3917 = vunpack.c.l.s4 1983009808
      %v3918 = vunpack.c.0.s8 %v3917
      %v3919 = vlaneseq
      %v3920 = vshrl.u32 %v3919, 7
      %v3921 = vsub.s32 %v3918, %v3920
      %v3922 = vrot.slane %v3914, %v3921
      %v3924 = vunpack.c.l.s4 1983009808
      %v3925 = vunpack.c.0.s8 %v3924
      %v3926 = vlaneseq
      %v3927 = vshrl.u32 %v3926, 7
      %v3928 = vsub.s32 %v3925, %v3927
      %v3929 = vrot.slane %v3915, %v3928
      %v3930 = vcombine.low %v3449, %v3541
      %v3931 = vcombine.high %v3449, %v3541
      %v3933 = vunpack.c.l.s4 1983009808
      %v3934 = vunpack.c.0.s8 %v3933
      %v3935 = vlaneseq
      %v3936 = vshrl.u32 %v3935, 7
      %v3937 = vsub.s32 %v3934, %v3936
      %v3938 = vrot.slane %v3930, %v3937
      %v3940 = vunpack.c.l.s4 1983009808
      %v3941 = vunpack.c.0.s8 %v3940
      %v3942 = vlaneseq
      %v3943 = vshrl.u32 %v3942, 7
      %v3944 = vsub.s32 %v3941, %v3943
      %v3945 = vrot.slane %v3931, %v3944
      %v3946 = vcombine.low %v3922, %v3938
      %v3947 = vcombine.high %v3922, %v3938
      %v3949 = vunpack.c.l.s4 1934713408
      %v3950 = vunpack.c.0.s8 %v3949
      %v3951 = vlaneseq
      %v3952 = vshrl.u32 %v3951, 7
      %v3953 = vsub.s32 %v3950, %v3952
      %v3954 = vrot.slane %v3946, %v3953
      %v3956 = vunpack.c.l.s4 1934713408
      %v3957 = vunpack.c.0.s8 %v3956
      %v3958 = vlaneseq
      %v3959 = vshrl.u32 %v3958, 7
      %v3960 = vsub.s32 %v3957, %v3959
      %v3961 = vrot.slane %v3947, %v3960
      %v3962 = vcombine.low %v3929, %v3945
      %v3963 = vcombine.high %v3954, 0.0
      %v3964 = vcombine.high %v3961, 0.0
      %v3966 = vunpack.c.l.s4 1934713408
      %v3967 = vunpack.c.0.s8 %v3966
      %v3968 = vlaneseq
      %v3969 = vshrl.u32 %v3968, 7
      %v3970 = vsub.s32 %v3967, %v3969
      %v3971 = vrot.slane %v3962, %v3970
      %v3972 = vcombine.low %v3587, %v3679
      %v3973 = vcombine.high %v3587, %v3679
      %v3975 = vunpack.c.l.s4 1983009808
      %v3976 = vunpack.c.0.s8 %v3975
      %v3977 = vlaneseq
      %v3978 = vshrl.u32 %v3977, 7
      %v3979 = vsub.s32 %v3976, %v3978
      %v3980 = vrot.slane %v3972, %v3979
      %v3982 = vunpack.c.l.s4 1983009808
      %v3983 = vunpack.c.0.s8 %v3982
      %v3984 = vlaneseq
      %v3985 = vshrl.u32 %v3984, 7
      %v3986 = vsub.s32 %v3983, %v3985
      %v3987 = vrot.slane %v3973, %v3986
      %v3988 = vcombine.low %v3633, %v3725
      %v3989 = vcombine.high %v3633, %v3725
      %v3991 = vunpack.c.l.s4 1983009808
      %v3992 = vunpack.c.0.s8 %v3991
      %v3993 = vlaneseq
      %v3994 = vshrl.u32 %v3993, 7
      %v3995 = vsub.s32 %v3992, %v3994
      %v3996 = vrot.slane %v3988, %v3995
      %v3998 = vunpack.c.l.s4 1983009808
      %v3999 = vunpack.c.0.s8 %v3998
      %v4000 = vlaneseq
      %v4001 = vshrl.u32 %v4000, 7
      %v4002 = vsub.s32 %v3999, %v4001
      %v4003 = vrot.slane %v3989, %v4002
      %v4004 = vcombine.low %v3980, %v3996
      %v4005 = vcombine.high %v3980, %v3996
      %v4007 = vunpack.c.l.s4 1934713408
      %v4008 = vunpack.c.0.s8 %v4007
      %v4009 = vlaneseq
      %v4010 = vshrl.u32 %v4009, 7
      %v4011 = vsub.s32 %v4008, %v4010
      %v4012 = vrot.slane %v4004, %v4011
      %v4014 = vunpack.c.l.s4 1934713408
      %v4015 = vunpack.c.0.s8 %v4014
      %v4016 = vlaneseq
      %v4017 = vshrl.u32 %v4016, 7
      %v4018 = vsub.s32 %v4015, %v4017
      %v4019 = vrot.slane %v4005, %v4018
      %v4020 = vcombine.low %v3987, %v4003
      %v4021 = vcombine.high %v4012, 0.0
      %v4022 = vcombine.high %v4019, 0.0
      %v4024 = vunpack.c.l.s4 1934713408
      %v4025 = vunpack.c.0.s8 %v4024
      %v4026 = vlaneseq
      %v4027 = vshrl.u32 %v4026, 7
      %v4028 = vsub.s32 %v4025, %v4027
      %v4029 = vrot.slane %v4020, %v4028
      %v4030 = vcombine.low %v3771, %v3863
      %v4031 = vcombine.high %v3771, %v3863
      %v4033 = vunpack.c.l.s4 1983009808
      %v4034 = vunpack.c.0.s8 %v4033
      %v4035 = vlaneseq
      %v4036 = vshrl.u32 %v4035, 7
      %v4037 = vsub.s32 %v4034, %v4036
      %v4038 = vrot.slane %v4030, %v4037
      %v4040 = vunpack.c.l.s4 1983009808
      %v4041 = vunpack.c.0.s8 %v4040
      %v4042 = vlaneseq
      %v4043 = vshrl.u32 %v4042, 7
      %v4044 = vsub.s32 %v4041, %v4043
      %v4045 = vrot.slane %v4031, %v4044
      %v4046 = vcombine.low %v3817, %v3909
      %v4047 = vcombine.high %v3817, %v3909
      %v4049 = vunpack.c.l.s4 1983009808
      %v4050 = vunpack.c.0.s8 %v4049
      %v4051 = vlaneseq
      %v4052 = vshrl.u32 %v4051, 7
      %v4053 = vsub.s32 %v4050, %v4052
      %v4054 = vrot.slane %v4046, %v4053
      %v4056 = vunpack.c.l.s4 1983009808
      %v4057 = vunpack.c.0.s8 %v4056
      %v4058 = vlaneseq
      %v4059 = vshrl.u32 %v4058, 7
      %v4060 = vsub.s32 %v4057, %v4059
      %v4061 = vrot.slane %v4047, %v4060
      %v4062 = vcombine.low %v4038, %v4054
      %v4063 = vcombine.high %v4038, %v4054
      %v4065 = vunpack.c.l.s4 1934713408
      %v4066 = vunpack.c.0.s8 %v4065
      %v4067 = vlaneseq
      %v4068 = vshrl.u32 %v4067, 7
      %v4069 = vsub.s32 %v4066, %v4068
      %v4070 = vrot.slane %v4062, %v4069
      %v4072 = vunpack.c.l.s4 1934713408
      %v4073 = vunpack.c.0.s8 %v4072
      %v4074 = vlaneseq
      %v4075 = vshrl.u32 %v4074, 7
      %v4076 = vsub.s32 %v4073, %v4075
      %v4077 = vrot.slane %v4063, %v4076
      %v4078 = vcombine.low %v4045, %v4061
      %v4079 = vcombine.high %v4070, 0.0
      %v4081 = vunpack.c.l.s4 1934713408
      %v4082 = vunpack.c.0.s8 %v4081
      %v4083 = vlaneseq
      %v4084 = vshrl.u32 %v4083, 7
      %v4085 = vsub.s32 %v4082, %v4084
      %v4086 = vrot.slane %v4078, %v4085
      %v4087 = vcombine.low %v3954, %v3961
      %v4089 = vunpack.c.l.s4 1983009808
      %v4090 = vunpack.c.0.s8 %v4089
      %v4091 = vlaneseq
      %v4092 = vshrl.u32 %v4091, 7
      %v4093 = vsub.s32 %v4090, %v4092
      %v4094 = vrot.slane %v4087, %v4093
      %v4095 = vcombine.low %v3963, %v3964
      %v4097 = vunpack.c.l.s4 1983009808
      %v4098 = vunpack.c.0.s8 %v4097
      %v4099 = vlaneseq
      %v4100 = vshrl.u32 %v4099, 7
      %v4101 = vsub.s32 %v4098, %v4100
      %v4102 = vrot.slane %v4095, %v4101
      %v4103 = vcombine.low %v3971, %v4021
      %v4105 = vunpack.c.l.s4 1983009808
      %v4106 = vunpack.c.0.s8 %v4105
      %v4107 = vlaneseq
      %v4108 = vshrl.u32 %v4107, 7
      %v4109 = vsub.s32 %v4106, %v4108
      %v4110 = vrot.slane %v4103, %v4109
      %v4111 = vcombine.low %v4012, %v4019
      %v4113 = vunpack.c.l.s4 1983009808
      %v4114 = vunpack.c.0.s8 %v4113
      %v4115 = vlaneseq
      %v4116 = vshrl.u32 %v4115, 7
      %v4117 = vsub.s32 %v4114, %v4116
      %v4118 = vrot.slane %v4111, %v4117
      %v4119 = vcombine.low %v4094, %v4102
      %v4120 = vcombine.high %v4094, %v4102
      %v4122 = vunpack.c.l.s4 1934713408
      %v4123 = vunpack.c.0.s8 %v4122
      %v4124 = vlaneseq
      %v4125 = vshrl.u32 %v4124, 7
      %v4126 = vsub.s32 %v4123, %v4125
      %v4127 = vrot.slane %v4119, %v4126
      %v4129 = vunpack.c.l.s4 1934713408
      %v4130 = vunpack.c.0.s8 %v4129
      %v4131 = vlaneseq
      %v4132 = vshrl.u32 %v4131, 7
      %v4133 = vsub.s32 %v4130, %v4132
      %v4134 = vrot.slane %v4120, %v4133
      %v4135 = vcombine.low %v4110, %v4118
      %v4136 = vcombine.high %v4110, %v4118
      %v4138 = vunpack.c.l.s4 1934713408
      %v4139 = vunpack.c.0.s8 %v4138
      %v4140 = vlaneseq
      %v4141 = vshrl.u32 %v4140, 7
      %v4142 = vsub.s32 %v4139, %v4141
      %v4143 = vrot.slane %v4135, %v4142
      %v4145 = vunpack.c.l.s4 1934713408
      %v4146 = vunpack.c.0.s8 %v4145
      %v4147 = vlaneseq
      %v4148 = vshrl.u32 %v4147, 7
      %v4149 = vsub.s32 %v4146, %v4148
      %v4150 = vrot.slane %v4136, %v4149
      %v4151 = vcombine.low %v4127, %v4143
      %v4152 = vcombine.high %v4127, %v4143
      %v4153 = vcombine.low %v4134, %v4150
      %v4154 = vcombine.high %v4134, %v4150
      %v4155 = vcombine.low %v4022, %v4070
      %v4157 = vunpack.c.l.s4 1983009808
      %v4158 = vunpack.c.0.s8 %v4157
      %v4159 = vlaneseq
      %v4160 = vshrl.u32 %v4159, 7
      %v4161 = vsub.s32 %v4158, %v4160
      %v4162 = vrot.slane %v4155, %v4161
      %v4163 = vcombine.low %v4029, %v4079
      %v4165 = vunpack.c.l.s4 1983009808
      %v4166 = vunpack.c.0.s8 %v4165
      %v4167 = vlaneseq
      %v4168 = vshrl.u32 %v4167, 7
      %v4169 = vsub.s32 %v4166, %v4168
      %v4170 = vrot.slane %v4163, %v4169
      %v4171 = vcombine.low %v4077, %v4086
      %v4173 = vunpack.c.l.s4 1983009808
      %v4174 = vunpack.c.0.s8 %v4173
      %v4175 = vlaneseq
      %v4176 = vshrl.u32 %v4175, 7
      %v4177 = vsub.s32 %v4174, %v4176
      %v4178 = vrot.slane %v4171, %v4177
      %v4179 = vcombine.high %v4077, 0.0
      %v4181 = vunpack.c.l.s4 1983009808
      %v4182 = vunpack.c.0.s8 %v4181
      %v4183 = vlaneseq
      %v4184 = vshrl.u32 %v4183, 7
      %v4185 = vsub.s32 %v4182, %v4184
      %v4186 = vrot.slane %v4179, %v4185
      %v4187 = vcombine.low %v4162, %v4170
      %v4188 = vcombine.high %v4162, %v4170
      %v4190 = vunpack.c.l.s4 1934713408
      %v4191 = vunpack.c.0.s8 %v4190
      %v4192 = vlaneseq
      %v4193 = vshrl.u32 %v4192, 7
      %v4194 = vsub.s32 %v4191, %v4193
      %v4195 = vrot.slane %v4187, %v4194
      %v4197 = vunpack.c.l.s4 1934713408
      %v4198 = vunpack.c.0.s8 %v4197
      %v4199 = vlaneseq
      %v4200 = vshrl.u32 %v4199, 7
      %v4201 = vsub.s32 %v4198, %v4200
      %v4202 = vrot.slane %v4188, %v4201
      %v4203 = vcombine.low %v4178, %v4186
      %v4204 = vcombine.high %v4178, %v4186
      %v4206 = vunpack.c.l.s4 1934713408
      %v4207 = vunpack.c.0.s8 %v4206
      %v4208 = vlaneseq
      %v4209 = vshrl.u32 %v4208, 7
      %v4210 = vsub.s32 %v4207, %v4209
      %v4211 = vrot.slane %v4203, %v4210
      %v4213 = vunpack.c.l.s4 1934713408
      %v4214 = vunpack.c.0.s8 %v4213
      %v4215 = vlaneseq
      %v4216 = vshrl.u32 %v4215, 7
      %v4217 = vsub.s32 %v4214, %v4216
      %v4218 = vrot.slane %v4204, %v4217
      %v4219 = vcombine.low %v4195, %v4211
      %v4220 = vcombine.high %v4195, %v4211
      %v4221 = vcombine.low %v4202, %v4218
      %v4222 = vcombine.high %v4202, %v4218
      %4225 = vrot.lane.b32.xlu0 %v4152, 16
      %v4226 = vpop.permute.xlu0 %4225
      %4227 = vrot.lane.b32.xlu0 %v4220, 16
      %v4228 = vpop.permute.xlu0 %4227
      %4233 = vrot.lane.b32.xlu0 %v4153, 32
      %v4234 = vpop.permute.xlu0 %4233
      %4235 = vrot.lane.b32.xlu0 %v4221, 32
      %v4236 = vpop.permute.xlu0 %4235
      %4241 = vrot.lane.b32.xlu0 %v4154, 48
      %v4242 = vpop.permute.xlu0 %4241
      %4243 = vrot.lane.b32.xlu0 %v4222, 48
      %v4244 = vpop.permute.xlu0 %4243
      %v4247 = vsel %vm2659, %v4151, %v4226
      %v4248 = vsel %vm2659, %v4219, %v4228
      %vm4249 = vcmask 261120
      %v4250 = vsel %vm4249, %v4247, %v4234
      %v4251 = vsel %vm4249, %v4248, %v4236
      %vm4252 = vcmask 392192
      %v4253 = vsel %vm4252, %v4250, %v4242
      %v4254 = vsel %vm4252, %v4251, %v4244
      %v4255 = vpack.c.bf16 %v4254, %v4253
      %v4256 = vld [vmem:[%s621] sm:$0xf]
      %v4257 = vld [vmem:[%s621 + $0x4] sm:$0xf]
      %v4258 = vld [vmem:[%s621 + $0x8] sm:$0xf]
      %v4259 = vld [vmem:[%s621 + $0xc] sm:$0xf]
      %v4260 = vld [vmem:[%s621 + $0x10] sm:$0xf]
      %v4261 = vld [vmem:[%s621 + $0x14] sm:$0xf]
      %v4262 = vld [vmem:[%s621 + $0x18] sm:$0xf]
      %v4263 = vld [vmem:[%s621 + $0x1c] sm:$0xf]
      %v4264 = vld [vmem:[%s624] sm:$0x1]
      %v4266 = vlaneseq
      %v4267 = vshrl.u32 %v4266, 7
      %v4268 = vsub.s32 0, %v4267
      %v4269 = vrot.slane %v4264, %v4268
      %v4279 = vunpack.c.l.b16 %v4256
      %v4280 = vunpack.c.l.b16 %v4257
      %v4281 = vunpack.c.l.b16 %v4258
      %v4282 = vunpack.c.l.b16 %v4259
      %v4283 = vunpack.c.l.b16 %v4260
      %v4284 = vunpack.c.l.b16 %v4261
      %v4285 = vunpack.c.l.b16 %v4262
      %v4286 = vunpack.c.l.b16 %v4263
      %v4287 = vpack.c.b16 %v4280, %v4279
      %v4288 = vpack.c.b16 %v4282, %v4281
      %v4289 = vpack.c.b16 %v4284, %v4283
      %v4290 = vpack.c.b16 %v4286, %v4285
      %v4296 = vsel %vm905, %v4255, 0
      %4298 = vmatprep.subr.bf16.mxu0 0
      %4299 = vmatpush1.bf16.msra.mxu0 %v4287
      %4300 = vmatprep.subr.bf16.mxu0 0
      %4301 = vmatpush1.bf16.msra.mxu0 %v4288
      %4302 = vmatprep.subr.bf16.mxu0 0
      %4303 = vmatpush1.bf16.msra.mxu0 %v4289
      %4304 = vmatprep.subr.bf16.mxu0 0
      %4305 = vmatpush1.bf16.msra.mxu0 %v4290
      %4306 = vmatprep.subr.bf16.mxu0 0
      %4307 = vmatpush1.bf16.msra.mxu0 0
      %4308 = vmatprep.subr.bf16.mxu0 0
      %4309 = vmatpush1.bf16.msra.mxu0 0
      %4310 = vmatprep.subr.bf16.mxu0 0
      %4311 = vmatpush1.bf16.msra.mxu0 0
      %4312 = vmatprep.subr.bf16.mxu0 0
      %4313 = vmatpush1.bf16.msra.mxu0 0
      %4314 = vmatprep.subr.bf16.mxu0 0
      %4315 = vmatpush1.bf16.msra.mxu0 0
      %4316 = vmatprep.subr.bf16.mxu0 0
      %4317 = vmatpush1.bf16.msra.mxu0 0
      %4318 = vmatprep.subr.bf16.mxu0 0
      %4319 = vmatpush1.bf16.msra.mxu0 0
      %4320 = vmatprep.subr.bf16.mxu0 0
      %4321 = vmatpush1.bf16.msra.mxu0 0
      %4322 = vmatprep.subr.bf16.mxu0 0
      %4323 = vmatpush1.bf16.msra.mxu0 0
      %4324 = vmatprep.subr.bf16.mxu0 0
      %4325 = vmatpush1.bf16.msra.mxu0 0
      %4326 = vmatprep.subr.bf16.mxu0 0
      %4327 = vmatpush1.bf16.msra.mxu0 0
      %4328 = vmatprep.subr.bf16.mxu0 0
      %4329 = vmatpush1.bf16.msra.mxu0 0
      %4330 = vmatprep.mubr.bf16.mxu0 0
      %4331 = vmatmul.mubr.bf16.gmra.mrb[0].mxu0 %v4296
      %v4332 = vpop.f32.mrb[0].mxu0
      %v4333 = vadd.f32 %v4269, %v4332
      %v4334 = vpop.f32.mrb[0].mxu0
      %v4335 = vpop.f32.mrb[0].mxu0
      %v4336 = vadd.f32 %v4269, %v4335
      %v4337 = vpop.f32.mrb[0].mxu0
      %4338 = vdwg.mxu0
      %v4341 = vcombine.high %v4333, %v4333
      %v4343 = vunpack.c.l.s4 1966171168
      %v4344 = vunpack.c.0.s8 %v4343
      %v4345 = vlaneseq
      %v4346 = vshrl.u32 %v4345, 7
      %v4347 = vsub.s32 %v4344, %v4346
      %v4348 = vrot.slane %v4333, %v4347
      %v4350 = vunpack.c.l.s4 1966171168
      %v4351 = vunpack.c.0.s8 %v4350
      %v4352 = vlaneseq
      %v4353 = vshrl.u32 %v4352, 7
      %v4354 = vsub.s32 %v4351, %v4353
      %v4355 = vrot.slane %v4341, %v4354
      %v4356 = vcombine.high %v4348, %v4348
      %v4357 = vcombine.high %v4355, %v4355
      %v4359 = vunpack.c.l.s4 1966171168
      %v4360 = vunpack.c.0.s8 %v4359
      %v4361 = vlaneseq
      %v4362 = vshrl.u32 %v4361, 7
      %v4363 = vsub.s32 %v4360, %v4362
      %v4364 = vrot.slane %v4348, %v4363
      %v4366 = vunpack.c.l.s4 1966171168
      %v4367 = vunpack.c.0.s8 %v4366
      %v4368 = vlaneseq
      %v4369 = vshrl.u32 %v4368, 7
      %v4370 = vsub.s32 %v4367, %v4369
      %v4371 = vrot.slane %v4355, %v4370
      %v4373 = vunpack.c.l.s4 1966171168
      %v4374 = vunpack.c.0.s8 %v4373
      %v4375 = vlaneseq
      %v4376 = vshrl.u32 %v4375, 7
      %v4377 = vsub.s32 %v4374, %v4376
      %v4378 = vrot.slane %v4356, %v4377
      %v4380 = vunpack.c.l.s4 1966171168
      %v4381 = vunpack.c.0.s8 %v4380
      %v4382 = vlaneseq
      %v4383 = vshrl.u32 %v4382, 7
      %v4384 = vsub.s32 %v4381, %v4383
      %v4385 = vrot.slane %v4357, %v4384
      %v4386 = vcombine.high %v4364, %v4364
      %v4387 = vcombine.high %v4371, %v4371
      %v4388 = vcombine.high %v4378, %v4378
      %v4389 = vcombine.high %v4385, %v4385
      %v4390 = vcombine.high %v4336, %v4336
      %v4392 = vunpack.c.l.s4 1966171168
      %v4393 = vunpack.c.0.s8 %v4392
      %v4394 = vlaneseq
      %v4395 = vshrl.u32 %v4394, 7
      %v4396 = vsub.s32 %v4393, %v4395
      %v4397 = vrot.slane %v4336, %v4396
      %v4399 = vunpack.c.l.s4 1966171168
      %v4400 = vunpack.c.0.s8 %v4399
      %v4401 = vlaneseq
      %v4402 = vshrl.u32 %v4401, 7
      %v4403 = vsub.s32 %v4400, %v4402
      %v4404 = vrot.slane %v4390, %v4403
      %v4405 = vcombine.high %v4397, %v4397
      %v4406 = vcombine.high %v4404, %v4404
      %v4408 = vunpack.c.l.s4 1966171168
      %v4409 = vunpack.c.0.s8 %v4408
      %v4410 = vlaneseq
      %v4411 = vshrl.u32 %v4410, 7
      %v4412 = vsub.s32 %v4409, %v4411
      %v4413 = vrot.slane %v4397, %v4412
      %v4415 = vunpack.c.l.s4 1966171168
      %v4416 = vunpack.c.0.s8 %v4415
      %v4417 = vlaneseq
      %v4418 = vshrl.u32 %v4417, 7
      %v4419 = vsub.s32 %v4416, %v4418
      %v4420 = vrot.slane %v4404, %v4419
      %v4422 = vunpack.c.l.s4 1966171168
      %v4423 = vunpack.c.0.s8 %v4422
      %v4424 = vlaneseq
      %v4425 = vshrl.u32 %v4424, 7
      %v4426 = vsub.s32 %v4423, %v4425
      %v4427 = vrot.slane %v4405, %v4426
      %v4429 = vunpack.c.l.s4 1966171168
      %v4430 = vunpack.c.0.s8 %v4429
      %v4431 = vlaneseq
      %v4432 = vshrl.u32 %v4431, 7
      %v4433 = vsub.s32 %v4430, %v4432
      %v4434 = vrot.slane %v4406, %v4433
      %v4435 = vcombine.high %v4413, %v4413
      %v4436 = vcombine.high %v4420, %v4420
      %v4437 = vcombine.high %v4427, %v4427
      %v4453 = vadd.f32 %v694, %v4364
      %v4454 = vadd.f32 %v708, %v4378
      %v4455 = vadd.f32 %v709, %v4386
      %v4456 = vadd.f32 %v710, %v4388
      %v4457 = vadd.f32 %v701, %v4371
      %v4458 = vadd.f32 %v733, %v4385
      %v4459 = vadd.f32 %v747, %v4387
      %v4460 = vadd.f32 %v748, %v4389
      %v4461 = vadd.f32 %v749, %v4413
      %v4462 = vadd.f32 %v740, %v4427
      %v4463 = vadd.f32 %v772, %v4435
      %v4464 = vadd.f32 %v786, %v4437
      %v4465 = vadd.f32 %v787, %v4420
      %v4466 = vadd.f32 %v788, %v4434
      %v4467 = vadd.f32 %v779, %v4436
      %v4468 = vld [vmem:[%s627] sm:$0x1]
      %v4469 = vld [vmem:[%s630] sm:$0x1]
      %v4485 = vcombine.low %v4453, %v4454
      %v4486 = vcombine.low %v4455, %v4456
      %v4487 = vcombine.low %v4457, %v4458
      %v4488 = vcombine.low %v4459, %v4460
      %v4490 = vunpack.c.l.s4 1966171168
      %v4491 = vunpack.c.0.s8 %v4490
      %v4492 = vlaneseq
      %v4493 = vshrl.u32 %v4492, 7
      %v4494 = vsub.s32 %v4491, %v4493
      %v4495 = vrot.slane %v4485, %v4494
      %v4497 = vunpack.c.l.s4 1966171168
      %v4498 = vunpack.c.0.s8 %v4497
      %v4499 = vlaneseq
      %v4500 = vshrl.u32 %v4499, 7
      %v4501 = vsub.s32 %v4498, %v4500
      %v4502 = vrot.slane %v4486, %v4501
      %v4504 = vunpack.c.l.s4 1966171168
      %v4505 = vunpack.c.0.s8 %v4504
      %v4506 = vlaneseq
      %v4507 = vshrl.u32 %v4506, 7
      %v4508 = vsub.s32 %v4505, %v4507
      %v4509 = vrot.slane %v4487, %v4508
      %v4511 = vunpack.c.l.s4 1966171168
      %v4512 = vunpack.c.0.s8 %v4511
      %v4513 = vlaneseq
      %v4514 = vshrl.u32 %v4513, 7
      %v4515 = vsub.s32 %v4512, %v4514
      %v4516 = vrot.slane %v4488, %v4515
      %v4517 = vcombine.low %v4495, %v4502
      %v4518 = vcombine.low %v4509, %v4516
      %v4520 = vunpack.c.l.s4 1966171168
      %v4521 = vunpack.c.0.s8 %v4520
      %v4522 = vlaneseq
      %v4523 = vshrl.u32 %v4522, 7
      %v4524 = vsub.s32 %v4521, %v4523
      %v4525 = vrot.slane %v4517, %v4524
      %v4527 = vunpack.c.l.s4 1966171168
      %v4528 = vunpack.c.0.s8 %v4527
      %v4529 = vlaneseq
      %v4530 = vshrl.u32 %v4529, 7
      %v4531 = vsub.s32 %v4528, %v4530
      %v4532 = vrot.slane %v4518, %v4531
      %v4533 = vcombine.low %v4525, %v4532
      %v4534 = vcombine.low %v4461, %v4462
      %v4535 = vcombine.low %v4463, %v4464
      %v4536 = vcombine.low %v4465, %v4466
      %v4538 = vunpack.c.l.s4 1966171168
      %v4539 = vunpack.c.0.s8 %v4538
      %v4540 = vlaneseq
      %v4541 = vshrl.u32 %v4540, 7
      %v4542 = vsub.s32 %v4539, %v4541
      %v4543 = vrot.slane %v4534, %v4542
      %v4545 = vunpack.c.l.s4 1966171168
      %v4546 = vunpack.c.0.s8 %v4545
      %v4547 = vlaneseq
      %v4548 = vshrl.u32 %v4547, 7
      %v4549 = vsub.s32 %v4546, %v4548
      %v4550 = vrot.slane %v4535, %v4549
      %v4552 = vunpack.c.l.s4 1966171168
      %v4553 = vunpack.c.0.s8 %v4552
      %v4554 = vlaneseq
      %v4555 = vshrl.u32 %v4554, 7
      %v4556 = vsub.s32 %v4553, %v4555
      %v4557 = vrot.slane %v4536, %v4556
      %v4559 = vunpack.c.l.s4 1966171168
      %v4560 = vunpack.c.0.s8 %v4559
      %v4561 = vlaneseq
      %v4562 = vshrl.u32 %v4561, 7
      %v4563 = vsub.s32 %v4560, %v4562
      %v4564 = vrot.slane %v4467, %v4563
      %v4565 = vcombine.low %v4543, %v4550
      %v4566 = vcombine.low %v4557, %v4564
      %v4568 = vunpack.c.l.s4 1966171168
      %v4569 = vunpack.c.0.s8 %v4568
      %v4570 = vlaneseq
      %v4571 = vshrl.u32 %v4570, 7
      %v4572 = vsub.s32 %v4569, %v4571
      %v4573 = vrot.slane %v4565, %v4572
      %v4575 = vunpack.c.l.s4 1966171168
      %v4576 = vunpack.c.0.s8 %v4575
      %v4577 = vlaneseq
      %v4578 = vshrl.u32 %v4577, 7
      %v4579 = vsub.s32 %v4576, %v4578
      %v4580 = vrot.slane %v4566, %v4579
      %v4581 = vcombine.low %v4573, %v4580
      %v4584 = vsel %vm905, %v4533, 0.0
      %4585 = vadd.xlane.f32.xlu0 %v4584
      %v4586 = vpop.xlane.xlu0 %4585
      %v4587 = vsel %vm909, %v4581, 0.0
      %4588 = vadd.xlane.f32.xlu0 %v4587
      %v4589 = vpop.xlane.xlu0 %4588
      %v4590 = vmul.f32 %v4586, %v913
      %v4591 = vmul.f32 %v4589, %v913
      %v4594 = vlaneseq
      %v4595 = vshrl.u32 %v4594, 7
      %v4596 = vsub.s32 0, %v4595
      %v4597 = vrot.slane %v4590, %v4596
      %v4598 = vlaneseq
      %v4599 = vshrl.u32 %v4598, 7
      %v4600 = vsub.s32 1, %v4599
      %v4601 = vrot.slane %v4590, %v4600
      %v4602 = vlaneseq
      %v4603 = vshrl.u32 %v4602, 7
      %v4604 = vsub.s32 2, %v4603
      %v4605 = vrot.slane %v4590, %v4604
      %v4606 = vlaneseq
      %v4607 = vshrl.u32 %v4606, 7
      %v4608 = vsub.s32 3, %v4607
      %v4609 = vrot.slane %v4590, %v4608
      %v4610 = vlaneseq
      %v4611 = vshrl.u32 %v4610, 7
      %v4612 = vsub.s32 4, %v4611
      %v4613 = vrot.slane %v4590, %v4612
      %v4614 = vlaneseq
      %v4615 = vshrl.u32 %v4614, 7
      %v4616 = vsub.s32 5, %v4615
      %v4617 = vrot.slane %v4590, %v4616
      %v4618 = vlaneseq
      %v4619 = vshrl.u32 %v4618, 7
      %v4620 = vsub.s32 6, %v4619
      %v4621 = vrot.slane %v4590, %v4620
      %v4622 = vlaneseq
      %v4623 = vshrl.u32 %v4622, 7
      %v4624 = vsub.s32 7, %v4623
      %v4625 = vrot.slane %v4590, %v4624
      %v4626 = vlaneseq
      %v4627 = vshrl.u32 %v4626, 7
      %v4628 = vsub.s32 0, %v4627
      %v4629 = vrot.slane %v4591, %v4628
      %v4630 = vlaneseq
      %v4631 = vshrl.u32 %v4630, 7
      %v4632 = vsub.s32 1, %v4631
      %v4633 = vrot.slane %v4591, %v4632
      %v4634 = vlaneseq
      %v4635 = vshrl.u32 %v4634, 7
      %v4636 = vsub.s32 2, %v4635
      %v4637 = vrot.slane %v4591, %v4636
      %v4638 = vlaneseq
      %v4639 = vshrl.u32 %v4638, 7
      %v4640 = vsub.s32 3, %v4639
      %v4641 = vrot.slane %v4591, %v4640
      %v4642 = vlaneseq
      %v4643 = vshrl.u32 %v4642, 7
      %v4644 = vsub.s32 4, %v4643
      %v4645 = vrot.slane %v4591, %v4644
      %v4646 = vlaneseq
      %v4647 = vshrl.u32 %v4646, 7
      %v4648 = vsub.s32 5, %v4647
      %v4649 = vrot.slane %v4591, %v4648
      %v4650 = vlaneseq
      %v4651 = vshrl.u32 %v4650, 7
      %v4652 = vsub.s32 6, %v4651
      %v4653 = vrot.slane %v4591, %v4652
      %v4669 = vsub.f32 %v4453, %v4597
      %v4670 = vsub.f32 %v4454, %v4601
      %v4671 = vsub.f32 %v4455, %v4605
      %v4672 = vsub.f32 %v4456, %v4609
      %v4673 = vsub.f32 %v4457, %v4613
      %v4674 = vsub.f32 %v4458, %v4617
      %v4675 = vsub.f32 %v4459, %v4621
      %v4676 = vsub.f32 %v4460, %v4625
      %v4677 = vsub.f32 %v4461, %v4629
      %v4678 = vsub.f32 %v4462, %v4633
      %v4679 = vsub.f32 %v4463, %v4637
      %v4680 = vsub.f32 %v4464, %v4641
      %v4681 = vsub.f32 %v4465, %v4645
      %v4682 = vsub.f32 %v4466, %v4649
      %v4683 = vsub.f32 %v4467, %v4653
      %v4684 = vmul.f32 %v4669, %v4669
      %v4685 = vmul.f32 %v4670, %v4670
      %v4686 = vmul.f32 %v4671, %v4671
      %v4687 = vmul.f32 %v4672, %v4672
      %v4688 = vmul.f32 %v4673, %v4673
      %v4689 = vmul.f32 %v4674, %v4674
      %v4690 = vmul.f32 %v4675, %v4675
      %v4691 = vmul.f32 %v4676, %v4676
      %v4692 = vmul.f32 %v4677, %v4677
      %v4693 = vmul.f32 %v4678, %v4678
      %v4694 = vmul.f32 %v4679, %v4679
      %v4695 = vmul.f32 %v4680, %v4680
      %v4696 = vmul.f32 %v4681, %v4681
      %v4697 = vmul.f32 %v4682, %v4682
      %v4698 = vmul.f32 %v4683, %v4683
      %v4714 = vcombine.low %v4684, %v4685
      %v4715 = vcombine.low %v4686, %v4687
      %v4716 = vcombine.low %v4688, %v4689
      %v4717 = vcombine.low %v4690, %v4691
      %v4719 = vunpack.c.l.s4 1966171168
      %v4720 = vunpack.c.0.s8 %v4719
      %v4721 = vlaneseq
      %v4722 = vshrl.u32 %v4721, 7
      %v4723 = vsub.s32 %v4720, %v4722
      %v4724 = vrot.slane %v4714, %v4723
      %v4726 = vunpack.c.l.s4 1966171168
      %v4727 = vunpack.c.0.s8 %v4726
      %v4728 = vlaneseq
      %v4729 = vshrl.u32 %v4728, 7
      %v4730 = vsub.s32 %v4727, %v4729
      %v4731 = vrot.slane %v4715, %v4730
      %v4733 = vunpack.c.l.s4 1966171168
      %v4734 = vunpack.c.0.s8 %v4733
      %v4735 = vlaneseq
      %v4736 = vshrl.u32 %v4735, 7
      %v4737 = vsub.s32 %v4734, %v4736
      %v4738 = vrot.slane %v4716, %v4737
      %v4740 = vunpack.c.l.s4 1966171168
      %v4741 = vunpack.c.0.s8 %v4740
      %v4742 = vlaneseq
      %v4743 = vshrl.u32 %v4742, 7
      %v4744 = vsub.s32 %v4741, %v4743
      %v4745 = vrot.slane %v4717, %v4744
      %v4746 = vcombine.low %v4724, %v4731
      %v4747 = vcombine.low %v4738, %v4745
      %v4749 = vunpack.c.l.s4 1966171168
      %v4750 = vunpack.c.0.s8 %v4749
      %v4751 = vlaneseq
      %v4752 = vshrl.u32 %v4751, 7
      %v4753 = vsub.s32 %v4750, %v4752
      %v4754 = vrot.slane %v4746, %v4753
      %v4756 = vunpack.c.l.s4 1966171168
      %v4757 = vunpack.c.0.s8 %v4756
      %v4758 = vlaneseq
      %v4759 = vshrl.u32 %v4758, 7
      %v4760 = vsub.s32 %v4757, %v4759
      %v4761 = vrot.slane %v4747, %v4760
      %v4762 = vcombine.low %v4754, %v4761
      %v4763 = vcombine.low %v4692, %v4693
      %v4764 = vcombine.low %v4694, %v4695
      %v4765 = vcombine.low %v4696, %v4697
      %v4767 = vunpack.c.l.s4 1966171168
      %v4768 = vunpack.c.0.s8 %v4767
      %v4769 = vlaneseq
      %v4770 = vshrl.u32 %v4769, 7
      %v4771 = vsub.s32 %v4768, %v4770
      %v4772 = vrot.slane %v4763, %v4771
      %v4774 = vunpack.c.l.s4 1966171168
      %v4775 = vunpack.c.0.s8 %v4774
      %v4776 = vlaneseq
      %v4777 = vshrl.u32 %v4776, 7
      %v4778 = vsub.s32 %v4775, %v4777
      %v4779 = vrot.slane %v4764, %v4778
      %v4781 = vunpack.c.l.s4 1966171168
      %v4782 = vunpack.c.0.s8 %v4781
      %v4783 = vlaneseq
      %v4784 = vshrl.u32 %v4783, 7
      %v4785 = vsub.s32 %v4782, %v4784
      %v4786 = vrot.slane %v4765, %v4785
      %v4788 = vunpack.c.l.s4 1966171168
      %v4789 = vunpack.c.0.s8 %v4788
      %v4790 = vlaneseq
      %v4791 = vshrl.u32 %v4790, 7
      %v4792 = vsub.s32 %v4789, %v4791
      %v4793 = vrot.slane %v4698, %v4792
      %v4794 = vcombine.low %v4772, %v4779
      %v4795 = vcombine.low %v4786, %v4793
      %v4797 = vunpack.c.l.s4 1966171168
      %v4798 = vunpack.c.0.s8 %v4797
      %v4799 = vlaneseq
      %v4800 = vshrl.u32 %v4799, 7
      %v4801 = vsub.s32 %v4798, %v4800
      %v4802 = vrot.slane %v4794, %v4801
      %v4804 = vunpack.c.l.s4 1966171168
      %v4805 = vunpack.c.0.s8 %v4804
      %v4806 = vlaneseq
      %v4807 = vshrl.u32 %v4806, 7
      %v4808 = vsub.s32 %v4805, %v4807
      %v4809 = vrot.slane %v4795, %v4808
      %v4810 = vcombine.low %v4802, %v4809
      %v4813 = vsel %vm905, %v4762, 0.0
      %4814 = vadd.xlane.f32.xlu0 %v4813
      %v4815 = vpop.xlane.xlu0 %4814
      %v4816 = vsel %vm909, %v4810, 0.0
      %4817 = vadd.xlane.f32.xlu0 %v4816
      %v4818 = vpop.xlane.xlu0 %4817
      %v4819 = vmul.f32 %v4815, %v913
      %v4820 = vmul.f32 %v4818, %v913
      %v4821 = vadd.f32 %v4819, 1e-05
      %v4822 = vadd.f32 %v4820, 1e-05
      %v4823 = vrsqrt.pop %v4821
      %v4824 = vrsqrt.pop %v4822
      %v4827 = vlaneseq
      %v4828 = vshrl.u32 %v4827, 7
      %v4829 = vsub.s32 0, %v4828
      %v4830 = vrot.slane %v4823, %v4829
      %v4831 = vlaneseq
      %v4832 = vshrl.u32 %v4831, 7
      %v4833 = vsub.s32 1, %v4832
      %v4834 = vrot.slane %v4823, %v4833
      %v4835 = vlaneseq
      %v4836 = vshrl.u32 %v4835, 7
      %v4837 = vsub.s32 2, %v4836
      %v4838 = vrot.slane %v4823, %v4837
      %v4839 = vlaneseq
      %v4840 = vshrl.u32 %v4839, 7
      %v4841 = vsub.s32 3, %v4840
      %v4842 = vrot.slane %v4823, %v4841
      %v4843 = vlaneseq
      %v4844 = vshrl.u32 %v4843, 7
      %v4845 = vsub.s32 4, %v4844
      %v4846 = vrot.slane %v4823, %v4845
      %v4847 = vlaneseq
      %v4848 = vshrl.u32 %v4847, 7
      %v4849 = vsub.s32 5, %v4848
      %v4850 = vrot.slane %v4823, %v4849
      %v4851 = vlaneseq
      %v4852 = vshrl.u32 %v4851, 7
      %v4853 = vsub.s32 6, %v4852
      %v4854 = vrot.slane %v4823, %v4853
      %v4855 = vlaneseq
      %v4856 = vshrl.u32 %v4855, 7
      %v4857 = vsub.s32 7, %v4856
      %v4858 = vrot.slane %v4823, %v4857
      %v4859 = vlaneseq
      %v4860 = vshrl.u32 %v4859, 7
      %v4861 = vsub.s32 0, %v4860
      %v4862 = vrot.slane %v4824, %v4861
      %v4863 = vlaneseq
      %v4864 = vshrl.u32 %v4863, 7
      %v4865 = vsub.s32 1, %v4864
      %v4866 = vrot.slane %v4824, %v4865
      %v4867 = vlaneseq
      %v4868 = vshrl.u32 %v4867, 7
      %v4869 = vsub.s32 2, %v4868
      %v4870 = vrot.slane %v4824, %v4869
      %v4871 = vlaneseq
      %v4872 = vshrl.u32 %v4871, 7
      %v4873 = vsub.s32 3, %v4872
      %v4874 = vrot.slane %v4824, %v4873
      %v4875 = vlaneseq
      %v4876 = vshrl.u32 %v4875, 7
      %v4877 = vsub.s32 4, %v4876
      %v4878 = vrot.slane %v4824, %v4877
      %v4879 = vlaneseq
      %v4880 = vshrl.u32 %v4879, 7
      %v4881 = vsub.s32 5, %v4880
      %v4882 = vrot.slane %v4824, %v4881
      %v4883 = vlaneseq
      %v4884 = vshrl.u32 %v4883, 7
      %v4885 = vsub.s32 6, %v4884
      %v4886 = vrot.slane %v4824, %v4885
      %v4902 = vmul.f32 %v4669, %v4830
      %v4903 = vmul.f32 %v4670, %v4834
      %v4904 = vmul.f32 %v4671, %v4838
      %v4905 = vmul.f32 %v4672, %v4842
      %v4906 = vmul.f32 %v4673, %v4846
      %v4907 = vmul.f32 %v4674, %v4850
      %v4908 = vmul.f32 %v4675, %v4854
      %v4909 = vmul.f32 %v4676, %v4858
      %v4910 = vmul.f32 %v4677, %v4862
      %v4911 = vmul.f32 %v4678, %v4866
      %v4912 = vmul.f32 %v4679, %v4870
      %v4913 = vmul.f32 %v4680, %v4874
      %v4914 = vmul.f32 %v4681, %v4878
      %v4915 = vmul.f32 %v4682, %v4882
      %v4916 = vmul.f32 %v4683, %v4886
      %v4918 = vlaneseq
      %v4919 = vshrl.u32 %v4918, 7
      %v4920 = vsub.s32 0, %v4919
      %v4921 = vrot.slane %v4468, %v4920
      %v4922 = vcombine.high %v4921, %v4921
      %v4924 = vunpack.c.l.s4 1966171168
      %v4925 = vunpack.c.0.s8 %v4924
      %v4926 = vlaneseq
      %v4927 = vshrl.u32 %v4926, 7
      %v4928 = vsub.s32 %v4925, %v4927
      %v4929 = vrot.slane %v4921, %v4928
      %v4931 = vunpack.c.l.s4 1966171168
      %v4932 = vunpack.c.0.s8 %v4931
      %v4933 = vlaneseq
      %v4934 = vshrl.u32 %v4933, 7
      %v4935 = vsub.s32 %v4932, %v4934
      %v4936 = vrot.slane %v4922, %v4935
      %v4937 = vcombine.high %v4929, %v4929
      %v4938 = vcombine.high %v4936, %v4936
      %v4940 = vunpack.c.l.s4 1966171168
      %v4941 = vunpack.c.0.s8 %v4940
      %v4942 = vlaneseq
      %v4943 = vshrl.u32 %v4942, 7
      %v4944 = vsub.s32 %v4941, %v4943
      %v4945 = vrot.slane %v4929, %v4944
      %v4947 = vunpack.c.l.s4 1966171168
      %v4948 = vunpack.c.0.s8 %v4947
      %v4949 = vlaneseq
      %v4950 = vshrl.u32 %v4949, 7
      %v4951 = vsub.s32 %v4948, %v4950
      %v4952 = vrot.slane %v4936, %v4951
      %v4954 = vunpack.c.l.s4 1966171168
      %v4955 = vunpack.c.0.s8 %v4954
      %v4956 = vlaneseq
      %v4957 = vshrl.u32 %v4956, 7
      %v4958 = vsub.s32 %v4955, %v4957
      %v4959 = vrot.slane %v4937, %v4958
      %v4961 = vunpack.c.l.s4 1966171168
      %v4962 = vunpack.c.0.s8 %v4961
      %v4963 = vlaneseq
      %v4964 = vshrl.u32 %v4963, 7
      %v4965 = vsub.s32 %v4962, %v4964
      %v4966 = vrot.slane %v4938, %v4965
      %v4967 = vcombine.high %v4945, %v4945
      %v4968 = vcombine.high %v4952, %v4952
      %v4969 = vcombine.high %v4959, %v4959
      %v4970 = vcombine.high %v4966, %v4966
      %v4979 = vmul.f32 %v4902, %v4945
      %v4980 = vmul.f32 %v4903, %v4959
      %v4981 = vmul.f32 %v4904, %v4967
      %v4982 = vmul.f32 %v4905, %v4969
      %v4983 = vmul.f32 %v4906, %v4952
      %v4984 = vmul.f32 %v4907, %v4966
      %v4985 = vmul.f32 %v4908, %v4968
      %v4986 = vmul.f32 %v4909, %v4970
      %v4987 = vmul.f32 %v4910, %v4945
      %v4988 = vmul.f32 %v4911, %v4959
      %v4989 = vmul.f32 %v4912, %v4967
      %v4990 = vmul.f32 %v4913, %v4969
      %v4991 = vmul.f32 %v4914, %v4952
      %v4992 = vmul.f32 %v4915, %v4966
      %v4993 = vmul.f32 %v4916, %v4968
      %v4995 = vlaneseq
      %v4996 = vshrl.u32 %v4995, 7
      %v4997 = vsub.s32 0, %v4996
      %v4998 = vrot.slane %v4469, %v4997
      %v4999 = vcombine.high %v4998, %v4998
      %v5001 = vunpack.c.l.s4 1966171168
      %v5002 = vunpack.c.0.s8 %v5001
      %v5003 = vlaneseq
      %v5004 = vshrl.u32 %v5003, 7
      %v5005 = vsub.s32 %v5002, %v5004
      %v5006 = vrot.slane %v4998, %v5005
      %v5008 = vunpack.c.l.s4 1966171168
      %v5009 = vunpack.c.0.s8 %v5008
      %v5010 = vlaneseq
      %v5011 = vshrl.u32 %v5010, 7
      %v5012 = vsub.s32 %v5009, %v5011
      %v5013 = vrot.slane %v4999, %v5012
      %v5014 = vcombine.high %v5006, %v5006
      %v5015 = vcombine.high %v5013, %v5013
      %v5017 = vunpack.c.l.s4 1966171168
      %v5018 = vunpack.c.0.s8 %v5017
      %v5019 = vlaneseq
      %v5020 = vshrl.u32 %v5019, 7
      %v5021 = vsub.s32 %v5018, %v5020
      %v5022 = vrot.slane %v5006, %v5021
      %v5024 = vunpack.c.l.s4 1966171168
      %v5025 = vunpack.c.0.s8 %v5024
      %v5026 = vlaneseq
      %v5027 = vshrl.u32 %v5026, 7
      %v5028 = vsub.s32 %v5025, %v5027
      %v5029 = vrot.slane %v5013, %v5028
      %v5031 = vunpack.c.l.s4 1966171168
      %v5032 = vunpack.c.0.s8 %v5031
      %v5033 = vlaneseq
      %v5034 = vshrl.u32 %v5033, 7
      %v5035 = vsub.s32 %v5032, %v5034
      %v5036 = vrot.slane %v5014, %v5035
      %v5038 = vunpack.c.l.s4 1966171168
      %v5039 = vunpack.c.0.s8 %v5038
      %v5040 = vlaneseq
      %v5041 = vshrl.u32 %v5040, 7
      %v5042 = vsub.s32 %v5039, %v5041
      %v5043 = vrot.slane %v5015, %v5042
      %v5044 = vcombine.high %v5022, %v5022
      %v5045 = vcombine.high %v5029, %v5029
      %v5046 = vcombine.high %v5036, %v5036
      %v5047 = vcombine.high %v5043, %v5043
      %v5056 = vadd.f32 %v4979, %v5022
      %v5057 = vadd.f32 %v4980, %v5036
      %v5058 = vadd.f32 %v4981, %v5044
      %v5059 = vadd.f32 %v4982, %v5046
      %v5060 = vadd.f32 %v4983, %v5029
      %v5061 = vadd.f32 %v4984, %v5043
      %v5062 = vadd.f32 %v4985, %v5045
      %v5063 = vadd.f32 %v4986, %v5047
      %v5064 = vadd.f32 %v4987, %v5022
      %v5065 = vadd.f32 %v4988, %v5036
      %v5066 = vadd.f32 %v4989, %v5044
      %v5067 = vadd.f32 %v4990, %v5046
      %v5068 = vadd.f32 %v4991, %v5029
      %v5069 = vadd.f32 %v4992, %v5043
      %v5070 = vadd.f32 %v4993, %v5045
      %v5086 = vcombine.low %v5056, %v5057
      %v5087 = vcombine.low %v5058, %v5059
      %v5088 = vcombine.low %v5060, %v5061
      %v5089 = vcombine.low %v5062, %v5063
      %v5091 = vunpack.c.l.s4 1966171168
      %v5092 = vunpack.c.0.s8 %v5091
      %v5093 = vlaneseq
      %v5094 = vshrl.u32 %v5093, 7
      %v5095 = vsub.s32 %v5092, %v5094
      %v5096 = vrot.slane %v5086, %v5095
      %v5098 = vunpack.c.l.s4 1966171168
      %v5099 = vunpack.c.0.s8 %v5098
      %v5100 = vlaneseq
      %v5101 = vshrl.u32 %v5100, 7
      %v5102 = vsub.s32 %v5099, %v5101
      %v5103 = vrot.slane %v5087, %v5102
      %v5105 = vunpack.c.l.s4 1966171168
      %v5106 = vunpack.c.0.s8 %v5105
      %v5107 = vlaneseq
      %v5108 = vshrl.u32 %v5107, 7
      %v5109 = vsub.s32 %v5106, %v5108
      %v5110 = vrot.slane %v5088, %v5109
      %v5112 = vunpack.c.l.s4 1966171168
      %v5113 = vunpack.c.0.s8 %v5112
      %v5114 = vlaneseq
      %v5115 = vshrl.u32 %v5114, 7
      %v5116 = vsub.s32 %v5113, %v5115
      %v5117 = vrot.slane %v5089, %v5116
      %v5118 = vcombine.low %v5096, %v5103
      %v5119 = vcombine.low %v5110, %v5117
      %v5121 = vunpack.c.l.s4 1966171168
      %v5122 = vunpack.c.0.s8 %v5121
      %v5123 = vlaneseq
      %v5124 = vshrl.u32 %v5123, 7
      %v5125 = vsub.s32 %v5122, %v5124
      %v5126 = vrot.slane %v5118, %v5125
      %v5128 = vunpack.c.l.s4 1966171168
      %v5129 = vunpack.c.0.s8 %v5128
      %v5130 = vlaneseq
      %v5131 = vshrl.u32 %v5130, 7
      %v5132 = vsub.s32 %v5129, %v5131
      %v5133 = vrot.slane %v5119, %v5132
      %v5134 = vcombine.low %v5126, %v5133
      %v5135 = vcombine.low %v5064, %v5065
      %v5136 = vcombine.low %v5066, %v5067
      %v5137 = vcombine.low %v5068, %v5069
      %v5139 = vunpack.c.l.s4 1966171168
      %v5140 = vunpack.c.0.s8 %v5139
      %v5141 = vlaneseq
      %v5142 = vshrl.u32 %v5141, 7
      %v5143 = vsub.s32 %v5140, %v5142
      %v5144 = vrot.slane %v5135, %v5143
      %v5146 = vunpack.c.l.s4 1966171168
      %v5147 = vunpack.c.0.s8 %v5146
      %v5148 = vlaneseq
      %v5149 = vshrl.u32 %v5148, 7
      %v5150 = vsub.s32 %v5147, %v5149
      %v5151 = vrot.slane %v5136, %v5150
      %v5153 = vunpack.c.l.s4 1966171168
      %v5154 = vunpack.c.0.s8 %v5153
      %v5155 = vlaneseq
      %v5156 = vshrl.u32 %v5155, 7
      %v5157 = vsub.s32 %v5154, %v5156
      %v5158 = vrot.slane %v5137, %v5157
      %v5160 = vunpack.c.l.s4 1966171168
      %v5161 = vunpack.c.0.s8 %v5160
      %v5162 = vlaneseq
      %v5163 = vshrl.u32 %v5162, 7
      %v5164 = vsub.s32 %v5161, %v5163
      %v5165 = vrot.slane %v5070, %v5164
      %v5166 = vcombine.low %v5144, %v5151
      %v5167 = vcombine.low %v5158, %v5165
      %v5169 = vunpack.c.l.s4 1966171168
      %v5170 = vunpack.c.0.s8 %v5169
      %v5171 = vlaneseq
      %v5172 = vshrl.u32 %v5171, 7
      %v5173 = vsub.s32 %v5170, %v5172
      %v5174 = vrot.slane %v5166, %v5173
      %v5176 = vunpack.c.l.s4 1966171168
      %v5177 = vunpack.c.0.s8 %v5176
      %v5178 = vlaneseq
      %v5179 = vshrl.u32 %v5178, 7
      %v5180 = vsub.s32 %v5177, %v5179
      %v5181 = vrot.slane %v5167, %v5180
      %v5182 = vcombine.low %v5174, %v5181
      %v5185 = vpack.c.bf16 %v5182, %v5134
      %v5186 = vld [vmem:[%s635] sm:$0xff]
      %v5187 = vld [vmem:[%s635 + $0x8] sm:$0xff]
      %v5188 = vld [vmem:[%s635 + $0x10] sm:$0xff]
      %v5189 = vld [vmem:[%s635 + $0x18] sm:$0xff]
      %v5190 = vld [vmem:[%s635 + $0x20] sm:$0xff]
      %v5191 = vld [vmem:[%s635 + $0x28] sm:$0xff]
      %v5192 = vld [vmem:[%s635 + $0x30] sm:$0xff]
      %v5193 = vld [vmem:[%s635 + $0x38] sm:$0xff]
      %v5194 = vld [vmem:[%s639] sm:$0x3]
      %v5196 = vlaneseq
      %v5197 = vshrl.u32 %v5196, 7
      %v5198 = vsub.s32 0, %v5197
      %v5199 = vrot.slane %v5194, %v5198
      %v5200 = vlaneseq
      %v5201 = vshrl.u32 %v5200, 7
      %v5202 = vsub.s32 1, %v5201
      %v5203 = vrot.slane %v5194, %v5202
      %v5214 = vunpack.c.l.b16 %v5186
      %v5215 = vunpack.c.h.b16 %v5186
      %v5216 = vunpack.c.l.b16 %v5187
      %v5217 = vunpack.c.h.b16 %v5187
      %v5218 = vunpack.c.l.b16 %v5188
      %v5219 = vunpack.c.h.b16 %v5188
      %v5220 = vunpack.c.l.b16 %v5189
      %v5221 = vunpack.c.h.b16 %v5189
      %v5222 = vunpack.c.l.b16 %v5190
      %v5223 = vunpack.c.h.b16 %v5190
      %v5224 = vunpack.c.l.b16 %v5191
      %v5225 = vunpack.c.h.b16 %v5191
      %v5226 = vunpack.c.l.b16 %v5192
      %v5227 = vunpack.c.h.b16 %v5192
      %v5228 = vunpack.c.l.b16 %v5193
      %v5229 = vunpack.c.h.b16 %v5193
      %v5230 = vpack.c.b16 %v5216, %v5214
      %v5231 = vpack.c.b16 %v5217, %v5215
      %v5232 = vpack.c.b16 %v5220, %v5218
      %v5233 = vpack.c.b16 %v5221, %v5219
      %v5234 = vpack.c.b16 %v5224, %v5222
      %v5235 = vpack.c.b16 %v5225, %v5223
      %v5236 = vpack.c.b16 %v5228, %v5226
      %v5237 = vpack.c.b16 %v5229, %v5227
      %v5247 = vsel %vm905, %v5185, 0
      %5249 = vmatprep.subr.bf16.mxu0 %v5231
      %5250 = vmatpush1.bf16.msra.mxu0 %v5230
      %5251 = vmatprep.subr.bf16.mxu0 %v5233
      %5252 = vmatpush1.bf16.msra.mxu0 %v5232
      %5253 = vmatprep.subr.bf16.mxu0 %v5235
      %5254 = vmatpush1.bf16.msra.mxu0 %v5234
      %5255 = vmatprep.subr.bf16.mxu0 %v5237
      %5256 = vmatpush1.bf16.msra.mxu0 %v5236
      %5257 = vmatprep.subr.bf16.mxu0 0
      %5258 = vmatpush1.bf16.msra.mxu0 0
      %5259 = vmatprep.subr.bf16.mxu0 0
      %5260 = vmatpush1.bf16.msra.mxu0 0
      %5261 = vmatprep.subr.bf16.mxu0 0
      %5262 = vmatpush1.bf16.msra.mxu0 0
      %5263 = vmatprep.subr.bf16.mxu0 0
      %5264 = vmatpush1.bf16.msra.mxu0 0
      %5265 = vmatprep.subr.bf16.mxu0 0
      %5266 = vmatpush1.bf16.msra.mxu0 0
      %5267 = vmatprep.subr.bf16.mxu0 0
      %5268 = vmatpush1.bf16.msra.mxu0 0
      %5269 = vmatprep.subr.bf16.mxu0 0
      %5270 = vmatpush1.bf16.msra.mxu0 0
      %5271 = vmatprep.subr.bf16.mxu0 0
      %5272 = vmatpush1.bf16.msra.mxu0 0
      %5273 = vmatprep.subr.bf16.mxu0 0
      %5274 = vmatpush1.bf16.msra.mxu0 0
      %5275 = vmatprep.subr.bf16.mxu0 0
      %5276 = vmatpush1.bf16.msra.mxu0 0
      %5277 = vmatprep.subr.bf16.mxu0 0
      %5278 = vmatpush1.bf16.msra.mxu0 0
      %5279 = vmatprep.subr.bf16.mxu0 0
      %5280 = vmatpush1.bf16.msra.mxu0 0
      %5281 = vmatprep.mubr.bf16.mxu0 0
      %5282 = vmatmul.mubr.bf16.gmra.mrb[0].mxu0 %v5247
      %v5283 = vpop.f32.mrb[0].mxu0
      %v5284 = vadd.f32 %v5199, %v5283
      %v5285 = vpop.f32.mrb[0].mxu0
      %v5286 = vadd.f32 %v5203, %v5285
      %v5287 = vpop.f32.mrb[0].mxu0
      %v5288 = vadd.f32 %v5199, %v5287
      %v5289 = vpop.f32.mrb[0].mxu0
      %v5290 = vadd.f32 %v5203, %v5289
      %5291 = vdwg.mxu0
      %v5292 = vmul.f32 %v5284, 0.5
      %v5293 = vmul.f32 %v5286, 0.5
      %v5294 = vmul.f32 %v5288, 0.5
      %v5295 = vmul.f32 %v5290, 0.5
      %v5296 = vmul.f32 %v5284, 0.044715
      %v5297 = vmul.f32 %v5286, 0.044715
      %v5298 = vmul.f32 %v5288, 0.044715
      %v5299 = vmul.f32 %v5290, 0.044715
      %v5300 = vmul.f32 %v5296, %v5284
      %v5301 = vmul.f32 %v5297, %v5286
      %v5302 = vmul.f32 %v5298, %v5288
      %v5303 = vmul.f32 %v5299, %v5290
      %v5304 = vmul.f32 %v5300, %v5284
      %v5305 = vmul.f32 %v5301, %v5286
      %v5306 = vmul.f32 %v5302, %v5288
      %v5307 = vmul.f32 %v5303, %v5290
      %v5308 = vadd.f32 %v5284, %v5304
      %v5309 = vadd.f32 %v5286, %v5305
      %v5310 = vadd.f32 %v5288, %v5306
      %v5311 = vadd.f32 %v5290, %v5307
      %v5312 = vmul.f32 %v5308, 0.7978846
      %v5313 = vmul.f32 %v5309, 0.7978846
      %v5314 = vmul.f32 %v5310, 0.7978846
      %v5315 = vmul.f32 %v5311, 0.7978846
      %v5316 = vtanh.pop %v5312
      %v5317 = vtanh.pop %v5313
      %v5318 = vtanh.pop %v5314
      %v5319 = vtanh.pop %v5315
      %v5320 = vadd.f32 %v5316, 1.0
      %v5321 = vadd.f32 %v5317, 1.0
      %v5322 = vadd.f32 %v5318, 1.0
      %v5323 = vadd.f32 %v5319, 1.0
      %v5324 = vmul.f32 %v5292, %v5320
      %v5325 = vmul.f32 %v5293, %v5321
      %v5326 = vmul.f32 %v5294, %v5322
      %v5327 = vmul.f32 %v5295, %v5323
      %v5328 = vpack.c.bf16 %v5326, %v5324
      %v5329 = vpack.c.bf16 %v5327, %v5325
      %v5330 = vld [vmem:[%s644] sm:$0xf]
      %v5331 = vld [vmem:[%s644 + $0x4] sm:$0xf]
      %v5332 = vld [vmem:[%s644 + $0x8] sm:$0xf]
      %v5333 = vld [vmem:[%s644 + $0xc] sm:$0xf]
      %v5334 = vld [vmem:[%s644 + $0x10] sm:$0xf]
      %v5335 = vld [vmem:[%s644 + $0x14] sm:$0xf]
      %v5336 = vld [vmem:[%s644 + $0x18] sm:$0xf]
      %v5337 = vld [vmem:[%s644 + $0x1c] sm:$0xf]
      %v5338 = vld [vmem:[%s644 + $0x20] sm:$0xf]
      %v5339 = vld [vmem:[%s644 + $0x24] sm:$0xf]
      %v5340 = vld [vmem:[%s644 + $0x28] sm:$0xf]
      %v5341 = vld [vmem:[%s644 + $0x2c] sm:$0xf]
      %v5342 = vld [vmem:[%s644 + $0x30] sm:$0xf]
      %v5343 = vld [vmem:[%s644 + $0x34] sm:$0xf]
      %v5344 = vld [vmem:[%s644 + $0x38] sm:$0xf]
      %v5345 = vld [vmem:[%s644 + $0x3c] sm:$0xf]
      %v5346 = vld [vmem:[%s644 + $0x40] sm:$0xf]
      %v5347 = vld [vmem:[%s644 + $0x44] sm:$0xf]
      %v5348 = vld [vmem:[%s644 + $0x48] sm:$0xf]
      %v5349 = vld [vmem:[%s644 + $0x4c] sm:$0xf]
      %v5350 = vld [vmem:[%s644 + $0x50] sm:$0xf]
      %v5351 = vld [vmem:[%s644 + $0x54] sm:$0xf]
      %v5352 = vld [vmem:[%s644 + $0x58] sm:$0xf]
      %v5353 = vld [vmem:[%s644 + $0x5c] sm:$0xf]
      %v5354 = vld [vmem:[%s644 + $0x60] sm:$0xf]
      %v5355 = vld [vmem:[%s644 + $0x64] sm:$0xf]
      %v5356 = vld [vmem:[%s644 + $0x68] sm:$0xf]
      %v5357 = vld [vmem:[%s644 + $0x6c] sm:$0xf]
      %v5358 = vld [vmem:[%s644 + $0x70] sm:$0xf]
      %v5359 = vld [vmem:[%s644 + $0x74] sm:$0xf]
      %v5360 = vld [vmem:[%s644 + $0x78] sm:$0xf]
      %v5361 = vld [vmem:[%s644 + $0x7c] sm:$0xf]
      %v5362 = vld [vmem:[%s647] sm:$0x1]
      %v5364 = vlaneseq
      %v5365 = vshrl.u32 %v5364, 7
      %v5366 = vsub.s32 0, %v5365
      %v5367 = vrot.slane %v5362, %v5366
      %v5401 = vunpack.c.l.b16 %v5330
      %v5402 = vunpack.c.l.b16 %v5331
      %v5403 = vunpack.c.l.b16 %v5332
      %v5404 = vunpack.c.l.b16 %v5333
      %v5405 = vunpack.c.l.b16 %v5334
      %v5406 = vunpack.c.l.b16 %v5335
      %v5407 = vunpack.c.l.b16 %v5336
      %v5408 = vunpack.c.l.b16 %v5337
      %v5409 = vunpack.c.l.b16 %v5338
      %v5410 = vunpack.c.l.b16 %v5339
      %v5411 = vunpack.c.l.b16 %v5340
      %v5412 = vunpack.c.l.b16 %v5341
      %v5413 = vunpack.c.l.b16 %v5342
      %v5414 = vunpack.c.l.b16 %v5343
      %v5415 = vunpack.c.l.b16 %v5344
      %v5416 = vunpack.c.l.b16 %v5345
      %v5417 = vunpack.c.l.b16 %v5346
      %v5418 = vunpack.c.l.b16 %v5347
      %v5419 = vunpack.c.l.b16 %v5348
      %v5420 = vunpack.c.l.b16 %v5349
      %v5421 = vunpack.c.l.b16 %v5350
      %v5422 = vunpack.c.l.b16 %v5351
      %v5423 = vunpack.c.l.b16 %v5352
      %v5424 = vunpack.c.l.b16 %v5353
      %v5425 = vunpack.c.l.b16 %v5354
      %v5426 = vunpack.c.l.b16 %v5355
      %v5427 = vunpack.c.l.b16 %v5356
      %v5428 = vunpack.c.l.b16 %v5357
      %v5429 = vunpack.c.l.b16 %v5358
      %v5430 = vunpack.c.l.b16 %v5359
      %v5431 = vunpack.c.l.b16 %v5360
      %v5432 = vunpack.c.l.b16 %v5361
      %v5433 = vpack.c.b16 %v5402, %v5401
      %v5434 = vpack.c.b16 %v5404, %v5403
      %v5435 = vpack.c.b16 %v5406, %v5405
      %v5436 = vpack.c.b16 %v5408, %v5407
      %v5437 = vpack.c.b16 %v5410, %v5409
      %v5438 = vpack.c.b16 %v5412, %v5411
      %v5439 = vpack.c.b16 %v5414, %v5413
      %v5440 = vpack.c.b16 %v5416, %v5415
      %v5441 = vpack.c.b16 %v5418, %v5417
      %v5442 = vpack.c.b16 %v5420, %v5419
      %v5443 = vpack.c.b16 %v5422, %v5421
      %v5444 = vpack.c.b16 %v5424, %v5423
      %v5445 = vpack.c.b16 %v5426, %v5425
      %v5446 = vpack.c.b16 %v5428, %v5427
      %v5447 = vpack.c.b16 %v5430, %v5429
      %v5448 = vpack.c.b16 %v5432, %v5431
      %5465 = vmatprep.subr.bf16.mxu0 0
      %5466 = vmatpush1.bf16.msra.mxu0 %v5433
      %5467 = vmatprep.subr.bf16.mxu0 0
      %5468 = vmatpush1.bf16.msra.mxu0 %v5434
      %5469 = vmatprep.subr.bf16.mxu0 0
      %5470 = vmatpush1.bf16.msra.mxu0 %v5435
      %5471 = vmatprep.subr.bf16.mxu0 0
      %5472 = vmatpush1.bf16.msra.mxu0 %v5436
      %5473 = vmatprep.subr.bf16.mxu0 0
      %5474 = vmatpush1.bf16.msra.mxu0 %v5437
      %5475 = vmatprep.subr.bf16.mxu0 0
      %5476 = vmatpush1.bf16.msra.mxu0 %v5438
      %5477 = vmatprep.subr.bf16.mxu0 0
      %5478 = vmatpush1.bf16.msra.mxu0 %v5439
      %5479 = vmatprep.subr.bf16.mxu0 0
      %5480 = vmatpush1.bf16.msra.mxu0 %v5440
      %5481 = vmatprep.subr.bf16.mxu0 0
      %5482 = vmatpush1.bf16.msra.mxu0 %v5441
      %5483 = vmatprep.subr.bf16.mxu0 0
      %5484 = vmatpush1.bf16.msra.mxu0 %v5442
      %5485 = vmatprep.subr.bf16.mxu0 0
      %5486 = vmatpush1.bf16.msra.mxu0 %v5443
      %5487 = vmatprep.subr.bf16.mxu0 0
      %5488 = vmatpush1.bf16.msra.mxu0 %v5444
      %5489 = vmatprep.subr.bf16.mxu0 0
      %5490 = vmatpush1.bf16.msra.mxu0 %v5445
      %5491 = vmatprep.subr.bf16.mxu0 0
      %5492 = vmatpush1.bf16.msra.mxu0 %v5446
      %5493 = vmatprep.subr.bf16.mxu0 0
      %5494 = vmatpush1.bf16.msra.mxu0 %v5447
      %5495 = vmatprep.subr.bf16.mxu0 0
      %5496 = vmatpush1.bf16.msra.mxu0 %v5448
      %5497 = vmatprep.mubr.bf16.mxu0 %v5329
      %5498 = vmatmul.mubr.bf16.gmra.mrb[0].mxu0 %v5328
      %v5499 = vpop.f32.mrb[0].mxu0
      %v5500 = vadd.f32 %v5367, %v5499
      %v5501 = vpop.f32.mrb[0].mxu0
      %v5502 = vpop.f32.mrb[0].mxu0
      %v5503 = vadd.f32 %v5367, %v5502
      %v5504 = vpop.f32.mrb[0].mxu0
      %5505 = vdwg.mxu0
      %v5508 = vcombine.high %v5500, %v5500
      %v5510 = vunpack.c.l.s4 1966171168
      %v5511 = vunpack.c.0.s8 %v5510
      %v5512 = vlaneseq
      %v5513 = vshrl.u32 %v5512, 7
      %v5514 = vsub.s32 %v5511, %v5513
      %v5515 = vrot.slane %v5500, %v5514
      %v5517 = vunpack.c.l.s4 1966171168
      %v5518 = vunpack.c.0.s8 %v5517
      %v5519 = vlaneseq
      %v5520 = vshrl.u32 %v5519, 7
      %v5521 = vsub.s32 %v5518, %v5520
      %v5522 = vrot.slane %v5508, %v5521
      %v5523 = vcombine.high %v5515, %v5515
      %v5524 = vcombine.high %v5522, %v5522
      %v5526 = vunpack.c.l.s4 1966171168
      %v5527 = vunpack.c.0.s8 %v5526
      %v5528 = vlaneseq
      %v5529 = vshrl.u32 %v5528, 7
      %v5530 = vsub.s32 %v5527, %v5529
      %v5531 = vrot.slane %v5515, %v5530
      %v5533 = vunpack.c.l.s4 1966171168
      %v5534 = vunpack.c.0.s8 %v5533
      %v5535 = vlaneseq
      %v5536 = vshrl.u32 %v5535, 7
      %v5537 = vsub.s32 %v5534, %v5536
      %v5538 = vrot.slane %v5522, %v5537
      %v5540 = vunpack.c.l.s4 1966171168
      %v5541 = vunpack.c.0.s8 %v5540
      %v5542 = vlaneseq
      %v5543 = vshrl.u32 %v5542, 7
      %v5544 = vsub.s32 %v5541, %v5543
      %v5545 = vrot.slane %v5523, %v5544
      %v5547 = vunpack.c.l.s4 1966171168
      %v5548 = vunpack.c.0.s8 %v5547
      %v5549 = vlaneseq
      %v5550 = vshrl.u32 %v5549, 7
      %v5551 = vsub.s32 %v5548, %v5550
      %v5552 = vrot.slane %v5524, %v5551
      %v5553 = vcombine.high %v5531, %v5531
      %v5554 = vcombine.high %v5538, %v5538
      %v5555 = vcombine.high %v5545, %v5545
      %v5556 = vcombine.high %v5552, %v5552
      %v5557 = vcombine.high %v5503, %v5503
      %v5559 = vunpack.c.l.s4 1966171168
      %v5560 = vunpack.c.0.s8 %v5559
      %v5561 = vlaneseq
      %v5562 = vshrl.u32 %v5561, 7
      %v5563 = vsub.s32 %v5560, %v5562
      %v5564 = vrot.slane %v5503, %v5563
      %v5566 = vunpack.c.l.s4 1966171168
      %v5567 = vunpack.c.0.s8 %v5566
      %v5568 = vlaneseq
      %v5569 = vshrl.u32 %v5568, 7
      %v5570 = vsub.s32 %v5567, %v5569
      %v5571 = vrot.slane %v5557, %v5570
      %v5572 = vcombine.high %v5564, %v5564
      %v5573 = vcombine.high %v5571, %v5571
      %v5575 = vunpack.c.l.s4 1966171168
      %v5576 = vunpack.c.0.s8 %v5575
      %v5577 = vlaneseq
      %v5578 = vshrl.u32 %v5577, 7
      %v5579 = vsub.s32 %v5576, %v5578
      %v5580 = vrot.slane %v5564, %v5579
      %v5582 = vunpack.c.l.s4 1966171168
      %v5583 = vunpack.c.0.s8 %v5582
      %v5584 = vlaneseq
      %v5585 = vshrl.u32 %v5584, 7
      %v5586 = vsub.s32 %v5583, %v5585
      %v5587 = vrot.slane %v5571, %v5586
      %v5589 = vunpack.c.l.s4 1966171168
      %v5590 = vunpack.c.0.s8 %v5589
      %v5591 = vlaneseq
      %v5592 = vshrl.u32 %v5591, 7
      %v5593 = vsub.s32 %v5590, %v5592
      %v5594 = vrot.slane %v5572, %v5593
      %v5596 = vunpack.c.l.s4 1966171168
      %v5597 = vunpack.c.0.s8 %v5596
      %v5598 = vlaneseq
      %v5599 = vshrl.u32 %v5598, 7
      %v5600 = vsub.s32 %v5597, %v5599
      %v5601 = vrot.slane %v5573, %v5600
      %v5602 = vcombine.high %v5580, %v5580
      %v5603 = vcombine.high %v5587, %v5587
      %v5604 = vcombine.high %v5594, %v5594
      %v5620 = vadd.f32 %v4453, %v5531
      %v5621 = vadd.f32 %v4454, %v5545
      %v5622 = vadd.f32 %v4455, %v5553
      %v5623 = vadd.f32 %v4456, %v5555
      %v5624 = vadd.f32 %v4457, %v5538
      %v5625 = vadd.f32 %v4458, %v5552
      %v5626 = vadd.f32 %v4459, %v5554
      %v5627 = vadd.f32 %v4460, %v5556
      %v5628 = vadd.f32 %v4461, %v5580
      %v5629 = vadd.f32 %v4462, %v5594
      %v5630 = vadd.f32 %v4463, %v5602
      %v5631 = vadd.f32 %v4464, %v5604
      %v5632 = vadd.f32 %v4465, %v5587
      %v5633 = vadd.f32 %v4466, %v5601
      %v5634 = vadd.f32 %v4467, %v5603
      %v5650 = vcombine.low %v5620, %v5621
      %v5651 = vcombine.low %v5622, %v5623
      %v5653 = vunpack.c.l.s4 1966171168
      %v5654 = vunpack.c.0.s8 %v5653
      %v5655 = vlaneseq
      %v5656 = vshrl.u32 %v5655, 7
      %v5657 = vsub.s32 %v5654, %v5656
      %v5658 = vrot.slane %v5650, %v5657
      %v5660 = vunpack.c.l.s4 1966171168
      %v5661 = vunpack.c.0.s8 %v5660
      %v5662 = vlaneseq
      %v5663 = vshrl.u32 %v5662, 7
      %v5664 = vsub.s32 %v5661, %v5663
      %v5665 = vrot.slane %v5651, %v5664
      %v5667 = vunpack.c.l.s4 1966171168
      %v5668 = vunpack.c.0.s8 %v5667
      %v5669 = vlaneseq
      %v5670 = vshrl.u32 %v5669, 7
      %v5671 = vsub.s32 %v5668, %v5670
      %v5672 = vrot.slane %v5624, %v5671
      %v5673 = vcombine.low %v5658, %v5665
      %v5675 = vunpack.c.l.s4 1966171168
      %v5676 = vunpack.c.0.s8 %v5675
      %v5677 = vlaneseq
      %v5678 = vshrl.u32 %v5677, 7
      %v5679 = vsub.s32 %v5676, %v5678
      %v5680 = vrot.slane %v5673, %v5679
      %v5682 = vunpack.c.l.s4 1966171168
      %v5683 = vunpack.c.0.s8 %v5682
      %v5684 = vlaneseq
      %v5685 = vshrl.u32 %v5684, 7
      %v5686 = vsub.s32 %v5683, %v5685
      %v5687 = vrot.slane %v5672, %v5686
      %v5688 = vcombine.low %v5680, %v5687
      %v5689 = vcombine.low %v5625, %v5626
      %v5690 = vcombine.low %v5627, %v5628
      %v5692 = vunpack.c.l.s4 1966171168
      %v5693 = vunpack.c.0.s8 %v5692
      %v5694 = vlaneseq
      %v5695 = vshrl.u32 %v5694, 7
      %v5696 = vsub.s32 %v5693, %v5695
      %v5697 = vrot.slane %v5689, %v5696
      %v5699 = vunpack.c.l.s4 1966171168
      %v5700 = vunpack.c.0.s8 %v5699
      %v5701 = vlaneseq
      %v5702 = vshrl.u32 %v5701, 7
      %v5703 = vsub.s32 %v5700, %v5702
      %v5704 = vrot.slane %v5690, %v5703
      %v5706 = vunpack.c.l.s4 1966171168
      %v5707 = vunpack.c.0.s8 %v5706
      %v5708 = vlaneseq
      %v5709 = vshrl.u32 %v5708, 7
      %v5710 = vsub.s32 %v5707, %v5709
      %v5711 = vrot.slane %v5629, %v5710
      %v5712 = vcombine.low %v5697, %v5704
      %v5714 = vunpack.c.l.s4 1966171168
      %v5715 = vunpack.c.0.s8 %v5714
      %v5716 = vlaneseq
      %v5717 = vshrl.u32 %v5716, 7
      %v5718 = vsub.s32 %v5715, %v5717
      %v5719 = vrot.slane %v5712, %v5718
      %v5721 = vunpack.c.l.s4 1966171168
      %v5722 = vunpack.c.0.s8 %v5721
      %v5723 = vlaneseq
      %v5724 = vshrl.u32 %v5723, 7
      %v5725 = vsub.s32 %v5722, %v5724
      %v5726 = vrot.slane %v5711, %v5725
      %v5727 = vcombine.low %v5719, %v5726
      %v5728 = vcombine.low %v5630, %v5631
      %v5729 = vcombine.low %v5632, %v5633
      %v5731 = vunpack.c.l.s4 1966171168
      %v5732 = vunpack.c.0.s8 %v5731
      %v5733 = vlaneseq
      %v5734 = vshrl.u32 %v5733, 7
      %v5735 = vsub.s32 %v5732, %v5734
      %v5736 = vrot.slane %v5728, %v5735
      %v5738 = vunpack.c.l.s4 1966171168
      %v5739 = vunpack.c.0.s8 %v5738
      %v5740 = vlaneseq
      %v5741 = vshrl.u32 %v5740, 7
      %v5742 = vsub.s32 %v5739, %v5741
      %v5743 = vrot.slane %v5729, %v5742
      %v5745 = vunpack.c.l.s4 1966171168
      %v5746 = vunpack.c.0.s8 %v5745
      %v5747 = vlaneseq
      %v5748 = vshrl.u32 %v5747, 7
      %v5749 = vsub.s32 %v5746, %v5748
      %v5750 = vrot.slane %v5634, %v5749
      %v5751 = vcombine.low %v5736, %v5743
      %v5753 = vunpack.c.l.s4 1966171168
      %v5754 = vunpack.c.0.s8 %v5753
      %v5755 = vlaneseq
      %v5756 = vshrl.u32 %v5755, 7
      %v5757 = vsub.s32 %v5754, %v5756
      %v5758 = vrot.slane %v5751, %v5757
      %v5760 = vunpack.c.l.s4 1966171168
      %v5761 = vunpack.c.0.s8 %v5760
      %v5762 = vlaneseq
      %v5763 = vshrl.u32 %v5762, 7
      %v5764 = vsub.s32 %v5761, %v5763
      %v5765 = vrot.slane %v5750, %v5764
      %v5766 = vcombine.low %v5758, %v5765
      %vm5770 = vcmask 520192
      %5771 = vst.msk [vmem:[%s652] sm:$0x1f] %vm5770, %v5688
      %5772 = vst.msk [vmem:[%s652 + $0x8] sm:$0x1f] %vm5770, %v5727
      %5773 = vst.msk [vmem:[%s652 + $0x10] sm:$0x1f] %vm5770, %v5766
      %s5774 = smul.u32 3, %s28
      %p5775 = scmp.lt.s32.totalorder %s5774, 5
      %s5776 = scalar_select %p5775, %s5774, 5
      %s5777 = smul.addr %s5776, 8
      %s5778 = scalar_lea.vmem %s13, %s5777
      // Predicated region
      $region77: #{model_forward.6} parent=71 // pred_check
        %p5779 = pneg %p392
      $region78: #{model_forward.6} parent=71 // pred_check_branch
        %5781 = sbr.rel (%p5779) target = $region80
      $region79: #{model_forward.6} parent=71 // pred_region
        %s5782 = smul.u32 3, %s28
      $region80: #{model_forward.6} parent=71 // pred_fallthru
        _
    $region72: #{model_forward.6} parent=5 // pred_fallthru
      _
    %p5783 = scmp.le.s32.totalorder 2, %s19
    // Predicated region
    $region81: #{model_forward.6} parent=5 // pred_check
      %p5784 = pneg %p5783
    $region82: #{model_forward.6} parent=5 // pred_check_branch
      %5786 = sbr.rel (%p5784) target = $region84
    $region83: #{model_forward.6} parent=5 // pred_region
      %s5787 = ssub.s32 %s19, 2
      // Predicated region
      $region85: #{model_forward.6} parent=83 // pred_check
        %p5788 = pneg %p398
      $region86: #{model_forward.6} parent=83 // pred_check_branch
        %5790 = sbr.rel (%p5788) target = $region88
      $region87: #{model_forward.6} parent=83 // pred_region
        %s5791 = smul.u32 3, %s30
        %p5792 = scmp.lt.s32.totalorder %s5791, 5
        %s5793 = scalar_select %p5792, %s5791, 5
        %s5794 = smul.addr %s5793, 8
        %s5795 = scalar_lea.vmem %s13, %s5794
      $region88: #{model_forward.6} parent=83 // pred_fallthru
        _
    $region84: #{model_forward.6} parent=5 // pred_fallthru
      _
  $region6: #{model_forward.6} parent=0 // loop_footer
    %s23 = sadd.s32 1, %s19
  $region7: #{model_forward.6} parent=0 // loop_footer_branch
    %18 = sbr.rel target = $region3
  $region8: #{model_forward.6} parent=0 // loop_exit
    _

// kernel: model_forward.8
$region0: #{model_forward.8}
  #allocation0 [shape = 'u32[]', space=smem, size = 0x4, offset = 0x4, fixed_abs, tag = 'smem constant byte address 0x4 - core index']
  #allocation1 [shape = 'u32[144,128]{1,0:T(1,128)}', space=vmem, size = 0x12000, scoped, tag = 'internal scratch']
  %s0 = inlined_call_operand.vmem [shape: f32[2,15,32], index: 0, kind: input, shape index: {}]
  %s1 = inlined_call_operand.vmem [shape: f32[15,15], index: 1, kind: input, shape index: {}]
  %s2 = inlined_call_operand.vmem [shape: f32[2,1,32], index: 2, kind: input, shape index: {}]
  %s3 = inlined_call_operand.vmem [shape: f32[2,1,32], index: 3, kind: input, shape index: {}]
  %s4 = inlined_call_operand.vmem [shape: bf16[2,32,96], index: 4, kind: input, shape index: {}]
  %s5 = inlined_call_operand.vmem [shape: bf16[2,32,32], index: 5, kind: input, shape index: {}]
  %s6 = inlined_call_operand.vmem [shape: f32[2,1,32], index: 6, kind: input, shape index: {}]
  %s7 = inlined_call_operand.vmem [shape: f32[2,1,32], index: 7, kind: input, shape index: {}]
  %s8 = inlined_call_operand.vmem [shape: f32[2,1,32], index: 8, kind: input, shape index: {}]
  %s9 = inlined_call_operand.vmem [shape: bf16[2,32,128], index: 9, kind: input, shape index: {}]
  %s10 = inlined_call_operand.vmem [shape: f32[2,1,128], index: 10, kind: input, shape index: {}]
  %s11 = inlined_call_operand.vmem [shape: bf16[2,128,32], index: 11, kind: input, shape index: {}]
  %s12 = inlined_call_operand.vmem [shape: f32[2,1,32], index: 12, kind: input, shape index: {}]
  %s13 = inlined_call_operand.vmem [shape: f32[2,15,32], index: 13, kind: output, shape index: {}]
  %s14 = sld [smem:[#allocation0]]
  $region89: #{model_forward.8} parent=0
    _
  %s16 = ssub.s32 1, %s14
  %s17 = scalar_select 0, %s16, %s14
  loop: start=0, step=1, limit=6
  $region2: #{model_forward.8} parent=0 // loop_pre_header
    _
  $region3: #{model_forward.8} parent=0 // loop_header
    %s19 = sphi 0, %s23
    %p20 = scmp.ge.s32.totalorder %s19, 6
    %s26 = sphi 0, %s38
    %s27 = sphi 0, %s34
    %s28 = sphi 0, %s26
    %s29 = sphi 0, %s27
    %s30 = sphi 0, %s28
    %s31 = sphi 0, %s29
    %s41 = sphi 0, %s43
    %s44 = sphi 0, %s41
    %s45 = sphi 0, %s44
    %s61 = sphi 0, %s45
    %s65 = sphi 0, %s65
    %s67 = sphi 0, %s65
    %s68 = sphi 0, %s67
    %s82 = sphi 0, %s68
    %s88 = sphi 0, %s90
    %s91 = sphi 0, %s88
    %s92 = sphi 0, %s91
    %s108 = sphi 0, %s92
    %s114 = sphi 0, %s116
    %s117 = sphi 0, %s114
    %s118 = sphi 0, %s117
    %s134 = sphi 0, %s118
    %s140 = sphi 0, %s142
    %s143 = sphi 0, %s140
    %s144 = sphi 0, %s143
    %s160 = sphi 0, %s144
    %s166 = sphi 0, %s168
    %s169 = sphi 0, %s166
    %s170 = sphi 0, %s169
    %s186 = sphi 0, %s170
    %s192 = sphi 0, %s194
    %s195 = sphi 0, %s192
    %s196 = sphi 0, %s195
    %s212 = sphi 0, %s196
    %s218 = sphi 0, %s220
    %s221 = sphi 0, %s218
    %s222 = sphi 0, %s221
    %s238 = sphi 0, %s222
    %s244 = sphi 0, %s246
    %s247 = sphi 0, %s244
    %s248 = sphi 0, %s247
    %s264 = sphi 0, %s248
    %s270 = sphi 0, %s272
    %s273 = sphi 0, %s270
    %s274 = sphi 0, %s273
    %s290 = sphi 0, %s274
    %s296 = sphi 0, %s298
    %s299 = sphi 0, %s296
    %s300 = sphi 0, %s299
    %s316 = sphi 0, %s300
    %s322 = sphi 0, %s324
    %s325 = sphi 0, %s322
    %s326 = sphi 0, %s325
    %s342 = sphi 0, %s326
    %s348 = sphi 0, %s350
    %s351 = sphi 0, %s348
    %s352 = sphi 0, %s351
    %s368 = sphi 0, %s352
    %s374 = sphi 0, %s376
    %s377 = sphi 0, %s374
    %s378 = sphi 0, %s377
    %s394 = sphi 0, %s378
  $region4: #{model_forward.8} parent=0 // loop_header_branch
    %22 = sbr.rel (%p20) target = $region8
  $region5: #{model_forward.8} parent=0 // loop_body
    %s24 = ssub.s32 %s19, 1
    %s25 = ssub.s32 %s19, 2
    %s32 = sadd.s32 1, %s27
    %p33 = scmp.ge.s32.totalorder %s32, 2
    %s34 = scalar_select %p33, 0, %s32
    %s35 = sadd.s32 1, %s26
    %s36 = scalar_select %p33, %s35, %s26
    %p37 = scmp.ge.s32.totalorder %s36, 2
    %s38 = scalar_select %p37, 0, %s36
    %s39 = ssub.s32 %s26, %s38
    %p40 = scmp.eq.s32.totalorder %s39, 0
    %s42 = sadd.s32 %s41, 1
    %s43 = scalar_select %p40, %s41, %s42
    %p46 = pneg %p40
    %p47 = scmp.eq.s32.totalorder %s19, 3
    %p48 = por %p46, %p47
    %p49 = scmp.ne.s32.totalorder %s41, %s44
    %p50 = scmp.eq.s32.totalorder %s19, 0
    %p51 = por %p49, %p50
    %p52 = scmp.ne.s32.totalorder %s41, %s44
    %p53 = scmp.eq.s32.totalorder %s24, 3
    %p54 = por %p52, %p53
    %p55 = scmp.ne.s32.totalorder %s44, %s45
    %p56 = scmp.eq.s32.totalorder %s24, 0
    %p57 = por %p55, %p56
    %p58 = scmp.ne.s32.totalorder %s44, %s45
    %p59 = scmp.eq.s32.totalorder %s25, 3
    %p60 = por %p58, %p59
    %p62 = scmp.ne.s32.totalorder %s45, %s61
    %p63 = scmp.eq.s32.totalorder %s25, 0
    %p64 = por %p62, %p63
    %s66 = sadd.s32 %s65, 1
    %p69 = scmp.eq.s32.totalorder %s19, 3
    %p70 = scmp.ne.s32.totalorder %s65, %s67
    %p71 = scmp.eq.s32.totalorder %s19, 0
    %p72 = por %p70, %p71
    %p73 = scmp.ne.s32.totalorder %s65, %s67
    %p74 = scmp.eq.s32.totalorder %s24, 3
    %p75 = por %p73, %p74
    %p76 = scmp.ne.s32.totalorder %s67, %s68
    %p77 = scmp.eq.s32.totalorder %s24, 0
    %p78 = por %p76, %p77
    %p79 = scmp.ne.s32.totalorder %s67, %s68
    %p80 = scmp.eq.s32.totalorder %s25, 3
    %p81 = por %p79, %p80
    %p83 = scmp.ne.s32.totalorder %s68, %s82
    %p84 = scmp.eq.s32.totalorder %s25, 0
    %p85 = por %p83, %p84
    %s86 = ssub.s32 %s27, %s34
    %p87 = scmp.eq.s32.totalorder %s86, 0
    %s89 = sadd.s32 %s88, 1
    %s90 = scalar_select %p87, %s88, %s89
    %p93 = pneg %p87
    %p94 = scmp.eq.s32.totalorder %s19, 3
    %p95 = por %p93, %p94
    %p96 = scmp.ne.s32.totalorder %s88, %s91
    %p97 = scmp.eq.s32.totalorder %s19, 0
    %p98 = por %p96, %p97
    %p99 = scmp.ne.s32.totalorder %s88, %s91
    %p100 = scmp.eq.s32.totalorder %s24, 3
    %p101 = por %p99, %p100
    %p102 = scmp.ne.s32.totalorder %s91, %s92
    %p103 = scmp.eq.s32.totalorder %s24, 0
    %p104 = por %p102, %p103
    %p105 = scmp.ne.s32.totalorder %s91, %s92
    %p106 = scmp.eq.s32.totalorder %s25, 3
    %p107 = por %p105, %p106
    %p109 = scmp.ne.s32.totalorder %s92, %s108
    %p110 = scmp.eq.s32.totalorder %s25, 0
    %p111 = por %p109, %p110
    %s112 = ssub.s32 %s27, %s34
    %p113 = scmp.eq.s32.totalorder %s112, 0
    %s115 = sadd.s32 %s114, 1
    %s116 = scalar_select %p113, %s114, %s115
    %p119 = pneg %p113
    %p120 = scmp.eq.s32.totalorder %s19, 3
    %p121 = por %p119, %p120
    %p122 = scmp.ne.s32.totalorder %s114, %s117
    %p123 = scmp.eq.s32.totalorder %s19, 0
    %p124 = por %p122, %p123
    %p125 = scmp.ne.s32.totalorder %s114, %s117
    %p126 = scmp.eq.s32.totalorder %s24, 3
    %p127 = por %p125, %p126
    %p128 = scmp.ne.s32.totalorder %s117, %s118
    %p129 = scmp.eq.s32.totalorder %s24, 0
    %p130 = por %p128, %p129
    %p131 = scmp.ne.s32.totalorder %s117, %s118
    %p132 = scmp.eq.s32.totalorder %s25, 3
    %p133 = por %p131, %p132
    %p135 = scmp.ne.s32.totalorder %s118, %s134
    %p136 = scmp.eq.s32.totalorder %s25, 0
    %p137 = por %p135, %p136
    %s138 = ssub.s32 %s27, %s34
    %p139 = scmp.eq.s32.totalorder %s138, 0
    %s141 = sadd.s32 %s140, 1
    %s142 = scalar_select %p139, %s140, %s141
    %p145 = pneg %p139
    %p146 = scmp.eq.s32.totalorder %s19, 3
    %p147 = por %p145, %p146
    %p148 = scmp.ne.s32.totalorder %s140, %s143
    %p149 = scmp.eq.s32.totalorder %s19, 0
    %p150 = por %p148, %p149
    %p151 = scmp.ne.s32.totalorder %s140, %s143
    %p152 = scmp.eq.s32.totalorder %s24, 3
    %p153 = por %p151, %p152
    %p154 = scmp.ne.s32.totalorder %s143, %s144
    %p155 = scmp.eq.s32.totalorder %s24, 0
    %p156 = por %p154, %p155
    %p157 = scmp.ne.s32.totalorder %s143, %s144
    %p158 = scmp.eq.s32.totalorder %s25, 3
    %p159 = por %p157, %p158
    %p161 = scmp.ne.s32.totalorder %s144, %s160
    %p162 = scmp.eq.s32.totalorder %s25, 0
    %p163 = por %p161, %p162
    %s164 = ssub.s32 %s27, %s34
    %p165 = scmp.eq.s32.totalorder %s164, 0
    %s167 = sadd.s32 %s166, 1
    %s168 = scalar_select %p165, %s166, %s167
    %p171 = pneg %p165
    %p172 = scmp.eq.s32.totalorder %s19, 3
    %p173 = por %p171, %p172
    %p174 = scmp.ne.s32.totalorder %s166, %s169
    %p175 = scmp.eq.s32.totalorder %s19, 0
    %p176 = por %p174, %p175
    %p177 = scmp.ne.s32.totalorder %s166, %s169
    %p178 = scmp.eq.s32.totalorder %s24, 3
    %p179 = por %p177, %p178
    %p180 = scmp.ne.s32.totalorder %s169, %s170
    %p181 = scmp.eq.s32.totalorder %s24, 0
    %p182 = por %p180, %p181
    %p183 = scmp.ne.s32.totalorder %s169, %s170
    %p184 = scmp.eq.s32.totalorder %s25, 3
    %p185 = por %p183, %p184
    %p187 = scmp.ne.s32.totalorder %s170, %s186
    %p188 = scmp.eq.s32.totalorder %s25, 0
    %p189 = por %p187, %p188
    %s190 = ssub.s32 %s27, %s34
    %p191 = scmp.eq.s32.totalorder %s190, 0
    %s193 = sadd.s32 %s192, 1
    %s194 = scalar_select %p191, %s192, %s193
    %p197 = pneg %p191
    %p198 = scmp.eq.s32.totalorder %s19, 3
    %p199 = por %p197, %p198
    %p200 = scmp.ne.s32.totalorder %s192, %s195
    %p201 = scmp.eq.s32.totalorder %s19, 0
    %p202 = por %p200, %p201
    %p203 = scmp.ne.s32.totalorder %s192, %s195
    %p204 = scmp.eq.s32.totalorder %s24, 3
    %p205 = por %p203, %p204
    %p206 = scmp.ne.s32.totalorder %s195, %s196
    %p207 = scmp.eq.s32.totalorder %s24, 0
    %p208 = por %p206, %p207
    %p209 = scmp.ne.s32.totalorder %s195, %s196
    %p210 = scmp.eq.s32.totalorder %s25, 3
    %p211 = por %p209, %p210
    %p213 = scmp.ne.s32.totalorder %s196, %s212
    %p214 = scmp.eq.s32.totalorder %s25, 0
    %p215 = por %p213, %p214
    %s216 = ssub.s32 %s27, %s34
    %p217 = scmp.eq.s32.totalorder %s216, 0
    %s219 = sadd.s32 %s218, 1
    %s220 = scalar_select %p217, %s218, %s219
    %p223 = pneg %p217
    %p224 = scmp.eq.s32.totalorder %s19, 3
    %p225 = por %p223, %p224
    %p226 = scmp.ne.s32.totalorder %s218, %s221
    %p227 = scmp.eq.s32.totalorder %s19, 0
    %p228 = por %p226, %p227
    %p229 = scmp.ne.s32.totalorder %s218, %s221
    %p230 = scmp.eq.s32.totalorder %s24, 3
    %p231 = por %p229, %p230
    %p232 = scmp.ne.s32.totalorder %s221, %s222
    %p233 = scmp.eq.s32.totalorder %s24, 0
    %p234 = por %p232, %p233
    %p235 = scmp.ne.s32.totalorder %s221, %s222
    %p236 = scmp.eq.s32.totalorder %s25, 3
    %p237 = por %p235, %p236
    %p239 = scmp.ne.s32.totalorder %s222, %s238
    %p240 = scmp.eq.s32.totalorder %s25, 0
    %p241 = por %p239, %p240
    %s242 = ssub.s32 %s27, %s34
    %p243 = scmp.eq.s32.totalorder %s242, 0
    %s245 = sadd.s32 %s244, 1
    %s246 = scalar_select %p243, %s244, %s245
    %p249 = pneg %p243
    %p250 = scmp.eq.s32.totalorder %s19, 3
    %p251 = por %p249, %p250
    %p252 = scmp.ne.s32.totalorder %s244, %s247
    %p253 = scmp.eq.s32.totalorder %s19, 0
    %p254 = por %p252, %p253
    %p255 = scmp.ne.s32.totalorder %s244, %s247
    %p256 = scmp.eq.s32.totalorder %s24, 3
    %p257 = por %p255, %p256
    %p258 = scmp.ne.s32.totalorder %s247, %s248
    %p259 = scmp.eq.s32.totalorder %s24, 0
    %p260 = por %p258, %p259
    %p261 = scmp.ne.s32.totalorder %s247, %s248
    %p262 = scmp.eq.s32.totalorder %s25, 3
    %p263 = por %p261, %p262
    %p265 = scmp.ne.s32.totalorder %s248, %s264
    %p266 = scmp.eq.s32.totalorder %s25, 0
    %p267 = por %p265, %p266
    %s268 = ssub.s32 %s27, %s34
    %p269 = scmp.eq.s32.totalorder %s268, 0
    %s271 = sadd.s32 %s270, 1
    %s272 = scalar_select %p269, %s270, %s271
    %p275 = pneg %p269
    %p276 = scmp.eq.s32.totalorder %s19, 3
    %p277 = por %p275, %p276
    %p278 = scmp.ne.s32.totalorder %s270, %s273
    %p279 = scmp.eq.s32.totalorder %s19, 0
    %p280 = por %p278, %p279
    %p281 = scmp.ne.s32.totalorder %s270, %s273
    %p282 = scmp.eq.s32.totalorder %s24, 3
    %p283 = por %p281, %p282
    %p284 = scmp.ne.s32.totalorder %s273, %s274
    %p285 = scmp.eq.s32.totalorder %s24, 0
    %p286 = por %p284, %p285
    %p287 = scmp.ne.s32.totalorder %s273, %s274
    %p288 = scmp.eq.s32.totalorder %s25, 3
    %p289 = por %p287, %p288
    %p291 = scmp.ne.s32.totalorder %s274, %s290
    %p292 = scmp.eq.s32.totalorder %s25, 0
    %p293 = por %p291, %p292
    %s294 = ssub.s32 %s27, %s34
    %p295 = scmp.eq.s32.totalorder %s294, 0
    %s297 = sadd.s32 %s296, 1
    %s298 = scalar_select %p295, %s296, %s297
    %p301 = pneg %p295
    %p302 = scmp.eq.s32.totalorder %s19, 3
    %p303 = por %p301, %p302
    %p304 = scmp.ne.s32.totalorder %s296, %s299
    %p305 = scmp.eq.s32.totalorder %s19, 0
    %p306 = por %p304, %p305
    %p307 = scmp.ne.s32.totalorder %s296, %s299
    %p308 = scmp.eq.s32.totalorder %s24, 3
    %p309 = por %p307, %p308
    %p310 = scmp.ne.s32.totalorder %s299, %s300
    %p311 = scmp.eq.s32.totalorder %s24, 0
    %p312 = por %p310, %p311
    %p313 = scmp.ne.s32.totalorder %s299, %s300
    %p314 = scmp.eq.s32.totalorder %s25, 3
    %p315 = por %p313, %p314
    %p317 = scmp.ne.s32.totalorder %s300, %s316
    %p318 = scmp.eq.s32.totalorder %s25, 0
    %p319 = por %p317, %p318
    %s320 = ssub.s32 %s27, %s34
    %p321 = scmp.eq.s32.totalorder %s320, 0
    %s323 = sadd.s32 %s322, 1
    %s324 = scalar_select %p321, %s322, %s323
    %p327 = pneg %p321
    %p328 = scmp.eq.s32.totalorder %s19, 3
    %p329 = por %p327, %p328
    %p330 = scmp.ne.s32.totalorder %s322, %s325
    %p331 = scmp.eq.s32.totalorder %s19, 0
    %p332 = por %p330, %p331
    %p333 = scmp.ne.s32.totalorder %s322, %s325
    %p334 = scmp.eq.s32.totalorder %s24, 3
    %p335 = por %p333, %p334
    %p336 = scmp.ne.s32.totalorder %s325, %s326
    %p337 = scmp.eq.s32.totalorder %s24, 0
    %p338 = por %p336, %p337
    %p339 = scmp.ne.s32.totalorder %s325, %s326
    %p340 = scmp.eq.s32.totalorder %s25, 3
    %p341 = por %p339, %p340
    %p343 = scmp.ne.s32.totalorder %s326, %s342
    %p344 = scmp.eq.s32.totalorder %s25, 0
    %p345 = por %p343, %p344
    %s346 = ssub.s32 %s27, %s34
    %p347 = scmp.eq.s32.totalorder %s346, 0
    %s349 = sadd.s32 %s348, 1
    %s350 = scalar_select %p347, %s348, %s349
    %p353 = pneg %p347
    %p354 = scmp.eq.s32.totalorder %s19, 3
    %p355 = por %p353, %p354
    %p356 = scmp.ne.s32.totalorder %s348, %s351
    %p357 = scmp.eq.s32.totalorder %s19, 0
    %p358 = por %p356, %p357
    %p359 = scmp.ne.s32.totalorder %s348, %s351
    %p360 = scmp.eq.s32.totalorder %s24, 3
    %p361 = por %p359, %p360
    %p362 = scmp.ne.s32.totalorder %s351, %s352
    %p363 = scmp.eq.s32.totalorder %s24, 0
    %p364 = por %p362, %p363
    %p365 = scmp.ne.s32.totalorder %s351, %s352
    %p366 = scmp.eq.s32.totalorder %s25, 3
    %p367 = por %p365, %p366
    %p369 = scmp.ne.s32.totalorder %s352, %s368
    %p370 = scmp.eq.s32.totalorder %s25, 0
    %p371 = por %p369, %p370
    %s372 = ssub.s32 %s26, %s38
    %p373 = scmp.eq.s32.totalorder %s372, 0
    %s375 = sadd.s32 %s374, 1
    %s376 = scalar_select %p373, %s374, %s375
    %p379 = pneg %p373
    %p380 = scmp.eq.s32.totalorder %s19, 3
    %p381 = por %p379, %p380
    %p382 = scmp.ne.s32.totalorder %s374, %s377
    %p383 = scmp.eq.s32.totalorder %s19, 0
    %p384 = por %p382, %p383
    %p385 = scmp.ne.s32.totalorder %s374, %s377
    %p386 = scmp.eq.s32.totalorder %s24, 3
    %p387 = por %p385, %p386
    %p388 = scmp.ne.s32.totalorder %s377, %s378
    %p389 = scmp.eq.s32.totalorder %s24, 0
    %p390 = por %p388, %p389
    %p391 = scmp.ne.s32.totalorder %s377, %s378
    %p392 = scmp.eq.s32.totalorder %s25, 3
    %p393 = por %p391, %p392
    %p395 = scmp.ne.s32.totalorder %s378, %s394
    %p396 = scmp.eq.s32.totalorder %s25, 0
    %p397 = por %p395, %p396
    %p398 = scmp.le.s32.totalorder 1, %s19
    %p399 = scmp.lt.s32.totalorder %s19, 5
    %p400 = pnand %p398, %p399
    %p401 = pneg %p400
    // Predicated region
    $region9: #{model_forward.8} parent=5 // pred_check
      _
    $region10: #{model_forward.8} parent=5 // pred_check_branch
      %403 = sbr.rel (%p400) target = $region12
    $region11: #{model_forward.8} parent=5 // pred_region
      %s404 = ssub.s32 %s19, 1
      // Predicated region
      $region13: #{model_forward.8} parent=11 // pred_check
        %p405 = pneg %p78
      $region14: #{model_forward.8} parent=11 // pred_check_branch
        %407 = sbr.rel (%p405) target = $region16
      $region15: #{model_forward.8} parent=11 // pred_region
        _
      $region16: #{model_forward.8} parent=11 // pred_fallthru
        _
    $region12: #{model_forward.8} parent=5 // pred_fallthru
      _
    %p408 = scmp.lt.s32.totalorder %s19, 4
    // Predicated region
    $region17: #{model_forward.8} parent=5 // pred_check
      %p409 = pneg %p408
    $region18: #{model_forward.8} parent=5 // pred_check_branch
      %411 = sbr.rel (%p409) target = $region20
    $region19: #{model_forward.8} parent=5 // pred_region
      // Predicated region
      $region21: #{model_forward.8} parent=19 // pred_check
        %p412 = pneg %p51
      $region22: #{model_forward.8} parent=19 // pred_check_branch
        %414 = sbr.rel (%p412) target = $region24
      $region23: #{model_forward.8} parent=19 // pred_region
        %p415 = scmp.lt.s32.totalorder %s26, 1
        %s416 = scalar_select %p415, %s26, 1
        %s417 = smul.addr %s416, 2
        %s418 = smul.addr %s417, 8
        %s419 = scalar_lea.vmem %s0, %s418
      $region24: #{model_forward.8} parent=19 // pred_fallthru
        _
      // Predicated region
      $region25: #{model_forward.8} parent=19 // pred_check
        %p420 = pneg %p98
      $region26: #{model_forward.8} parent=19 // pred_check_branch
        %422 = sbr.rel (%p420) target = $region28
      $region27: #{model_forward.8} parent=19 // pred_region
        %p423 = scmp.lt.s32.totalorder %s27, 1
        %s424 = scalar_select %p423, %s27, 1
        %s425 = scalar_lea.vmem %s2, %s424
      $region28: #{model_forward.8} parent=19 // pred_fallthru
        _
      // Predicated region
      $region29: #{model_forward.8} parent=19 // pred_check
        %p426 = pneg %p124
      $region30: #{model_forward.8} parent=19 // pred_check_branch
        %428 = sbr.rel (%p426) target = $region32
      $region31: #{model_forward.8} parent=19 // pred_region
        %p429 = scmp.lt.s32.totalorder %s27, 1
        %s430 = scalar_select %p429, %s27, 1
        %s431 = scalar_lea.vmem %s3, %s430
      $region32: #{model_forward.8} parent=19 // pred_fallthru
        _
      // Predicated region
      $region33: #{model_forward.8} parent=19 // pred_check
        %p432 = pneg %p150
      $region34: #{model_forward.8} parent=19 // pred_check_branch
        %434 = sbr.rel (%p432) target = $region36
      $region35: #{model_forward.8} parent=19 // pred_region
        %p435 = scmp.lt.s32.totalorder %s27, 1
        %s436 = scalar_select %p435, %s27, 1
        %s437 = smul.addr %s436, 4
        %s438 = smul.addr %s437, 4
        %s439 = scalar_lea.vmem %s4, %s438
      $region36: #{model_forward.8} parent=19 // pred_fallthru
        _
      // Predicated region
      $region37: #{model_forward.8} parent=19 // pred_check
        %p440 = pneg %p176
      $region38: #{model_forward.8} parent=19 // pred_check_branch
        %442 = sbr.rel (%p440) target = $region40
      $region39: #{model_forward.8} parent=19 // pred_region
        %p443 = scmp.lt.s32.totalorder %s27, 1
        %s444 = scalar_select %p443, %s27, 1
        %s445 = smul.addr %s444, 4
        %s446 = smul.addr %s445, 4
        %s447 = scalar_lea.vmem %s5, %s446
      $region40: #{model_forward.8} parent=19 // pred_fallthru
        _
      // Predicated region
      $region41: #{model_forward.8} parent=19 // pred_check
        %p448 = pneg %p202
      $region42: #{model_forward.8} parent=19 // pred_check_branch
        %450 = sbr.rel (%p448) target = $region44
      $region43: #{model_forward.8} parent=19 // pred_region
        %p451 = scmp.lt.s32.totalorder %s27, 1
        %s452 = scalar_select %p451, %s27, 1
        %s453 = scalar_lea.vmem %s6, %s452
      $region44: #{model_forward.8} parent=19 // pred_fallthru
        _
      // Predicated region
      $region45: #{model_forward.8} parent=19 // pred_check
        %p454 = pneg %p228
      $region46: #{model_forward.8} parent=19 // pred_check_branch
        %456 = sbr.rel (%p454) target = $region48
      $region47: #{model_forward.8} parent=19 // pred_region
        %p457 = scmp.lt.s32.totalorder %s27, 1
        %s458 = scalar_select %p457, %s27, 1
        %s459 = scalar_lea.vmem %s7, %s458
      $region48: #{model_forward.8} parent=19 // pred_fallthru
        _
      // Predicated region
      $region49: #{model_forward.8} parent=19 // pred_check
        %p460 = pneg %p254
      $region50: #{model_forward.8} parent=19 // pred_check_branch
        %462 = sbr.rel (%p460) target = $region52
      $region51: #{model_forward.8} parent=19 // pred_region
        %p463 = scmp.lt.s32.totalorder %s27, 1
        %s464 = scalar_select %p463, %s27, 1
        %s465 = scalar_lea.vmem %s8, %s464
      $region52: #{model_forward.8} parent=19 // pred_fallthru
        _
      // Predicated region
      $region53: #{model_forward.8} parent=19 // pred_check
        %p466 = pneg %p280
      $region54: #{model_forward.8} parent=19 // pred_check_branch
        %468 = sbr.rel (%p466) target = $region56
      $region55: #{model_forward.8} parent=19 // pred_region
        %p469 = scmp.lt.s32.totalorder %s27, 1
        %s470 = scalar_select %p469, %s27, 1
        %s471 = smul.addr %s470, 4
        %s472 = smul.addr %s471, 4
        %s473 = scalar_lea.vmem %s9, %s472
      $region56: #{model_forward.8} parent=19 // pred_fallthru
        _
      // Predicated region
      $region57: #{model_forward.8} parent=19 // pred_check
        %p474 = pneg %p306
      $region58: #{model_forward.8} parent=19 // pred_check_branch
        %476 = sbr.rel (%p474) target = $region60
      $region59: #{model_forward.8} parent=19 // pred_region
        %p477 = scmp.lt.s32.totalorder %s27, 1
        %s478 = scalar_select %p477, %s27, 1
        %s479 = scalar_lea.vmem %s10, %s478
      $region60: #{model_forward.8} parent=19 // pred_fallthru
        _
      // Predicated region
      $region61: #{model_forward.8} parent=19 // pred_check
        %p480 = pneg %p332
      $region62: #{model_forward.8} parent=19 // pred_check_branch
        %482 = sbr.rel (%p480) target = $region64
      $region63: #{model_forward.8} parent=19 // pred_region
        %p483 = scmp.lt.s32.totalorder %s27, 1
        %s484 = scalar_select %p483, %s27, 1
        %s485 = smul.addr %s484, 16
        %s486 = smul.addr %s485, 4
        %s487 = scalar_lea.vmem %s11, %s486
      $region64: #{model_forward.8} parent=19 // pred_fallthru
        _
      // Predicated region
      $region65: #{model_forward.8} parent=19 // pred_check
        %p488 = pneg %p358
      $region66: #{model_forward.8} parent=19 // pred_check_branch
        %490 = sbr.rel (%p488) target = $region68
      $region67: #{model_forward.8} parent=19 // pred_region
        %p491 = scmp.lt.s32.totalorder %s27, 1
        %s492 = scalar_select %p491, %s27, 1
        %s493 = scalar_lea.vmem %s12, %s492
      $region68: #{model_forward.8} parent=19 // pred_fallthru
        _
    $region20: #{model_forward.8} parent=5 // pred_fallthru
      _
    %p494 = scmp.le.s32.totalorder 1, %s19
    %p495 = scmp.lt.s32.totalorder %s19, 5
    %p496 = pnand %p494, %p495
    %p497 = pneg %p496
    // Predicated region
    $region69: #{model_forward.8} parent=5 // pred_check
      _
    $region70: #{model_forward.8} parent=5 // pred_check_branch
      %499 = sbr.rel (%p496) target = $region72
    $region71: #{model_forward.8} parent=5 // pred_region
      %s500 = ssub.s32 %s19, 1
      %p501 = scmp.lt.s32.totalorder %s28, 1
      %s502 = scalar_select %p501, %s28, 1
      %s503 = smul.addr %s502, 2
      %s504 = smul.addr %s503, 8
      %s505 = scalar_lea.vmem %s0, %s504
      %p506 = pneg %p57
      %p507 = pneg %p54
      %p508 = pneg %p78
      %p509 = pneg %p75
      %p510 = scmp.lt.s32.totalorder %s29, 1
      %s511 = scalar_select %p510, %s29, 1
      %s512 = scalar_lea.vmem %s2, %s511
      %p513 = pneg %p104
      %p514 = pneg %p101
      %p515 = scmp.lt.s32.totalorder %s29, 1
      %s516 = scalar_select %p515, %s29, 1
      %s517 = scalar_lea.vmem %s3, %s516
      %p518 = pneg %p130
      %p519 = pneg %p127
      %p520 = scmp.lt.s32.totalorder %s29, 1
      %s521 = scalar_select %p520, %s29, 1
      %s522 = smul.addr %s521, 4
      %s523 = smul.addr %s522, 4
      %s524 = scalar_lea.vmem %s4, %s523
      %p525 = pneg %p156
      %p526 = pneg %p153
      %p527 = scmp.lt.s32.totalorder %s29, 1
      %s528 = scalar_select %p527, %s29, 1
      %s529 = smul.addr %s528, 4
      %s530 = smul.addr %s529, 4
      %s531 = scalar_lea.vmem %s5, %s530
      %p532 = pneg %p182
      %p533 = pneg %p179
      %p534 = scmp.lt.s32.totalorder %s29, 1
      %s535 = scalar_select %p534, %s29, 1
      %s536 = scalar_lea.vmem %s6, %s535
      %p537 = pneg %p208
      %p538 = pneg %p205
      %p539 = scmp.lt.s32.totalorder %s29, 1
      %s540 = scalar_select %p539, %s29, 1
      %s541 = scalar_lea.vmem %s7, %s540
      %p542 = pneg %p234
      %p543 = pneg %p231
      %p544 = scmp.lt.s32.totalorder %s29, 1
      %s545 = scalar_select %p544, %s29, 1
      %s546 = scalar_lea.vmem %s8, %s545
      %p547 = pneg %p260
      %p548 = pneg %p257
      %p549 = scmp.lt.s32.totalorder %s29, 1
      %s550 = scalar_select %p549, %s29, 1
      %s551 = smul.addr %s550, 4
      %s552 = smul.addr %s551, 4
      %s553 = scalar_lea.vmem %s9, %s552
      %p554 = pneg %p286
      %p555 = pneg %p283
      %p556 = scmp.lt.s32.totalorder %s29, 1
      %s557 = scalar_select %p556, %s29, 1
      %s558 = scalar_lea.vmem %s10, %s557
      %p559 = pneg %p312
      %p560 = pneg %p309
      %p561 = scmp.lt.s32.totalorder %s29, 1
      %s562 = scalar_select %p561, %s29, 1
      %s563 = smul.addr %s562, 16
      %s564 = smul.addr %s563, 4
      %s565 = scalar_lea.vmem %s11, %s564
      %p566 = pneg %p338
      %p567 = pneg %p335
      %p568 = scmp.lt.s32.totalorder %s29, 1
      %s569 = scalar_select %p568, %s29, 1
      %s570 = scalar_lea.vmem %s12, %s569
      %p571 = pneg %p364
      %p572 = pneg %p361
      %p573 = pneg %p390
      %p574 = pneg %p387
      %p575 = scmp.lt.s32.totalorder %s28, 1
      %s576 = scalar_select %p575, %s28, 1
      %s577 = smul.addr %s576, 2
      %s578 = smul.addr %s577, 8
      %s579 = scalar_lea.vmem %s13, %s578
      %p580 = scmp.lt.s32.totalorder %s28, 1
      %s581 = scalar_select %p580, %s28, 1
      %s582 = smul.addr %s581, 2
      %s583 = smul.addr %s582, 8
      %s584 = scalar_lea.vmem %s0, %s583
      %p585 = scmp.lt.s32.totalorder %s29, 1
      %s586 = scalar_select %p585, %s29, 1
      %s587 = scalar_lea.vmem %s2, %s586
      %p588 = scmp.lt.s32.totalorder %s29, 1
      %s589 = scalar_select %p588, %s29, 1
      %s590 = scalar_lea.vmem %s3, %s589
      %p591 = scmp.lt.s32.totalorder %s29, 1
      %s592 = scalar_select %p591, %s29, 1
      %s593 = smul.addr %s592, 4
      %s594 = smul.addr %s593, 4
      %s595 = scalar_lea.vmem %s4, %s594
      %p596 = scmp.lt.s32.totalorder %s29, 1
      %s597 = scalar_select %p596, %s29, 1
      %s598 = smul.addr %s597, 4
      %s599 = smul.addr %s598, 4
      %s600 = scalar_lea.vmem %s5, %s599
      %p601 = scmp.lt.s32.totalorder %s29, 1
      %s602 = scalar_select %p601, %s29, 1
      %s603 = scalar_lea.vmem %s6, %s602
      %p604 = scmp.lt.s32.totalorder %s29, 1
      %s605 = scalar_select %p604, %s29, 1
      %s606 = scalar_lea.vmem %s7, %s605
      %p607 = scmp.lt.s32.totalorder %s29, 1
      %s608 = scalar_select %p607, %s29, 1
      %s609 = scalar_lea.vmem %s8, %s608
      %p610 = scmp.lt.s32.totalorder %s29, 1
      %s611 = scalar_select %p610, %s29, 1
      %s612 = smul.addr %s611, 4
      %s613 = smul.addr %s612, 4
      %s614 = scalar_lea.vmem %s9, %s613
      %p615 = scmp.lt.s32.totalorder %s29, 1
      %s616 = scalar_select %p615, %s29, 1
      %s617 = scalar_lea.vmem %s10, %s616
      %p618 = scmp.lt.s32.totalorder %s29, 1
      %s619 = scalar_select %p618, %s29, 1
      %s620 = smul.addr %s619, 16
      %s621 = smul.addr %s620, 4
      %s622 = scalar_lea.vmem %s11, %s621
      %p623 = scmp.lt.s32.totalorder %s29, 1
      %s624 = scalar_select %p623, %s29, 1
      %s625 = scalar_lea.vmem %s12, %s624
      %p626 = scmp.lt.s32.totalorder %s28, 1
      %s627 = scalar_select %p626, %s28, 1
      %s628 = smul.addr %s627, 2
      %s629 = smul.addr %s628, 8
      %s630 = scalar_lea.vmem %s13, %s629
      %p632 = scmp.eq.s32.totalorder %s29, 0
      // Predicated region
      $region73: #{model_forward.8} parent=71 // pred_check
        %p633 = pneg %p632
      $region74: #{model_forward.8} parent=71 // pred_check_branch
        %635 = sbr.rel (%p633) target = $region76
      $region75: #{model_forward.8} parent=71 // pred_region
        %v636 = vld [vmem:[%s584] sm:$0xff]
        %v637 = vld [vmem:[%s584 + $0x8] sm:$0x7f]
        %vm638 = vcmask 261120
        %639 = vst.msk [vmem:[%s630] sm:$0xff] %vm638, %v636
        %vm640 = vcmask 260096
        %641 = vst.msk [vmem:[%s630 + $0x8] sm:$0x7f] %vm640, %v637
      $region76: #{model_forward.8} parent=71 // pred_fallthru
        _
      %v642 = vld [vmem:[%s630] sm:$0xff]
      %v643 = vld [vmem:[%s630 + $0x8] sm:$0x7f]
      %v644 = vld [vmem:[%s587] sm:$0x1]
      %v645 = vld [vmem:[%s590] sm:$0x1]
      %vm646 = vcmask 261120
      %v647 = vsel %vm646, %v642, 0.0
      %648 = vadd.xlane.f32.xlu0 %v647
      %v649 = vpop.xlane.xlu0 %648
      %vm650 = vcmask 260096
      %v651 = vsel %vm650, %v643, 0.0
      %652 = vadd.xlane.f32.xlu0 %v651
      %v653 = vpop.xlane.xlu0 %652
      %v654 = vrcp.pop 32.0
      %v655 = vmul.f32 %v649, %v654
      %v656 = vmul.f32 %v653, %v654
      %v657 = vsub.f32 %v642, %v655
      %v658 = vsub.f32 %v643, %v656
      %v659 = vmul.f32 %v657, %v657
      %v660 = vmul.f32 %v658, %v658
      %v661 = vsel %vm646, %v659, 0.0
      %662 = vadd.xlane.f32.xlu0 %v661
      %v663 = vpop.xlane.xlu0 %662
      %v664 = vsel %vm650, %v660, 0.0
      %665 = vadd.xlane.f32.xlu0 %v664
      %v666 = vpop.xlane.xlu0 %665
      %v667 = vmul.f32 %v663, %v654
      %v668 = vmul.f32 %v666, %v654
      %v669 = vadd.f32 %v667, 1e-05
      %v670 = vadd.f32 %v668, 1e-05
      %v671 = vrsqrt.pop %v669
      %v672 = vrsqrt.pop %v670
      %v673 = vmul.f32 %v657, %v671
      %v674 = vmul.f32 %v658, %v672
      %v676 = vlaneseq
      %v677 = vshrl.u32 %v676, 7
      %v678 = vsub.s32 0, %v677
      %v679 = vrot.slane %v644, %v678
      %v681 = vmul.f32 %v673, %v679
      %v682 = vmul.f32 %v674, %v679
      %v684 = vlaneseq
      %v685 = vshrl.u32 %v684, 7
      %v686 = vsub.s32 0, %v685
      %v687 = vrot.slane %v645, %v686
      %v689 = vadd.f32 %v681, %v687
      %v690 = vadd.f32 %v682, %v687
      %v691 = vpack.c.bf16 %v690, %v689
      %v692 = vld [vmem:[%s595] sm:$0xf]
      %v693 = vld [vmem:[%s595 + $0x4] sm:$0xf]
      %v694 = vld [vmem:[%s595 + $0x8] sm:$0xf]
      %v695 = vld [vmem:[%s595 + $0xc] sm:$0xf]
      %v700 = vunpack.c.l.b16 %v692
      %v701 = vunpack.c.l.b16 %v693
      %v702 = vunpack.c.l.b16 %v694
      %v703 = vunpack.c.l.b16 %v695
      %v704 = vpack.c.b16 %v701, %v700
      %v705 = vpack.c.b16 %v703, %v702
      %v709 = vsel %vm646, %v691, 0
      %711 = vmatprep.subr.bf16.mxu0 0
      %712 = vmatpush1.bf16.msra.mxu0 %v704
      %713 = vmatprep.subr.bf16.mxu0 0
      %714 = vmatpush1.bf16.msra.mxu0 %v705
      %715 = vmatprep.subr.bf16.mxu0 0
      %716 = vmatpush1.bf16.msra.mxu0 0
      %717 = vmatprep.subr.bf16.mxu0 0
      %718 = vmatpush1.bf16.msra.mxu0 0
      %719 = vmatprep.subr.bf16.mxu0 0
      %720 = vmatpush1.bf16.msra.mxu0 0
      %721 = vmatprep.subr.bf16.mxu0 0
      %722 = vmatpush1.bf16.msra.mxu0 0
      %723 = vmatprep.subr.bf16.mxu0 0
      %724 = vmatpush1.bf16.msra.mxu0 0
      %725 = vmatprep.subr.bf16.mxu0 0
      %726 = vmatpush1.bf16.msra.mxu0 0
      %727 = vmatprep.subr.bf16.mxu0 0
      %728 = vmatpush1.bf16.msra.mxu0 0
      %729 = vmatprep.subr.bf16.mxu0 0
      %730 = vmatpush1.bf16.msra.mxu0 0
      %731 = vmatprep.subr.bf16.mxu0 0
      %732 = vmatpush1.bf16.msra.mxu0 0
      %733 = vmatprep.subr.bf16.mxu0 0
      %734 = vmatpush1.bf16.msra.mxu0 0
      %735 = vmatprep.subr.bf16.mxu0 0
      %736 = vmatpush1.bf16.msra.mxu0 0
      %737 = vmatprep.subr.bf16.mxu0 0
      %738 = vmatpush1.bf16.msra.mxu0 0
      %739 = vmatprep.subr.bf16.mxu0 0
      %740 = vmatpush1.bf16.msra.mxu0 0
      %741 = vmatprep.subr.bf16.mxu0 0
      %742 = vmatpush1.bf16.msra.mxu0 0
      %743 = vmatprep.mubr.bf16.mxu0 0
      %744 = vmatmul.mubr.bf16.gmra.mrb[0].mxu0 %v709
      %v745 = vpop.f32.mrb[0].mxu0
      %v746 = vadd.f32 0.0, %v745
      %v747 = vpop.f32.mrb[0].mxu0
      %v748 = vpop.f32.mrb[0].mxu0
      %v749 = vadd.f32 0.0, %v748
      %v750 = vpop.f32.mrb[0].mxu0
      %751 = vdwg.mxu0
      %754 = vrot.lane.b32.xlu0 %v746, 120
      %v755 = vpop.permute.xlu0 %754
      %756 = vrot.lane.b32.xlu0 %v749, 120
      %v757 = vpop.permute.xlu0 %756
      %760 = vrot.lane.b32.xlu0 %v746, 112
      %v761 = vpop.permute.xlu0 %760
      %762 = vrot.lane.b32.xlu0 %v749, 112
      %v763 = vpop.permute.xlu0 %762
      %766 = vrot.lane.b32.xlu0 %v746, 104
      %v767 = vpop.permute.xlu0 %766
      %768 = vrot.lane.b32.xlu0 %v749, 104
      %v769 = vpop.permute.xlu0 %768
      %772 = vrot.lane.b32.xlu0 %v746, 96
      %v773 = vpop.permute.xlu0 %772
      %774 = vrot.lane.b32.xlu0 %v749, 96
      %v775 = vpop.permute.xlu0 %774
      %778 = vrot.lane.b32.xlu0 %v746, 88
      %v779 = vpop.permute.xlu0 %778
      %780 = vrot.lane.b32.xlu0 %v749, 88
      %v781 = vpop.permute.xlu0 %780
      %784 = vrot.lane.b32.xlu0 %v746, 80
      %v785 = vpop.permute.xlu0 %784
      %786 = vrot.lane.b32.xlu0 %v749, 80
      %v787 = vpop.permute.xlu0 %786
      %790 = vrot.lane.b32.xlu0 %v746, 72
      %v791 = vpop.permute.xlu0 %790
      %792 = vrot.lane.b32.xlu0 %v749, 72
      %v793 = vpop.permute.xlu0 %792
      %796 = vrot.lane.b32.xlu0 %v746, 64
      %v797 = vpop.permute.xlu0 %796
      %798 = vrot.lane.b32.xlu0 %v749, 64
      %v799 = vpop.permute.xlu0 %798
      %802 = vrot.lane.b32.xlu0 %v746, 56
      %v803 = vpop.permute.xlu0 %802
      %804 = vrot.lane.b32.xlu0 %v749, 56
      %v805 = vpop.permute.xlu0 %804
      %808 = vrot.lane.b32.xlu0 %v746, 48
      %v809 = vpop.permute.xlu0 %808
      %810 = vrot.lane.b32.xlu0 %v749, 48
      %v811 = vpop.permute.xlu0 %810
      %814 = vrot.lane.b32.xlu0 %v746, 40
      %v815 = vpop.permute.xlu0 %814
      %816 = vrot.lane.b32.xlu0 %v749, 40
      %v817 = vpop.permute.xlu0 %816
      %v820 = vcombine.low %v746, %v761
      %v821 = vcombine.high %v746, %v761
      %v823 = vunpack.c.l.s4 1983009808
      %v824 = vunpack.c.0.s8 %v823
      %v825 = vlaneseq
      %v826 = vshrl.u32 %v825, 7
      %v827 = vsub.s32 %v824, %v826
      %v828 = vrot.slane %v820, %v827
      %v830 = vunpack.c.l.s4 1983009808
      %v831 = vunpack.c.0.s8 %v830
      %v832 = vlaneseq
      %v833 = vshrl.u32 %v832, 7
      %v834 = vsub.s32 %v831, %v833
      %v835 = vrot.slane %v821, %v834
      %v836 = vcombine.low %v755, %v767
      %v837 = vcombine.high %v755, %v767
      %v839 = vunpack.c.l.s4 1983009808
      %v840 = vunpack.c.0.s8 %v839
      %v841 = vlaneseq
      %v842 = vshrl.u32 %v841, 7
      %v843 = vsub.s32 %v840, %v842
      %v844 = vrot.slane %v836, %v843
      %v846 = vunpack.c.l.s4 1983009808
      %v847 = vunpack.c.0.s8 %v846
      %v848 = vlaneseq
      %v849 = vshrl.u32 %v848, 7
      %v850 = vsub.s32 %v847, %v849
      %v851 = vrot.slane %v837, %v850
      %v852 = vcombine.low %v773, %v785
      %v853 = vcombine.high %v773, %v785
      %v855 = vunpack.c.l.s4 1983009808
      %v856 = vunpack.c.0.s8 %v855
      %v857 = vlaneseq
      %v858 = vshrl.u32 %v857, 7
      %v859 = vsub.s32 %v856, %v858
      %v860 = vrot.slane %v852, %v859
      %v862 = vunpack.c.l.s4 1983009808
      %v863 = vunpack.c.0.s8 %v862
      %v864 = vlaneseq
      %v865 = vshrl.u32 %v864, 7
      %v866 = vsub.s32 %v863, %v865
      %v867 = vrot.slane %v853, %v866
      %v868 = vcombine.low %v779, %v791
      %v869 = vcombine.high %v779, %v791
      %v871 = vunpack.c.l.s4 1983009808
      %v872 = vunpack.c.0.s8 %v871
      %v873 = vlaneseq
      %v874 = vshrl.u32 %v873, 7
      %v875 = vsub.s32 %v872, %v874
      %v876 = vrot.slane %v868, %v875
      %v878 = vunpack.c.l.s4 1983009808
      %v879 = vunpack.c.0.s8 %v878
      %v880 = vlaneseq
      %v881 = vshrl.u32 %v880, 7
      %v882 = vsub.s32 %v879, %v881
      %v883 = vrot.slane %v869, %v882
      %v884 = vcombine.low %v828, %v844
      %v885 = vcombine.high %v828, %v844
      %v887 = vunpack.c.l.s4 1934713408
      %v888 = vunpack.c.0.s8 %v887
      %v889 = vlaneseq
      %v890 = vshrl.u32 %v889, 7
      %v891 = vsub.s32 %v888, %v890
      %v892 = vrot.slane %v884, %v891
      %v894 = vunpack.c.l.s4 1934713408
      %v895 = vunpack.c.0.s8 %v894
      %v896 = vlaneseq
      %v897 = vshrl.u32 %v896, 7
      %v898 = vsub.s32 %v895, %v897
      %v899 = vrot.slane %v885, %v898
      %v900 = vcombine.low %v835, %v851
      %v901 = vcombine.high %v835, %v851
      %v903 = vunpack.c.l.s4 1934713408
      %v904 = vunpack.c.0.s8 %v903
      %v905 = vlaneseq
      %v906 = vshrl.u32 %v905, 7
      %v907 = vsub.s32 %v904, %v906
      %v908 = vrot.slane %v900, %v907
      %v910 = vunpack.c.l.s4 1934713408
      %v911 = vunpack.c.0.s8 %v910
      %v912 = vlaneseq
      %v913 = vshrl.u32 %v912, 7
      %v914 = vsub.s32 %v911, %v913
      %v915 = vrot.slane %v901, %v914
      %v916 = vcombine.low %v860, %v876
      %v917 = vcombine.high %v860, %v876
      %v919 = vunpack.c.l.s4 1934713408
      %v920 = vunpack.c.0.s8 %v919
      %v921 = vlaneseq
      %v922 = vshrl.u32 %v921, 7
      %v923 = vsub.s32 %v920, %v922
      %v924 = vrot.slane %v916, %v923
      %v926 = vunpack.c.l.s4 1934713408
      %v927 = vunpack.c.0.s8 %v926
      %v928 = vlaneseq
      %v929 = vshrl.u32 %v928, 7
      %v930 = vsub.s32 %v927, %v929
      %v931 = vrot.slane %v917, %v930
      %v932 = vcombine.low %v867, %v883
      %v933 = vcombine.high %v867, %v883
      %v935 = vunpack.c.l.s4 1934713408
      %v936 = vunpack.c.0.s8 %v935
      %v937 = vlaneseq
      %v938 = vshrl.u32 %v937, 7
      %v939 = vsub.s32 %v936, %v938
      %v940 = vrot.slane %v932, %v939
      %v942 = vunpack.c.l.s4 1934713408
      %v943 = vunpack.c.0.s8 %v942
      %v944 = vlaneseq
      %v945 = vshrl.u32 %v944, 7
      %v946 = vsub.s32 %v943, %v945
      %v947 = vrot.slane %v933, %v946
      %v948 = vcombine.low %v892, %v924
      %v949 = vcombine.high %v892, %v924
      %v950 = vcombine.low %v899, %v931
      %v951 = vcombine.high %v899, %v931
      %v952 = vcombine.low %v908, %v940
      %v953 = vcombine.high %v908, %v940
      %v954 = vcombine.low %v915, %v947
      %v955 = vcombine.high %v915, %v947
      %v956 = vcombine.low %v797, %v809
      %v957 = vcombine.high %v797, %v809
      %v959 = vunpack.c.l.s4 1983009808
      %v960 = vunpack.c.0.s8 %v959
      %v961 = vlaneseq
      %v962 = vshrl.u32 %v961, 7
      %v963 = vsub.s32 %v960, %v962
      %v964 = vrot.slane %v956, %v963
      %v966 = vunpack.c.l.s4 1983009808
      %v967 = vunpack.c.0.s8 %v966
      %v968 = vlaneseq
      %v969 = vshrl.u32 %v968, 7
      %v970 = vsub.s32 %v967, %v969
      %v971 = vrot.slane %v957, %v970
      %v972 = vcombine.low %v803, %v815
      %v973 = vcombine.high %v803, %v815
      %v975 = vunpack.c.l.s4 1983009808
      %v976 = vunpack.c.0.s8 %v975
      %v977 = vlaneseq
      %v978 = vshrl.u32 %v977, 7
      %v979 = vsub.s32 %v976, %v978
      %v980 = vrot.slane %v972, %v979
      %v982 = vunpack.c.l.s4 1983009808
      %v983 = vunpack.c.0.s8 %v982
      %v984 = vlaneseq
      %v985 = vshrl.u32 %v984, 7
      %v986 = vsub.s32 %v983, %v985
      %v987 = vrot.slane %v973, %v986
      %v988 = vcombine.low %v964, %v980
      %v989 = vcombine.high %v964, %v980
      %v991 = vunpack.c.l.s4 1934713408
      %v992 = vunpack.c.0.s8 %v991
      %v993 = vlaneseq
      %v994 = vshrl.u32 %v993, 7
      %v995 = vsub.s32 %v992, %v994
      %v996 = vrot.slane %v988, %v995
      %v998 = vunpack.c.l.s4 1934713408
      %v999 = vunpack.c.0.s8 %v998
      %v1000 = vlaneseq
      %v1001 = vshrl.u32 %v1000, 7
      %v1002 = vsub.s32 %v999, %v1001
      %v1003 = vrot.slane %v989, %v1002
      %v1004 = vcombine.low %v971, %v987
      %v1005 = vcombine.high %v971, %v987
      %v1007 = vunpack.c.l.s4 1934713408
      %v1008 = vunpack.c.0.s8 %v1007
      %v1009 = vlaneseq
      %v1010 = vshrl.u32 %v1009, 7
      %v1011 = vsub.s32 %v1008, %v1010
      %v1012 = vrot.slane %v1004, %v1011
      %v1014 = vunpack.c.l.s4 1934713408
      %v1015 = vunpack.c.0.s8 %v1014
      %v1016 = vlaneseq
      %v1017 = vshrl.u32 %v1016, 7
      %v1018 = vsub.s32 %v1015, %v1017
      %v1019 = vrot.slane %v1005, %v1018
      %v1020 = vcombine.high %v996, 0.0
      %v1021 = vcombine.high %v1003, 0.0
      %v1022 = vcombine.high %v1012, 0.0
      %v1023 = vcombine.high %v1019, 0.0
      %v1024 = vcombine.low %v749, %v763
      %v1025 = vcombine.high %v749, %v763
      %v1027 = vunpack.c.l.s4 1983009808
      %v1028 = vunpack.c.0.s8 %v1027
      %v1029 = vlaneseq
      %v1030 = vshrl.u32 %v1029, 7
      %v1031 = vsub.s32 %v1028, %v1030
      %v1032 = vrot.slane %v1024, %v1031
      %v1034 = vunpack.c.l.s4 1983009808
      %v1035 = vunpack.c.0.s8 %v1034
      %v1036 = vlaneseq
      %v1037 = vshrl.u32 %v1036, 7
      %v1038 = vsub.s32 %v1035, %v1037
      %v1039 = vrot.slane %v1025, %v1038
      %v1040 = vcombine.low %v757, %v769
      %v1041 = vcombine.high %v757, %v769
      %v1043 = vunpack.c.l.s4 1983009808
      %v1044 = vunpack.c.0.s8 %v1043
      %v1045 = vlaneseq
      %v1046 = vshrl.u32 %v1045, 7
      %v1047 = vsub.s32 %v1044, %v1046
      %v1048 = vrot.slane %v1040, %v1047
      %v1050 = vunpack.c.l.s4 1983009808
      %v1051 = vunpack.c.0.s8 %v1050
      %v1052 = vlaneseq
      %v1053 = vshrl.u32 %v1052, 7
      %v1054 = vsub.s32 %v1051, %v1053
      %v1055 = vrot.slane %v1041, %v1054
      %v1056 = vcombine.low %v775, %v787
      %v1057 = vcombine.high %v775, %v787
      %v1059 = vunpack.c.l.s4 1983009808
      %v1060 = vunpack.c.0.s8 %v1059
      %v1061 = vlaneseq
      %v1062 = vshrl.u32 %v1061, 7
      %v1063 = vsub.s32 %v1060, %v1062
      %v1064 = vrot.slane %v1056, %v1063
      %v1066 = vunpack.c.l.s4 1983009808
      %v1067 = vunpack.c.0.s8 %v1066
      %v1068 = vlaneseq
      %v1069 = vshrl.u32 %v1068, 7
      %v1070 = vsub.s32 %v1067, %v1069
      %v1071 = vrot.slane %v1057, %v1070
      %v1072 = vcombine.low %v781, %v793
      %v1073 = vcombine.high %v781, %v793
      %v1075 = vunpack.c.l.s4 1983009808
      %v1076 = vunpack.c.0.s8 %v1075
      %v1077 = vlaneseq
      %v1078 = vshrl.u32 %v1077, 7
      %v1079 = vsub.s32 %v1076, %v1078
      %v1080 = vrot.slane %v1072, %v1079
      %v1082 = vunpack.c.l.s4 1983009808
      %v1083 = vunpack.c.0.s8 %v1082
      %v1084 = vlaneseq
      %v1085 = vshrl.u32 %v1084, 7
      %v1086 = vsub.s32 %v1083, %v1085
      %v1087 = vrot.slane %v1073, %v1086
      %v1088 = vcombine.low %v1032, %v1048
      %v1089 = vcombine.high %v1032, %v1048
      %v1091 = vunpack.c.l.s4 1934713408
      %v1092 = vunpack.c.0.s8 %v1091
      %v1093 = vlaneseq
      %v1094 = vshrl.u32 %v1093, 7
      %v1095 = vsub.s32 %v1092, %v1094
      %v1096 = vrot.slane %v1088, %v1095
      %v1098 = vunpack.c.l.s4 1934713408
      %v1099 = vunpack.c.0.s8 %v1098
      %v1100 = vlaneseq
      %v1101 = vshrl.u32 %v1100, 7
      %v1102 = vsub.s32 %v1099, %v1101
      %v1103 = vrot.slane %v1089, %v1102
      %v1104 = vcombine.low %v1039, %v1055
      %v1105 = vcombine.high %v1039, %v1055
      %v1107 = vunpack.c.l.s4 1934713408
      %v1108 = vunpack.c.0.s8 %v1107
      %v1109 = vlaneseq
      %v1110 = vshrl.u32 %v1109, 7
      %v1111 = vsub.s32 %v1108, %v1110
      %v1112 = vrot.slane %v1104, %v1111
      %v1114 = vunpack.c.l.s4 1934713408
      %v1115 = vunpack.c.0.s8 %v1114
      %v1116 = vlaneseq
      %v1117 = vshrl.u32 %v1116, 7
      %v1118 = vsub.s32 %v1115, %v1117
      %v1119 = vrot.slane %v1105, %v1118
      %v1120 = vcombine.low %v1064, %v1080
      %v1121 = vcombine.high %v1064, %v1080
      %v1123 = vunpack.c.l.s4 1934713408
      %v1124 = vunpack.c.0.s8 %v1123
      %v1125 = vlaneseq
      %v1126 = vshrl.u32 %v1125, 7
      %v1127 = vsub.s32 %v1124, %v1126
      %v1128 = vrot.slane %v1120, %v1127
      %v1130 = vunpack.c.l.s4 1934713408
      %v1131 = vunpack.c.0.s8 %v1130
      %v1132 = vlaneseq
      %v1133 = vshrl.u32 %v1132, 7
      %v1134 = vsub.s32 %v1131, %v1133
      %v1135 = vrot.slane %v1121, %v1134
      %v1136 = vcombine.low %v1071, %v1087
      %v1137 = vcombine.high %v1071, %v1087
      %v1139 = vunpack.c.l.s4 1934713408
      %v1140 = vunpack.c.0.s8 %v1139
      %v1141 = vlaneseq
      %v1142 = vshrl.u32 %v1141, 7
      %v1143 = vsub.s32 %v1140, %v1142
      %v1144 = vrot.slane %v1136, %v1143
      %v1146 = vunpack.c.l.s4 1934713408
      %v1147 = vunpack.c.0.s8 %v1146
      %v1148 = vlaneseq
      %v1149 = vshrl.u32 %v1148, 7
      %v1150 = vsub.s32 %v1147, %v1149
      %v1151 = vrot.slane %v1137, %v1150
      %v1152 = vcombine.low %v1096, %v1128
      %v1153 = vcombine.high %v1096, %v1128
      %v1154 = vcombine.low %v1103, %v1135
      %v1155 = vcombine.high %v1103, %v1135
      %v1156 = vcombine.low %v1112, %v1144
      %v1157 = vcombine.high %v1112, %v1144
      %v1158 = vcombine.low %v1119, %v1151
      %v1159 = vcombine.low %v799, %v811
      %v1160 = vcombine.high %v799, %v811
      %v1162 = vunpack.c.l.s4 1983009808
      %v1163 = vunpack.c.0.s8 %v1162
      %v1164 = vlaneseq
      %v1165 = vshrl.u32 %v1164, 7
      %v1166 = vsub.s32 %v1163, %v1165
      %v1167 = vrot.slane %v1159, %v1166
      %v1169 = vunpack.c.l.s4 1983009808
      %v1170 = vunpack.c.0.s8 %v1169
      %v1171 = vlaneseq
      %v1172 = vshrl.u32 %v1171, 7
      %v1173 = vsub.s32 %v1170, %v1172
      %v1174 = vrot.slane %v1160, %v1173
      %v1175 = vcombine.low %v805, %v817
      %v1176 = vcombine.high %v805, %v817
      %v1178 = vunpack.c.l.s4 1983009808
      %v1179 = vunpack.c.0.s8 %v1178
      %v1180 = vlaneseq
      %v1181 = vshrl.u32 %v1180, 7
      %v1182 = vsub.s32 %v1179, %v1181
      %v1183 = vrot.slane %v1175, %v1182
      %v1185 = vunpack.c.l.s4 1983009808
      %v1186 = vunpack.c.0.s8 %v1185
      %v1187 = vlaneseq
      %v1188 = vshrl.u32 %v1187, 7
      %v1189 = vsub.s32 %v1186, %v1188
      %v1190 = vrot.slane %v1176, %v1189
      %v1191 = vcombine.low %v1167, %v1183
      %v1192 = vcombine.high %v1167, %v1183
      %v1194 = vunpack.c.l.s4 1934713408
      %v1195 = vunpack.c.0.s8 %v1194
      %v1196 = vlaneseq
      %v1197 = vshrl.u32 %v1196, 7
      %v1198 = vsub.s32 %v1195, %v1197
      %v1199 = vrot.slane %v1191, %v1198
      %v1201 = vunpack.c.l.s4 1934713408
      %v1202 = vunpack.c.0.s8 %v1201
      %v1203 = vlaneseq
      %v1204 = vshrl.u32 %v1203, 7
      %v1205 = vsub.s32 %v1202, %v1204
      %v1206 = vrot.slane %v1192, %v1205
      %v1207 = vcombine.low %v1174, %v1190
      %v1208 = vcombine.high %v1174, %v1190
      %v1210 = vunpack.c.l.s4 1934713408
      %v1211 = vunpack.c.0.s8 %v1210
      %v1212 = vlaneseq
      %v1213 = vshrl.u32 %v1212, 7
      %v1214 = vsub.s32 %v1211, %v1213
      %v1215 = vrot.slane %v1207, %v1214
      %v1216 = vcombine.high %v1199, 0.0
      %v1217 = vcombine.high %v1206, 0.0
      %v1219 = vunpack.c.l.s4 1934713408
      %v1220 = vunpack.c.0.s8 %v1219
      %v1221 = vlaneseq
      %v1222 = vshrl.u32 %v1221, 7
      %v1223 = vsub.s32 %v1220, %v1222
      %v1224 = vrot.slane %v1208, %v1223
      %v1225 = vcombine.low %v948, %v950
      %v1226 = vcombine.high %v948, %v950
      %v1228 = vunpack.c.l.s4 1983009808
      %v1229 = vunpack.c.0.s8 %v1228
      %v1230 = vlaneseq
      %v1231 = vshrl.u32 %v1230, 7
      %v1232 = vsub.s32 %v1229, %v1231
      %v1233 = vrot.slane %v1225, %v1232
      %v1235 = vunpack.c.l.s4 1983009808
      %v1236 = vunpack.c.0.s8 %v1235
      %v1237 = vlaneseq
      %v1238 = vshrl.u32 %v1237, 7
      %v1239 = vsub.s32 %v1236, %v1238
      %v1240 = vrot.slane %v1226, %v1239
      %v1241 = vcombine.low %v949, %v951
      %v1242 = vcombine.high %v949, %v951
      %v1244 = vunpack.c.l.s4 1983009808
      %v1245 = vunpack.c.0.s8 %v1244
      %v1246 = vlaneseq
      %v1247 = vshrl.u32 %v1246, 7
      %v1248 = vsub.s32 %v1245, %v1247
      %v1249 = vrot.slane %v1241, %v1248
      %v1251 = vunpack.c.l.s4 1983009808
      %v1252 = vunpack.c.0.s8 %v1251
      %v1253 = vlaneseq
      %v1254 = vshrl.u32 %v1253, 7
      %v1255 = vsub.s32 %v1252, %v1254
      %v1256 = vrot.slane %v1242, %v1255
      %v1257 = vcombine.low %v952, %v954
      %v1258 = vcombine.high %v952, %v954
      %v1260 = vunpack.c.l.s4 1983009808
      %v1261 = vunpack.c.0.s8 %v1260
      %v1262 = vlaneseq
      %v1263 = vshrl.u32 %v1262, 7
      %v1264 = vsub.s32 %v1261, %v1263
      %v1265 = vrot.slane %v1257, %v1264
      %v1267 = vunpack.c.l.s4 1983009808
      %v1268 = vunpack.c.0.s8 %v1267
      %v1269 = vlaneseq
      %v1270 = vshrl.u32 %v1269, 7
      %v1271 = vsub.s32 %v1268, %v1270
      %v1272 = vrot.slane %v1258, %v1271
      %v1273 = vcombine.low %v953, %v955
      %v1274 = vcombine.high %v953, %v955
      %v1276 = vunpack.c.l.s4 1983009808
      %v1277 = vunpack.c.0.s8 %v1276
      %v1278 = vlaneseq
      %v1279 = vshrl.u32 %v1278, 7
      %v1280 = vsub.s32 %v1277, %v1279
      %v1281 = vrot.slane %v1273, %v1280
      %v1283 = vunpack.c.l.s4 1983009808
      %v1284 = vunpack.c.0.s8 %v1283
      %v1285 = vlaneseq
      %v1286 = vshrl.u32 %v1285, 7
      %v1287 = vsub.s32 %v1284, %v1286
      %v1288 = vrot.slane %v1274, %v1287
      %v1289 = vcombine.low %v1233, %v1249
      %v1290 = vcombine.high %v1233, %v1249
      %v1292 = vunpack.c.l.s4 1934713408
      %v1293 = vunpack.c.0.s8 %v1292
      %v1294 = vlaneseq
      %v1295 = vshrl.u32 %v1294, 7
      %v1296 = vsub.s32 %v1293, %v1295
      %v1297 = vrot.slane %v1289, %v1296
      %v1299 = vunpack.c.l.s4 1934713408
      %v1300 = vunpack.c.0.s8 %v1299
      %v1301 = vlaneseq
      %v1302 = vshrl.u32 %v1301, 7
      %v1303 = vsub.s32 %v1300, %v1302
      %v1304 = vrot.slane %v1290, %v1303
      %v1305 = vcombine.low %v1240, %v1256
      %v1306 = vcombine.high %v1240, %v1256
      %v1308 = vunpack.c.l.s4 1934713408
      %v1309 = vunpack.c.0.s8 %v1308
      %v1310 = vlaneseq
      %v1311 = vshrl.u32 %v1310, 7
      %v1312 = vsub.s32 %v1309, %v1311
      %v1313 = vrot.slane %v1305, %v1312
      %v1315 = vunpack.c.l.s4 1934713408
      %v1316 = vunpack.c.0.s8 %v1315
      %v1317 = vlaneseq
      %v1318 = vshrl.u32 %v1317, 7
      %v1319 = vsub.s32 %v1316, %v1318
      %v1320 = vrot.slane %v1306, %v1319
      %v1321 = vcombine.low %v1265, %v1281
      %v1322 = vcombine.high %v1265, %v1281
      %v1324 = vunpack.c.l.s4 1934713408
      %v1325 = vunpack.c.0.s8 %v1324
      %v1326 = vlaneseq
      %v1327 = vshrl.u32 %v1326, 7
      %v1328 = vsub.s32 %v1325, %v1327
      %v1329 = vrot.slane %v1321, %v1328
      %v1331 = vunpack.c.l.s4 1934713408
      %v1332 = vunpack.c.0.s8 %v1331
      %v1333 = vlaneseq
      %v1334 = vshrl.u32 %v1333, 7
      %v1335 = vsub.s32 %v1332, %v1334
      %v1336 = vrot.slane %v1322, %v1335
      %v1337 = vcombine.low %v1272, %v1288
      %v1338 = vcombine.high %v1272, %v1288
      %v1340 = vunpack.c.l.s4 1934713408
      %v1341 = vunpack.c.0.s8 %v1340
      %v1342 = vlaneseq
      %v1343 = vshrl.u32 %v1342, 7
      %v1344 = vsub.s32 %v1341, %v1343
      %v1345 = vrot.slane %v1337, %v1344
      %v1347 = vunpack.c.l.s4 1934713408
      %v1348 = vunpack.c.0.s8 %v1347
      %v1349 = vlaneseq
      %v1350 = vshrl.u32 %v1349, 7
      %v1351 = vsub.s32 %v1348, %v1350
      %v1352 = vrot.slane %v1338, %v1351
      %v1353 = vcombine.low %v1297, %v1329
      %v1354 = vcombine.high %v1297, %v1329
      %v1355 = vcombine.low %v1304, %v1336
      %v1356 = vcombine.high %v1304, %v1336
      %v1357 = vcombine.low %v1313, %v1345
      %v1358 = vcombine.high %v1313, %v1345
      %v1359 = vcombine.low %v1320, %v1352
      %v1360 = vcombine.high %v1320, %v1352
      %v1361 = vcombine.low %v1152, %v1154
      %v1362 = vcombine.high %v1152, %v1154
      %v1364 = vunpack.c.l.s4 1983009808
      %v1365 = vunpack.c.0.s8 %v1364
      %v1366 = vlaneseq
      %v1367 = vshrl.u32 %v1366, 7
      %v1368 = vsub.s32 %v1365, %v1367
      %v1369 = vrot.slane %v1361, %v1368
      %v1371 = vunpack.c.l.s4 1983009808
      %v1372 = vunpack.c.0.s8 %v1371
      %v1373 = vlaneseq
      %v1374 = vshrl.u32 %v1373, 7
      %v1375 = vsub.s32 %v1372, %v1374
      %v1376 = vrot.slane %v1362, %v1375
      %v1377 = vcombine.low %v1153, %v1155
      %v1378 = vcombine.high %v1153, %v1155
      %v1380 = vunpack.c.l.s4 1983009808
      %v1381 = vunpack.c.0.s8 %v1380
      %v1382 = vlaneseq
      %v1383 = vshrl.u32 %v1382, 7
      %v1384 = vsub.s32 %v1381, %v1383
      %v1385 = vrot.slane %v1377, %v1384
      %v1387 = vunpack.c.l.s4 1983009808
      %v1388 = vunpack.c.0.s8 %v1387
      %v1389 = vlaneseq
      %v1390 = vshrl.u32 %v1389, 7
      %v1391 = vsub.s32 %v1388, %v1390
      %v1392 = vrot.slane %v1378, %v1391
      %v1393 = vcombine.low %v1156, %v1158
      %v1394 = vcombine.high %v1156, %v1158
      %v1396 = vunpack.c.l.s4 1983009808
      %v1397 = vunpack.c.0.s8 %v1396
      %v1398 = vlaneseq
      %v1399 = vshrl.u32 %v1398, 7
      %v1400 = vsub.s32 %v1397, %v1399
      %v1401 = vrot.slane %v1393, %v1400
      %v1403 = vunpack.c.l.s4 1983009808
      %v1404 = vunpack.c.0.s8 %v1403
      %v1405 = vlaneseq
      %v1406 = vshrl.u32 %v1405, 7
      %v1407 = vsub.s32 %v1404, %v1406
      %v1408 = vrot.slane %v1394, %v1407
      %v1409 = vcombine.high %v1157, 0.0
      %v1411 = vunpack.c.l.s4 1983009808
      %v1412 = vunpack.c.0.s8 %v1411
      %v1413 = vlaneseq
      %v1414 = vshrl.u32 %v1413, 7
      %v1415 = vsub.s32 %v1412, %v1414
      %v1416 = vrot.slane %v1157, %v1415
      %v1418 = vunpack.c.l.s4 1983009808
      %v1419 = vunpack.c.0.s8 %v1418
      %v1420 = vlaneseq
      %v1421 = vshrl.u32 %v1420, 7
      %v1422 = vsub.s32 %v1419, %v1421
      %v1423 = vrot.slane %v1409, %v1422
      %v1424 = vcombine.low %v1369, %v1385
      %v1425 = vcombine.high %v1369, %v1385
      %v1427 = vunpack.c.l.s4 1934713408
      %v1428 = vunpack.c.0.s8 %v1427
      %v1429 = vlaneseq
      %v1430 = vshrl.u32 %v1429, 7
      %v1431 = vsub.s32 %v1428, %v1430
      %v1432 = vrot.slane %v1424, %v1431
      %v1434 = vunpack.c.l.s4 1934713408
      %v1435 = vunpack.c.0.s8 %v1434
      %v1436 = vlaneseq
      %v1437 = vshrl.u32 %v1436, 7
      %v1438 = vsub.s32 %v1435, %v1437
      %v1439 = vrot.slane %v1425, %v1438
      %v1440 = vcombine.low %v1376, %v1392
      %v1441 = vcombine.high %v1376, %v1392
      %v1443 = vunpack.c.l.s4 1934713408
      %v1444 = vunpack.c.0.s8 %v1443
      %v1445 = vlaneseq
      %v1446 = vshrl.u32 %v1445, 7
      %v1447 = vsub.s32 %v1444, %v1446
      %v1448 = vrot.slane %v1440, %v1447
      %v1450 = vunpack.c.l.s4 1934713408
      %v1451 = vunpack.c.0.s8 %v1450
      %v1452 = vlaneseq
      %v1453 = vshrl.u32 %v1452, 7
      %v1454 = vsub.s32 %v1451, %v1453
      %v1455 = vrot.slane %v1441, %v1454
      %v1456 = vcombine.low %v1401, %v1416
      %v1457 = vcombine.high %v1401, %v1416
      %v1459 = vunpack.c.l.s4 1934713408
      %v1460 = vunpack.c.0.s8 %v1459
      %v1461 = vlaneseq
      %v1462 = vshrl.u32 %v1461, 7
      %v1463 = vsub.s32 %v1460, %v1462
      %v1464 = vrot.slane %v1456, %v1463
      %v1466 = vunpack.c.l.s4 1934713408
      %v1467 = vunpack.c.0.s8 %v1466
      %v1468 = vlaneseq
      %v1469 = vshrl.u32 %v1468, 7
      %v1470 = vsub.s32 %v1467, %v1469
      %v1471 = vrot.slane %v1457, %v1470
      %v1472 = vcombine.low %v1408, %v1423
      %v1473 = vcombine.high %v1408, %v1423
      %v1475 = vunpack.c.l.s4 1934713408
      %v1476 = vunpack.c.0.s8 %v1475
      %v1477 = vlaneseq
      %v1478 = vshrl.u32 %v1477, 7
      %v1479 = vsub.s32 %v1476, %v1478
      %v1480 = vrot.slane %v1472, %v1479
      %v1482 = vunpack.c.l.s4 1934713408
      %v1483 = vunpack.c.0.s8 %v1482
      %v1484 = vlaneseq
      %v1485 = vshrl.u32 %v1484, 7
      %v1486 = vsub.s32 %v1483, %v1485
      %v1487 = vrot.slane %v1473, %v1486
      %v1488 = vcombine.low %v1432, %v1464
      %v1489 = vcombine.high %v1432, %v1464
      %v1490 = vcombine.low %v1439, %v1471
      %v1491 = vcombine.high %v1439, %v1471
      %v1492 = vcombine.low %v1448, %v1480
      %v1493 = vcombine.high %v1448, %v1480
      %v1494 = vcombine.low %v1455, %v1487
      %v1495 = vcombine.high %v1455, %v1487
      %v1496 = vcombine.low %v996, %v1003
      %v1498 = vunpack.c.l.s4 1983009808
      %v1499 = vunpack.c.0.s8 %v1498
      %v1500 = vlaneseq
      %v1501 = vshrl.u32 %v1500, 7
      %v1502 = vsub.s32 %v1499, %v1501
      %v1503 = vrot.slane %v1496, %v1502
      %v1504 = vcombine.low %v1020, %v1021
      %v1506 = vunpack.c.l.s4 1983009808
      %v1507 = vunpack.c.0.s8 %v1506
      %v1508 = vlaneseq
      %v1509 = vshrl.u32 %v1508, 7
      %v1510 = vsub.s32 %v1507, %v1509
      %v1511 = vrot.slane %v1504, %v1510
      %v1512 = vcombine.low %v1012, %v1019
      %v1514 = vunpack.c.l.s4 1983009808
      %v1515 = vunpack.c.0.s8 %v1514
      %v1516 = vlaneseq
      %v1517 = vshrl.u32 %v1516, 7
      %v1518 = vsub.s32 %v1515, %v1517
      %v1519 = vrot.slane %v1512, %v1518
      %v1520 = vcombine.low %v1022, %v1023
      %v1522 = vunpack.c.l.s4 1983009808
      %v1523 = vunpack.c.0.s8 %v1522
      %v1524 = vlaneseq
      %v1525 = vshrl.u32 %v1524, 7
      %v1526 = vsub.s32 %v1523, %v1525
      %v1527 = vrot.slane %v1520, %v1526
      %v1528 = vcombine.low %v1503, %v1511
      %v1529 = vcombine.high %v1503, %v1511
      %v1531 = vunpack.c.l.s4 1934713408
      %v1532 = vunpack.c.0.s8 %v1531
      %v1533 = vlaneseq
      %v1534 = vshrl.u32 %v1533, 7
      %v1535 = vsub.s32 %v1532, %v1534
      %v1536 = vrot.slane %v1528, %v1535
      %v1538 = vunpack.c.l.s4 1934713408
      %v1539 = vunpack.c.0.s8 %v1538
      %v1540 = vlaneseq
      %v1541 = vshrl.u32 %v1540, 7
      %v1542 = vsub.s32 %v1539, %v1541
      %v1543 = vrot.slane %v1529, %v1542
      %v1544 = vcombine.low %v1519, %v1527
      %v1545 = vcombine.high %v1519, %v1527
      %v1547 = vunpack.c.l.s4 1934713408
      %v1548 = vunpack.c.0.s8 %v1547
      %v1549 = vlaneseq
      %v1550 = vshrl.u32 %v1549, 7
      %v1551 = vsub.s32 %v1548, %v1550
      %v1552 = vrot.slane %v1544, %v1551
      %v1554 = vunpack.c.l.s4 1934713408
      %v1555 = vunpack.c.0.s8 %v1554
      %v1556 = vlaneseq
      %v1557 = vshrl.u32 %v1556, 7
      %v1558 = vsub.s32 %v1555, %v1557
      %v1559 = vrot.slane %v1545, %v1558
      %v1560 = vcombine.low %v1536, %v1552
      %v1561 = vcombine.high %v1536, %v1552
      %v1562 = vcombine.low %v1543, %v1559
      %v1563 = vcombine.high %v1543, %v1559
      %v1564 = vcombine.low %v1199, %v1206
      %v1566 = vunpack.c.l.s4 1983009808
      %v1567 = vunpack.c.0.s8 %v1566
      %v1568 = vlaneseq
      %v1569 = vshrl.u32 %v1568, 7
      %v1570 = vsub.s32 %v1567, %v1569
      %v1571 = vrot.slane %v1564, %v1570
      %v1572 = vcombine.low %v1216, %v1217
      %v1574 = vunpack.c.l.s4 1983009808
      %v1575 = vunpack.c.0.s8 %v1574
      %v1576 = vlaneseq
      %v1577 = vshrl.u32 %v1576, 7
      %v1578 = vsub.s32 %v1575, %v1577
      %v1579 = vrot.slane %v1572, %v1578
      %v1580 = vcombine.low %v1215, %v1224
      %v1582 = vunpack.c.l.s4 1983009808
      %v1583 = vunpack.c.0.s8 %v1582
      %v1584 = vlaneseq
      %v1585 = vshrl.u32 %v1584, 7
      %v1586 = vsub.s32 %v1583, %v1585
      %v1587 = vrot.slane %v1580, %v1586
      %v1588 = vcombine.high %v1215, 0.0
      %v1590 = vunpack.c.l.s4 1983009808
      %v1591 = vunpack.c.0.s8 %v1590
      %v1592 = vlaneseq
      %v1593 = vshrl.u32 %v1592, 7
      %v1594 = vsub.s32 %v1591, %v1593
      %v1595 = vrot.slane %v1588, %v1594
      %v1596 = vcombine.low %v1571, %v1579
      %v1597 = vcombine.high %v1571, %v1579
      %v1599 = vunpack.c.l.s4 1934713408
      %v1600 = vunpack.c.0.s8 %v1599
      %v1601 = vlaneseq
      %v1602 = vshrl.u32 %v1601, 7
      %v1603 = vsub.s32 %v1600, %v1602
      %v1604 = vrot.slane %v1596, %v1603
      %v1606 = vunpack.c.l.s4 1934713408
      %v1607 = vunpack.c.0.s8 %v1606
      %v1608 = vlaneseq
      %v1609 = vshrl.u32 %v1608, 7
      %v1610 = vsub.s32 %v1607, %v1609
      %v1611 = vrot.slane %v1597, %v1610
      %v1612 = vcombine.low %v1587, %v1595
      %v1613 = vcombine.high %v1587, %v1595
      %v1615 = vunpack.c.l.s4 1934713408
      %v1616 = vunpack.c.0.s8 %v1615
      %v1617 = vlaneseq
      %v1618 = vshrl.u32 %v1617, 7
      %v1619 = vsub.s32 %v1616, %v1618
      %v1620 = vrot.slane %v1612, %v1619
      %v1622 = vunpack.c.l.s4 1934713408
      %v1623 = vunpack.c.0.s8 %v1622
      %v1624 = vlaneseq
      %v1625 = vshrl.u32 %v1624, 7
      %v1626 = vsub.s32 %v1623, %v1625
      %v1627 = vrot.slane %v1613, %v1626
      %v1628 = vcombine.low %v1604, %v1620
      %v1629 = vcombine.high %v1604, %v1620
      %v1630 = vcombine.low %v1611, %v1627
      %v1631 = vcombine.high %v1611, %v1627
      %v1632 = vmul.f32 %v1353, 0.35355338
      %v1633 = vmul.f32 %v1488, 0.35355338
      %v1634 = vmul.f32 %v1354, 0.35355338
      %v1635 = vmul.f32 %v1489, 0.35355338
      %v1636 = vmul.f32 %v1355, 0.35355338
      %v1637 = vmul.f32 %v1490, 0.35355338
      %v1638 = vmul.f32 %v1356, 0.35355338
      %v1639 = vmul.f32 %v1491, 0.35355338
      %v1640 = vpack.c.bf16 %v1633, %v1632
      %v1641 = vpack.c.bf16 %v1635, %v1634
      %v1642 = vpack.c.bf16 %v1637, %v1636
      %v1643 = vpack.c.bf16 %v1639, %v1638
      %v1644 = vpack.c.bf16 %v1492, %v1357
      %v1645 = vpack.c.bf16 %v1493, %v1358
      %v1646 = vpack.c.bf16 %v1494, %v1359
      %v1647 = vpack.c.bf16 %v1495, %v1360
      %v1648 = vpack.c.bf16 %v1628, %v1560
      %v1649 = vpack.c.bf16 %v1629, %v1561
      %v1650 = vpack.c.bf16 %v1630, %v1562
      %v1651 = vpack.c.bf16 %v1631, %v1563
      %v1652 = vld [vmem:[%s1] sm:$0xff]
      %v1653 = vld [vmem:[%s1 + $0x8] sm:$0x7f]
      %vm1654 = vcmask 64512
      %v1656 = vsel %vm1654, %v1640, 0
      %v1659 = vsel %vm1654, %v1644, 0
      %1661 = vmatprep.subr.bf16.mxu0 0
      %1662 = vmatpush1.bf16.xpose.msra.mxu0 %v1659
      %1663 = vmatprep.subr.bf16.mxu0 0
      %1664 = vmatpush1.bf16.xpose.msra.mxu0 0
      %1665 = vmatprep.subr.bf16.mxu0 0
      %1666 = vmatpush1.bf16.xpose.msra.mxu0 0
      %1667 = vmatprep.subr.bf16.mxu0 0
      %1668 = vmatpush1.bf16.xpose.msra.mxu0 0
      %1669 = vmatprep.subr.bf16.mxu0 0
      %1670 = vmatpush1.bf16.xpose.msra.mxu0 0
      %1671 = vmatprep.subr.bf16.mxu0 0
      %1672 = vmatpush1.bf16.xpose.msra.mxu0 0
      %1673 = vmatprep.subr.bf16.mxu0 0
      %1674 = vmatpush1.bf16.xpose.msra.mxu0 0
      %1675 = vmatprep.subr.bf16.mxu0 0
      %1676 = vmatpush1.bf16.xpose.msra.mxu0 0
      %1677 = vmatprep.subr.bf16.mxu0 0
      %1678 = vmatpush1.bf16.xpose.msra.mxu0 0
      %1679 = vmatprep.subr.bf16.mxu0 0
      %1680 = vmatpush1.bf16.xpose.msra.mxu0 0
      %1681 = vmatprep.subr.bf16.mxu0 0
      %1682 = vmatpush1.bf16.xpose.msra.mxu0 0
      %1683 = vmatprep.subr.bf16.mxu0 0
      %1684 = vmatpush1.bf16.xpose.msra.mxu0 0
      %1685 = vmatprep.subr.bf16.mxu0 0
      %1686 = vmatpush1.bf16.xpose.msra.mxu0 0
      %1687 = vmatprep.subr.bf16.mxu0 0
      %1688 = vmatpush1.bf16.xpose.msra.mxu0 0
      %1689 = vmatprep.subr.bf16.mxu0 0
      %1690 = vmatpush1.bf16.xpose.msra.mxu0 0
      %1691 = vmatprep.subr.bf16.mxu0 0
      %1692 = vmatpush1.bf16.xpose.msra.mxu0 0
      %1693 = vmatprep.mubr.bf16.mxu0 0
      %1694 = vmatmul.mubr.bf16.gmra.mrb[0].mxu0 %v1656
      %v1695 = vpop.f32.mrb[0].mxu0
      %v1696 = vadd.f32 %v1652, %v1695
      %v1697 = vpop.f32.mrb[0].mxu0
      %v1698 = vpop.f32.mrb[0].mxu0
      %v1699 = vadd.f32 %v1653, %v1698
      %v1700 = vpop.f32.mrb[0].mxu0
      %1701 = vdwg.mxu0
      %v1703 = vsel %vm1654, %v1641, 0
      %v1706 = vsel %vm1654, %v1645, 0
      %1708 = vmatprep.subr.bf16.mxu0 0
      %1709 = vmatpush1.bf16.xpose.msra.mxu0 %v1706
      %1710 = vmatprep.subr.bf16.mxu0 0
      %1711 = vmatpush1.bf16.xpose.msra.mxu0 0
      %1712 = vmatprep.subr.bf16.mxu0 0
      %1713 = vmatpush1.bf16.xpose.msra.mxu0 0
      %1714 = vmatprep.subr.bf16.mxu0 0
      %1715 = vmatpush1.bf16.xpose.msra.mxu0 0
      %1716 = vmatprep.subr.bf16.mxu0 0
      %1717 = vmatpush1.bf16.xpose.msra.mxu0 0
      %1718 = vmatprep.subr.bf16.mxu0 0
      %1719 = vmatpush1.bf16.xpose.msra.mxu0 0
      %1720 = vmatprep.subr.bf16.mxu0 0
      %1721 = vmatpush1.bf16.xpose.msra.mxu0 0
      %1722 = vmatprep.subr.bf16.mxu0 0
      %1723 = vmatpush1.bf16.xpose.msra.mxu0 0
      %1724 = vmatprep.subr.bf16.mxu0 0
      %1725 = vmatpush1.bf16.xpose.msra.mxu0 0
      %1726 = vmatprep.subr.bf16.mxu0 0
      %1727 = vmatpush1.bf16.xpose.msra.mxu0 0
      %1728 = vmatprep.subr.bf16.mxu0 0
      %1729 = vmatpush1.bf16.xpose.msra.mxu0 0
      %1730 = vmatprep.subr.bf16.mxu0 0
      %1731 = vmatpush1.bf16.xpose.msra.mxu0 0
      %1732 = vmatprep.subr.bf16.mxu0 0
      %1733 = vmatpush1.bf16.xpose.msra.mxu0 0
      %1734 = vmatprep.subr.bf16.mxu0 0
      %1735 = vmatpush1.bf16.xpose.msra.mxu0 0
      %1736 = vmatprep.subr.bf16.mxu0 0
      %1737 = vmatpush1.bf16.xpose.msra.mxu0 0
      %1738 = vmatprep.subr.bf16.mxu0 0
      %1739 = vmatpush1.bf16.xpose.msra.mxu0 0
      %1740 = vmatprep.mubr.bf16.mxu0 0
      %1741 = vmatmul.mubr.bf16.gmra.mrb[0].mxu0 %v1703
      %v1742 = vpop.f32.mrb[0].mxu0
      %v1743 = vadd.f32 %v1652, %v1742
      %v1744 = vpop.f32.mrb[0].mxu0
      %v1745 = vpop.f32.mrb[0].mxu0
      %v1746 = vadd.f32 %v1653, %v1745
      %v1747 = vpop.f32.mrb[0].mxu0
      %1748 = vdwg.mxu0
      %v1750 = vsel %vm1654, %v1642, 0
      %v1753 = vsel %vm1654, %v1646, 0
      %1755 = vmatprep.subr.bf16.mxu0 0
      %1756 = vmatpush1.bf16.xpose.msra.mxu0 %v1753
      %1757 = vmatprep.subr.bf16.mxu0 0
      %1758 = vmatpush1.bf16.xpose.msra.mxu0 0
      %1759 = vmatprep.subr.bf16.mxu0 0
      %1760 = vmatpush1.bf16.xpose.msra.mxu0 0
      %1761 = vmatprep.subr.bf16.mxu0 0
      %1762 = vmatpush1.bf16.xpose.msra.mxu0 0
      %1763 = vmatprep.subr.bf16.mxu0 0
      %1764 = vmatpush1.bf16.xpose.msra.mxu0 0
      %1765 = vmatprep.subr.bf16.mxu0 0
      %1766 = vmatpush1.bf16.xpose.msra.mxu0 0
      %1767 = vmatprep.subr.bf16.mxu0 0
      %1768 = vmatpush1.bf16.xpose.msra.mxu0 0
      %1769 = vmatprep.subr.bf16.mxu0 0
      %1770 = vmatpush1.bf16.xpose.msra.mxu0 0
      %1771 = vmatprep.subr.bf16.mxu0 0
      %1772 = vmatpush1.bf16.xpose.msra.mxu0 0
      %1773 = vmatprep.subr.bf16.mxu0 0
      %1774 = vmatpush1.bf16.xpose.msra.mxu0 0
      %1775 = vmatprep.subr.bf16.mxu0 0
      %1776 = vmatpush1.bf16.xpose.msra.mxu0 0
      %1777 = vmatprep.subr.bf16.mxu0 0
      %1778 = vmatpush1.bf16.xpose.msra.mxu0 0
      %1779 = vmatprep.subr.bf16.mxu0 0
      %1780 = vmatpush1.bf16.xpose.msra.mxu0 0
      %1781 = vmatprep.subr.bf16.mxu0 0
      %1782 = vmatpush1.bf16.xpose.msra.mxu0 0
      %1783 = vmatprep.subr.bf16.mxu0 0
      %1784 = vmatpush1.bf16.xpose.msra.mxu0 0
      %1785 = vmatprep.subr.bf16.mxu0 0
      %1786 = vmatpush1.bf16.xpose.msra.mxu0 0
      %1787 = vmatprep.mubr.bf16.mxu0 0
      %1788 = vmatmul.mubr.bf16.gmra.mrb[0].mxu0 %v1750
      %v1789 = vpop.f32.mrb[0].mxu0
      %v1790 = vadd.f32 %v1652, %v1789
      %v1791 = vpop.f32.mrb[0].mxu0
      %v1792 = vpop.f32.mrb[0].mxu0
      %v1793 = vadd.f32 %v1653, %v1792
      %v1794 = vpop.f32.mrb[0].mxu0
      %1795 = vdwg.mxu0
      %v1797 = vsel %vm1654, %v1643, 0
      %v1800 = vsel %vm1654, %v1647, 0
      %1802 = vmatprep.subr.bf16.mxu0 0
      %1803 = vmatpush1.bf16.xpose.msra.mxu0 %v1800
      %1804 = vmatprep.subr.bf16.mxu0 0
      %1805 = vmatpush1.bf16.xpose.msra.mxu0 0
      %1806 = vmatprep.subr.bf16.mxu0 0
      %1807 = vmatpush1.bf16.xpose.msra.mxu0 0
      %1808 = vmatprep.subr.bf16.mxu0 0
      %1809 = vmatpush1.bf16.xpose.msra.mxu0 0
      %1810 = vmatprep.subr.bf16.mxu0 0
      %1811 = vmatpush1.bf16.xpose.msra.mxu0 0
      %1812 = vmatprep.subr.bf16.mxu0 0
      %1813 = vmatpush1.bf16.xpose.msra.mxu0 0
      %1814 = vmatprep.subr.bf16.mxu0 0
      %1815 = vmatpush1.bf16.xpose.msra.mxu0 0
      %1816 = vmatprep.subr.bf16.mxu0 0
      %1817 = vmatpush1.bf16.xpose.msra.mxu0 0
      %1818 = vmatprep.subr.bf16.mxu0 0
      %1819 = vmatpush1.bf16.xpose.msra.mxu0 0
      %1820 = vmatprep.subr.bf16.mxu0 0
      %1821 = vmatpush1.bf16.xpose.msra.mxu0 0
      %1822 = vmatprep.subr.bf16.mxu0 0
      %1823 = vmatpush1.bf16.xpose.msra.mxu0 0
      %1824 = vmatprep.subr.bf16.mxu0 0
      %1825 = vmatpush1.bf16.xpose.msra.mxu0 0
      %1826 = vmatprep.subr.bf16.mxu0 0
      %1827 = vmatpush1.bf16.xpose.msra.mxu0 0
      %1828 = vmatprep.subr.bf16.mxu0 0
      %1829 = vmatpush1.bf16.xpose.msra.mxu0 0
      %1830 = vmatprep.subr.bf16.mxu0 0
      %1831 = vmatpush1.bf16.xpose.msra.mxu0 0
      %1832 = vmatprep.subr.bf16.mxu0 0
      %1833 = vmatpush1.bf16.xpose.msra.mxu0 0
      %1834 = vmatprep.mubr.bf16.mxu0 0
      %1835 = vmatmul.mubr.bf16.gmra.mrb[0].mxu0 %v1797
      %v1836 = vpop.f32.mrb[0].mxu0
      %v1837 = vadd.f32 %v1652, %v1836
      %v1838 = vpop.f32.mrb[0].mxu0
      %v1839 = vpop.f32.mrb[0].mxu0
      %v1840 = vadd.f32 %v1653, %v1839
      %v1841 = vpop.f32.mrb[0].mxu0
      %1842 = vdwg.mxu0
      %vm1843 = vcmask 121856
      %v1844 = vsel %vm1843, %v1696, -inf
      %1845 = vmax.xlane.f32.xlu0 %v1844
      %v1846 = vpop.xlane.xlu0 %1845
      %vm1847 = vcmask 120832
      %v1848 = vsel %vm1847, %v1699, -inf
      %1849 = vmax.xlane.f32.xlu0 %v1848
      %v1850 = vpop.xlane.xlu0 %1849
      %v1851 = vsel %vm1843, %v1743, -inf
      %1852 = vmax.xlane.f32.xlu0 %v1851
      %v1853 = vpop.xlane.xlu0 %1852
      %v1854 = vsel %vm1847, %v1746, -inf
      %1855 = vmax.xlane.f32.xlu0 %v1854
      %v1856 = vpop.xlane.xlu0 %1855
      %v1857 = vsel %vm1843, %v1790, -inf
      %1858 = vmax.xlane.f32.xlu0 %v1857
      %v1859 = vpop.xlane.xlu0 %1858
      %v1860 = vsel %vm1847, %v1793, -inf
      %1861 = vmax.xlane.f32.xlu0 %v1860
      %v1862 = vpop.xlane.xlu0 %1861
      %v1863 = vsel %vm1843, %v1837, -inf
      %1864 = vmax.xlane.f32.xlu0 %v1863
      %v1865 = vpop.xlane.xlu0 %1864
      %v1866 = vsel %vm1847, %v1840, -inf
      %1867 = vmax.xlane.f32.xlu0 %v1866
      %v1868 = vpop.xlane.xlu0 %1867
      %v1869 = vsub.f32 %v1696, %v1846
      %v1870 = vsub.f32 %v1699, %v1850
      %v1871 = vsub.f32 %v1743, %v1853
      %v1872 = vsub.f32 %v1746, %v1856
      %v1873 = vsub.f32 %v1790, %v1859
      %v1874 = vsub.f32 %v1793, %v1862
      %v1875 = vsub.f32 %v1837, %v1865
      %v1876 = vsub.f32 %v1840, %v1868
      %v1877 = vmul.f32 %v1869, 1.442695
      %v1878 = vpow.pop %v1877
      %v1879 = vmul.f32 %v1870, 1.442695
      %v1880 = vpow.pop %v1879
      %v1881 = vmul.f32 %v1871, 1.442695
      %v1882 = vpow.pop %v1881
      %v1883 = vmul.f32 %v1872, 1.442695
      %v1884 = vpow.pop %v1883
      %v1885 = vmul.f32 %v1873, 1.442695
      %v1886 = vpow.pop %v1885
      %v1887 = vmul.f32 %v1874, 1.442695
      %v1888 = vpow.pop %v1887
      %v1889 = vmul.f32 %v1875, 1.442695
      %v1890 = vpow.pop %v1889
      %v1891 = vmul.f32 %v1876, 1.442695
      %v1892 = vpow.pop %v1891
      %v1893 = vsel %vm1843, %v1878, 0.0
      %1894 = vadd.xlane.f32.xlu0 %v1893
      %v1895 = vpop.xlane.xlu0 %1894
      %v1896 = vsel %vm1847, %v1880, 0.0
      %1897 = vadd.xlane.f32.xlu0 %v1896
      %v1898 = vpop.xlane.xlu0 %1897
      %v1899 = vsel %vm1843, %v1882, 0.0
      %1900 = vadd.xlane.f32.xlu0 %v1899
      %v1901 = vpop.xlane.xlu0 %1900
      %v1902 = vsel %vm1847, %v1884, 0.0
      %1903 = vadd.xlane.f32.xlu0 %v1902
      %v1904 = vpop.xlane.xlu0 %1903
      %v1905 = vsel %vm1843, %v1886, 0.0
      %1906 = vadd.xlane.f32.xlu0 %v1905
      %v1907 = vpop.xlane.xlu0 %1906
      %v1908 = vsel %vm1847, %v1888, 0.0
      %1909 = vadd.xlane.f32.xlu0 %v1908
      %v1910 = vpop.xlane.xlu0 %1909
      %v1911 = vsel %vm1843, %v1890, 0.0
      %1912 = vadd.xlane.f32.xlu0 %v1911
      %v1913 = vpop.xlane.xlu0 %1912
      %v1914 = vsel %vm1847, %v1892, 0.0
      %1915 = vadd.xlane.f32.xlu0 %v1914
      %v1916 = vpop.xlane.xlu0 %1915
      %v1917 = vrcp.pop %v1895
      %v1918 = vrcp.pop %v1898
      %v1919 = vrcp.pop %v1901
      %v1920 = vrcp.pop %v1904
      %v1921 = vrcp.pop %v1907
      %v1922 = vrcp.pop %v1910
      %v1923 = vrcp.pop %v1913
      %v1924 = vrcp.pop %v1916
      %v1925 = vmul.f32 %v1878, %v1917
      %v1926 = vmul.f32 %v1880, %v1918
      %v1927 = vmul.f32 %v1882, %v1919
      %v1928 = vmul.f32 %v1884, %v1920
      %v1929 = vmul.f32 %v1886, %v1921
      %v1930 = vmul.f32 %v1888, %v1922
      %v1931 = vmul.f32 %v1890, %v1923
      %v1932 = vmul.f32 %v1892, %v1924
      %v1933 = vpack.c.bf16 %v1926, %v1925
      %v1934 = vpack.c.bf16 %v1928, %v1927
      %v1935 = vpack.c.bf16 %v1930, %v1929
      %v1936 = vpack.c.bf16 %v1932, %v1931
      %v1938 = vsel %vm1843, %v1933, 0
      %vm1940 = vcmask 1046528
      %vm1941 = vcmask 1047552
      %v1942 = vsel %vm1940, 4294967295, 65535
      %v1943 = vsel %vm1941, %v1942, 0
      %v1945 = vand.u32 %v1648, %v1943
      %1947 = vmatprep.subr.bf16.mxu0 0
      %1948 = vmatpush1.bf16.msra.mxu0 %v1945
      %1949 = vmatprep.subr.bf16.mxu0 0
      %1950 = vmatpush1.bf16.msra.mxu0 0
      %1951 = vmatprep.subr.bf16.mxu0 0
      %1952 = vmatpush1.bf16.msra.mxu0 0
      %1953 = vmatprep.subr.bf16.mxu0 0
      %1954 = vmatpush1.bf16.msra.mxu0 0
      %1955 = vmatprep.subr.bf16.mxu0 0
      %1956 = vmatpush1.bf16.msra.mxu0 0
      %1957 = vmatprep.subr.bf16.mxu0 0
      %1958 = vmatpush1.bf16.msra.mxu0 0
      %1959 = vmatprep.subr.bf16.mxu0 0
      %1960 = vmatpush1.bf16.msra.mxu0 0
      %1961 = vmatprep.subr.bf16.mxu0 0
      %1962 = vmatpush1.bf16.msra.mxu0 0
      %1963 = vmatprep.subr.bf16.mxu0 0
      %1964 = vmatpush1.bf16.msra.mxu0 0
      %1965 = vmatprep.subr.bf16.mxu0 0
      %1966 = vmatpush1.bf16.msra.mxu0 0
      %1967 = vmatprep.subr.bf16.mxu0 0
      %1968 = vmatpush1.bf16.msra.mxu0 0
      %1969 = vmatprep.subr.bf16.mxu0 0
      %1970 = vmatpush1.bf16.msra.mxu0 0
      %1971 = vmatprep.subr.bf16.mxu0 0
      %1972 = vmatpush1.bf16.msra.mxu0 0
      %1973 = vmatprep.subr.bf16.mxu0 0
      %1974 = vmatpush1.bf16.msra.mxu0 0
      %1975 = vmatprep.subr.bf16.mxu0 0
      %1976 = vmatpush1.bf16.msra.mxu0 0
      %1977 = vmatprep.subr.bf16.mxu0 0
      %1978 = vmatpush1.bf16.msra.mxu0 0
      %1979 = vmatprep.mubr.bf16.mxu0 0
      %1980 = vmatmul.mubr.bf16.gmra.mrb[0].mxu0 %v1938
      %v1981 = vpop.f32.mrb[0].mxu0
      %v1982 = vadd.f32 0.0, %v1981
      %v1983 = vpop.f32.mrb[0].mxu0
      %v1984 = vpop.f32.mrb[0].mxu0
      %v1985 = vadd.f32 0.0, %v1984
      %v1986 = vpop.f32.mrb[0].mxu0
      %1987 = vdwg.mxu0
      %v1989 = vsel %vm1843, %v1934, 0
      %v1992 = vand.u32 %v1649, %v1943
      %1994 = vmatprep.subr.bf16.mxu0 0
      %1995 = vmatpush1.bf16.msra.mxu0 %v1992
      %1996 = vmatprep.subr.bf16.mxu0 0
      %1997 = vmatpush1.bf16.msra.mxu0 0
      %1998 = vmatprep.subr.bf16.mxu0 0
      %1999 = vmatpush1.bf16.msra.mxu0 0
      %2000 = vmatprep.subr.bf16.mxu0 0
      %2001 = vmatpush1.bf16.msra.mxu0 0
      %2002 = vmatprep.subr.bf16.mxu0 0
      %2003 = vmatpush1.bf16.msra.mxu0 0
      %2004 = vmatprep.subr.bf16.mxu0 0
      %2005 = vmatpush1.bf16.msra.mxu0 0
      %2006 = vmatprep.subr.bf16.mxu0 0
      %2007 = vmatpush1.bf16.msra.mxu0 0
      %2008 = vmatprep.subr.bf16.mxu0 0
      %2009 = vmatpush1.bf16.msra.mxu0 0
      %2010 = vmatprep.subr.bf16.mxu0 0
      %2011 = vmatpush1.bf16.msra.mxu0 0
      %2012 = vmatprep.subr.bf16.mxu0 0
      %2013 = vmatpush1.bf16.msra.mxu0 0
      %2014 = vmatprep.subr.bf16.mxu0 0
      %2015 = vmatpush1.bf16.msra.mxu0 0
      %2016 = vmatprep.subr.bf16.mxu0 0
      %2017 = vmatpush1.bf16.msra.mxu0 0
      %2018 = vmatprep.subr.bf16.mxu0 0
      %2019 = vmatpush1.bf16.msra.mxu0 0
      %2020 = vmatprep.subr.bf16.mxu0 0
      %2021 = vmatpush1.bf16.msra.mxu0 0
      %2022 = vmatprep.subr.bf16.mxu0 0
      %2023 = vmatpush1.bf16.msra.mxu0 0
      %2024 = vmatprep.subr.bf16.mxu0 0
      %2025 = vmatpush1.bf16.msra.mxu0 0
      %2026 = vmatprep.mubr.bf16.mxu0 0
      %2027 = vmatmul.mubr.bf16.gmra.mrb[0].mxu0 %v1989
      %v2028 = vpop.f32.mrb[0].mxu0
      %v2029 = vadd.f32 0.0, %v2028
      %v2030 = vpop.f32.mrb[0].mxu0
      %v2031 = vpop.f32.mrb[0].mxu0
      %v2032 = vadd.f32 0.0, %v2031
      %v2033 = vpop.f32.mrb[0].mxu0
      %2034 = vdwg.mxu0
      %v2036 = vsel %vm1843, %v1935, 0
      %v2039 = vand.u32 %v1650, %v1943
      %2041 = vmatprep.subr.bf16.mxu0 0
      %2042 = vmatpush1.bf16.msra.mxu0 %v2039
      %2043 = vmatprep.subr.bf16.mxu0 0
      %2044 = vmatpush1.bf16.msra.mxu0 0
      %2045 = vmatprep.subr.bf16.mxu0 0
      %2046 = vmatpush1.bf16.msra.mxu0 0
      %2047 = vmatprep.subr.bf16.mxu0 0
      %2048 = vmatpush1.bf16.msra.mxu0 0
      %2049 = vmatprep.subr.bf16.mxu0 0
      %2050 = vmatpush1.bf16.msra.mxu0 0
      %2051 = vmatprep.subr.bf16.mxu0 0
      %2052 = vmatpush1.bf16.msra.mxu0 0
      %2053 = vmatprep.subr.bf16.mxu0 0
      %2054 = vmatpush1.bf16.msra.mxu0 0
      %2055 = vmatprep.subr.bf16.mxu0 0
      %2056 = vmatpush1.bf16.msra.mxu0 0
      %2057 = vmatprep.subr.bf16.mxu0 0
      %2058 = vmatpush1.bf16.msra.mxu0 0
      %2059 = vmatprep.subr.bf16.mxu0 0
      %2060 = vmatpush1.bf16.msra.mxu0 0
      %2061 = vmatprep.subr.bf16.mxu0 0
      %2062 = vmatpush1.bf16.msra.mxu0 0
      %2063 = vmatprep.subr.bf16.mxu0 0
      %2064 = vmatpush1.bf16.msra.mxu0 0
      %2065 = vmatprep.subr.bf16.mxu0 0
      %2066 = vmatpush1.bf16.msra.mxu0 0
      %2067 = vmatprep.subr.bf16.mxu0 0
      %2068 = vmatpush1.bf16.msra.mxu0 0
      %2069 = vmatprep.subr.bf16.mxu0 0
      %2070 = vmatpush1.bf16.msra.mxu0 0
      %2071 = vmatprep.subr.bf16.mxu0 0
      %2072 = vmatpush1.bf16.msra.mxu0 0
      %2073 = vmatprep.mubr.bf16.mxu0 0
      %2074 = vmatmul.mubr.bf16.gmra.mrb[0].mxu0 %v2036
      %v2075 = vpop.f32.mrb[0].mxu0
      %v2076 = vadd.f32 0.0, %v2075
      %v2077 = vpop.f32.mrb[0].mxu0
      %v2078 = vpop.f32.mrb[0].mxu0
      %v2079 = vadd.f32 0.0, %v2078
      %v2080 = vpop.f32.mrb[0].mxu0
      %2081 = vdwg.mxu0
      %v2083 = vsel %vm1843, %v1936, 0
      %v2086 = vand.u32 %v1651, %v1943
      %2088 = vmatprep.subr.bf16.mxu0 0
      %2089 = vmatpush1.bf16.msra.mxu0 %v2086
      %2090 = vmatprep.subr.bf16.mxu0 0
      %2091 = vmatpush1.bf16.msra.mxu0 0
      %2092 = vmatprep.subr.bf16.mxu0 0
      %2093 = vmatpush1.bf16.msra.mxu0 0
      %2094 = vmatprep.subr.bf16.mxu0 0
      %2095 = vmatpush1.bf16.msra.mxu0 0
      %2096 = vmatprep.subr.bf16.mxu0 0
      %2097 = vmatpush1.bf16.msra.mxu0 0
      %2098 = vmatprep.subr.bf16.mxu0 0
      %2099 = vmatpush1.bf16.msra.mxu0 0
      %2100 = vmatprep.subr.bf16.mxu0 0
      %2101 = vmatpush1.bf16.msra.mxu0 0
      %2102 = vmatprep.subr.bf16.mxu0 0
      %2103 = vmatpush1.bf16.msra.mxu0 0
      %2104 = vmatprep.subr.bf16.mxu0 0
      %2105 = vmatpush1.bf16.msra.mxu0 0
      %2106 = vmatprep.subr.bf16.mxu0 0
      %2107 = vmatpush1.bf16.msra.mxu0 0
      %2108 = vmatprep.subr.bf16.mxu0 0
      %2109 = vmatpush1.bf16.msra.mxu0 0
      %2110 = vmatprep.subr.bf16.mxu0 0
      %2111 = vmatpush1.bf16.msra.mxu0 0
      %2112 = vmatprep.subr.bf16.mxu0 0
      %2113 = vmatpush1.bf16.msra.mxu0 0
      %2114 = vmatprep.subr.bf16.mxu0 0
      %2115 = vmatpush1.bf16.msra.mxu0 0
      %2116 = vmatprep.subr.bf16.mxu0 0
      %2117 = vmatpush1.bf16.msra.mxu0 0
      %2118 = vmatprep.subr.bf16.mxu0 0
      %2119 = vmatpush1.bf16.msra.mxu0 0
      %2120 = vmatprep.mubr.bf16.mxu0 0
      %2121 = vmatmul.mubr.bf16.gmra.mrb[0].mxu0 %v2083
      %v2122 = vpop.f32.mrb[0].mxu0
      %v2123 = vadd.f32 0.0, %v2122
      %v2124 = vpop.f32.mrb[0].mxu0
      %v2125 = vpop.f32.mrb[0].mxu0
      %v2126 = vadd.f32 0.0, %v2125
      %v2127 = vpop.f32.mrb[0].mxu0
      %2128 = vdwg.mxu0
      %v2129 = vcombine.low %v1982, %v2076
      %v2130 = vcombine.high %v1982, %v2076
      %v2132 = vunpack.c.l.s4 1983009808
      %v2133 = vunpack.c.0.s8 %v2132
      %v2134 = vlaneseq
      %v2135 = vshrl.u32 %v2134, 7
      %v2136 = vsub.s32 %v2133, %v2135
      %v2137 = vrot.slane %v2129, %v2136
      %v2139 = vunpack.c.l.s4 1983009808
      %v2140 = vunpack.c.0.s8 %v2139
      %v2141 = vlaneseq
      %v2142 = vshrl.u32 %v2141, 7
      %v2143 = vsub.s32 %v2140, %v2142
      %v2144 = vrot.slane %v2130, %v2143
      %v2145 = vcombine.low %v2029, %v2123
      %v2146 = vcombine.high %v2029, %v2123
      %v2148 = vunpack.c.l.s4 1983009808
      %v2149 = vunpack.c.0.s8 %v2148
      %v2150 = vlaneseq
      %v2151 = vshrl.u32 %v2150, 7
      %v2152 = vsub.s32 %v2149, %v2151
      %v2153 = vrot.slane %v2145, %v2152
      %v2155 = vunpack.c.l.s4 1983009808
      %v2156 = vunpack.c.0.s8 %v2155
      %v2157 = vlaneseq
      %v2158 = vshrl.u32 %v2157, 7
      %v2159 = vsub.s32 %v2156, %v2158
      %v2160 = vrot.slane %v2146, %v2159
      %v2161 = vcombine.low %v2137, %v2153
      %v2162 = vcombine.high %v2137, %v2153
      %v2164 = vunpack.c.l.s4 1934713408
      %v2165 = vunpack.c.0.s8 %v2164
      %v2166 = vlaneseq
      %v2167 = vshrl.u32 %v2166, 7
      %v2168 = vsub.s32 %v2165, %v2167
      %v2169 = vrot.slane %v2161, %v2168
      %v2171 = vunpack.c.l.s4 1934713408
      %v2172 = vunpack.c.0.s8 %v2171
      %v2173 = vlaneseq
      %v2174 = vshrl.u32 %v2173, 7
      %v2175 = vsub.s32 %v2172, %v2174
      %v2176 = vrot.slane %v2162, %v2175
      %v2177 = vcombine.low %v2144, %v2160
      %v2178 = vcombine.high %v2144, %v2160
      %v2180 = vunpack.c.l.s4 1934713408
      %v2181 = vunpack.c.0.s8 %v2180
      %v2182 = vlaneseq
      %v2183 = vshrl.u32 %v2182, 7
      %v2184 = vsub.s32 %v2181, %v2183
      %v2185 = vrot.slane %v2177, %v2184
      %v2187 = vunpack.c.l.s4 1934713408
      %v2188 = vunpack.c.0.s8 %v2187
      %v2189 = vlaneseq
      %v2190 = vshrl.u32 %v2189, 7
      %v2191 = vsub.s32 %v2188, %v2190
      %v2192 = vrot.slane %v2178, %v2191
      %v2193 = vcombine.high %v2169, 0.0
      %v2194 = vcombine.high %v2176, 0.0
      %v2195 = vcombine.high %v2185, 0.0
      %v2196 = vcombine.high %v2192, 0.0
      %v2197 = vcombine.low %v1985, %v2079
      %v2198 = vcombine.high %v1985, %v2079
      %v2200 = vunpack.c.l.s4 1983009808
      %v2201 = vunpack.c.0.s8 %v2200
      %v2202 = vlaneseq
      %v2203 = vshrl.u32 %v2202, 7
      %v2204 = vsub.s32 %v2201, %v2203
      %v2205 = vrot.slane %v2197, %v2204
      %v2207 = vunpack.c.l.s4 1983009808
      %v2208 = vunpack.c.0.s8 %v2207
      %v2209 = vlaneseq
      %v2210 = vshrl.u32 %v2209, 7
      %v2211 = vsub.s32 %v2208, %v2210
      %v2212 = vrot.slane %v2198, %v2211
      %v2213 = vcombine.low %v2032, %v2126
      %v2214 = vcombine.high %v2032, %v2126
      %v2216 = vunpack.c.l.s4 1983009808
      %v2217 = vunpack.c.0.s8 %v2216
      %v2218 = vlaneseq
      %v2219 = vshrl.u32 %v2218, 7
      %v2220 = vsub.s32 %v2217, %v2219
      %v2221 = vrot.slane %v2213, %v2220
      %v2223 = vunpack.c.l.s4 1983009808
      %v2224 = vunpack.c.0.s8 %v2223
      %v2225 = vlaneseq
      %v2226 = vshrl.u32 %v2225, 7
      %v2227 = vsub.s32 %v2224, %v2226
      %v2228 = vrot.slane %v2214, %v2227
      %v2229 = vcombine.low %v2205, %v2221
      %v2230 = vcombine.high %v2205, %v2221
      %v2232 = vunpack.c.l.s4 1934713408
      %v2233 = vunpack.c.0.s8 %v2232
      %v2234 = vlaneseq
      %v2235 = vshrl.u32 %v2234, 7
      %v2236 = vsub.s32 %v2233, %v2235
      %v2237 = vrot.slane %v2229, %v2236
      %v2239 = vunpack.c.l.s4 1934713408
      %v2240 = vunpack.c.0.s8 %v2239
      %v2241 = vlaneseq
      %v2242 = vshrl.u32 %v2241, 7
      %v2243 = vsub.s32 %v2240, %v2242
      %v2244 = vrot.slane %v2230, %v2243
      %v2245 = vcombine.low %v2212, %v2228
      %v2246 = vcombine.high %v2212, %v2228
      %v2248 = vunpack.c.l.s4 1934713408
      %v2249 = vunpack.c.0.s8 %v2248
      %v2250 = vlaneseq
      %v2251 = vshrl.u32 %v2250, 7
      %v2252 = vsub.s32 %v2249, %v2251
      %v2253 = vrot.slane %v2245, %v2252
      %v2254 = vcombine.high %v2237, 0.0
      %v2255 = vcombine.high %v2244, 0.0
      %v2257 = vunpack.c.l.s4 1934713408
      %v2258 = vunpack.c.0.s8 %v2257
      %v2259 = vlaneseq
      %v2260 = vshrl.u32 %v2259, 7
      %v2261 = vsub.s32 %v2258, %v2260
      %v2262 = vrot.slane %v2246, %v2261
      %v2263 = vcombine.low %v2169, %v2176
      %v2265 = vunpack.c.l.s4 1983009808
      %v2266 = vunpack.c.0.s8 %v2265
      %v2267 = vlaneseq
      %v2268 = vshrl.u32 %v2267, 7
      %v2269 = vsub.s32 %v2266, %v2268
      %v2270 = vrot.slane %v2263, %v2269
      %v2271 = vcombine.low %v2193, %v2194
      %v2273 = vunpack.c.l.s4 1983009808
      %v2274 = vunpack.c.0.s8 %v2273
      %v2275 = vlaneseq
      %v2276 = vshrl.u32 %v2275, 7
      %v2277 = vsub.s32 %v2274, %v2276
      %v2278 = vrot.slane %v2271, %v2277
      %v2279 = vcombine.low %v2185, %v2192
      %v2281 = vunpack.c.l.s4 1983009808
      %v2282 = vunpack.c.0.s8 %v2281
      %v2283 = vlaneseq
      %v2284 = vshrl.u32 %v2283, 7
      %v2285 = vsub.s32 %v2282, %v2284
      %v2286 = vrot.slane %v2279, %v2285
      %v2287 = vcombine.low %v2195, %v2196
      %v2289 = vunpack.c.l.s4 1983009808
      %v2290 = vunpack.c.0.s8 %v2289
      %v2291 = vlaneseq
      %v2292 = vshrl.u32 %v2291, 7
      %v2293 = vsub.s32 %v2290, %v2292
      %v2294 = vrot.slane %v2287, %v2293
      %v2295 = vcombine.low %v2270, %v2278
      %v2296 = vcombine.high %v2270, %v2278
      %v2298 = vunpack.c.l.s4 1934713408
      %v2299 = vunpack.c.0.s8 %v2298
      %v2300 = vlaneseq
      %v2301 = vshrl.u32 %v2300, 7
      %v2302 = vsub.s32 %v2299, %v2301
      %v2303 = vrot.slane %v2295, %v2302
      %v2305 = vunpack.c.l.s4 1934713408
      %v2306 = vunpack.c.0.s8 %v2305
      %v2307 = vlaneseq
      %v2308 = vshrl.u32 %v2307, 7
      %v2309 = vsub.s32 %v2306, %v2308
      %v2310 = vrot.slane %v2296, %v2309
      %v2311 = vcombine.low %v2286, %v2294
      %v2312 = vcombine.high %v2286, %v2294
      %v2314 = vunpack.c.l.s4 1934713408
      %v2315 = vunpack.c.0.s8 %v2314
      %v2316 = vlaneseq
      %v2317 = vshrl.u32 %v2316, 7
      %v2318 = vsub.s32 %v2315, %v2317
      %v2319 = vrot.slane %v2311, %v2318
      %v2321 = vunpack.c.l.s4 1934713408
      %v2322 = vunpack.c.0.s8 %v2321
      %v2323 = vlaneseq
      %v2324 = vshrl.u32 %v2323, 7
      %v2325 = vsub.s32 %v2322, %v2324
      %v2326 = vrot.slane %v2312, %v2325
      %v2327 = vcombine.low %v2303, %v2319
      %v2328 = vcombine.high %v2303, %v2319
      %v2329 = vcombine.low %v2310, %v2326
      %v2330 = vcombine.high %v2310, %v2326
      %v2331 = vcombine.low %v2237, %v2244
      %v2333 = vunpack.c.l.s4 1983009808
      %v2334 = vunpack.c.0.s8 %v2333
      %v2335 = vlaneseq
      %v2336 = vshrl.u32 %v2335, 7
      %v2337 = vsub.s32 %v2334, %v2336
      %v2338 = vrot.slane %v2331, %v2337
      %v2339 = vcombine.low %v2254, %v2255
      %v2341 = vunpack.c.l.s4 1983009808
      %v2342 = vunpack.c.0.s8 %v2341
      %v2343 = vlaneseq
      %v2344 = vshrl.u32 %v2343, 7
      %v2345 = vsub.s32 %v2342, %v2344
      %v2346 = vrot.slane %v2339, %v2345
      %v2347 = vcombine.low %v2253, %v2262
      %v2349 = vunpack.c.l.s4 1983009808
      %v2350 = vunpack.c.0.s8 %v2349
      %v2351 = vlaneseq
      %v2352 = vshrl.u32 %v2351, 7
      %v2353 = vsub.s32 %v2350, %v2352
      %v2354 = vrot.slane %v2347, %v2353
      %v2355 = vcombine.high %v2253, 0.0
      %v2357 = vunpack.c.l.s4 1983009808
      %v2358 = vunpack.c.0.s8 %v2357
      %v2359 = vlaneseq
      %v2360 = vshrl.u32 %v2359, 7
      %v2361 = vsub.s32 %v2358, %v2360
      %v2362 = vrot.slane %v2355, %v2361
      %v2363 = vcombine.low %v2338, %v2346
      %v2364 = vcombine.high %v2338, %v2346
      %v2366 = vunpack.c.l.s4 1934713408
      %v2367 = vunpack.c.0.s8 %v2366
      %v2368 = vlaneseq
      %v2369 = vshrl.u32 %v2368, 7
      %v2370 = vsub.s32 %v2367, %v2369
      %v2371 = vrot.slane %v2363, %v2370
      %v2373 = vunpack.c.l.s4 1934713408
      %v2374 = vunpack.c.0.s8 %v2373
      %v2375 = vlaneseq
      %v2376 = vshrl.u32 %v2375, 7
      %v2377 = vsub.s32 %v2374, %v2376
      %v2378 = vrot.slane %v2364, %v2377
      %v2379 = vcombine.low %v2354, %v2362
      %v2380 = vcombine.high %v2354, %v2362
      %v2382 = vunpack.c.l.s4 1934713408
      %v2383 = vunpack.c.0.s8 %v2382
      %v2384 = vlaneseq
      %v2385 = vshrl.u32 %v2384, 7
      %v2386 = vsub.s32 %v2383, %v2385
      %v2387 = vrot.slane %v2379, %v2386
      %v2389 = vunpack.c.l.s4 1934713408
      %v2390 = vunpack.c.0.s8 %v2389
      %v2391 = vlaneseq
      %v2392 = vshrl.u32 %v2391, 7
      %v2393 = vsub.s32 %v2390, %v2392
      %v2394 = vrot.slane %v2380, %v2393
      %v2395 = vcombine.low %v2371, %v2387
      %v2396 = vcombine.high %v2371, %v2387
      %v2397 = vcombine.low %v2378, %v2394
      %v2398 = vcombine.high %v2378, %v2394
      %2401 = vrot.lane.b32.xlu0 %v2328, 8
      %v2402 = vpop.permute.xlu0 %2401
      %2403 = vrot.lane.b32.xlu0 %v2396, 8
      %v2404 = vpop.permute.xlu0 %2403
      %2409 = vrot.lane.b32.xlu0 %v2329, 16
      %v2410 = vpop.permute.xlu0 %2409
      %2411 = vrot.lane.b32.xlu0 %v2397, 16
      %v2412 = vpop.permute.xlu0 %2411
      %2417 = vrot.lane.b32.xlu0 %v2330, 24
      %v2418 = vpop.permute.xlu0 %2417
      %2419 = vrot.lane.b32.xlu0 %v2398, 24
      %v2420 = vpop.permute.xlu0 %2419
      %v2423 = vsel %vm1654, %v2327, %v2402
      %v2424 = vsel %vm1654, %v2395, %v2404
      %vm2425 = vcmask 130048
      %v2426 = vsel %vm2425, %v2423, %v2410
      %v2427 = vsel %vm2425, %v2424, %v2412
      %vm2428 = vcmask 195584
      %v2429 = vsel %vm2428, %v2426, %v2418
      %v2430 = vsel %vm2428, %v2427, %v2420
      %v2431 = vpack.c.bf16 %v2430, %v2429
      %v2432 = vld [vmem:[%s600] sm:$0xf]
      %v2433 = vld [vmem:[%s600 + $0x4] sm:$0xf]
      %v2434 = vld [vmem:[%s600 + $0x8] sm:$0xf]
      %v2435 = vld [vmem:[%s600 + $0xc] sm:$0xf]
      %v2436 = vld [vmem:[%s603] sm:$0x1]
      %v2438 = vlaneseq
      %v2439 = vshrl.u32 %v2438, 7
      %v2440 = vsub.s32 0, %v2439
      %v2441 = vrot.slane %v2436, %v2440
      %v2447 = vunpack.c.l.b16 %v2432
      %v2448 = vunpack.c.l.b16 %v2433
      %v2449 = vunpack.c.l.b16 %v2434
      %v2450 = vunpack.c.l.b16 %v2435
      %v2451 = vpack.c.b16 %v2448, %v2447
      %v2452 = vpack.c.b16 %v2450, %v2449
      %v2456 = vsel %vm646, %v2431, 0
      %2458 = vmatprep.subr.bf16.mxu0 0
      %2459 = vmatpush1.bf16.msra.mxu0 %v2451
      %2460 = vmatprep.subr.bf16.mxu0 0
      %2461 = vmatpush1.bf16.msra.mxu0 %v2452
      %2462 = vmatprep.subr.bf16.mxu0 0
      %2463 = vmatpush1.bf16.msra.mxu0 0
      %2464 = vmatprep.subr.bf16.mxu0 0
      %2465 = vmatpush1.bf16.msra.mxu0 0
      %2466 = vmatprep.subr.bf16.mxu0 0
      %2467 = vmatpush1.bf16.msra.mxu0 0
      %2468 = vmatprep.subr.bf16.mxu0 0
      %2469 = vmatpush1.bf16.msra.mxu0 0
      %2470 = vmatprep.subr.bf16.mxu0 0
      %2471 = vmatpush1.bf16.msra.mxu0 0
      %2472 = vmatprep.subr.bf16.mxu0 0
      %2473 = vmatpush1.bf16.msra.mxu0 0
      %2474 = vmatprep.subr.bf16.mxu0 0
      %2475 = vmatpush1.bf16.msra.mxu0 0
      %2476 = vmatprep.subr.bf16.mxu0 0
      %2477 = vmatpush1.bf16.msra.mxu0 0
      %2478 = vmatprep.subr.bf16.mxu0 0
      %2479 = vmatpush1.bf16.msra.mxu0 0
      %2480 = vmatprep.subr.bf16.mxu0 0
      %2481 = vmatpush1.bf16.msra.mxu0 0
      %2482 = vmatprep.subr.bf16.mxu0 0
      %2483 = vmatpush1.bf16.msra.mxu0 0
      %2484 = vmatprep.subr.bf16.mxu0 0
      %2485 = vmatpush1.bf16.msra.mxu0 0
      %2486 = vmatprep.subr.bf16.mxu0 0
      %2487 = vmatpush1.bf16.msra.mxu0 0
      %2488 = vmatprep.subr.bf16.mxu0 0
      %2489 = vmatpush1.bf16.msra.mxu0 0
      %2490 = vmatprep.mubr.bf16.mxu0 0
      %2491 = vmatmul.mubr.bf16.gmra.mrb[0].mxu0 %v2456
      %v2492 = vpop.f32.mrb[0].mxu0
      %v2493 = vadd.f32 %v2441, %v2492
      %v2494 = vpop.f32.mrb[0].mxu0
      %v2495 = vpop.f32.mrb[0].mxu0
      %v2496 = vadd.f32 %v2441, %v2495
      %v2497 = vpop.f32.mrb[0].mxu0
      %2498 = vdwg.mxu0
      %v2499 = vadd.f32 %v642, %v2493
      %v2500 = vadd.f32 %v643, %v2496
      %v2501 = vld [vmem:[%s606] sm:$0x1]
      %v2502 = vld [vmem:[%s609] sm:$0x1]
      %v2503 = vsel %vm646, %v2499, 0.0
      %2504 = vadd.xlane.f32.xlu0 %v2503
      %v2505 = vpop.xlane.xlu0 %2504
      %v2506 = vsel %vm650, %v2500, 0.0
      %2507 = vadd.xlane.f32.xlu0 %v2506
      %v2508 = vpop.xlane.xlu0 %2507
      %v2509 = vmul.f32 %v2505, %v654
      %v2510 = vmul.f32 %v2508, %v654
      %v2511 = vsub.f32 %v2499, %v2509
      %v2512 = vsub.f32 %v2500, %v2510
      %v2513 = vmul.f32 %v2511, %v2511
      %v2514 = vmul.f32 %v2512, %v2512
      %v2515 = vsel %vm646, %v2513, 0.0
      %2516 = vadd.xlane.f32.xlu0 %v2515
      %v2517 = vpop.xlane.xlu0 %2516
      %v2518 = vsel %vm650, %v2514, 0.0
      %2519 = vadd.xlane.f32.xlu0 %v2518
      %v2520 = vpop.xlane.xlu0 %2519
      %v2521 = vmul.f32 %v2517, %v654
      %v2522 = vmul.f32 %v2520, %v654
      %v2523 = vadd.f32 %v2521, 1e-05
      %v2524 = vadd.f32 %v2522, 1e-05
      %v2525 = vrsqrt.pop %v2523
      %v2526 = vrsqrt.pop %v2524
      %v2527 = vmul.f32 %v2511, %v2525
      %v2528 = vmul.f32 %v2512, %v2526
      %v2530 = vlaneseq
      %v2531 = vshrl.u32 %v2530, 7
      %v2532 = vsub.s32 0, %v2531
      %v2533 = vrot.slane %v2501, %v2532
      %v2535 = vmul.f32 %v2527, %v2533
      %v2536 = vmul.f32 %v2528, %v2533
      %v2538 = vlaneseq
      %v2539 = vshrl.u32 %v2538, 7
      %v2540 = vsub.s32 0, %v2539
      %v2541 = vrot.slane %v2502, %v2540
      %v2543 = vadd.f32 %v2535, %v2541
      %v2544 = vadd.f32 %v2536, %v2541
      %v2545 = vpack.c.bf16 %v2544, %v2543
      %v2546 = vld [vmem:[%s614] sm:$0xf]
      %v2547 = vld [vmem:[%s614 + $0x4] sm:$0xf]
      %v2548 = vld [vmem:[%s614 + $0x8] sm:$0xf]
      %v2549 = vld [vmem:[%s614 + $0xc] sm:$0xf]
      %v2550 = vld [vmem:[%s617] sm:$0x1]
      %v2552 = vlaneseq
      %v2553 = vshrl.u32 %v2552, 7
      %v2554 = vsub.s32 0, %v2553
      %v2555 = vrot.slane %v2550, %v2554
      %v2561 = vunpack.c.l.b16 %v2546
      %v2562 = vunpack.c.l.b16 %v2547
      %v2563 = vunpack.c.l.b16 %v2548
      %v2564 = vunpack.c.l.b16 %v2549
      %v2565 = vpack.c.b16 %v2562, %v2561
      %v2566 = vpack.c.b16 %v2564, %v2563
      %v2570 = vsel %vm646, %v2545, 0
      %2572 = vmatprep.subr.bf16.mxu0 0
      %2573 = vmatpush1.bf16.msra.mxu0 %v2565
      %2574 = vmatprep.subr.bf16.mxu0 0
      %2575 = vmatpush1.bf16.msra.mxu0 %v2566
      %2576 = vmatprep.subr.bf16.mxu0 0
      %2577 = vmatpush1.bf16.msra.mxu0 0
      %2578 = vmatprep.subr.bf16.mxu0 0
      %2579 = vmatpush1.bf16.msra.mxu0 0
      %2580 = vmatprep.subr.bf16.mxu0 0
      %2581 = vmatpush1.bf16.msra.mxu0 0
      %2582 = vmatprep.subr.bf16.mxu0 0
      %2583 = vmatpush1.bf16.msra.mxu0 0
      %2584 = vmatprep.subr.bf16.mxu0 0
      %2585 = vmatpush1.bf16.msra.mxu0 0
      %2586 = vmatprep.subr.bf16.mxu0 0
      %2587 = vmatpush1.bf16.msra.mxu0 0
      %2588 = vmatprep.subr.bf16.mxu0 0
      %2589 = vmatpush1.bf16.msra.mxu0 0
      %2590 = vmatprep.subr.bf16.mxu0 0
      %2591 = vmatpush1.bf16.msra.mxu0 0
      %2592 = vmatprep.subr.bf16.mxu0 0
      %2593 = vmatpush1.bf16.msra.mxu0 0
      %2594 = vmatprep.subr.bf16.mxu0 0
      %2595 = vmatpush1.bf16.msra.mxu0 0
      %2596 = vmatprep.subr.bf16.mxu0 0
      %2597 = vmatpush1.bf16.msra.mxu0 0
      %2598 = vmatprep.subr.bf16.mxu0 0
      %2599 = vmatpush1.bf16.msra.mxu0 0
      %2600 = vmatprep.subr.bf16.mxu0 0
      %2601 = vmatpush1.bf16.msra.mxu0 0
      %2602 = vmatprep.subr.bf16.mxu0 0
      %2603 = vmatpush1.bf16.msra.mxu0 0
      %2604 = vmatprep.mubr.bf16.mxu0 0
      %2605 = vmatmul.mubr.bf16.gmra.mrb[0].mxu0 %v2570
      %v2606 = vpop.f32.mrb[0].mxu0
      %v2607 = vadd.f32 %v2555, %v2606
      %v2608 = vpop.f32.mrb[0].mxu0
      %v2609 = vpop.f32.mrb[0].mxu0
      %v2610 = vadd.f32 %v2555, %v2609
      %v2611 = vpop.f32.mrb[0].mxu0
      %2612 = vdwg.mxu0
      %v2613 = vmul.f32 %v2607, 0.5
      %v2614 = vmul.f32 %v2610, 0.5
      %v2615 = vmul.f32 %v2607, 0.044715
      %v2616 = vmul.f32 %v2610, 0.044715
      %v2617 = vmul.f32 %v2615, %v2607
      %v2618 = vmul.f32 %v2616, %v2610
      %v2619 = vmul.f32 %v2617, %v2607
      %v2620 = vmul.f32 %v2618, %v2610
      %v2621 = vadd.f32 %v2607, %v2619
      %v2622 = vadd.f32 %v2610, %v2620
      %v2623 = vmul.f32 %v2621, 0.7978846
      %v2624 = vmul.f32 %v2622, 0.7978846
      %v2625 = vtanh.pop %v2623
      %v2626 = vtanh.pop %v2624
      %v2627 = vadd.f32 %v2625, 1.0
      %v2628 = vadd.f32 %v2626, 1.0
      %v2629 = vmul.f32 %v2613, %v2627
      %v2630 = vmul.f32 %v2614, %v2628
      %v2631 = vpack.c.bf16 %v2630, %v2629
      %v2632 = vld [vmem:[%s622] sm:$0xf]
      %v2633 = vld [vmem:[%s622 + $0x4] sm:$0xf]
      %v2634 = vld [vmem:[%s622 + $0x8] sm:$0xf]
      %v2635 = vld [vmem:[%s622 + $0xc] sm:$0xf]
      %v2636 = vld [vmem:[%s622 + $0x10] sm:$0xf]
      %v2637 = vld [vmem:[%s622 + $0x14] sm:$0xf]
      %v2638 = vld [vmem:[%s622 + $0x18] sm:$0xf]
      %v2639 = vld [vmem:[%s622 + $0x1c] sm:$0xf]
      %v2640 = vld [vmem:[%s622 + $0x20] sm:$0xf]
      %v2641 = vld [vmem:[%s622 + $0x24] sm:$0xf]
      %v2642 = vld [vmem:[%s622 + $0x28] sm:$0xf]
      %v2643 = vld [vmem:[%s622 + $0x2c] sm:$0xf]
      %v2644 = vld [vmem:[%s622 + $0x30] sm:$0xf]
      %v2645 = vld [vmem:[%s622 + $0x34] sm:$0xf]
      %v2646 = vld [vmem:[%s622 + $0x38] sm:$0xf]
      %v2647 = vld [vmem:[%s622 + $0x3c] sm:$0xf]
      %v2648 = vld [vmem:[%s625] sm:$0x1]
      %v2650 = vlaneseq
      %v2651 = vshrl.u32 %v2650, 7
      %v2652 = vsub.s32 0, %v2651
      %v2653 = vrot.slane %v2648, %v2652
      %v2671 = vunpack.c.l.b16 %v2632
      %v2672 = vunpack.c.l.b16 %v2633
      %v2673 = vunpack.c.l.b16 %v2634
      %v2674 = vunpack.c.l.b16 %v2635
      %v2675 = vunpack.c.l.b16 %v2636
      %v2676 = vunpack.c.l.b16 %v2637
      %v2677 = vunpack.c.l.b16 %v2638
      %v2678 = vunpack.c.l.b16 %v2639
      %v2679 = vunpack.c.l.b16 %v2640
      %v2680 = vunpack.c.l.b16 %v2641
      %v2681 = vunpack.c.l.b16 %v2642
      %v2682 = vunpack.c.l.b16 %v2643
      %v2683 = vunpack.c.l.b16 %v2644
      %v2684 = vunpack.c.l.b16 %v2645
      %v2685 = vunpack.c.l.b16 %v2646
      %v2686 = vunpack.c.l.b16 %v2647
      %v2687 = vpack.c.b16 %v2672, %v2671
      %v2688 = vpack.c.b16 %v2674, %v2673
      %v2689 = vpack.c.b16 %v2676, %v2675
      %v2690 = vpack.c.b16 %v2678, %v2677
      %v2691 = vpack.c.b16 %v2680, %v2679
      %v2692 = vpack.c.b16 %v2682, %v2681
      %v2693 = vpack.c.b16 %v2684, %v2683
      %v2694 = vpack.c.b16 %v2686, %v2685
      %2703 = vmatprep.subr.bf16.mxu0 0
      %2704 = vmatpush1.bf16.msra.mxu0 %v2687
      %2705 = vmatprep.subr.bf16.mxu0 0
      %2706 = vmatpush1.bf16.msra.mxu0 %v2688
      %2707 = vmatprep.subr.bf16.mxu0 0
      %2708 = vmatpush1.bf16.msra.mxu0 %v2689
      %2709 = vmatprep.subr.bf16.mxu0 0
      %2710 = vmatpush1.bf16.msra.mxu0 %v2690
      %2711 = vmatprep.subr.bf16.mxu0 0
      %2712 = vmatpush1.bf16.msra.mxu0 %v2691
      %2713 = vmatprep.subr.bf16.mxu0 0
      %2714 = vmatpush1.bf16.msra.mxu0 %v2692
      %2715 = vmatprep.subr.bf16.mxu0 0
      %2716 = vmatpush1.bf16.msra.mxu0 %v2693
      %2717 = vmatprep.subr.bf16.mxu0 0
      %2718 = vmatpush1.bf16.msra.mxu0 %v2694
      %2719 = vmatprep.subr.bf16.mxu0 0
      %2720 = vmatpush1.bf16.msra.mxu0 0
      %2721 = vmatprep.subr.bf16.mxu0 0
      %2722 = vmatpush1.bf16.msra.mxu0 0
      %2723 = vmatprep.subr.bf16.mxu0 0
      %2724 = vmatpush1.bf16.msra.mxu0 0
      %2725 = vmatprep.subr.bf16.mxu0 0
      %2726 = vmatpush1.bf16.msra.mxu0 0
      %2727 = vmatprep.subr.bf16.mxu0 0
      %2728 = vmatpush1.bf16.msra.mxu0 0
      %2729 = vmatprep.subr.bf16.mxu0 0
      %2730 = vmatpush1.bf16.msra.mxu0 0
      %2731 = vmatprep.subr.bf16.mxu0 0
      %2732 = vmatpush1.bf16.msra.mxu0 0
      %2733 = vmatprep.subr.bf16.mxu0 0
      %2734 = vmatpush1.bf16.msra.mxu0 0
      %2735 = vmatprep.mubr.bf16.mxu0 0
      %2736 = vmatmul.mubr.bf16.gmra.mrb[0].mxu0 %v2631
      %v2737 = vpop.f32.mrb[0].mxu0
      %v2738 = vadd.f32 %v2653, %v2737
      %v2739 = vpop.f32.mrb[0].mxu0
      %v2740 = vpop.f32.mrb[0].mxu0
      %v2741 = vadd.f32 %v2653, %v2740
      %v2742 = vpop.f32.mrb[0].mxu0
      %2743 = vdwg.mxu0
      %v2744 = vadd.f32 %v2499, %v2738
      %v2745 = vadd.f32 %v2500, %v2741
      %2746 = vst.msk [vmem:[%s630] sm:$0xff] %vm646, %v2744
      %2747 = vst.msk [vmem:[%s630 + $0x8] sm:$0x7f] %vm650, %v2745
      %p2748 = scmp.lt.s32.totalorder %s28, 1
      %s2749 = scalar_select %p2748, %s28, 1
      %s2750 = smul.addr %s2749, 2
      %s2751 = smul.addr %s2750, 8
      %s2752 = scalar_lea.vmem %s13, %s2751
      // Predicated region
      $region77: #{model_forward.8} parent=71 // pred_check
        %p2753 = pneg %p387
      $region78: #{model_forward.8} parent=71 // pred_check_branch
        %2755 = sbr.rel (%p2753) target = $region80
      $region79: #{model_forward.8} parent=71 // pred_region
        _
      $region80: #{model_forward.8} parent=71 // pred_fallthru
        _
    $region72: #{model_forward.8} parent=5 // pred_fallthru
      _
    %p2756 = scmp.le.s32.totalorder 2, %s19
    // Predicated region
    $region81: #{model_forward.8} parent=5 // pred_check
      %p2757 = pneg %p2756
    $region82: #{model_forward.8} parent=5 // pred_check_branch
      %2759 = sbr.rel (%p2757) target = $region84
    $region83: #{model_forward.8} parent=5 // pred_region
      %s2760 = ssub.s32 %s19, 2
      // Predicated region
      $region85: #{model_forward.8} parent=83 // pred_check
        %p2761 = pneg %p393
      $region86: #{model_forward.8} parent=83 // pred_check_branch
        %2763 = sbr.rel (%p2761) target = $region88
      $region87: #{model_forward.8} parent=83 // pred_region
        %p2764 = scmp.lt.s32.totalorder %s30, 1
        %s2765 = scalar_select %p2764, %s30, 1
        %s2766 = smul.addr %s2765, 2
        %s2767 = smul.addr %s2766, 8
        %s2768 = scalar_lea.vmem %s13, %s2767
      $region88: #{model_forward.8} parent=83 // pred_fallthru
        _
    $region84: #{model_forward.8} parent=5 // pred_fallthru
      _
  $region6: #{model_forward.8} parent=0 // loop_footer
    %s23 = sadd.s32 1, %s19
  $region7: #{model_forward.8} parent=0 // loop_footer_branch
    %18 = sbr.rel target = $region3
  $region8: #{model_forward.8} parent=0 // loop_exit
    _

</llo_original>
